<compile_context>
chip_gen: v5e
topology: v5e:2x2
jax: 0.10.0
libtpu: 0.0.40
codegen_flags: <defaults>
</compile_context>

<pallas_src>
import jax
import jax.numpy as jnp
from jax.experimental import pallas as pl
from jax.experimental.pallas import tpu as pltpu

# (in_dim, out_dim) for every nn.Linear, in order.
LINEAR_DIMS = [
    (40, 100), (100, 200), (200, 400), (400, 800), (800, 800),
    (800, 400), (400, 200), (200, 100), (100, 20),
]
N_LAYERS = len(LINEAR_DIMS)
EPS = 1e-5


def _pad128(d):
    return ((d + 127) // 128) * 128


D_IN = [d for d, _ in LINEAR_DIMS]
D_OUT = [d for _, d in LINEAR_DIMS]
D_IN_P = [_pad128(d) for d in D_IN]      # 128,128,256,512,896,896,512,256,128
D_OUT_P = [_pad128(d) for d in D_OUT]    # 128,256,512,896,896,512,256,128,128
VEC_W = max(D_IN_P + D_OUT_P)            # 896

# Weight slabs grouped by padded d_in (slab rows); layers concatenated along
# columns at 128-aligned offsets.
WGROUP_LAYERS = ((128, (0, 1, 8)), (256, (2, 7)), (512, (3, 6)), (896, (4, 5)))
LAYER_WSLOT = {}
for _gi, (_rows, _lids) in enumerate(WGROUP_LAYERS):
    _off = 0
    for _li in _lids:
        LAYER_WSLOT[_li] = (_gi, _off)
        _off += D_OUT_P[_li]


def _vmem_limit_bytes():
    # Actual footprint: ~4.2 MiB bf16 weight slabs (double-buffered ~8.3 MiB)
    # + ~0.1 MiB vectors + small activation tiles.  Cap well under physical
    # VMEM on every generation (v7x has only 64 MiB per TensorCore).
    try:
        cap = pltpu.get_tpu_info().vmem_capacity_bytes
    except Exception:
        cap = 64 << 20
    return min(24 << 20, cap // 2)


def mlp_kernel(x_ref, w128_ref, w256_ref, w512_ref, w896_ref, vec_ref, o_ref):
    wrefs = (w128_ref, w256_ref, w512_ref, w896_ref)
    h = x_ref[...].astype(jnp.float32)          # (TM, 128); padded cols are 0
    for i in range(N_LAYERS):
        d_in = D_IN[i]
        d_in_p, d_out_p = D_IN_P[i], D_OUT_P[i]
        gi, coff = LAYER_WSLOT[i]

        # LayerNorm statistics over the REAL feature width d_in.  Padded
        # columns of h are exactly zero, so the padded-row sums equal the
        # real sums; var = E[h^2] - mu^2 keeps padding out of the reduction.
        mu = jnp.sum(h, axis=-1, keepdims=True) * (1.0 / d_in)
        e2 = jnp.sum(h * h, axis=-1, keepdims=True) * (1.0 / d_in)
        var = e2 - mu * mu
        hn = (h - mu) * jax.lax.rsqrt(var + EPS)

        if i == 0:
            # LN(40) affine is folded into W0'/b0' in pack_params (no SiLU
            # between this LN and its Linear, so the fold is exact).
            g = hn
        else:
            gamma = vec_ref[3 * i + 0:3 * i + 1, 0:d_in_p]   # (1, d_in_p)
            beta = vec_ref[3 * i + 1:3 * i + 2, 0:d_in_p]    # (1, d_in_p)
            a = hn * gamma + beta        # padded cols: *0 + 0 -> stay 0
            g = a * jax.nn.sigmoid(a)    # SiLU; silu(0)=0 keeps padding zero

        # Dropout2d(0.1) layers are identity in eval mode (inference).
        w = wrefs[gi][:, coff:coff + d_out_p]                # (d_in_p, d_out_p) bf16
        b = vec_ref[3 * i + 2:3 * i + 3, 0:d_out_p]          # (1, d_out_p) f32
        h = jnp.dot(g.astype(jnp.bfloat16), w,
                    preferred_element_type=jnp.float32) + b
    o_ref[...] = h.astype(o_ref.dtype)


def init_params(key):
    """Deterministic parameter init mirroring the module's shapes."""
    params = []
    for i, (d_in, d_out) in enumerate(LINEAR_DIMS):
        k_w, k_b, k_g, k_be = jax.random.split(jax.random.fold_in(key, i), 4)
        gamma = 1.0 + 0.01 * jax.random.normal(k_g, (1, d_in), jnp.float32)
        beta = 0.01 * jax.random.normal(k_be, (1, d_in), jnp.float32)
        w = jax.random.normal(k_w, (d_in, d_out), jnp.float32) / jnp.sqrt(d_in)
        b = 0.01 * jax.random.normal(k_b, (1, d_out), jnp.float32)
        params.extend([gamma, beta, w, b])
    return params


def pack_params(params):
    """One-time prep: fold the layer-0 LN affine into the first Linear,
    zero-pad every dim to a multiple of 128 lanes, cast weights to bf16 and
    pack them into 4 column-concatenated slabs + 1 f32 gamma/beta/bias slab."""
    gammas, betas, ws, bs = [], [], [], []
    for i in range(N_LAYERS):
        gamma, beta, w, b = params[4 * i:4 * i + 4]
        gammas.append(jnp.reshape(gamma, (-1,)).astype(jnp.float32))
        betas.append(jnp.reshape(beta, (-1,)).astype(jnp.float32))
        ws.append(w.astype(jnp.float32))
        bs.append(jnp.reshape(b, (-1,)).astype(jnp.float32))

    # Exact fold of LN(40)'s affine into Linear(40,100):
    #   (n*g + be) @ W + b == n @ (g[:,None]*W) + (be @ W + b)
    w0 = ws[0]
    bs[0] = bs[0] + betas[0] @ w0
    ws[0] = w0 * gammas[0][:, None]
    gammas[0] = jnp.zeros_like(gammas[0])   # unused in-kernel (folded)
    betas[0] = jnp.zeros_like(betas[0])

    # (27, 896) f32 slab: rows 3i, 3i+1, 3i+2 = gamma_i, beta_i, bias_i,
    # each zero-padded to 896 lanes (zeros in padded cols keep the
    # zero-padding invariant of the activations).
    def _row(v):
        return jnp.pad(v, (0, VEC_W - v.shape[0]))

    vec = jnp.stack(
        [_row(r) for i in range(N_LAYERS) for r in (gammas[i], betas[i], bs[i])],
        axis=0)

    # bf16 weight slabs, zero-padded rows/cols, 128-aligned column offsets.
    slabs = []
    for rows_p, lids in WGROUP_LAYERS:
        cols = []
        for li in lids:
            d_in, d_out = LINEAR_DIMS[li]
            wp = jnp.zeros((rows_p, D_OUT_P[li]), jnp.float32)
            wp = wp.at[:d_in, :d_out].set(ws[li])
            cols.append(wp)
        slabs.append(jnp.concatenate(cols, axis=1).astype(jnp.bfloat16))
    return tuple(slabs) + (vec,)


def _round_up(n, m):
    return ((n + m - 1) // m) * m


@jax.jit
def mlp_forward(x, packed):
    w128, w256, w512, w896, vec = packed
    batch = x.shape[0]
    # MXU M-tile: 256 fills v6e/v7x's 256-wide MXU (use 128 if tuning for
    # v5e); small batches run as a single 8-row-aligned block.
    tm = 256 if batch >= 256 else _round_up(batch, 8)
    b_pad = _round_up(batch, tm)
    d0p, dlp = D_IN_P[0], D_OUT_P[-1]

    x_pad = jnp.zeros((b_pad, d0p), jnp.float32)
    x_pad = x_pad.at[:batch, :D_IN[0]].set(x.astype(jnp.float32))

    def _full(arr):
        # Whole-array block, constant index map -> loaded once, stays resident.
        return pl.BlockSpec(arr.shape, lambda i: (0, 0))

    out = pl.pallas_call(
        mlp_kernel,
        out_shape=jax.ShapeDtypeStruct((b_pad, dlp), jnp.float32),
        grid=(b_pad // tm,),
        in_specs=[
            pl.BlockSpec((tm, d0p), lambda i: (i, 0)),
            _full(w128), _full(w256), _full(w512), _full(w896), _full(vec),
        ],
        out_specs=pl.BlockSpec((tm, dlp), lambda i: (i, 0)),
        compiler_params=pltpu.CompilerParams(
            dimension_semantics=("parallel",),
            vmem_limit_bytes=_vmem_limit_bytes()),
    )(x_pad, w128, w256, w512, w896, vec)
    return out[:batch, :D_OUT[-1]]


def mlp_reference(x, params):
    """Pure-JAX f32 reference with the exact PyTorch module semantics."""
    h = x.astype(jnp.float32)
    for i in range(N_LAYERS):
        gamma, beta, w, b = params[4 * i:4 * i + 4]
        mu = jnp.mean(h, axis=-1, keepdims=True)
        var = jnp.mean((h - mu) ** 2, axis=-1, keepdims=True)
        h = (h - mu) * jax.lax.rsqrt(var + EPS) * gamma + beta
        if i > 0:
            h = h * jax.nn.sigmoid(h)
        h = h @ w + b
    return h


if __name__ == "__main__":
    key = jax.random.PRNGKey(0)
    k_x, k_p = jax.random.split(key)

    batch = 8
    x = jax.random.normal(k_x, (batch, 40), jnp.float32)
    params = init_params(k_p)
    packed = pack_params(params)

    out = jax.block_until_ready(mlp_forward(x, packed))
    ref = mlp_reference(x, params)

    assert out.shape == (batch, 20), out.shape
    # bf16 weights/activations through 9 chained layers -> compare against the
    # exact f32 reference with a tolerance of 10% of the output scale (real
    # structural bugs produce O(100%) errors; bf16 drift is ~1-3%).
    err = float(jnp.max(jnp.abs(out - ref)))
    scale = float(jnp.max(jnp.abs(ref)))
    assert err <= 0.1 * max(scale, 1.0), (err, scale)
    print("KERNEL_OK")
</pallas_src>

<mosaic_0001>
module attributes {stable_mosaic.version = 11 : i64} {
  func.func @mlp_kernel(%arg0: i32, %arg1: memref<8x128xf32, #tpu.memory_space<vmem>>, %arg2: memref<128x512xbf16, #tpu.memory_space<vmem>>, %arg3: memref<256x640xbf16, #tpu.memory_space<vmem>>, %arg4: memref<512x1152xbf16, #tpu.memory_space<vmem>>, %arg5: memref<896x1408xbf16, #tpu.memory_space<vmem>>, %arg6: memref<27x896xf32, #tpu.memory_space<vmem>>, %arg7: memref<8x128xf32, #tpu.memory_space<vmem>>) attributes {dimension_semantics = [#tpu.dimension_semantics<parallel>], iteration_bounds = array<i64: 1>, scalar_prefetch = 0 : i64, scratch_operands = 0 : i64, tpu.core_type = #tpu.core_type<tc>, window_params = [{transform_indices = @transform_0, window_bounds = array<i64: 8, 128>}, {pipeline_mode = #tpu.pipeline_mode<synchronous>, transform_indices = @transform_1, window_bounds = array<i64: 128, 512>}, {pipeline_mode = #tpu.pipeline_mode<synchronous>, transform_indices = @transform_2, window_bounds = array<i64: 256, 640>}, {pipeline_mode = #tpu.pipeline_mode<synchronous>, transform_indices = @transform_3, window_bounds = array<i64: 512, 1152>}, {pipeline_mode = #tpu.pipeline_mode<synchronous>, transform_indices = @transform_4, window_bounds = array<i64: 896, 1408>}, {pipeline_mode = #tpu.pipeline_mode<synchronous>, transform_indices = @transform_5, window_bounds = array<i64: 27, 896>}, {transform_indices = @transform_6, window_bounds = array<i64: 8, 128>}]} {
    %c0 = arith.constant 0 : index
    %c0_0 = arith.constant 0 : index
    %0 = vector.load %arg1[%c0, %c0_0] : memref<8x128xf32, #tpu.memory_space<vmem>>, vector<8x128xf32>
    %cst = arith.constant dense<0.000000e+00> : vector<8xf32>
    %1 = vector.multi_reduction <add>, %0, %cst [1] : vector<8x128xf32> to vector<8xf32>
    %2 = vector.shape_cast %1 : vector<8xf32> to vector<8x1xf32>
    %cst_1 = arith.constant 2.500000e-02 : f32
    %3 = vector.broadcast %cst_1 : f32 to vector<8x1xf32>
    %4 = arith.mulf %2, %3 : vector<8x1xf32>
    %5 = arith.mulf %0, %0 : vector<8x128xf32>
    %cst_2 = arith.constant dense<0.000000e+00> : vector<8xf32>
    %6 = vector.multi_reduction <add>, %5, %cst_2 [1] : vector<8x128xf32> to vector<8xf32>
    %7 = vector.shape_cast %6 : vector<8xf32> to vector<8x1xf32>
    %cst_3 = arith.constant 2.500000e-02 : f32
    %8 = vector.broadcast %cst_3 : f32 to vector<8x1xf32>
    %9 = arith.mulf %7, %8 : vector<8x1xf32>
    %10 = arith.mulf %4, %4 : vector<8x1xf32>
    %11 = arith.subf %9, %10 : vector<8x1xf32>
    %12 = vector.broadcast %4 : vector<8x1xf32> to vector<8x128xf32>
    %13 = arith.subf %0, %12 : vector<8x128xf32>
    %cst_4 = arith.constant 9.99999974E-6 : f32
    %14 = vector.broadcast %cst_4 : f32 to vector<8x1xf32>
    %15 = arith.addf %11, %14 : vector<8x1xf32>
    %16 = math.rsqrt %15 : vector<8x1xf32>
    %17 = vector.broadcast %16 : vector<8x1xf32> to vector<8x128xf32>
    %18 = arith.mulf %13, %17 : vector<8x128xf32>
    %c0_5 = arith.constant 0 : index
    %c0_6 = arith.constant 0 : index
    %19 = vector.load %arg2[%c0_5, %c0_6] : memref<128x512xbf16, #tpu.memory_space<vmem>>, vector<128x128xbf16>
    %c2 = arith.constant 2 : index
    %c0_7 = arith.constant 0 : index
    %20 = vector.load %arg6[%c2, %c0_7] : memref<27x896xf32, #tpu.memory_space<vmem>>, vector<1x128xf32>
    %21 = arith.truncf %18 : vector<8x128xf32> to vector<8x128xbf16>
    %cst_8 = arith.constant dense<0.000000e+00> : vector<8x128xf32>
    %22 = tpu.matmul %21, %19, %cst_8 {dimension_numbers = #tpu.dot_dimension_numbers<[1], [0], [0], [1], [0, 0, 1, 1], [], []>} : vector<8x128xbf16>, vector<128x128xbf16>, vector<8x128xf32> -> vector<8x128xf32>
    %23 = vector.broadcast %20 : vector<1x128xf32> to vector<8x128xf32>
    %24 = arith.addf %22, %23 : vector<8x128xf32>
    %cst_9 = arith.constant dense<0.000000e+00> : vector<8xf32>
    %25 = vector.multi_reduction <add>, %24, %cst_9 [1] : vector<8x128xf32> to vector<8xf32>
    %26 = vector.shape_cast %25 : vector<8xf32> to vector<8x1xf32>
    %cst_10 = arith.constant 0.00999999977 : f32
    %27 = vector.broadcast %cst_10 : f32 to vector<8x1xf32>
    %28 = arith.mulf %26, %27 : vector<8x1xf32>
    %29 = arith.mulf %24, %24 : vector<8x128xf32>
    %cst_11 = arith.constant dense<0.000000e+00> : vector<8xf32>
    %30 = vector.multi_reduction <add>, %29, %cst_11 [1] : vector<8x128xf32> to vector<8xf32>
    %31 = vector.shape_cast %30 : vector<8xf32> to vector<8x1xf32>
    %cst_12 = arith.constant 0.00999999977 : f32
    %32 = vector.broadcast %cst_12 : f32 to vector<8x1xf32>
    %33 = arith.mulf %31, %32 : vector<8x1xf32>
    %34 = arith.mulf %28, %28 : vector<8x1xf32>
    %35 = arith.subf %33, %34 : vector<8x1xf32>
    %36 = vector.broadcast %28 : vector<8x1xf32> to vector<8x128xf32>
    %37 = arith.subf %24, %36 : vector<8x128xf32>
    %cst_13 = arith.constant 9.99999974E-6 : f32
    %38 = vector.broadcast %cst_13 : f32 to vector<8x1xf32>
    %39 = arith.addf %35, %38 : vector<8x1xf32>
    %40 = math.rsqrt %39 : vector<8x1xf32>
    %41 = vector.broadcast %40 : vector<8x1xf32> to vector<8x128xf32>
    %42 = arith.mulf %37, %41 : vector<8x128xf32>
    %c3 = arith.constant 3 : index
    %c0_14 = arith.constant 0 : index
    %43 = vector.load %arg6[%c3, %c0_14] : memref<27x896xf32, #tpu.memory_space<vmem>>, vector<1x128xf32>
    %c4 = arith.constant 4 : index
    %c0_15 = arith.constant 0 : index
    %44 = vector.load %arg6[%c4, %c0_15] : memref<27x896xf32, #tpu.memory_space<vmem>>, vector<1x128xf32>
    %45 = vector.broadcast %43 : vector<1x128xf32> to vector<8x128xf32>
    %46 = arith.mulf %42, %45 : vector<8x128xf32>
    %47 = vector.broadcast %44 : vector<1x128xf32> to vector<8x128xf32>
    %48 = arith.addf %46, %47 : vector<8x128xf32>
    %49 = arith.negf %48 : vector<8x128xf32>
    %50 = math.exp %49 : vector<8x128xf32>
    %cst_16 = arith.constant 1.000000e+00 : f32
    %51 = vector.broadcast %cst_16 : f32 to vector<8x128xf32>
    %52 = arith.addf %51, %50 : vector<8x128xf32>
    %53 = arith.divf %51, %52 : vector<8x128xf32>
    %54 = arith.mulf %48, %53 : vector<8x128xf32>
    %c0_17 = arith.constant 0 : index
    %c128 = arith.constant 128 : index
    %55 = vector.load %arg2[%c0_17, %c128] : memref<128x512xbf16, #tpu.memory_space<vmem>>, vector<128x256xbf16>
    %c5 = arith.constant 5 : index
    %c0_18 = arith.constant 0 : index
    %56 = vector.load %arg6[%c5, %c0_18] : memref<27x896xf32, #tpu.memory_space<vmem>>, vector<1x256xf32>
    %57 = arith.truncf %54 : vector<8x128xf32> to vector<8x128xbf16>
    %cst_19 = arith.constant dense<0.000000e+00> : vector<8x256xf32>
    %58 = tpu.matmul %57, %55, %cst_19 {dimension_numbers = #tpu.dot_dimension_numbers<[1], [0], [0], [1], [0, 0, 1, 1], [], []>} : vector<8x128xbf16>, vector<128x256xbf16>, vector<8x256xf32> -> vector<8x256xf32>
    %59 = vector.broadcast %56 : vector<1x256xf32> to vector<8x256xf32>
    %60 = arith.addf %58, %59 : vector<8x256xf32>
    %cst_20 = arith.constant dense<0.000000e+00> : vector<8xf32>
    %61 = vector.multi_reduction <add>, %60, %cst_20 [1] : vector<8x256xf32> to vector<8xf32>
    %62 = vector.shape_cast %61 : vector<8xf32> to vector<8x1xf32>
    %cst_21 = arith.constant 5.000000e-03 : f32
    %63 = vector.broadcast %cst_21 : f32 to vector<8x1xf32>
    %64 = arith.mulf %62, %63 : vector<8x1xf32>
    %65 = arith.mulf %60, %60 : vector<8x256xf32>
    %cst_22 = arith.constant dense<0.000000e+00> : vector<8xf32>
    %66 = vector.multi_reduction <add>, %65, %cst_22 [1] : vector<8x256xf32> to vector<8xf32>
    %67 = vector.shape_cast %66 : vector<8xf32> to vector<8x1xf32>
    %cst_23 = arith.constant 5.000000e-03 : f32
    %68 = vector.broadcast %cst_23 : f32 to vector<8x1xf32>
    %69 = arith.mulf %67, %68 : vector<8x1xf32>
    %70 = arith.mulf %64, %64 : vector<8x1xf32>
    %71 = arith.subf %69, %70 : vector<8x1xf32>
    %72 = vector.broadcast %64 : vector<8x1xf32> to vector<8x256xf32>
    %73 = arith.subf %60, %72 : vector<8x256xf32>
    %cst_24 = arith.constant 9.99999974E-6 : f32
    %74 = vector.broadcast %cst_24 : f32 to vector<8x1xf32>
    %75 = arith.addf %71, %74 : vector<8x1xf32>
    %76 = math.rsqrt %75 : vector<8x1xf32>
    %77 = vector.broadcast %76 : vector<8x1xf32> to vector<8x256xf32>
    %78 = arith.mulf %73, %77 : vector<8x256xf32>
    %c6 = arith.constant 6 : index
    %c0_25 = arith.constant 0 : index
    %79 = vector.load %arg6[%c6, %c0_25] : memref<27x896xf32, #tpu.memory_space<vmem>>, vector<1x256xf32>
    %c7 = arith.constant 7 : index
    %c0_26 = arith.constant 0 : index
    %80 = vector.load %arg6[%c7, %c0_26] : memref<27x896xf32, #tpu.memory_space<vmem>>, vector<1x256xf32>
    %81 = vector.broadcast %79 : vector<1x256xf32> to vector<8x256xf32>
    %82 = arith.mulf %78, %81 : vector<8x256xf32>
    %83 = vector.broadcast %80 : vector<1x256xf32> to vector<8x256xf32>
    %84 = arith.addf %82, %83 : vector<8x256xf32>
    %85 = arith.negf %84 : vector<8x256xf32>
    %86 = math.exp %85 : vector<8x256xf32>
    %cst_27 = arith.constant 1.000000e+00 : f32
    %87 = vector.broadcast %cst_27 : f32 to vector<8x256xf32>
    %88 = arith.addf %87, %86 : vector<8x256xf32>
    %89 = arith.divf %87, %88 : vector<8x256xf32>
    %90 = arith.mulf %84, %89 : vector<8x256xf32>
    %c0_28 = arith.constant 0 : index
    %c0_29 = arith.constant 0 : index
    %91 = vector.load %arg3[%c0_28, %c0_29] : memref<256x640xbf16, #tpu.memory_space<vmem>>, vector<256x512xbf16>
    %c8 = arith.constant 8 : index
    %c0_30 = arith.constant 0 : index
    %92 = vector.load %arg6[%c8, %c0_30] : memref<27x896xf32, #tpu.memory_space<vmem>>, vector<1x512xf32>
    %93 = arith.truncf %90 : vector<8x256xf32> to vector<8x256xbf16>
    %cst_31 = arith.constant dense<0.000000e+00> : vector<8x512xf32>
    %94 = tpu.matmul %93, %91, %cst_31 {dimension_numbers = #tpu.dot_dimension_numbers<[1], [0], [0], [1], [0, 0, 1, 1], [], []>} : vector<8x256xbf16>, vector<256x512xbf16>, vector<8x512xf32> -> vector<8x512xf32>
    %95 = vector.broadcast %92 : vector<1x512xf32> to vector<8x512xf32>
    %96 = arith.addf %94, %95 : vector<8x512xf32>
    %cst_32 = arith.constant dense<0.000000e+00> : vector<8xf32>
    %97 = vector.multi_reduction <add>, %96, %cst_32 [1] : vector<8x512xf32> to vector<8xf32>
    %98 = vector.shape_cast %97 : vector<8xf32> to vector<8x1xf32>
    %cst_33 = arith.constant 2.500000e-03 : f32
    %99 = vector.broadcast %cst_33 : f32 to vector<8x1xf32>
    %100 = arith.mulf %98, %99 : vector<8x1xf32>
    %101 = arith.mulf %96, %96 : vector<8x512xf32>
    %cst_34 = arith.constant dense<0.000000e+00> : vector<8xf32>
    %102 = vector.multi_reduction <add>, %101, %cst_34 [1] : vector<8x512xf32> to vector<8xf32>
    %103 = vector.shape_cast %102 : vector<8xf32> to vector<8x1xf32>
    %cst_35 = arith.constant 2.500000e-03 : f32
    %104 = vector.broadcast %cst_35 : f32 to vector<8x1xf32>
    %105 = arith.mulf %103, %104 : vector<8x1xf32>
    %106 = arith.mulf %100, %100 : vector<8x1xf32>
    %107 = arith.subf %105, %106 : vector<8x1xf32>
    %108 = vector.broadcast %100 : vector<8x1xf32> to vector<8x512xf32>
    %109 = arith.subf %96, %108 : vector<8x512xf32>
    %cst_36 = arith.constant 9.99999974E-6 : f32
    %110 = vector.broadcast %cst_36 : f32 to vector<8x1xf32>
    %111 = arith.addf %107, %110 : vector<8x1xf32>
    %112 = math.rsqrt %111 : vector<8x1xf32>
    %113 = vector.broadcast %112 : vector<8x1xf32> to vector<8x512xf32>
    %114 = arith.mulf %109, %113 : vector<8x512xf32>
    %c9 = arith.constant 9 : index
    %c0_37 = arith.constant 0 : index
    %115 = vector.load %arg6[%c9, %c0_37] : memref<27x896xf32, #tpu.memory_space<vmem>>, vector<1x512xf32>
    %c10 = arith.constant 10 : index
    %c0_38 = arith.constant 0 : index
    %116 = vector.load %arg6[%c10, %c0_38] : memref<27x896xf32, #tpu.memory_space<vmem>>, vector<1x512xf32>
    %117 = vector.broadcast %115 : vector<1x512xf32> to vector<8x512xf32>
    %118 = arith.mulf %114, %117 : vector<8x512xf32>
    %119 = vector.broadcast %116 : vector<1x512xf32> to vector<8x512xf32>
    %120 = arith.addf %118, %119 : vector<8x512xf32>
    %121 = arith.negf %120 : vector<8x512xf32>
    %122 = math.exp %121 : vector<8x512xf32>
    %cst_39 = arith.constant 1.000000e+00 : f32
    %123 = vector.broadcast %cst_39 : f32 to vector<8x512xf32>
    %124 = arith.addf %123, %122 : vector<8x512xf32>
    %125 = arith.divf %123, %124 : vector<8x512xf32>
    %126 = arith.mulf %120, %125 : vector<8x512xf32>
    %c0_40 = arith.constant 0 : index
    %c0_41 = arith.constant 0 : index
    %127 = vector.load %arg4[%c0_40, %c0_41] : memref<512x1152xbf16, #tpu.memory_space<vmem>>, vector<512x896xbf16>
    %c11 = arith.constant 11 : index
    %c0_42 = arith.constant 0 : index
    %128 = vector.load %arg6[%c11, %c0_42] : memref<27x896xf32, #tpu.memory_space<vmem>>, vector<1x896xf32>
    %129 = arith.truncf %126 : vector<8x512xf32> to vector<8x512xbf16>
    %cst_43 = arith.constant dense<0.000000e+00> : vector<8x896xf32>
    %130 = tpu.matmul %129, %127, %cst_43 {dimension_numbers = #tpu.dot_dimension_numbers<[1], [0], [0], [1], [0, 0, 1, 1], [], []>} : vector<8x512xbf16>, vector<512x896xbf16>, vector<8x896xf32> -> vector<8x896xf32>
    %131 = vector.broadcast %128 : vector<1x896xf32> to vector<8x896xf32>
    %132 = arith.addf %130, %131 : vector<8x896xf32>
    %cst_44 = arith.constant dense<0.000000e+00> : vector<8xf32>
    %133 = vector.multi_reduction <add>, %132, %cst_44 [1] : vector<8x896xf32> to vector<8xf32>
    %134 = vector.shape_cast %133 : vector<8xf32> to vector<8x1xf32>
    %cst_45 = arith.constant 1.250000e-03 : f32
    %135 = vector.broadcast %cst_45 : f32 to vector<8x1xf32>
    %136 = arith.mulf %134, %135 : vector<8x1xf32>
    %137 = arith.mulf %132, %132 : vector<8x896xf32>
    %cst_46 = arith.constant dense<0.000000e+00> : vector<8xf32>
    %138 = vector.multi_reduction <add>, %137, %cst_46 [1] : vector<8x896xf32> to vector<8xf32>
    %139 = vector.shape_cast %138 : vector<8xf32> to vector<8x1xf32>
    %cst_47 = arith.constant 1.250000e-03 : f32
    %140 = vector.broadcast %cst_47 : f32 to vector<8x1xf32>
    %141 = arith.mulf %139, %140 : vector<8x1xf32>
    %142 = arith.mulf %136, %136 : vector<8x1xf32>
    %143 = arith.subf %141, %142 : vector<8x1xf32>
    %144 = vector.broadcast %136 : vector<8x1xf32> to vector<8x896xf32>
    %145 = arith.subf %132, %144 : vector<8x896xf32>
    %cst_48 = arith.constant 9.99999974E-6 : f32
    %146 = vector.broadcast %cst_48 : f32 to vector<8x1xf32>
    %147 = arith.addf %143, %146 : vector<8x1xf32>
    %148 = math.rsqrt %147 : vector<8x1xf32>
    %149 = vector.broadcast %148 : vector<8x1xf32> to vector<8x896xf32>
    %150 = arith.mulf %145, %149 : vector<8x896xf32>
    %c12 = arith.constant 12 : index
    %c0_49 = arith.constant 0 : index
    %151 = vector.load %arg6[%c12, %c0_49] : memref<27x896xf32, #tpu.memory_space<vmem>>, vector<1x896xf32>
    %c13 = arith.constant 13 : index
    %c0_50 = arith.constant 0 : index
    %152 = vector.load %arg6[%c13, %c0_50] : memref<27x896xf32, #tpu.memory_space<vmem>>, vector<1x896xf32>
    %153 = vector.broadcast %151 : vector<1x896xf32> to vector<8x896xf32>
    %154 = arith.mulf %150, %153 : vector<8x896xf32>
    %155 = vector.broadcast %152 : vector<1x896xf32> to vector<8x896xf32>
    %156 = arith.addf %154, %155 : vector<8x896xf32>
    %157 = arith.negf %156 : vector<8x896xf32>
    %158 = math.exp %157 : vector<8x896xf32>
    %cst_51 = arith.constant 1.000000e+00 : f32
    %159 = vector.broadcast %cst_51 : f32 to vector<8x896xf32>
    %160 = arith.addf %159, %158 : vector<8x896xf32>
    %161 = arith.divf %159, %160 : vector<8x896xf32>
    %162 = arith.mulf %156, %161 : vector<8x896xf32>
    %c0_52 = arith.constant 0 : index
    %c0_53 = arith.constant 0 : index
    %163 = vector.load %arg5[%c0_52, %c0_53] : memref<896x1408xbf16, #tpu.memory_space<vmem>>, vector<896x896xbf16>
    %c14 = arith.constant 14 : index
    %c0_54 = arith.constant 0 : index
    %164 = vector.load %arg6[%c14, %c0_54] : memref<27x896xf32, #tpu.memory_space<vmem>>, vector<1x896xf32>
    %165 = arith.truncf %162 : vector<8x896xf32> to vector<8x896xbf16>
    %cst_55 = arith.constant dense<0.000000e+00> : vector<8x896xf32>
    %166 = tpu.matmul %165, %163, %cst_55 {dimension_numbers = #tpu.dot_dimension_numbers<[1], [0], [0], [1], [0, 0, 1, 1], [], []>} : vector<8x896xbf16>, vector<896x896xbf16>, vector<8x896xf32> -> vector<8x896xf32>
    %167 = vector.broadcast %164 : vector<1x896xf32> to vector<8x896xf32>
    %168 = arith.addf %166, %167 : vector<8x896xf32>
    %cst_56 = arith.constant dense<0.000000e+00> : vector<8xf32>
    %169 = vector.multi_reduction <add>, %168, %cst_56 [1] : vector<8x896xf32> to vector<8xf32>
    %170 = vector.shape_cast %169 : vector<8xf32> to vector<8x1xf32>
    %cst_57 = arith.constant 1.250000e-03 : f32
    %171 = vector.broadcast %cst_57 : f32 to vector<8x1xf32>
    %172 = arith.mulf %170, %171 : vector<8x1xf32>
    %173 = arith.mulf %168, %168 : vector<8x896xf32>
    %cst_58 = arith.constant dense<0.000000e+00> : vector<8xf32>
    %174 = vector.multi_reduction <add>, %173, %cst_58 [1] : vector<8x896xf32> to vector<8xf32>
    %175 = vector.shape_cast %174 : vector<8xf32> to vector<8x1xf32>
    %cst_59 = arith.constant 1.250000e-03 : f32
    %176 = vector.broadcast %cst_59 : f32 to vector<8x1xf32>
    %177 = arith.mulf %175, %176 : vector<8x1xf32>
    %178 = arith.mulf %172, %172 : vector<8x1xf32>
    %179 = arith.subf %177, %178 : vector<8x1xf32>
    %180 = vector.broadcast %172 : vector<8x1xf32> to vector<8x896xf32>
    %181 = arith.subf %168, %180 : vector<8x896xf32>
    %cst_60 = arith.constant 9.99999974E-6 : f32
    %182 = vector.broadcast %cst_60 : f32 to vector<8x1xf32>
    %183 = arith.addf %179, %182 : vector<8x1xf32>
    %184 = math.rsqrt %183 : vector<8x1xf32>
    %185 = vector.broadcast %184 : vector<8x1xf32> to vector<8x896xf32>
    %186 = arith.mulf %181, %185 : vector<8x896xf32>
    %c15 = arith.constant 15 : index
    %c0_61 = arith.constant 0 : index
    %187 = vector.load %arg6[%c15, %c0_61] : memref<27x896xf32, #tpu.memory_space<vmem>>, vector<1x896xf32>
    %c16 = arith.constant 16 : index
    %c0_62 = arith.constant 0 : index
    %188 = vector.load %arg6[%c16, %c0_62] : memref<27x896xf32, #tpu.memory_space<vmem>>, vector<1x896xf32>
    %189 = vector.broadcast %187 : vector<1x896xf32> to vector<8x896xf32>
    %190 = arith.mulf %186, %189 : vector<8x896xf32>
    %191 = vector.broadcast %188 : vector<1x896xf32> to vector<8x896xf32>
    %192 = arith.addf %190, %191 : vector<8x896xf32>
    %193 = arith.negf %192 : vector<8x896xf32>
    %194 = math.exp %193 : vector<8x896xf32>
    %cst_63 = arith.constant 1.000000e+00 : f32
    %195 = vector.broadcast %cst_63 : f32 to vector<8x896xf32>
    %196 = arith.addf %195, %194 : vector<8x896xf32>
    %197 = arith.divf %195, %196 : vector<8x896xf32>
    %198 = arith.mulf %192, %197 : vector<8x896xf32>
    %c0_64 = arith.constant 0 : index
    %c896 = arith.constant 896 : index
    %199 = vector.load %arg5[%c0_64, %c896] : memref<896x1408xbf16, #tpu.memory_space<vmem>>, vector<896x512xbf16>
    %c17 = arith.constant 17 : index
    %c0_65 = arith.constant 0 : index
    %200 = vector.load %arg6[%c17, %c0_65] : memref<27x896xf32, #tpu.memory_space<vmem>>, vector<1x512xf32>
    %201 = arith.truncf %198 : vector<8x896xf32> to vector<8x896xbf16>
    %cst_66 = arith.constant dense<0.000000e+00> : vector<8x512xf32>
    %202 = tpu.matmul %201, %199, %cst_66 {dimension_numbers = #tpu.dot_dimension_numbers<[1], [0], [0], [1], [0, 0, 1, 1], [], []>} : vector<8x896xbf16>, vector<896x512xbf16>, vector<8x512xf32> -> vector<8x512xf32>
    %203 = vector.broadcast %200 : vector<1x512xf32> to vector<8x512xf32>
    %204 = arith.addf %202, %203 : vector<8x512xf32>
    %cst_67 = arith.constant dense<0.000000e+00> : vector<8xf32>
    %205 = vector.multi_reduction <add>, %204, %cst_67 [1] : vector<8x512xf32> to vector<8xf32>
    %206 = vector.shape_cast %205 : vector<8xf32> to vector<8x1xf32>
    %cst_68 = arith.constant 2.500000e-03 : f32
    %207 = vector.broadcast %cst_68 : f32 to vector<8x1xf32>
    %208 = arith.mulf %206, %207 : vector<8x1xf32>
    %209 = arith.mulf %204, %204 : vector<8x512xf32>
    %cst_69 = arith.constant dense<0.000000e+00> : vector<8xf32>
    %210 = vector.multi_reduction <add>, %209, %cst_69 [1] : vector<8x512xf32> to vector<8xf32>
    %211 = vector.shape_cast %210 : vector<8xf32> to vector<8x1xf32>
    %cst_70 = arith.constant 2.500000e-03 : f32
    %212 = vector.broadcast %cst_70 : f32 to vector<8x1xf32>
    %213 = arith.mulf %211, %212 : vector<8x1xf32>
    %214 = arith.mulf %208, %208 : vector<8x1xf32>
    %215 = arith.subf %213, %214 : vector<8x1xf32>
    %216 = vector.broadcast %208 : vector<8x1xf32> to vector<8x512xf32>
    %217 = arith.subf %204, %216 : vector<8x512xf32>
    %cst_71 = arith.constant 9.99999974E-6 : f32
    %218 = vector.broadcast %cst_71 : f32 to vector<8x1xf32>
    %219 = arith.addf %215, %218 : vector<8x1xf32>
    %220 = math.rsqrt %219 : vector<8x1xf32>
    %221 = vector.broadcast %220 : vector<8x1xf32> to vector<8x512xf32>
    %222 = arith.mulf %217, %221 : vector<8x512xf32>
    %c18 = arith.constant 18 : index
    %c0_72 = arith.constant 0 : index
    %223 = vector.load %arg6[%c18, %c0_72] : memref<27x896xf32, #tpu.memory_space<vmem>>, vector<1x512xf32>
    %c19 = arith.constant 19 : index
    %c0_73 = arith.constant 0 : index
    %224 = vector.load %arg6[%c19, %c0_73] : memref<27x896xf32, #tpu.memory_space<vmem>>, vector<1x512xf32>
    %225 = vector.broadcast %223 : vector<1x512xf32> to vector<8x512xf32>
    %226 = arith.mulf %222, %225 : vector<8x512xf32>
    %227 = vector.broadcast %224 : vector<1x512xf32> to vector<8x512xf32>
    %228 = arith.addf %226, %227 : vector<8x512xf32>
    %229 = arith.negf %228 : vector<8x512xf32>
    %230 = math.exp %229 : vector<8x512xf32>
    %cst_74 = arith.constant 1.000000e+00 : f32
    %231 = vector.broadcast %cst_74 : f32 to vector<8x512xf32>
    %232 = arith.addf %231, %230 : vector<8x512xf32>
    %233 = arith.divf %231, %232 : vector<8x512xf32>
    %234 = arith.mulf %228, %233 : vector<8x512xf32>
    %c0_75 = arith.constant 0 : index
    %c896_76 = arith.constant 896 : index
    %235 = vector.load %arg4[%c0_75, %c896_76] : memref<512x1152xbf16, #tpu.memory_space<vmem>>, vector<512x256xbf16>
    %c20 = arith.constant 20 : index
    %c0_77 = arith.constant 0 : index
    %236 = vector.load %arg6[%c20, %c0_77] : memref<27x896xf32, #tpu.memory_space<vmem>>, vector<1x256xf32>
    %237 = arith.truncf %234 : vector<8x512xf32> to vector<8x512xbf16>
    %cst_78 = arith.constant dense<0.000000e+00> : vector<8x256xf32>
    %238 = tpu.matmul %237, %235, %cst_78 {dimension_numbers = #tpu.dot_dimension_numbers<[1], [0], [0], [1], [0, 0, 1, 1], [], []>} : vector<8x512xbf16>, vector<512x256xbf16>, vector<8x256xf32> -> vector<8x256xf32>
    %239 = vector.broadcast %236 : vector<1x256xf32> to vector<8x256xf32>
    %240 = arith.addf %238, %239 : vector<8x256xf32>
    %cst_79 = arith.constant dense<0.000000e+00> : vector<8xf32>
    %241 = vector.multi_reduction <add>, %240, %cst_79 [1] : vector<8x256xf32> to vector<8xf32>
    %242 = vector.shape_cast %241 : vector<8xf32> to vector<8x1xf32>
    %cst_80 = arith.constant 5.000000e-03 : f32
    %243 = vector.broadcast %cst_80 : f32 to vector<8x1xf32>
    %244 = arith.mulf %242, %243 : vector<8x1xf32>
    %245 = arith.mulf %240, %240 : vector<8x256xf32>
    %cst_81 = arith.constant dense<0.000000e+00> : vector<8xf32>
    %246 = vector.multi_reduction <add>, %245, %cst_81 [1] : vector<8x256xf32> to vector<8xf32>
    %247 = vector.shape_cast %246 : vector<8xf32> to vector<8x1xf32>
    %cst_82 = arith.constant 5.000000e-03 : f32
    %248 = vector.broadcast %cst_82 : f32 to vector<8x1xf32>
    %249 = arith.mulf %247, %248 : vector<8x1xf32>
    %250 = arith.mulf %244, %244 : vector<8x1xf32>
    %251 = arith.subf %249, %250 : vector<8x1xf32>
    %252 = vector.broadcast %244 : vector<8x1xf32> to vector<8x256xf32>
    %253 = arith.subf %240, %252 : vector<8x256xf32>
    %cst_83 = arith.constant 9.99999974E-6 : f32
    %254 = vector.broadcast %cst_83 : f32 to vector<8x1xf32>
    %255 = arith.addf %251, %254 : vector<8x1xf32>
    %256 = math.rsqrt %255 : vector<8x1xf32>
    %257 = vector.broadcast %256 : vector<8x1xf32> to vector<8x256xf32>
    %258 = arith.mulf %253, %257 : vector<8x256xf32>
    %c21 = arith.constant 21 : index
    %c0_84 = arith.constant 0 : index
    %259 = vector.load %arg6[%c21, %c0_84] : memref<27x896xf32, #tpu.memory_space<vmem>>, vector<1x256xf32>
    %c22 = arith.constant 22 : index
    %c0_85 = arith.constant 0 : index
    %260 = vector.load %arg6[%c22, %c0_85] : memref<27x896xf32, #tpu.memory_space<vmem>>, vector<1x256xf32>
    %261 = vector.broadcast %259 : vector<1x256xf32> to vector<8x256xf32>
    %262 = arith.mulf %258, %261 : vector<8x256xf32>
    %263 = vector.broadcast %260 : vector<1x256xf32> to vector<8x256xf32>
    %264 = arith.addf %262, %263 : vector<8x256xf32>
    %265 = arith.negf %264 : vector<8x256xf32>
    %266 = math.exp %265 : vector<8x256xf32>
    %cst_86 = arith.constant 1.000000e+00 : f32
    %267 = vector.broadcast %cst_86 : f32 to vector<8x256xf32>
    %268 = arith.addf %267, %266 : vector<8x256xf32>
    %269 = arith.divf %267, %268 : vector<8x256xf32>
    %270 = arith.mulf %264, %269 : vector<8x256xf32>
    %c0_87 = arith.constant 0 : index
    %c512 = arith.constant 512 : index
    %271 = vector.load %arg3[%c0_87, %c512] : memref<256x640xbf16, #tpu.memory_space<vmem>>, vector<256x128xbf16>
    %c23 = arith.constant 23 : index
    %c0_88 = arith.constant 0 : index
    %272 = vector.load %arg6[%c23, %c0_88] : memref<27x896xf32, #tpu.memory_space<vmem>>, vector<1x128xf32>
    %273 = arith.truncf %270 : vector<8x256xf32> to vector<8x256xbf16>
    %cst_89 = arith.constant dense<0.000000e+00> : vector<8x128xf32>
    %274 = tpu.matmul %273, %271, %cst_89 {dimension_numbers = #tpu.dot_dimension_numbers<[1], [0], [0], [1], [0, 0, 1, 1], [], []>} : vector<8x256xbf16>, vector<256x128xbf16>, vector<8x128xf32> -> vector<8x128xf32>
    %275 = vector.broadcast %272 : vector<1x128xf32> to vector<8x128xf32>
    %276 = arith.addf %274, %275 : vector<8x128xf32>
    %cst_90 = arith.constant dense<0.000000e+00> : vector<8xf32>
    %277 = vector.multi_reduction <add>, %276, %cst_90 [1] : vector<8x128xf32> to vector<8xf32>
    %278 = vector.shape_cast %277 : vector<8xf32> to vector<8x1xf32>
    %cst_91 = arith.constant 0.00999999977 : f32
    %279 = vector.broadcast %cst_91 : f32 to vector<8x1xf32>
    %280 = arith.mulf %278, %279 : vector<8x1xf32>
    %281 = arith.mulf %276, %276 : vector<8x128xf32>
    %cst_92 = arith.constant dense<0.000000e+00> : vector<8xf32>
    %282 = vector.multi_reduction <add>, %281, %cst_92 [1] : vector<8x128xf32> to vector<8xf32>
    %283 = vector.shape_cast %282 : vector<8xf32> to vector<8x1xf32>
    %cst_93 = arith.constant 0.00999999977 : f32
    %284 = vector.broadcast %cst_93 : f32 to vector<8x1xf32>
    %285 = arith.mulf %283, %284 : vector<8x1xf32>
    %286 = arith.mulf %280, %280 : vector<8x1xf32>
    %287 = arith.subf %285, %286 : vector<8x1xf32>
    %288 = vector.broadcast %280 : vector<8x1xf32> to vector<8x128xf32>
    %289 = arith.subf %276, %288 : vector<8x128xf32>
    %cst_94 = arith.constant 9.99999974E-6 : f32
    %290 = vector.broadcast %cst_94 : f32 to vector<8x1xf32>
    %291 = arith.addf %287, %290 : vector<8x1xf32>
    %292 = math.rsqrt %291 : vector<8x1xf32>
    %293 = vector.broadcast %292 : vector<8x1xf32> to vector<8x128xf32>
    %294 = arith.mulf %289, %293 : vector<8x128xf32>
    %c24 = arith.constant 24 : index
    %c0_95 = arith.constant 0 : index
    %295 = vector.load %arg6[%c24, %c0_95] : memref<27x896xf32, #tpu.memory_space<vmem>>, vector<1x128xf32>
    %c25 = arith.constant 25 : index
    %c0_96 = arith.constant 0 : index
    %296 = vector.load %arg6[%c25, %c0_96] : memref<27x896xf32, #tpu.memory_space<vmem>>, vector<1x128xf32>
    %297 = vector.broadcast %295 : vector<1x128xf32> to vector<8x128xf32>
    %298 = arith.mulf %294, %297 : vector<8x128xf32>
    %299 = vector.broadcast %296 : vector<1x128xf32> to vector<8x128xf32>
    %300 = arith.addf %298, %299 : vector<8x128xf32>
    %301 = arith.negf %300 : vector<8x128xf32>
    %302 = math.exp %301 : vector<8x128xf32>
    %cst_97 = arith.constant 1.000000e+00 : f32
    %303 = vector.broadcast %cst_97 : f32 to vector<8x128xf32>
    %304 = arith.addf %303, %302 : vector<8x128xf32>
    %305 = arith.divf %303, %304 : vector<8x128xf32>
    %306 = arith.mulf %300, %305 : vector<8x128xf32>
    %c0_98 = arith.constant 0 : index
    %c384 = arith.constant 384 : index
    %307 = vector.load %arg2[%c0_98, %c384] : memref<128x512xbf16, #tpu.memory_space<vmem>>, vector<128x128xbf16>
    %c26 = arith.constant 26 : index
    %c0_99 = arith.constant 0 : index
    %308 = vector.load %arg6[%c26, %c0_99] : memref<27x896xf32, #tpu.memory_space<vmem>>, vector<1x128xf32>
    %309 = arith.truncf %306 : vector<8x128xf32> to vector<8x128xbf16>
    %cst_100 = arith.constant dense<0.000000e+00> : vector<8x128xf32>
    %310 = tpu.matmul %309, %307, %cst_100 {dimension_numbers = #tpu.dot_dimension_numbers<[1], [0], [0], [1], [0, 0, 1, 1], [], []>} : vector<8x128xbf16>, vector<128x128xbf16>, vector<8x128xf32> -> vector<8x128xf32>
    %311 = vector.broadcast %308 : vector<1x128xf32> to vector<8x128xf32>
    %312 = arith.addf %310, %311 : vector<8x128xf32>
    %c0_101 = arith.constant 0 : index
    %c0_102 = arith.constant 0 : index
    %313 = vector.load %arg7[%c0_101, %c0_102] : memref<8x128xf32, #tpu.memory_space<vmem>>, vector<8x128xf32>
    tpu.vector_store %arg7[%c0_101, %c0_102], %312 {strides = array<i32>} : memref<8x128xf32, #tpu.memory_space<vmem>>, vector<8x128xf32>,
    return
  }
  func.func @transform_0(%arg0: i32) -> (i32, i32) {
    %c0_i32 = arith.constant 0 : i32
    %c0_i32_0 = arith.constant 0 : i32
    return %arg0, %c0_i32 : i32, i32
  }
  func.func @transform_1(%arg0: i32) -> (i32, i32) {
    %c0_i32 = arith.constant 0 : i32
    %c0_i32_0 = arith.constant 0 : i32
    %c0_i32_1 = arith.constant 0 : i32
    return %c0_i32, %c0_i32_0 : i32, i32
  }
  func.func @transform_2(%arg0: i32) -> (i32, i32) {
    %c0_i32 = arith.constant 0 : i32
    %c0_i32_0 = arith.constant 0 : i32
    %c0_i32_1 = arith.constant 0 : i32
    return %c0_i32, %c0_i32_0 : i32, i32
  }
  func.func @transform_3(%arg0: i32) -> (i32, i32) {
    %c0_i32 = arith.constant 0 : i32
    %c0_i32_0 = arith.constant 0 : i32
    %c0_i32_1 = arith.constant 0 : i32
    return %c0_i32, %c0_i32_0 : i32, i32
  }
  func.func @transform_4(%arg0: i32) -> (i32, i32) {
    %c0_i32 = arith.constant 0 : i32
    %c0_i32_0 = arith.constant 0 : i32
    %c0_i32_1 = arith.constant 0 : i32
    return %c0_i32, %c0_i32_0 : i32, i32
  }
  func.func @transform_5(%arg0: i32) -> (i32, i32) {
    %c0_i32 = arith.constant 0 : i32
    %c0_i32_0 = arith.constant 0 : i32
    %c0_i32_1 = arith.constant 0 : i32
    return %c0_i32, %c0_i32_0 : i32, i32
  }
  func.func @transform_6(%arg0: i32) -> (i32, i32) {
    %c0_i32 = arith.constant 0 : i32
    %c0_i32_0 = arith.constant 0 : i32
    return %arg0, %c0_i32 : i32, i32
  }
}

</mosaic_0001>

<llo_original>
// kernel: mlp_forward.1
$region0: #{mlp_forward.1}
  #allocation0 [shape = 'u32[]', space=smem, size = 0x4, offset = 0x4, fixed_abs, tag = 'smem constant byte address 0x4 - core index']
  #allocation1 [shape = 'u32[72,128]{1,0:T(1,128)}', space=vmem, size = 0x9000, scoped, tag = 'internal scratch']
  %s0 = inlined_call_operand.vmem [shape: f32[8,128], index: 0, kind: input, shape index: {}]
  %s1 = inlined_call_operand.hbm [shape: bf16[128,512], index: 1, kind: input, shape index: {}]
  %s2 = inlined_call_operand.hbm [shape: bf16[256,640], index: 2, kind: input, shape index: {}]
  %s3 = inlined_call_operand.hbm [shape: bf16[512,1152], index: 3, kind: input, shape index: {}]
  %s4 = inlined_call_operand.hbm [shape: bf16[896,1408], index: 4, kind: input, shape index: {}]
  %s5 = inlined_call_operand.hbm [shape: f32[27,896], index: 5, kind: input, shape index: {}]
  %s6 = inlined_call_operand.hbm [shape: f32[8,128], index: 6, kind: output, shape index: {}]
  %s7 = sld [smem:[#allocation0]]
  $region54: #{mlp_forward.1} parent=0
    _
  %s9 = ssub.s32 1, %s7
  %s10 = scalar_select 0, %s9, %s7
  $region1: #{mlp_forward.1} parent=0
    #allocation2 [shape = 'u8[131072]{0}', space=vmem, size = 0x20000, scoped, tag = 'input window, operand 1, single buffered']
    #allocation3 [shape = 's32[1]{0}', space=sflag, size = 0x4, scoped, tag = 'scoped memory for mlp_forward.1']
    #allocation4 [shape = 's32[1]{0}', space=sflag, size = 0x4, scoped, tag = 'scoped memory for mlp_forward.1']
    #allocation5 [shape = 'u8[327680]{0}', space=vmem, size = 0x50000, scoped, tag = 'input window, operand 2, single buffered']
    #allocation6 [shape = 's32[1]{0}', space=sflag, size = 0x4, scoped, tag = 'scoped memory for mlp_forward.1']
    #allocation7 [shape = 'u8[1179648]{0}', space=vmem, size = 0x120000, scoped, tag = 'input window, operand 3, single buffered']
    #allocation8 [shape = 'u8[2523136]{0}', space=vmem, size = 0x268000, scoped, tag = 'input window, operand 4, single buffered']
    #allocation9 [shape = 's32[1]{0}', space=sflag, size = 0x4, scoped, tag = 'scoped memory for mlp_forward.1']
    #allocation10 [shape = 'u8[114688]{0}', space=vmem, size = 0x1c000, scoped, tag = 'input window, operand 5, single buffered']
    #allocation11 [shape = 'u8[4096]{0}', space=vmem, size = 0x1000, scoped, tag = 'output window, operand 0, single buffered']
    %11 = vsyncpa [#allocation3], 0
    %12 = vsyncpa [#allocation6], 0
    %13 = vsyncpa [#allocation9], 0
    %14 = vsyncpa [#allocation4], 0
    // Predicated region
    $region2: #{mlp_forward.1} parent=1 // pred_check
      _
    $region3: #{mlp_forward.1} parent=1 // pred_check_branch
      %16 = sbr.rel (0) target = $region5
    $region4: #{mlp_forward.1} parent=1 // pred_region
      _
    $region5: #{mlp_forward.1} parent=1 // pred_fallthru
      _
    // Predicated region
    $region6: #{mlp_forward.1} parent=1 // pred_check
      _
    $region7: #{mlp_forward.1} parent=1 // pred_check_branch
      %18 = sbr.rel (0) target = $region9
    $region8: #{mlp_forward.1} parent=1 // pred_region
      %20 = vsyncadd [#allocation3], 0
      %s21 = sshll.u32 %s1, 4
      %s22 = int_to_ptr.hbm [resolvable:$true] %s21
      %s23 = sshll.u32 [#allocation2], 4
      %s24 = int_to_ptr.vmem [resolvable:$true] %s23
      %29 = dma.hbm_to_vmem [thread:$0]  %s22, 4096, %s24, [#allocation3], 256, 256, 16
    $region9: #{mlp_forward.1} parent=1 // pred_fallthru
      _
    // Predicated region
    $region10: #{mlp_forward.1} parent=1 // pred_check
      _
    $region11: #{mlp_forward.1} parent=1 // pred_check_branch
      %31 = sbr.rel (0) target = $region13
    $region12: #{mlp_forward.1} parent=1 // pred_region
      %33 = vsyncadd [#allocation6], 0
      %s34 = sshll.u32 %s2, 4
      %s35 = int_to_ptr.hbm [resolvable:$true] %s34
      %s36 = sshll.u32 [#allocation5], 4
      %s37 = int_to_ptr.vmem [resolvable:$true] %s36
      %42 = dma.hbm_to_vmem [thread:$0]  %s35, 10240, %s37, [#allocation6], 320, 320, 20
    $region13: #{mlp_forward.1} parent=1 // pred_fallthru
      _
    // Predicated region
    $region14: #{mlp_forward.1} parent=1 // pred_check
      _
    $region15: #{mlp_forward.1} parent=1 // pred_check_branch
      %44 = sbr.rel (0) target = $region17
    $region16: #{mlp_forward.1} parent=1 // pred_region
      %46 = vsyncadd [#allocation6], 0
      %s47 = sshll.u32 %s3, 4
      %s48 = int_to_ptr.hbm [resolvable:$true] %s47
      %s49 = sshll.u32 [#allocation7], 4
      %s50 = int_to_ptr.vmem [resolvable:$true] %s49
      %55 = dma.hbm_to_vmem [thread:$0]  %s48, 36864, %s50, [#allocation6], 576, 576, 36
    $region17: #{mlp_forward.1} parent=1 // pred_fallthru
      _
    // Predicated region
    $region18: #{mlp_forward.1} parent=1 // pred_check
      _
    $region19: #{mlp_forward.1} parent=1 // pred_check_branch
      %57 = sbr.rel (0) target = $region21
    $region20: #{mlp_forward.1} parent=1 // pred_region
      %59 = vsyncadd [#allocation9], 0
      %s60 = sshll.u32 %s4, 4
      %s61 = int_to_ptr.hbm [resolvable:$true] %s60
      %s62 = sshll.u32 [#allocation8], 4
      %s63 = int_to_ptr.vmem [resolvable:$true] %s62
      %68 = dma.hbm_to_vmem [thread:$0]  %s61, 78848, %s63, [#allocation9], 704, 704, 44
    $region21: #{mlp_forward.1} parent=1 // pred_fallthru
      _
    // Predicated region
    $region22: #{mlp_forward.1} parent=1 // pred_check
      _
    $region23: #{mlp_forward.1} parent=1 // pred_check_branch
      %70 = sbr.rel (0) target = $region25
    $region24: #{mlp_forward.1} parent=1 // pred_region
      %72 = vsyncadd [#allocation9], 0
      %s73 = sshll.u32 %s5, 4
      %s74 = int_to_ptr.hbm [resolvable:$true] %s73
      %s75 = sshll.u32 [#allocation10], 4
      %s76 = int_to_ptr.vmem [resolvable:$true] %s75
      %81 = dma.hbm_to_vmem [thread:$0]  %s74, 3584, %s76, [#allocation9], 896, 896, 56
    $region25: #{mlp_forward.1} parent=1 // pred_fallthru
      _
    // Predicated region
    $region26: #{mlp_forward.1} parent=1 // pred_check
      _
    $region27: #{mlp_forward.1} parent=1 // pred_check_branch
      %83 = sbr.rel (0) target = $region29
    $region28: #{mlp_forward.1} parent=1 // pred_region
      %85 = dma.done [#allocation3], 4096
    $region29: #{mlp_forward.1} parent=1 // pred_fallthru
      _
    // Predicated region
    $region30: #{mlp_forward.1} parent=1 // pred_check
      _
    $region31: #{mlp_forward.1} parent=1 // pred_check_branch
      %87 = sbr.rel (0) target = $region33
    $region32: #{mlp_forward.1} parent=1 // pred_region
      %89 = dma.done [#allocation6], 10240
    $region33: #{mlp_forward.1} parent=1 // pred_fallthru
      _
    // Predicated region
    $region34: #{mlp_forward.1} parent=1 // pred_check
      _
    $region35: #{mlp_forward.1} parent=1 // pred_check_branch
      %91 = sbr.rel (0) target = $region37
    $region36: #{mlp_forward.1} parent=1 // pred_region
      %93 = dma.done [#allocation6], 36864
    $region37: #{mlp_forward.1} parent=1 // pred_fallthru
      _
    // Predicated region
    $region38: #{mlp_forward.1} parent=1 // pred_check
      _
    $region39: #{mlp_forward.1} parent=1 // pred_check_branch
      %95 = sbr.rel (0) target = $region41
    $region40: #{mlp_forward.1} parent=1 // pred_region
      %97 = dma.done [#allocation9], 78848
    $region41: #{mlp_forward.1} parent=1 // pred_fallthru
      _
    // Predicated region
    $region42: #{mlp_forward.1} parent=1 // pred_check
      _
    $region43: #{mlp_forward.1} parent=1 // pred_check_branch
      %99 = sbr.rel (0) target = $region45
    $region44: #{mlp_forward.1} parent=1 // pred_region
      %101 = dma.done [#allocation9], 3584
    $region45: #{mlp_forward.1} parent=1 // pred_fallthru
      _
    %v102 = vld [vmem:[%s0] sm:$0xff]
    %103 = vadd.xlane.f32.xlu0 %v102
    %v104 = vpop.xlane.xlu0 %103
    %v105 = vmul.f32 %v104, 0.025
    %v106 = vmul.f32 %v102, %v102
    %107 = vadd.xlane.f32.xlu0 %v106
    %v108 = vpop.xlane.xlu0 %107
    %v109 = vmul.f32 %v108, 0.025
    %v110 = vmul.f32 %v105, %v105
    %v111 = vsub.f32 %v109, %v110
    %v112 = vsub.f32 %v102, %v105
    %v113 = vadd.f32 %v111, 1e-05
    %v114 = vrsqrt.pop %v113
    %v115 = vmul.f32 %v114, %v113
    %v116 = vmul.f32 %v115, %v114
    %v117 = vmul.f32 0.5, %v116
    %v118 = vsub.f32 1.5, %v117
    %v119 = vmul.f32 %v114, %v118
    %vm120 = vweird.f32 %v113
    %vm121 = vweird.f32 %v114
    %vm122 = vmor %vm120, %vm121
    %v123 = vsel %vm122, %v114, %v119
    %v124 = vmul.f32 %v112, %v123
    %v125 = vld [vmem:[#allocation2] sm:$0xf]
    %v126 = vld [vmem:[#allocation2 + $0x10] sm:$0xf]
    %v127 = vld [vmem:[#allocation2 + $0x20] sm:$0xf]
    %v128 = vld [vmem:[#allocation2 + $0x30] sm:$0xf]
    %v129 = vld [vmem:[#allocation2 + $0x40] sm:$0xf]
    %v130 = vld [vmem:[#allocation2 + $0x50] sm:$0xf]
    %v131 = vld [vmem:[#allocation2 + $0x60] sm:$0xf]
    %v132 = vld [vmem:[#allocation2 + $0x70] sm:$0xf]
    %v133 = vld [vmem:[#allocation2 + $0x80] sm:$0xf]
    %v134 = vld [vmem:[#allocation2 + $0x90] sm:$0xf]
    %v135 = vld [vmem:[#allocation2 + $0xa0] sm:$0xf]
    %v136 = vld [vmem:[#allocation2 + $0xb0] sm:$0xf]
    %v137 = vld [vmem:[#allocation2 + $0xc0] sm:$0xf]
    %v138 = vld [vmem:[#allocation2 + $0xd0] sm:$0xf]
    %v139 = vld [vmem:[#allocation2 + $0xe0] sm:$0xf]
    %v140 = vld [vmem:[#allocation2 + $0xf0] sm:$0xf]
    %v141 = vld [vmem:[#allocation10 + $0x2] ss:$0 sm:$0xff]
    %v142 = vpack.c.bf16 %v124, %v124
    %v159 = vunpack.c.l.b16 %v125
    %v160 = vunpack.c.l.b16 %v126
    %v161 = vunpack.c.l.b16 %v127
    %v162 = vunpack.c.l.b16 %v128
    %v163 = vunpack.c.l.b16 %v129
    %v164 = vunpack.c.l.b16 %v130
    %v165 = vunpack.c.l.b16 %v131
    %v166 = vunpack.c.l.b16 %v132
    %v167 = vunpack.c.l.b16 %v133
    %v168 = vunpack.c.l.b16 %v134
    %v169 = vunpack.c.l.b16 %v135
    %v170 = vunpack.c.l.b16 %v136
    %v171 = vunpack.c.l.b16 %v137
    %v172 = vunpack.c.l.b16 %v138
    %v173 = vunpack.c.l.b16 %v139
    %v174 = vunpack.c.l.b16 %v140
    %v175 = vpack.c.b16 %v160, %v159
    %v176 = vpack.c.b16 %v162, %v161
    %v177 = vpack.c.b16 %v164, %v163
    %v178 = vpack.c.b16 %v166, %v165
    %v179 = vpack.c.b16 %v168, %v167
    %v180 = vpack.c.b16 %v170, %v169
    %v181 = vpack.c.b16 %v172, %v171
    %v182 = vpack.c.b16 %v174, %v173
    %191 = vmatpush.bf16.msra.mxu0 %v182
    %192 = vmatpush.bf16.msra.mxu0 %v181
    %193 = vmatpush.bf16.msra.mxu0 %v180
    %194 = vmatpush.bf16.msra.mxu0 %v179
    %195 = vmatpush.bf16.msra.mxu0 %v178
    %196 = vmatpush.bf16.msra.mxu0 %v177
    %197 = vmatpush.bf16.msra.mxu0 %v176
    %198 = vmatpush.bf16.msra.mxu0 %v175
    %199 = vmatmul.bf16.gmra.mxu0 %v142
    %v200 = vpop.f32.mrf.mxu0
    %v201 = vadd.f32 %v141, %v200
    %v202 = vpop.f32.mrf.mxu0
    %203 = vdwg.mxu0
    %204 = vadd.xlane.f32.xlu0 %v201
    %v205 = vpop.xlane.xlu0 %204
    %v206 = vmul.f32 %v205, 0.01
    %v207 = vmul.f32 %v201, %v201
    %208 = vadd.xlane.f32.xlu0 %v207
    %v209 = vpop.xlane.xlu0 %208
    %v210 = vmul.f32 %v209, 0.01
    %v211 = vmul.f32 %v206, %v206
    %v212 = vsub.f32 %v210, %v211
    %v213 = vsub.f32 %v201, %v206
    %v214 = vadd.f32 %v212, 1e-05
    %v215 = vrsqrt.pop %v214
    %v216 = vmul.f32 %v215, %v214
    %v217 = vmul.f32 %v216, %v215
    %v218 = vmul.f32 0.5, %v217
    %v219 = vsub.f32 1.5, %v218
    %v220 = vmul.f32 %v215, %v219
    %vm221 = vweird.f32 %v214
    %vm222 = vweird.f32 %v215
    %vm223 = vmor %vm221, %vm222
    %v224 = vsel %vm223, %v215, %v220
    %v225 = vmul.f32 %v213, %v224
    %v226 = vld [vmem:[#allocation10 + $0x3] ss:$0 sm:$0xff]
    %v227 = vld [vmem:[#allocation10 + $0x4] ss:$0 sm:$0xff]
    %v228 = vmul.f32 %v225, %v226
    %v229 = vadd.f32 %v228, %v227
    %v230 = vxor.u32 %v229, 2147483648
    %v231 = vmul.f32 %v230, 1.442695
    %v232 = vpow.pop %v231
    %v233 = vadd.f32 %v232, 1.0
    %v234 = vrcp.pop %v233
    %v235 = vmul.f32 %v233, %v234
    %v236 = vsub.f32 1.0, %v235
    %v237 = vmul.f32 %v234, %v236
    %v238 = vadd.f32 %v234, %v237
    %vm239 = vweird.f32 %v233
    %vm240 = vweird.f32 %v234
    %vm241 = vmor %vm239, %vm240
    %v242 = vsel %vm241, %v234, %v238
    %v243 = vand.u32 2147483647, %v233
    %vm244 = vcmp.eq.f32.partialorder %v243, 8.507059e+37
    %v245 = vand.u32 %v233, 2147483648
    %v246 = vor.u32 1.1754944e-38, %v245
    %v247 = vsel %vm244, %v246, %v242
    %v248 = vmul.f32 1.0, %v247
    %v249 = vmul.f32 %v229, %v248
    %v250 = vld [vmem:[#allocation2 + $0x4] sm:$0xff]
    %v251 = vld [vmem:[#allocation2 + $0x14] sm:$0xff]
    %v252 = vld [vmem:[#allocation2 + $0x24] sm:$0xff]
    %v253 = vld [vmem:[#allocation2 + $0x34] sm:$0xff]
    %v254 = vld [vmem:[#allocation2 + $0x44] sm:$0xff]
    %v255 = vld [vmem:[#allocation2 + $0x54] sm:$0xff]
    %v256 = vld [vmem:[#allocation2 + $0x64] sm:$0xff]
    %v257 = vld [vmem:[#allocation2 + $0x74] sm:$0xff]
    %v258 = vld [vmem:[#allocation2 + $0x84] sm:$0xff]
    %v259 = vld [vmem:[#allocation2 + $0x94] sm:$0xff]
    %v260 = vld [vmem:[#allocation2 + $0xa4] sm:$0xff]
    %v261 = vld [vmem:[#allocation2 + $0xb4] sm:$0xff]
    %v262 = vld [vmem:[#allocation2 + $0xc4] sm:$0xff]
    %v263 = vld [vmem:[#allocation2 + $0xd4] sm:$0xff]
    %v264 = vld [vmem:[#allocation2 + $0xe4] sm:$0xff]
    %v265 = vld [vmem:[#allocation2 + $0xf4] sm:$0xff]
    %s266 = scalar_lea.vmem [#allocation10], 5
    %v267 = vld [vmem:[%s266] ss:$8 sm:$0x3]
    %v268 = vpack.c.bf16 %v249, %v249
    %v270 = vperm.slane %v267, 0
    %v271 = vperm.slane %v267, 1
    %v290 = vunpack.c.l.b16 %v250
    %v291 = vunpack.c.h.b16 %v250
    %v292 = vunpack.c.l.b16 %v251
    %v293 = vunpack.c.h.b16 %v251
    %v294 = vunpack.c.l.b16 %v252
    %v295 = vunpack.c.h.b16 %v252
    %v296 = vunpack.c.l.b16 %v253
    %v297 = vunpack.c.h.b16 %v253
    %v298 = vunpack.c.l.b16 %v254
    %v299 = vunpack.c.h.b16 %v254
    %v300 = vunpack.c.l.b16 %v255
    %v301 = vunpack.c.h.b16 %v255
    %v302 = vunpack.c.l.b16 %v256
    %v303 = vunpack.c.h.b16 %v256
    %v304 = vunpack.c.l.b16 %v257
    %v305 = vunpack.c.h.b16 %v257
    %v306 = vunpack.c.l.b16 %v258
    %v307 = vunpack.c.h.b16 %v258
    %v308 = vunpack.c.l.b16 %v259
    %v309 = vunpack.c.h.b16 %v259
    %v310 = vunpack.c.l.b16 %v260
    %v311 = vunpack.c.h.b16 %v260
    %v312 = vunpack.c.l.b16 %v261
    %v313 = vunpack.c.h.b16 %v261
    %v314 = vunpack.c.l.b16 %v262
    %v315 = vunpack.c.h.b16 %v262
    %v316 = vunpack.c.l.b16 %v263
    %v317 = vunpack.c.h.b16 %v263
    %v318 = vunpack.c.l.b16 %v264
    %v319 = vunpack.c.h.b16 %v264
    %v320 = vunpack.c.l.b16 %v265
    %v321 = vunpack.c.h.b16 %v265
    %v322 = vpack.c.b16 %v292, %v290
    %v323 = vpack.c.b16 %v293, %v291
    %v324 = vpack.c.b16 %v296, %v294
    %v325 = vpack.c.b16 %v297, %v295
    %v326 = vpack.c.b16 %v300, %v298
    %v327 = vpack.c.b16 %v301, %v299
    %v328 = vpack.c.b16 %v304, %v302
    %v329 = vpack.c.b16 %v305, %v303
    %v330 = vpack.c.b16 %v308, %v306
    %v331 = vpack.c.b16 %v309, %v307
    %v332 = vpack.c.b16 %v312, %v310
    %v333 = vpack.c.b16 %v313, %v311
    %v334 = vpack.c.b16 %v316, %v314
    %v335 = vpack.c.b16 %v317, %v315
    %v336 = vpack.c.b16 %v320, %v318
    %v337 = vpack.c.b16 %v321, %v319
    %354 = vmatpush.bf16.msra.mxu0 %v336
    %355 = vmatpush.bf16.msra.mxu0 %v334
    %356 = vmatpush.bf16.msra.mxu0 %v332
    %357 = vmatpush.bf16.msra.mxu0 %v330
    %358 = vmatpush.bf16.msra.mxu0 %v328
    %359 = vmatpush.bf16.msra.mxu0 %v326
    %360 = vmatpush.bf16.msra.mxu0 %v324
    %361 = vmatpush.bf16.msra.mxu0 %v322
    %362 = vmatmul.bf16.gmra.mxu0 %v268
    %v363 = vpop.f32.mrf.mxu0
    %v364 = vadd.f32 %v270, %v363
    %v365 = vpop.f32.mrf.mxu0
    %366 = vdwg.mxu0
    %367 = vmatpush.bf16.msra.mxu0 %v337
    %368 = vmatpush.bf16.msra.mxu0 %v335
    %369 = vmatpush.bf16.msra.mxu0 %v333
    %370 = vmatpush.bf16.msra.mxu0 %v331
    %371 = vmatpush.bf16.msra.mxu0 %v329
    %372 = vmatpush.bf16.msra.mxu0 %v327
    %373 = vmatpush.bf16.msra.mxu0 %v325
    %374 = vmatpush.bf16.msra.mxu0 %v323
    %375 = vmatmul.bf16.gmra.mxu0 %v268
    %v376 = vpop.f32.mrf.mxu0
    %v377 = vadd.f32 %v271, %v376
    %v378 = vpop.f32.mrf.mxu0
    %379 = vdwg.mxu0
    %v380 = vadd.f32 %v364, %v377
    %381 = vadd.xlane.f32.xlu0 %v380
    %v382 = vpop.xlane.xlu0 %381
    %v383 = vmul.f32 %v382, 0.005
    %v384 = vmul.f32 %v364, %v364
    %v385 = vmul.f32 %v377, %v377
    %v386 = vadd.f32 %v384, %v385
    %387 = vadd.xlane.f32.xlu0 %v386
    %v388 = vpop.xlane.xlu0 %387
    %v389 = vmul.f32 %v388, 0.005
    %v390 = vmul.f32 %v383, %v383
    %v391 = vsub.f32 %v389, %v390
    %v392 = vsub.f32 %v364, %v383
    %v393 = vsub.f32 %v377, %v383
    %v394 = vadd.f32 %v391, 1e-05
    %v395 = vrsqrt.pop %v394
    %v396 = vmul.f32 %v395, %v394
    %v397 = vmul.f32 %v396, %v395
    %v398 = vmul.f32 0.5, %v397
    %v399 = vsub.f32 1.5, %v398
    %v400 = vmul.f32 %v395, %v399
    %vm401 = vweird.f32 %v394
    %vm402 = vweird.f32 %v395
    %vm403 = vmor %vm401, %vm402
    %v404 = vsel %vm403, %v395, %v400
    %v405 = vmul.f32 %v392, %v404
    %v406 = vmul.f32 %v393, %v404
    %s407 = scalar_lea.vmem [#allocation10], 6
    %v408 = vld [vmem:[%s407] ss:$8 sm:$0x3]
    %s409 = scalar_lea.vmem [#allocation10], 7
    %v410 = vld [vmem:[%s409] ss:$8 sm:$0x3]
    %v412 = vperm.slane %v408, 0
    %v413 = vperm.slane %v408, 1
    %v416 = vmul.f32 %v405, %v412
    %v417 = vmul.f32 %v406, %v413
    %v419 = vperm.slane %v410, 0
    %v420 = vperm.slane %v410, 1
    %v423 = vadd.f32 %v416, %v419
    %v424 = vadd.f32 %v417, %v420
    %v425 = vxor.u32 %v423, 2147483648
    %v426 = vxor.u32 %v424, 2147483648
    %v427 = vmul.f32 %v425, 1.442695
    %v428 = vpow.pop %v427
    %v429 = vmul.f32 %v426, 1.442695
    %v430 = vpow.pop %v429
    %v431 = vadd.f32 %v428, 1.0
    %v432 = vadd.f32 %v430, 1.0
    %v433 = vrcp.pop %v431
    %v434 = vmul.f32 %v431, %v433
    %v435 = vsub.f32 1.0, %v434
    %v436 = vmul.f32 %v433, %v435
    %v437 = vadd.f32 %v433, %v436
    %vm438 = vweird.f32 %v431
    %vm439 = vweird.f32 %v433
    %vm440 = vmor %vm438, %vm439
    %v441 = vsel %vm440, %v433, %v437
    %v442 = vand.u32 2147483647, %v431
    %vm443 = vcmp.eq.f32.partialorder %v442, 8.507059e+37
    %v444 = vand.u32 %v431, 2147483648
    %v445 = vor.u32 1.1754944e-38, %v444
    %v446 = vsel %vm443, %v445, %v441
    %v447 = vmul.f32 1.0, %v446
    %v448 = vrcp.pop %v432
    %v449 = vmul.f32 %v432, %v448
    %v450 = vsub.f32 1.0, %v449
    %v451 = vmul.f32 %v448, %v450
    %v452 = vadd.f32 %v448, %v451
    %vm453 = vweird.f32 %v432
    %vm454 = vweird.f32 %v448
    %vm455 = vmor %vm453, %vm454
    %v456 = vsel %vm455, %v448, %v452
    %v457 = vand.u32 2147483647, %v432
    %vm458 = vcmp.eq.f32.partialorder %v457, 8.507059e+37
    %v459 = vand.u32 %v432, 2147483648
    %v460 = vor.u32 1.1754944e-38, %v459
    %v461 = vsel %vm458, %v460, %v456
    %v462 = vmul.f32 1.0, %v461
    %v463 = vmul.f32 %v423, %v447
    %v464 = vmul.f32 %v424, %v462
    %v465 = vld [vmem:[#allocation5] sm:$0xff]
    %v466 = vld [vmem:[#allocation5 + $0x8] sm:$0xff]
    %v467 = vld [vmem:[#allocation5 + $0x14] sm:$0xff]
    %v468 = vld [vmem:[#allocation5 + $0x1c] sm:$0xff]
    %v469 = vld [vmem:[#allocation5 + $0x28] sm:$0xff]
    %v470 = vld [vmem:[#allocation5 + $0x30] sm:$0xff]
    %v471 = vld [vmem:[#allocation5 + $0x3c] sm:$0xff]
    %v472 = vld [vmem:[#allocation5 + $0x44] sm:$0xff]
    %v473 = vld [vmem:[#allocation5 + $0x50] sm:$0xff]
    %v474 = vld [vmem:[#allocation5 + $0x58] sm:$0xff]
    %v475 = vld [vmem:[#allocation5 + $0x64] sm:$0xff]
    %v476 = vld [vmem:[#allocation5 + $0x6c] sm:$0xff]
    %v477 = vld [vmem:[#allocation5 + $0x78] sm:$0xff]
    %v478 = vld [vmem:[#allocation5 + $0x80] sm:$0xff]
    %v479 = vld [vmem:[#allocation5 + $0x8c] sm:$0xff]
    %v480 = vld [vmem:[#allocation5 + $0x94] sm:$0xff]
    %v481 = vld [vmem:[#allocation5 + $0xa0] sm:$0xff]
    %v482 = vld [vmem:[#allocation5 + $0xa8] sm:$0xff]
    %v483 = vld [vmem:[#allocation5 + $0xb4] sm:$0xff]
    %v484 = vld [vmem:[#allocation5 + $0xbc] sm:$0xff]
    %v485 = vld [vmem:[#allocation5 + $0xc8] sm:$0xff]
    %v486 = vld [vmem:[#allocation5 + $0xd0] sm:$0xff]
    %v487 = vld [vmem:[#allocation5 + $0xdc] sm:$0xff]
    %v488 = vld [vmem:[#allocation5 + $0xe4] sm:$0xff]
    %v489 = vld [vmem:[#allocation5 + $0xf0] sm:$0xff]
    %v490 = vld [vmem:[#allocation5 + $0xf8] sm:$0xff]
    %v491 = vld [vmem:[#allocation5 + $0x104] sm:$0xff]
    %v492 = vld [vmem:[#allocation5 + $0x10c] sm:$0xff]
    %v493 = vld [vmem:[#allocation5 + $0x118] sm:$0xff]
    %v494 = vld [vmem:[#allocation5 + $0x120] sm:$0xff]
    %v495 = vld [vmem:[#allocation5 + $0x12c] sm:$0xff]
    %v496 = vld [vmem:[#allocation5 + $0x134] sm:$0xff]
    %v497 = vld [vmem:[#allocation5 + $0x140] sm:$0xff]
    %v498 = vld [vmem:[#allocation5 + $0x148] sm:$0xff]
    %v499 = vld [vmem:[#allocation5 + $0x154] sm:$0xff]
    %v500 = vld [vmem:[#allocation5 + $0x15c] sm:$0xff]
    %v501 = vld [vmem:[#allocation5 + $0x168] sm:$0xff]
    %v502 = vld [vmem:[#allocation5 + $0x170] sm:$0xff]
    %v503 = vld [vmem:[#allocation5 + $0x17c] sm:$0xff]
    %v504 = vld [vmem:[#allocation5 + $0x184] sm:$0xff]
    %v505 = vld [vmem:[#allocation5 + $0x190] sm:$0xff]
    %v506 = vld [vmem:[#allocation5 + $0x198] sm:$0xff]
    %v507 = vld [vmem:[#allocation5 + $0x1a4] sm:$0xff]
    %v508 = vld [vmem:[#allocation5 + $0x1ac] sm:$0xff]
    %v509 = vld [vmem:[#allocation5 + $0x1b8] sm:$0xff]
    %v510 = vld [vmem:[#allocation5 + $0x1c0] sm:$0xff]
    %v511 = vld [vmem:[#allocation5 + $0x1cc] sm:$0xff]
    %v512 = vld [vmem:[#allocation5 + $0x1d4] sm:$0xff]
    %v513 = vld [vmem:[#allocation5 + $0x1e0] sm:$0xff]
    %v514 = vld [vmem:[#allocation5 + $0x1e8] sm:$0xff]
    %v515 = vld [vmem:[#allocation5 + $0x1f4] sm:$0xff]
    %v516 = vld [vmem:[#allocation5 + $0x1fc] sm:$0xff]
    %v517 = vld [vmem:[#allocation5 + $0x208] sm:$0xff]
    %v518 = vld [vmem:[#allocation5 + $0x210] sm:$0xff]
    %v519 = vld [vmem:[#allocation5 + $0x21c] sm:$0xff]
    %v520 = vld [vmem:[#allocation5 + $0x224] sm:$0xff]
    %v521 = vld [vmem:[#allocation5 + $0x230] sm:$0xff]
    %v522 = vld [vmem:[#allocation5 + $0x238] sm:$0xff]
    %v523 = vld [vmem:[#allocation5 + $0x244] sm:$0xff]
    %v524 = vld [vmem:[#allocation5 + $0x24c] sm:$0xff]
    %v525 = vld [vmem:[#allocation5 + $0x258] sm:$0xff]
    %v526 = vld [vmem:[#allocation5 + $0x260] sm:$0xff]
    %v527 = vld [vmem:[#allocation5 + $0x26c] sm:$0xff]
    %v528 = vld [vmem:[#allocation5 + $0x274] sm:$0xff]
    %s529 = scalar_lea.vmem [#allocation10], 56
    %v530 = vld [vmem:[%s529] ss:$8 sm:$0xf]
    %v531 = vpack.c.bf16 %v463, %v463
    %v532 = vpack.c.bf16 %v464, %v464
    %v534 = vperm.slane %v530, 0
    %v535 = vperm.slane %v530, 1
    %v536 = vperm.slane %v530, 2
    %v537 = vperm.slane %v530, 3
    %v606 = vunpack.c.l.b16 %v465
    %v607 = vunpack.c.h.b16 %v465
    %v608 = vunpack.c.l.b16 %v466
    %v609 = vunpack.c.h.b16 %v466
    %v610 = vunpack.c.l.b16 %v467
    %v611 = vunpack.c.h.b16 %v467
    %v612 = vunpack.c.l.b16 %v468
    %v613 = vunpack.c.h.b16 %v468
    %v614 = vunpack.c.l.b16 %v469
    %v615 = vunpack.c.h.b16 %v469
    %v616 = vunpack.c.l.b16 %v470
    %v617 = vunpack.c.h.b16 %v470
    %v618 = vunpack.c.l.b16 %v471
    %v619 = vunpack.c.h.b16 %v471
    %v620 = vunpack.c.l.b16 %v472
    %v621 = vunpack.c.h.b16 %v472
    %v622 = vunpack.c.l.b16 %v473
    %v623 = vunpack.c.h.b16 %v473
    %v624 = vunpack.c.l.b16 %v474
    %v625 = vunpack.c.h.b16 %v474
    %v626 = vunpack.c.l.b16 %v475
    %v627 = vunpack.c.h.b16 %v475
    %v628 = vunpack.c.l.b16 %v476
    %v629 = vunpack.c.h.b16 %v476
    %v630 = vunpack.c.l.b16 %v477
    %v631 = vunpack.c.h.b16 %v477
    %v632 = vunpack.c.l.b16 %v478
    %v633 = vunpack.c.h.b16 %v478
    %v634 = vunpack.c.l.b16 %v479
    %v635 = vunpack.c.h.b16 %v479
    %v636 = vunpack.c.l.b16 %v480
    %v637 = vunpack.c.h.b16 %v480
    %v638 = vunpack.c.l.b16 %v481
    %v639 = vunpack.c.h.b16 %v481
    %v640 = vunpack.c.l.b16 %v482
    %v641 = vunpack.c.h.b16 %v482
    %v642 = vunpack.c.l.b16 %v483
    %v643 = vunpack.c.h.b16 %v483
    %v644 = vunpack.c.l.b16 %v484
    %v645 = vunpack.c.h.b16 %v484
    %v646 = vunpack.c.l.b16 %v485
    %v647 = vunpack.c.h.b16 %v485
    %v648 = vunpack.c.l.b16 %v486
    %v649 = vunpack.c.h.b16 %v486
    %v650 = vunpack.c.l.b16 %v487
    %v651 = vunpack.c.h.b16 %v487
    %v652 = vunpack.c.l.b16 %v488
    %v653 = vunpack.c.h.b16 %v488
    %v654 = vunpack.c.l.b16 %v489
    %v655 = vunpack.c.h.b16 %v489
    %v656 = vunpack.c.l.b16 %v490
    %v657 = vunpack.c.h.b16 %v490
    %v658 = vunpack.c.l.b16 %v491
    %v659 = vunpack.c.h.b16 %v491
    %v660 = vunpack.c.l.b16 %v492
    %v661 = vunpack.c.h.b16 %v492
    %v662 = vunpack.c.l.b16 %v493
    %v663 = vunpack.c.h.b16 %v493
    %v664 = vunpack.c.l.b16 %v494
    %v665 = vunpack.c.h.b16 %v494
    %v666 = vunpack.c.l.b16 %v495
    %v667 = vunpack.c.h.b16 %v495
    %v668 = vunpack.c.l.b16 %v496
    %v669 = vunpack.c.h.b16 %v496
    %v670 = vunpack.c.l.b16 %v497
    %v671 = vunpack.c.h.b16 %v497
    %v672 = vunpack.c.l.b16 %v498
    %v673 = vunpack.c.h.b16 %v498
    %v674 = vunpack.c.l.b16 %v499
    %v675 = vunpack.c.h.b16 %v499
    %v676 = vunpack.c.l.b16 %v500
    %v677 = vunpack.c.h.b16 %v500
    %v678 = vunpack.c.l.b16 %v501
    %v679 = vunpack.c.h.b16 %v501
    %v680 = vunpack.c.l.b16 %v502
    %v681 = vunpack.c.h.b16 %v502
    %v682 = vunpack.c.l.b16 %v503
    %v683 = vunpack.c.h.b16 %v503
    %v684 = vunpack.c.l.b16 %v504
    %v685 = vunpack.c.h.b16 %v504
    %v686 = vunpack.c.l.b16 %v505
    %v687 = vunpack.c.h.b16 %v505
    %v688 = vunpack.c.l.b16 %v506
    %v689 = vunpack.c.h.b16 %v506
    %v690 = vunpack.c.l.b16 %v507
    %v691 = vunpack.c.h.b16 %v507
    %v692 = vunpack.c.l.b16 %v508
    %v693 = vunpack.c.h.b16 %v508
    %v694 = vunpack.c.l.b16 %v509
    %v695 = vunpack.c.h.b16 %v509
    %v696 = vunpack.c.l.b16 %v510
    %v697 = vunpack.c.h.b16 %v510
    %v698 = vunpack.c.l.b16 %v511
    %v699 = vunpack.c.h.b16 %v511
    %v700 = vunpack.c.l.b16 %v512
    %v701 = vunpack.c.h.b16 %v512
    %v702 = vunpack.c.l.b16 %v513
    %v703 = vunpack.c.h.b16 %v513
    %v704 = vunpack.c.l.b16 %v514
    %v705 = vunpack.c.h.b16 %v514
    %v706 = vunpack.c.l.b16 %v515
    %v707 = vunpack.c.h.b16 %v515
    %v708 = vunpack.c.l.b16 %v516
    %v709 = vunpack.c.h.b16 %v516
    %v710 = vunpack.c.l.b16 %v517
    %v711 = vunpack.c.h.b16 %v517
    %v712 = vunpack.c.l.b16 %v518
    %v713 = vunpack.c.h.b16 %v518
    %v714 = vunpack.c.l.b16 %v519
    %v715 = vunpack.c.h.b16 %v519
    %v716 = vunpack.c.l.b16 %v520
    %v717 = vunpack.c.h.b16 %v520
    %v718 = vunpack.c.l.b16 %v521
    %v719 = vunpack.c.h.b16 %v521
    %v720 = vunpack.c.l.b16 %v522
    %v721 = vunpack.c.h.b16 %v522
    %v722 = vunpack.c.l.b16 %v523
    %v723 = vunpack.c.h.b16 %v523
    %v724 = vunpack.c.l.b16 %v524
    %v725 = vunpack.c.h.b16 %v524
    %v726 = vunpack.c.l.b16 %v525
    %v727 = vunpack.c.h.b16 %v525
    %v728 = vunpack.c.l.b16 %v526
    %v729 = vunpack.c.h.b16 %v526
    %v730 = vunpack.c.l.b16 %v527
    %v731 = vunpack.c.h.b16 %v527
    %v732 = vunpack.c.l.b16 %v528
    %v733 = vunpack.c.h.b16 %v528
    %v734 = vpack.c.b16 %v610, %v606
    %v735 = vpack.c.b16 %v611, %v607
    %v736 = vpack.c.b16 %v612, %v608
    %v737 = vpack.c.b16 %v613, %v609
    %v738 = vpack.c.b16 %v618, %v614
    %v739 = vpack.c.b16 %v619, %v615
    %v740 = vpack.c.b16 %v620, %v616
    %v741 = vpack.c.b16 %v621, %v617
    %v742 = vpack.c.b16 %v626, %v622
    %v743 = vpack.c.b16 %v627, %v623
    %v744 = vpack.c.b16 %v628, %v624
    %v745 = vpack.c.b16 %v629, %v625
    %v746 = vpack.c.b16 %v634, %v630
    %v747 = vpack.c.b16 %v635, %v631
    %v748 = vpack.c.b16 %v636, %v632
    %v749 = vpack.c.b16 %v637, %v633
    %v750 = vpack.c.b16 %v642, %v638
    %v751 = vpack.c.b16 %v643, %v639
    %v752 = vpack.c.b16 %v644, %v640
    %v753 = vpack.c.b16 %v645, %v641
    %v754 = vpack.c.b16 %v650, %v646
    %v755 = vpack.c.b16 %v651, %v647
    %v756 = vpack.c.b16 %v652, %v648
    %v757 = vpack.c.b16 %v653, %v649
    %v758 = vpack.c.b16 %v658, %v654
    %v759 = vpack.c.b16 %v659, %v655
    %v760 = vpack.c.b16 %v660, %v656
    %v761 = vpack.c.b16 %v661, %v657
    %v762 = vpack.c.b16 %v666, %v662
    %v763 = vpack.c.b16 %v667, %v663
    %v764 = vpack.c.b16 %v668, %v664
    %v765 = vpack.c.b16 %v669, %v665
    %v766 = vpack.c.b16 %v674, %v670
    %v767 = vpack.c.b16 %v675, %v671
    %v768 = vpack.c.b16 %v676, %v672
    %v769 = vpack.c.b16 %v677, %v673
    %v770 = vpack.c.b16 %v682, %v678
    %v771 = vpack.c.b16 %v683, %v679
    %v772 = vpack.c.b16 %v684, %v680
    %v773 = vpack.c.b16 %v685, %v681
    %v774 = vpack.c.b16 %v690, %v686
    %v775 = vpack.c.b16 %v691, %v687
    %v776 = vpack.c.b16 %v692, %v688
    %v777 = vpack.c.b16 %v693, %v689
    %v778 = vpack.c.b16 %v698, %v694
    %v779 = vpack.c.b16 %v699, %v695
    %v780 = vpack.c.b16 %v700, %v696
    %v781 = vpack.c.b16 %v701, %v697
    %v782 = vpack.c.b16 %v706, %v702
    %v783 = vpack.c.b16 %v707, %v703
    %v784 = vpack.c.b16 %v708, %v704
    %v785 = vpack.c.b16 %v709, %v705
    %v786 = vpack.c.b16 %v714, %v710
    %v787 = vpack.c.b16 %v715, %v711
    %v788 = vpack.c.b16 %v716, %v712
    %v789 = vpack.c.b16 %v717, %v713
    %v790 = vpack.c.b16 %v722, %v718
    %v791 = vpack.c.b16 %v723, %v719
    %v792 = vpack.c.b16 %v724, %v720
    %v793 = vpack.c.b16 %v725, %v721
    %v794 = vpack.c.b16 %v730, %v726
    %v795 = vpack.c.b16 %v731, %v727
    %v796 = vpack.c.b16 %v732, %v728
    %v797 = vpack.c.b16 %v733, %v729
    %862 = vmatpush.bf16.msra.mxu0 %v762
    %863 = vmatpush.bf16.msra.mxu0 %v758
    %864 = vmatpush.bf16.msra.mxu0 %v754
    %865 = vmatpush.bf16.msra.mxu0 %v750
    %866 = vmatpush.bf16.msra.mxu0 %v746
    %867 = vmatpush.bf16.msra.mxu0 %v742
    %868 = vmatpush.bf16.msra.mxu0 %v738
    %869 = vmatpush.bf16.msra.mxu0 %v734
    %870 = vmatmul.bf16.gmra.mxu0 %v531
    %v871 = vpop.f32.mrf.mxu0
    %v872 = vadd.f32 %v534, %v871
    %v873 = vpop.f32.mrf.mxu0
    %874 = vdwg.mxu0
    %875 = vmatpush.bf16.msra.mxu0 %v794
    %876 = vmatpush.bf16.msra.mxu0 %v790
    %877 = vmatpush.bf16.msra.mxu0 %v786
    %878 = vmatpush.bf16.msra.mxu0 %v782
    %879 = vmatpush.bf16.msra.mxu0 %v778
    %880 = vmatpush.bf16.msra.mxu0 %v774
    %881 = vmatpush.bf16.msra.mxu0 %v770
    %882 = vmatpush.bf16.msra.mxu0 %v766
    %883 = vmatmul.bf16.gmra.mxu0 %v532
    %v884 = vpop.f32.mrf.mxu0
    %v885 = vadd.f32 %v872, %v884
    %v886 = vpop.f32.mrf.mxu0
    %887 = vdwg.mxu0
    %888 = vmatpush.bf16.msra.mxu0 %v763
    %889 = vmatpush.bf16.msra.mxu0 %v759
    %890 = vmatpush.bf16.msra.mxu0 %v755
    %891 = vmatpush.bf16.msra.mxu0 %v751
    %892 = vmatpush.bf16.msra.mxu0 %v747
    %893 = vmatpush.bf16.msra.mxu0 %v743
    %894 = vmatpush.bf16.msra.mxu0 %v739
    %895 = vmatpush.bf16.msra.mxu0 %v735
    %896 = vmatmul.bf16.gmra.mxu0 %v531
    %v897 = vpop.f32.mrf.mxu0
    %v898 = vadd.f32 %v535, %v897
    %v899 = vpop.f32.mrf.mxu0
    %900 = vdwg.mxu0
    %901 = vmatpush.bf16.msra.mxu0 %v795
    %902 = vmatpush.bf16.msra.mxu0 %v791
    %903 = vmatpush.bf16.msra.mxu0 %v787
    %904 = vmatpush.bf16.msra.mxu0 %v783
    %905 = vmatpush.bf16.msra.mxu0 %v779
    %906 = vmatpush.bf16.msra.mxu0 %v775
    %907 = vmatpush.bf16.msra.mxu0 %v771
    %908 = vmatpush.bf16.msra.mxu0 %v767
    %909 = vmatmul.bf16.gmra.mxu0 %v532
    %v910 = vpop.f32.mrf.mxu0
    %v911 = vadd.f32 %v898, %v910
    %v912 = vpop.f32.mrf.mxu0
    %913 = vdwg.mxu0
    %914 = vmatpush.bf16.msra.mxu0 %v764
    %915 = vmatpush.bf16.msra.mxu0 %v760
    %916 = vmatpush.bf16.msra.mxu0 %v756
    %917 = vmatpush.bf16.msra.mxu0 %v752
    %918 = vmatpush.bf16.msra.mxu0 %v748
    %919 = vmatpush.bf16.msra.mxu0 %v744
    %920 = vmatpush.bf16.msra.mxu0 %v740
    %921 = vmatpush.bf16.msra.mxu0 %v736
    %922 = vmatmul.bf16.gmra.mxu0 %v531
    %v923 = vpop.f32.mrf.mxu0
    %v924 = vadd.f32 %v536, %v923
    %v925 = vpop.f32.mrf.mxu0
    %926 = vdwg.mxu0
    %927 = vmatpush.bf16.msra.mxu0 %v796
    %928 = vmatpush.bf16.msra.mxu0 %v792
    %929 = vmatpush.bf16.msra.mxu0 %v788
    %930 = vmatpush.bf16.msra.mxu0 %v784
    %931 = vmatpush.bf16.msra.mxu0 %v780
    %932 = vmatpush.bf16.msra.mxu0 %v776
    %933 = vmatpush.bf16.msra.mxu0 %v772
    %934 = vmatpush.bf16.msra.mxu0 %v768
    %935 = vmatmul.bf16.gmra.mxu0 %v532
    %v936 = vpop.f32.mrf.mxu0
    %v937 = vadd.f32 %v924, %v936
    %v938 = vpop.f32.mrf.mxu0
    %939 = vdwg.mxu0
    %940 = vmatpush.bf16.msra.mxu0 %v765
    %941 = vmatpush.bf16.msra.mxu0 %v761
    %942 = vmatpush.bf16.msra.mxu0 %v757
    %943 = vmatpush.bf16.msra.mxu0 %v753
    %944 = vmatpush.bf16.msra.mxu0 %v749
    %945 = vmatpush.bf16.msra.mxu0 %v745
    %946 = vmatpush.bf16.msra.mxu0 %v741
    %947 = vmatpush.bf16.msra.mxu0 %v737
    %948 = vmatmul.bf16.gmra.mxu0 %v531
    %v949 = vpop.f32.mrf.mxu0
    %v950 = vadd.f32 %v537, %v949
    %v951 = vpop.f32.mrf.mxu0
    %952 = vdwg.mxu0
    %953 = vmatpush.bf16.msra.mxu0 %v797
    %954 = vmatpush.bf16.msra.mxu0 %v793
    %955 = vmatpush.bf16.msra.mxu0 %v789
    %956 = vmatpush.bf16.msra.mxu0 %v785
    %957 = vmatpush.bf16.msra.mxu0 %v781
    %958 = vmatpush.bf16.msra.mxu0 %v777
    %959 = vmatpush.bf16.msra.mxu0 %v773
    %960 = vmatpush.bf16.msra.mxu0 %v769
    %961 = vmatmul.bf16.gmra.mxu0 %v532
    %v962 = vpop.f32.mrf.mxu0
    %v963 = vadd.f32 %v950, %v962
    %v964 = vpop.f32.mrf.mxu0
    %965 = vdwg.mxu0
    %v966 = vadd.f32 %v885, %v911
    %v967 = vadd.f32 %v966, %v937
    %v968 = vadd.f32 %v967, %v963
    %969 = vadd.xlane.f32.xlu0 %v968
    %v970 = vpop.xlane.xlu0 %969
    %v971 = vmul.f32 %v970, 0.0025
    %v972 = vmul.f32 %v885, %v885
    %v973 = vmul.f32 %v911, %v911
    %v974 = vmul.f32 %v937, %v937
    %v975 = vmul.f32 %v963, %v963
    %v976 = vadd.f32 %v972, %v973
    %v977 = vadd.f32 %v976, %v974
    %v978 = vadd.f32 %v977, %v975
    %979 = vadd.xlane.f32.xlu0 %v978
    %v980 = vpop.xlane.xlu0 %979
    %v981 = vmul.f32 %v980, 0.0025
    %v982 = vmul.f32 %v971, %v971
    %v983 = vsub.f32 %v981, %v982
    %v984 = vsub.f32 %v885, %v971
    %v985 = vsub.f32 %v911, %v971
    %v986 = vsub.f32 %v937, %v971
    %v987 = vsub.f32 %v963, %v971
    %v988 = vadd.f32 %v983, 1e-05
    %v989 = vrsqrt.pop %v988
    %v990 = vmul.f32 %v989, %v988
    %v991 = vmul.f32 %v990, %v989
    %v992 = vmul.f32 0.5, %v991
    %v993 = vsub.f32 1.5, %v992
    %v994 = vmul.f32 %v989, %v993
    %vm995 = vweird.f32 %v988
    %vm996 = vweird.f32 %v989
    %vm997 = vmor %vm995, %vm996
    %v998 = vsel %vm997, %v989, %v994
    %v999 = vmul.f32 %v984, %v998
    %v1000 = vmul.f32 %v985, %v998
    %v1001 = vmul.f32 %v986, %v998
    %v1002 = vmul.f32 %v987, %v998
    %s1003 = scalar_lea.vmem [#allocation10], 57
    %v1004 = vld [vmem:[%s1003] ss:$8 sm:$0xf]
    %s1005 = scalar_lea.vmem [#allocation10], 58
    %v1006 = vld [vmem:[%s1005] ss:$8 sm:$0xf]
    %v1008 = vperm.slane %v1004, 0
    %v1009 = vperm.slane %v1004, 1
    %v1010 = vperm.slane %v1004, 2
    %v1011 = vperm.slane %v1004, 3
    %v1016 = vmul.f32 %v999, %v1008
    %v1017 = vmul.f32 %v1000, %v1009
    %v1018 = vmul.f32 %v1001, %v1010
    %v1019 = vmul.f32 %v1002, %v1011
    %v1021 = vperm.slane %v1006, 0
    %v1022 = vperm.slane %v1006, 1
    %v1023 = vperm.slane %v1006, 2
    %v1024 = vperm.slane %v1006, 3
    %v1029 = vadd.f32 %v1016, %v1021
    %v1030 = vadd.f32 %v1017, %v1022
    %v1031 = vadd.f32 %v1018, %v1023
    %v1032 = vadd.f32 %v1019, %v1024
    %v1033 = vxor.u32 %v1029, 2147483648
    %v1034 = vxor.u32 %v1030, 2147483648
    %v1035 = vxor.u32 %v1031, 2147483648
    %v1036 = vxor.u32 %v1032, 2147483648
    %v1037 = vmul.f32 %v1033, 1.442695
    %v1038 = vpow.pop %v1037
    %v1039 = vmul.f32 %v1034, 1.442695
    %v1040 = vpow.pop %v1039
    %v1041 = vmul.f32 %v1035, 1.442695
    %v1042 = vpow.pop %v1041
    %v1043 = vmul.f32 %v1036, 1.442695
    %v1044 = vpow.pop %v1043
    %v1045 = vadd.f32 %v1038, 1.0
    %v1046 = vadd.f32 %v1040, 1.0
    %v1047 = vadd.f32 %v1042, 1.0
    %v1048 = vadd.f32 %v1044, 1.0
    %v1049 = vrcp.pop %v1045
    %v1050 = vmul.f32 %v1045, %v1049
    %v1051 = vsub.f32 1.0, %v1050
    %v1052 = vmul.f32 %v1049, %v1051
    %v1053 = vadd.f32 %v1049, %v1052
    %vm1054 = vweird.f32 %v1045
    %vm1055 = vweird.f32 %v1049
    %vm1056 = vmor %vm1054, %vm1055
    %v1057 = vsel %vm1056, %v1049, %v1053
    %v1058 = vand.u32 2147483647, %v1045
    %vm1059 = vcmp.eq.f32.partialorder %v1058, 8.507059e+37
    %v1060 = vand.u32 %v1045, 2147483648
    %v1061 = vor.u32 1.1754944e-38, %v1060
    %v1062 = vsel %vm1059, %v1061, %v1057
    %v1063 = vmul.f32 1.0, %v1062
    %v1064 = vrcp.pop %v1046
    %v1065 = vmul.f32 %v1046, %v1064
    %v1066 = vsub.f32 1.0, %v1065
    %v1067 = vmul.f32 %v1064, %v1066
    %v1068 = vadd.f32 %v1064, %v1067
    %vm1069 = vweird.f32 %v1046
    %vm1070 = vweird.f32 %v1064
    %vm1071 = vmor %vm1069, %vm1070
    %v1072 = vsel %vm1071, %v1064, %v1068
    %v1073 = vand.u32 2147483647, %v1046
    %vm1074 = vcmp.eq.f32.partialorder %v1073, 8.507059e+37
    %v1075 = vand.u32 %v1046, 2147483648
    %v1076 = vor.u32 1.1754944e-38, %v1075
    %v1077 = vsel %vm1074, %v1076, %v1072
    %v1078 = vmul.f32 1.0, %v1077
    %v1079 = vrcp.pop %v1047
    %v1080 = vmul.f32 %v1047, %v1079
    %v1081 = vsub.f32 1.0, %v1080
    %v1082 = vmul.f32 %v1079, %v1081
    %v1083 = vadd.f32 %v1079, %v1082
    %vm1084 = vweird.f32 %v1047
    %vm1085 = vweird.f32 %v1079
    %vm1086 = vmor %vm1084, %vm1085
    %v1087 = vsel %vm1086, %v1079, %v1083
    %v1088 = vand.u32 2147483647, %v1047
    %vm1089 = vcmp.eq.f32.partialorder %v1088, 8.507059e+37
    %v1090 = vand.u32 %v1047, 2147483648
    %v1091 = vor.u32 1.1754944e-38, %v1090
    %v1092 = vsel %vm1089, %v1091, %v1087
    %v1093 = vmul.f32 1.0, %v1092
    %v1094 = vrcp.pop %v1048
    %v1095 = vmul.f32 %v1048, %v1094
    %v1096 = vsub.f32 1.0, %v1095
    %v1097 = vmul.f32 %v1094, %v1096
    %v1098 = vadd.f32 %v1094, %v1097
    %vm1099 = vweird.f32 %v1048
    %vm1100 = vweird.f32 %v1094
    %vm1101 = vmor %vm1099, %vm1100
    %v1102 = vsel %vm1101, %v1094, %v1098
    %v1103 = vand.u32 2147483647, %v1048
    %vm1104 = vcmp.eq.f32.partialorder %v1103, 8.507059e+37
    %v1105 = vand.u32 %v1048, 2147483648
    %v1106 = vor.u32 1.1754944e-38, %v1105
    %v1107 = vsel %vm1104, %v1106, %v1102
    %v1108 = vmul.f32 1.0, %v1107
    %v1109 = vmul.f32 %v1029, %v1063
    %v1110 = vmul.f32 %v1030, %v1078
    %v1111 = vmul.f32 %v1031, %v1093
    %v1112 = vmul.f32 %v1032, %v1108
    %v1113 = vld [vmem:[#allocation7] sm:$0xff]
    %v1114 = vld [vmem:[#allocation7 + $0x8] sm:$0xff]
    %v1115 = vld [vmem:[#allocation7 + $0x10] sm:$0xff]
    %v1116 = vld [vmem:[#allocation7 + $0x18] sm:$0xf]
    %v1117 = vld [vmem:[#allocation7 + $0x24] sm:$0xff]
    %v1118 = vld [vmem:[#allocation7 + $0x2c] sm:$0xff]
    %v1119 = vld [vmem:[#allocation7 + $0x34] sm:$0xff]
    %v1120 = vld [vmem:[#allocation7 + $0x3c] sm:$0xf]
    %v1121 = vld [vmem:[#allocation7 + $0x48] sm:$0xff]
    %v1122 = vld [vmem:[#allocation7 + $0x50] sm:$0xff]
    %v1123 = vld [vmem:[#allocation7 + $0x58] sm:$0xff]
    %v1124 = vld [vmem:[#allocation7 + $0x60] sm:$0xf]
    %v1125 = vld [vmem:[#allocation7 + $0x6c] sm:$0xff]
    %v1126 = vld [vmem:[#allocation7 + $0x74] sm:$0xff]
    %v1127 = vld [vmem:[#allocation7 + $0x7c] sm:$0xff]
    %v1128 = vld [vmem:[#allocation7 + $0x84] sm:$0xf]
    %v1129 = vld [vmem:[#allocation7 + $0x90] sm:$0xff]
    %v1130 = vld [vmem:[#allocation7 + $0x98] sm:$0xff]
    %v1131 = vld [vmem:[#allocation7 + $0xa0] sm:$0xff]
    %v1132 = vld [vmem:[#allocation7 + $0xa8] sm:$0xf]
    %v1133 = vld [vmem:[#allocation7 + $0xb4] sm:$0xff]
    %v1134 = vld [vmem:[#allocation7 + $0xbc] sm:$0xff]
    %v1135 = vld [vmem:[#allocation7 + $0xc4] sm:$0xff]
    %v1136 = vld [vmem:[#allocation7 + $0xcc] sm:$0xf]
    %v1137 = vld [vmem:[#allocation7 + $0xd8] sm:$0xff]
    %v1138 = vld [vmem:[#allocation7 + $0xe0] sm:$0xff]
    %v1139 = vld [vmem:[#allocation7 + $0xe8] sm:$0xff]
    %v1140 = vld [vmem:[#allocation7 + $0xf0] sm:$0xf]
    %v1141 = vld [vmem:[#allocation7 + $0xfc] sm:$0xff]
    %v1142 = vld [vmem:[#allocation7 + $0x104] sm:$0xff]
    %v1143 = vld [vmem:[#allocation7 + $0x10c] sm:$0xff]
    %v1144 = vld [vmem:[#allocation7 + $0x114] sm:$0xf]
    %v1145 = vld [vmem:[#allocation7 + $0x120] sm:$0xff]
    %v1146 = vld [vmem:[#allocation7 + $0x128] sm:$0xff]
    %v1147 = vld [vmem:[#allocation7 + $0x130] sm:$0xff]
    %v1148 = vld [vmem:[#allocation7 + $0x138] sm:$0xf]
    %v1149 = vld [vmem:[#allocation7 + $0x144] sm:$0xff]
    %v1150 = vld [vmem:[#allocation7 + $0x14c] sm:$0xff]
    %v1151 = vld [vmem:[#allocation7 + $0x154] sm:$0xff]
    %v1152 = vld [vmem:[#allocation7 + $0x15c] sm:$0xf]
    %v1153 = vld [vmem:[#allocation7 + $0x168] sm:$0xff]
    %v1154 = vld [vmem:[#allocation7 + $0x170] sm:$0xff]
    %v1155 = vld [vmem:[#allocation7 + $0x178] sm:$0xff]
    %v1156 = vld [vmem:[#allocation7 + $0x180] sm:$0xf]
    %v1157 = vld [vmem:[#allocation7 + $0x18c] sm:$0xff]
    %v1158 = vld [vmem:[#allocation7 + $0x194] sm:$0xff]
    %v1159 = vld [vmem:[#allocation7 + $0x19c] sm:$0xff]
    %v1160 = vld [vmem:[#allocation7 + $0x1a4] sm:$0xf]
    %v1161 = vld [vmem:[#allocation7 + $0x1b0] sm:$0xff]
    %v1162 = vld [vmem:[#allocation7 + $0x1b8] sm:$0xff]
    %v1163 = vld [vmem:[#allocation7 + $0x1c0] sm:$0xff]
    %v1164 = vld [vmem:[#allocation7 + $0x1c8] sm:$0xf]
    %v1165 = vld [vmem:[#allocation7 + $0x1d4] sm:$0xff]
    %v1166 = vld [vmem:[#allocation7 + $0x1dc] sm:$0xff]
    %v1167 = vld [vmem:[#allocation7 + $0x1e4] sm:$0xff]
    %v1168 = vld [vmem:[#allocation7 + $0x1ec] sm:$0xf]
    %v1169 = vld [vmem:[#allocation7 + $0x1f8] sm:$0xff]
    %v1170 = vld [vmem:[#allocation7 + $0x200] sm:$0xff]
    %v1171 = vld [vmem:[#allocation7 + $0x208] sm:$0xff]
    %v1172 = vld [vmem:[#allocation7 + $0x210] sm:$0xf]
    %v1173 = vld [vmem:[#allocation7 + $0x21c] sm:$0xff]
    %v1174 = vld [vmem:[#allocation7 + $0x224] sm:$0xff]
    %v1175 = vld [vmem:[#allocation7 + $0x22c] sm:$0xff]
    %v1176 = vld [vmem:[#allocation7 + $0x234] sm:$0xf]
    %v1177 = vld [vmem:[#allocation7 + $0x240] sm:$0xff]
    %v1178 = vld [vmem:[#allocation7 + $0x248] sm:$0xff]
    %v1179 = vld [vmem:[#allocation7 + $0x250] sm:$0xff]
    %v1180 = vld [vmem:[#allocation7 + $0x258] sm:$0xf]
    %v1181 = vld [vmem:[#allocation7 + $0x264] sm:$0xff]
    %v1182 = vld [vmem:[#allocation7 + $0x26c] sm:$0xff]
    %v1183 = vld [vmem:[#allocation7 + $0x274] sm:$0xff]
    %v1184 = vld [vmem:[#allocation7 + $0x27c] sm:$0xf]
    %v1185 = vld [vmem:[#allocation7 + $0x288] sm:$0xff]
    %v1186 = vld [vmem:[#allocation7 + $0x290] sm:$0xff]
    %v1187 = vld [vmem:[#allocation7 + $0x298] sm:$0xff]
    %v1188 = vld [vmem:[#allocation7 + $0x2a0] sm:$0xf]
    %v1189 = vld [vmem:[#allocation7 + $0x2ac] sm:$0xff]
    %v1190 = vld [vmem:[#allocation7 + $0x2b4] sm:$0xff]
    %v1191 = vld [vmem:[#allocation7 + $0x2bc] sm:$0xff]
    %v1192 = vld [vmem:[#allocation7 + $0x2c4] sm:$0xf]
    %v1193 = vld [vmem:[#allocation7 + $0x2d0] sm:$0xff]
    %v1194 = vld [vmem:[#allocation7 + $0x2d8] sm:$0xff]
    %v1195 = vld [vmem:[#allocation7 + $0x2e0] sm:$0xff]
    %v1196 = vld [vmem:[#allocation7 + $0x2e8] sm:$0xf]
    %v1197 = vld [vmem:[#allocation7 + $0x2f4] sm:$0xff]
    %v1198 = vld [vmem:[#allocation7 + $0x2fc] sm:$0xff]
    %v1199 = vld [vmem:[#allocation7 + $0x304] sm:$0xff]
    %v1200 = vld [vmem:[#allocation7 + $0x30c] sm:$0xf]
    %v1201 = vld [vmem:[#allocation7 + $0x318] sm:$0xff]
    %v1202 = vld [vmem:[#allocation7 + $0x320] sm:$0xff]
    %v1203 = vld [vmem:[#allocation7 + $0x328] sm:$0xff]
    %v1204 = vld [vmem:[#allocation7 + $0x330] sm:$0xf]
    %v1205 = vld [vmem:[#allocation7 + $0x33c] sm:$0xff]
    %v1206 = vld [vmem:[#allocation7 + $0x344] sm:$0xff]
    %v1207 = vld [vmem:[#allocation7 + $0x34c] sm:$0xff]
    %v1208 = vld [vmem:[#allocation7 + $0x354] sm:$0xf]
    %v1209 = vld [vmem:[#allocation7 + $0x360] sm:$0xff]
    %v1210 = vld [vmem:[#allocation7 + $0x368] sm:$0xff]
    %v1211 = vld [vmem:[#allocation7 + $0x370] sm:$0xff]
    %v1212 = vld [vmem:[#allocation7 + $0x378] sm:$0xf]
    %v1213 = vld [vmem:[#allocation7 + $0x384] sm:$0xff]
    %v1214 = vld [vmem:[#allocation7 + $0x38c] sm:$0xff]
    %v1215 = vld [vmem:[#allocation7 + $0x394] sm:$0xff]
    %v1216 = vld [vmem:[#allocation7 + $0x39c] sm:$0xf]
    %v1217 = vld [vmem:[#allocation7 + $0x3a8] sm:$0xff]
    %v1218 = vld [vmem:[#allocation7 + $0x3b0] sm:$0xff]
    %v1219 = vld [vmem:[#allocation7 + $0x3b8] sm:$0xff]
    %v1220 = vld [vmem:[#allocation7 + $0x3c0] sm:$0xf]
    %v1221 = vld [vmem:[#allocation7 + $0x3cc] sm:$0xff]
    %v1222 = vld [vmem:[#allocation7 + $0x3d4] sm:$0xff]
    %v1223 = vld [vmem:[#allocation7 + $0x3dc] sm:$0xff]
    %v1224 = vld [vmem:[#allocation7 + $0x3e4] sm:$0xf]
    %v1225 = vld [vmem:[#allocation7 + $0x3f0] sm:$0xff]
    %v1226 = vld [vmem:[#allocation7 + $0x3f8] sm:$0xff]
    %v1227 = vld [vmem:[#allocation7 + $0x400] sm:$0xff]
    %v1228 = vld [vmem:[#allocation7 + $0x408] sm:$0xf]
    %v1229 = vld [vmem:[#allocation7 + $0x414] sm:$0xff]
    %v1230 = vld [vmem:[#allocation7 + $0x41c] sm:$0xff]
    %v1231 = vld [vmem:[#allocation7 + $0x424] sm:$0xff]
    %v1232 = vld [vmem:[#allocation7 + $0x42c] sm:$0xf]
    %v1233 = vld [vmem:[#allocation7 + $0x438] sm:$0xff]
    %v1234 = vld [vmem:[#allocation7 + $0x440] sm:$0xff]
    %v1235 = vld [vmem:[#allocation7 + $0x448] sm:$0xff]
    %v1236 = vld [vmem:[#allocation7 + $0x450] sm:$0xf]
    %v1237 = vld [vmem:[#allocation7 + $0x45c] sm:$0xff]
    %v1238 = vld [vmem:[#allocation7 + $0x464] sm:$0xff]
    %v1239 = vld [vmem:[#allocation7 + $0x46c] sm:$0xff]
    %v1240 = vld [vmem:[#allocation7 + $0x474] sm:$0xf]
    %v1241 = vld [vmem:[#allocation7 + $0x480] sm:$0xff]
    %v1242 = vld [vmem:[#allocation7 + $0x488] sm:$0xff]
    %v1243 = vld [vmem:[#allocation7 + $0x490] sm:$0xff]
    %v1244 = vld [vmem:[#allocation7 + $0x498] sm:$0xf]
    %v1245 = vld [vmem:[#allocation7 + $0x4a4] sm:$0xff]
    %v1246 = vld [vmem:[#allocation7 + $0x4ac] sm:$0xff]
    %v1247 = vld [vmem:[#allocation7 + $0x4b4] sm:$0xff]
    %v1248 = vld [vmem:[#allocation7 + $0x4bc] sm:$0xf]
    %v1249 = vld [vmem:[#allocation7 + $0x4c8] sm:$0xff]
    %v1250 = vld [vmem:[#allocation7 + $0x4d0] sm:$0xff]
    %v1251 = vld [vmem:[#allocation7 + $0x4d8] sm:$0xff]
    %v1252 = vld [vmem:[#allocation7 + $0x4e0] sm:$0xf]
    %v1253 = vld [vmem:[#allocation7 + $0x4ec] sm:$0xff]
    %v1254 = vld [vmem:[#allocation7 + $0x4f4] sm:$0xff]
    %v1255 = vld [vmem:[#allocation7 + $0x4fc] sm:$0xff]
    %v1256 = vld [vmem:[#allocation7 + $0x504] sm:$0xf]
    %v1257 = vld [vmem:[#allocation7 + $0x510] sm:$0xff]
    %v1258 = vld [vmem:[#allocation7 + $0x518] sm:$0xff]
    %v1259 = vld [vmem:[#allocation7 + $0x520] sm:$0xff]
    %v1260 = vld [vmem:[#allocation7 + $0x528] sm:$0xf]
    %v1261 = vld [vmem:[#allocation7 + $0x534] sm:$0xff]
    %v1262 = vld [vmem:[#allocation7 + $0x53c] sm:$0xff]
    %v1263 = vld [vmem:[#allocation7 + $0x544] sm:$0xff]
    %v1264 = vld [vmem:[#allocation7 + $0x54c] sm:$0xf]
    %v1265 = vld [vmem:[#allocation7 + $0x558] sm:$0xff]
    %v1266 = vld [vmem:[#allocation7 + $0x560] sm:$0xff]
    %v1267 = vld [vmem:[#allocation7 + $0x568] sm:$0xff]
    %v1268 = vld [vmem:[#allocation7 + $0x570] sm:$0xf]
    %v1269 = vld [vmem:[#allocation7 + $0x57c] sm:$0xff]
    %v1270 = vld [vmem:[#allocation7 + $0x584] sm:$0xff]
    %v1271 = vld [vmem:[#allocation7 + $0x58c] sm:$0xff]
    %v1272 = vld [vmem:[#allocation7 + $0x594] sm:$0xf]
    %v1273 = vld [vmem:[#allocation7 + $0x5a0] sm:$0xff]
    %v1274 = vld [vmem:[#allocation7 + $0x5a8] sm:$0xff]
    %v1275 = vld [vmem:[#allocation7 + $0x5b0] sm:$0xff]
    %v1276 = vld [vmem:[#allocation7 + $0x5b8] sm:$0xf]
    %v1277 = vld [vmem:[#allocation7 + $0x5c4] sm:$0xff]
    %v1278 = vld [vmem:[#allocation7 + $0x5cc] sm:$0xff]
    %v1279 = vld [vmem:[#allocation7 + $0x5d4] sm:$0xff]
    %v1280 = vld [vmem:[#allocation7 + $0x5dc] sm:$0xf]
    %v1281 = vld [vmem:[#allocation7 + $0x5e8] sm:$0xff]
    %v1282 = vld [vmem:[#allocation7 + $0x5f0] sm:$0xff]
    %v1283 = vld [vmem:[#allocation7 + $0x5f8] sm:$0xff]
    %v1284 = vld [vmem:[#allocation7 + $0x600] sm:$0xf]
    %v1285 = vld [vmem:[#allocation7 + $0x60c] sm:$0xff]
    %v1286 = vld [vmem:[#allocation7 + $0x614] sm:$0xff]
    %v1287 = vld [vmem:[#allocation7 + $0x61c] sm:$0xff]
    %v1288 = vld [vmem:[#allocation7 + $0x624] sm:$0xf]
    %v1289 = vld [vmem:[#allocation7 + $0x630] sm:$0xff]
    %v1290 = vld [vmem:[#allocation7 + $0x638] sm:$0xff]
    %v1291 = vld [vmem:[#allocation7 + $0x640] sm:$0xff]
    %v1292 = vld [vmem:[#allocation7 + $0x648] sm:$0xf]
    %v1293 = vld [vmem:[#allocation7 + $0x654] sm:$0xff]
    %v1294 = vld [vmem:[#allocation7 + $0x65c] sm:$0xff]
    %v1295 = vld [vmem:[#allocation7 + $0x664] sm:$0xff]
    %v1296 = vld [vmem:[#allocation7 + $0x66c] sm:$0xf]
    %v1297 = vld [vmem:[#allocation7 + $0x678] sm:$0xff]
    %v1298 = vld [vmem:[#allocation7 + $0x680] sm:$0xff]
    %v1299 = vld [vmem:[#allocation7 + $0x688] sm:$0xff]
    %v1300 = vld [vmem:[#allocation7 + $0x690] sm:$0xf]
    %v1301 = vld [vmem:[#allocation7 + $0x69c] sm:$0xff]
    %v1302 = vld [vmem:[#allocation7 + $0x6a4] sm:$0xff]
    %v1303 = vld [vmem:[#allocation7 + $0x6ac] sm:$0xff]
    %v1304 = vld [vmem:[#allocation7 + $0x6b4] sm:$0xf]
    %v1305 = vld [vmem:[#allocation7 + $0x6c0] sm:$0xff]
    %v1306 = vld [vmem:[#allocation7 + $0x6c8] sm:$0xff]
    %v1307 = vld [vmem:[#allocation7 + $0x6d0] sm:$0xff]
    %v1308 = vld [vmem:[#allocation7 + $0x6d8] sm:$0xf]
    %v1309 = vld [vmem:[#allocation7 + $0x6e4] sm:$0xff]
    %v1310 = vld [vmem:[#allocation7 + $0x6ec] sm:$0xff]
    %v1311 = vld [vmem:[#allocation7 + $0x6f4] sm:$0xff]
    %v1312 = vld [vmem:[#allocation7 + $0x6fc] sm:$0xf]
    %v1313 = vld [vmem:[#allocation7 + $0x708] sm:$0xff]
    %v1314 = vld [vmem:[#allocation7 + $0x710] sm:$0xff]
    %v1315 = vld [vmem:[#allocation7 + $0x718] sm:$0xff]
    %v1316 = vld [vmem:[#allocation7 + $0x720] sm:$0xf]
    %v1317 = vld [vmem:[#allocation7 + $0x72c] sm:$0xff]
    %v1318 = vld [vmem:[#allocation7 + $0x734] sm:$0xff]
    %v1319 = vld [vmem:[#allocation7 + $0x73c] sm:$0xff]
    %v1320 = vld [vmem:[#allocation7 + $0x744] sm:$0xf]
    %v1321 = vld [vmem:[#allocation7 + $0x750] sm:$0xff]
    %v1322 = vld [vmem:[#allocation7 + $0x758] sm:$0xff]
    %v1323 = vld [vmem:[#allocation7 + $0x760] sm:$0xff]
    %v1324 = vld [vmem:[#allocation7 + $0x768] sm:$0xf]
    %v1325 = vld [vmem:[#allocation7 + $0x774] sm:$0xff]
    %v1326 = vld [vmem:[#allocation7 + $0x77c] sm:$0xff]
    %v1327 = vld [vmem:[#allocation7 + $0x784] sm:$0xff]
    %v1328 = vld [vmem:[#allocation7 + $0x78c] sm:$0xf]
    %v1329 = vld [vmem:[#allocation7 + $0x798] sm:$0xff]
    %v1330 = vld [vmem:[#allocation7 + $0x7a0] sm:$0xff]
    %v1331 = vld [vmem:[#allocation7 + $0x7a8] sm:$0xff]
    %v1332 = vld [vmem:[#allocation7 + $0x7b0] sm:$0xf]
    %v1333 = vld [vmem:[#allocation7 + $0x7bc] sm:$0xff]
    %v1334 = vld [vmem:[#allocation7 + $0x7c4] sm:$0xff]
    %v1335 = vld [vmem:[#allocation7 + $0x7cc] sm:$0xff]
    %v1336 = vld [vmem:[#allocation7 + $0x7d4] sm:$0xf]
    %v1337 = vld [vmem:[#allocation7 + $0x7e0] sm:$0xff]
    %v1338 = vld [vmem:[#allocation7 + $0x7e8] sm:$0xff]
    %v1339 = vld [vmem:[#allocation7 + $0x7f0] sm:$0xff]
    %v1340 = vld [vmem:[#allocation7 + $0x7f8] sm:$0xf]
    %v1341 = vld [vmem:[#allocation7 + $0x804] sm:$0xff]
    %v1342 = vld [vmem:[#allocation7 + $0x80c] sm:$0xff]
    %v1343 = vld [vmem:[#allocation7 + $0x814] sm:$0xff]
    %v1344 = vld [vmem:[#allocation7 + $0x81c] sm:$0xf]
    %v1345 = vld [vmem:[#allocation7 + $0x828] sm:$0xff]
    %v1346 = vld [vmem:[#allocation7 + $0x830] sm:$0xff]
    %v1347 = vld [vmem:[#allocation7 + $0x838] sm:$0xff]
    %v1348 = vld [vmem:[#allocation7 + $0x840] sm:$0xf]
    %v1349 = vld [vmem:[#allocation7 + $0x84c] sm:$0xff]
    %v1350 = vld [vmem:[#allocation7 + $0x854] sm:$0xff]
    %v1351 = vld [vmem:[#allocation7 + $0x85c] sm:$0xff]
    %v1352 = vld [vmem:[#allocation7 + $0x864] sm:$0xf]
    %v1353 = vld [vmem:[#allocation7 + $0x870] sm:$0xff]
    %v1354 = vld [vmem:[#allocation7 + $0x878] sm:$0xff]
    %v1355 = vld [vmem:[#allocation7 + $0x880] sm:$0xff]
    %v1356 = vld [vmem:[#allocation7 + $0x888] sm:$0xf]
    %v1357 = vld [vmem:[#allocation7 + $0x894] sm:$0xff]
    %v1358 = vld [vmem:[#allocation7 + $0x89c] sm:$0xff]
    %v1359 = vld [vmem:[#allocation7 + $0x8a4] sm:$0xff]
    %v1360 = vld [vmem:[#allocation7 + $0x8ac] sm:$0xf]
    %v1361 = vld [vmem:[#allocation7 + $0x8b8] sm:$0xff]
    %v1362 = vld [vmem:[#allocation7 + $0x8c0] sm:$0xff]
    %v1363 = vld [vmem:[#allocation7 + $0x8c8] sm:$0xff]
    %v1364 = vld [vmem:[#allocation7 + $0x8d0] sm:$0xf]
    %v1365 = vld [vmem:[#allocation7 + $0x8dc] sm:$0xff]
    %v1366 = vld [vmem:[#allocation7 + $0x8e4] sm:$0xff]
    %v1367 = vld [vmem:[#allocation7 + $0x8ec] sm:$0xff]
    %v1368 = vld [vmem:[#allocation7 + $0x8f4] sm:$0xf]
    %s1369 = scalar_lea.vmem [#allocation10], 59
    %v1370 = vld [vmem:[%s1369] ss:$8 sm:$0xf]
    %v1371 = vld [vmem:[%s1369] ss:$8 sm:$0xf0]
    %v1372 = vor.u32 %v1370, %v1371
    %v1373 = vpack.c.bf16 %v1109, %v1109
    %v1374 = vpack.c.bf16 %v1110, %v1110
    %v1375 = vpack.c.bf16 %v1111, %v1111
    %v1376 = vpack.c.bf16 %v1112, %v1112
    %v1378 = vperm.slane %v1372, 0
    %v1379 = vperm.slane %v1372, 1
    %v1380 = vperm.slane %v1372, 2
    %v1381 = vperm.slane %v1372, 3
    %v1382 = vperm.slane %v1372, 4
    %v1383 = vperm.slane %v1372, 5
    %v1384 = vperm.slane %v1372, 6
    %v1648 = vunpack.c.l.b16 %v1113
    %v1649 = vunpack.c.h.b16 %v1113
    %v1650 = vunpack.c.l.b16 %v1114
    %v1651 = vunpack.c.h.b16 %v1114
    %v1652 = vunpack.c.l.b16 %v1115
    %v1653 = vunpack.c.h.b16 %v1115
    %v1654 = vunpack.c.l.b16 %v1116
    %v1655 = vunpack.c.l.b16 %v1117
    %v1656 = vunpack.c.h.b16 %v1117
    %v1657 = vunpack.c.l.b16 %v1118
    %v1658 = vunpack.c.h.b16 %v1118
    %v1659 = vunpack.c.l.b16 %v1119
    %v1660 = vunpack.c.h.b16 %v1119
    %v1661 = vunpack.c.l.b16 %v1120
    %v1662 = vunpack.c.l.b16 %v1121
    %v1663 = vunpack.c.h.b16 %v1121
    %v1664 = vunpack.c.l.b16 %v1122
    %v1665 = vunpack.c.h.b16 %v1122
    %v1666 = vunpack.c.l.b16 %v1123
    %v1667 = vunpack.c.h.b16 %v1123
    %v1668 = vunpack.c.l.b16 %v1124
    %v1669 = vunpack.c.l.b16 %v1125
    %v1670 = vunpack.c.h.b16 %v1125
    %v1671 = vunpack.c.l.b16 %v1126
    %v1672 = vunpack.c.h.b16 %v1126
    %v1673 = vunpack.c.l.b16 %v1127
    %v1674 = vunpack.c.h.b16 %v1127
    %v1675 = vunpack.c.l.b16 %v1128
    %v1676 = vunpack.c.l.b16 %v1129
    %v1677 = vunpack.c.h.b16 %v1129
    %v1678 = vunpack.c.l.b16 %v1130
    %v1679 = vunpack.c.h.b16 %v1130
    %v1680 = vunpack.c.l.b16 %v1131
    %v1681 = vunpack.c.h.b16 %v1131
    %v1682 = vunpack.c.l.b16 %v1132
    %v1683 = vunpack.c.l.b16 %v1133
    %v1684 = vunpack.c.h.b16 %v1133
    %v1685 = vunpack.c.l.b16 %v1134
    %v1686 = vunpack.c.h.b16 %v1134
    %v1687 = vunpack.c.l.b16 %v1135
    %v1688 = vunpack.c.h.b16 %v1135
    %v1689 = vunpack.c.l.b16 %v1136
    %v1690 = vunpack.c.l.b16 %v1137
    %v1691 = vunpack.c.h.b16 %v1137
    %v1692 = vunpack.c.l.b16 %v1138
    %v1693 = vunpack.c.h.b16 %v1138
    %v1694 = vunpack.c.l.b16 %v1139
    %v1695 = vunpack.c.h.b16 %v1139
    %v1696 = vunpack.c.l.b16 %v1140
    %v1697 = vunpack.c.l.b16 %v1141
    %v1698 = vunpack.c.h.b16 %v1141
    %v1699 = vunpack.c.l.b16 %v1142
    %v1700 = vunpack.c.h.b16 %v1142
    %v1701 = vunpack.c.l.b16 %v1143
    %v1702 = vunpack.c.h.b16 %v1143
    %v1703 = vunpack.c.l.b16 %v1144
    %v1704 = vunpack.c.l.b16 %v1145
    %v1705 = vunpack.c.h.b16 %v1145
    %v1706 = vunpack.c.l.b16 %v1146
    %v1707 = vunpack.c.h.b16 %v1146
    %v1708 = vunpack.c.l.b16 %v1147
    %v1709 = vunpack.c.h.b16 %v1147
    %v1710 = vunpack.c.l.b16 %v1148
    %v1711 = vunpack.c.l.b16 %v1149
    %v1712 = vunpack.c.h.b16 %v1149
    %v1713 = vunpack.c.l.b16 %v1150
    %v1714 = vunpack.c.h.b16 %v1150
    %v1715 = vunpack.c.l.b16 %v1151
    %v1716 = vunpack.c.h.b16 %v1151
    %v1717 = vunpack.c.l.b16 %v1152
    %v1718 = vunpack.c.l.b16 %v1153
    %v1719 = vunpack.c.h.b16 %v1153
    %v1720 = vunpack.c.l.b16 %v1154
    %v1721 = vunpack.c.h.b16 %v1154
    %v1722 = vunpack.c.l.b16 %v1155
    %v1723 = vunpack.c.h.b16 %v1155
    %v1724 = vunpack.c.l.b16 %v1156
    %v1725 = vunpack.c.l.b16 %v1157
    %v1726 = vunpack.c.h.b16 %v1157
    %v1727 = vunpack.c.l.b16 %v1158
    %v1728 = vunpack.c.h.b16 %v1158
    %v1729 = vunpack.c.l.b16 %v1159
    %v1730 = vunpack.c.h.b16 %v1159
    %v1731 = vunpack.c.l.b16 %v1160
    %v1732 = vunpack.c.l.b16 %v1161
    %v1733 = vunpack.c.h.b16 %v1161
    %v1734 = vunpack.c.l.b16 %v1162
    %v1735 = vunpack.c.h.b16 %v1162
    %v1736 = vunpack.c.l.b16 %v1163
    %v1737 = vunpack.c.h.b16 %v1163
    %v1738 = vunpack.c.l.b16 %v1164
    %v1739 = vunpack.c.l.b16 %v1165
    %v1740 = vunpack.c.h.b16 %v1165
    %v1741 = vunpack.c.l.b16 %v1166
    %v1742 = vunpack.c.h.b16 %v1166
    %v1743 = vunpack.c.l.b16 %v1167
    %v1744 = vunpack.c.h.b16 %v1167
    %v1745 = vunpack.c.l.b16 %v1168
    %v1746 = vunpack.c.l.b16 %v1169
    %v1747 = vunpack.c.h.b16 %v1169
    %v1748 = vunpack.c.l.b16 %v1170
    %v1749 = vunpack.c.h.b16 %v1170
    %v1750 = vunpack.c.l.b16 %v1171
    %v1751 = vunpack.c.h.b16 %v1171
    %v1752 = vunpack.c.l.b16 %v1172
    %v1753 = vunpack.c.l.b16 %v1173
    %v1754 = vunpack.c.h.b16 %v1173
    %v1755 = vunpack.c.l.b16 %v1174
    %v1756 = vunpack.c.h.b16 %v1174
    %v1757 = vunpack.c.l.b16 %v1175
    %v1758 = vunpack.c.h.b16 %v1175
    %v1759 = vunpack.c.l.b16 %v1176
    %v1760 = vunpack.c.l.b16 %v1177
    %v1761 = vunpack.c.h.b16 %v1177
    %v1762 = vunpack.c.l.b16 %v1178
    %v1763 = vunpack.c.h.b16 %v1178
    %v1764 = vunpack.c.l.b16 %v1179
    %v1765 = vunpack.c.h.b16 %v1179
    %v1766 = vunpack.c.l.b16 %v1180
    %v1767 = vunpack.c.l.b16 %v1181
    %v1768 = vunpack.c.h.b16 %v1181
    %v1769 = vunpack.c.l.b16 %v1182
    %v1770 = vunpack.c.h.b16 %v1182
    %v1771 = vunpack.c.l.b16 %v1183
    %v1772 = vunpack.c.h.b16 %v1183
    %v1773 = vunpack.c.l.b16 %v1184
    %v1774 = vunpack.c.l.b16 %v1185
    %v1775 = vunpack.c.h.b16 %v1185
    %v1776 = vunpack.c.l.b16 %v1186
    %v1777 = vunpack.c.h.b16 %v1186
    %v1778 = vunpack.c.l.b16 %v1187
    %v1779 = vunpack.c.h.b16 %v1187
    %v1780 = vunpack.c.l.b16 %v1188
    %v1781 = vunpack.c.l.b16 %v1189
    %v1782 = vunpack.c.h.b16 %v1189
    %v1783 = vunpack.c.l.b16 %v1190
    %v1784 = vunpack.c.h.b16 %v1190
    %v1785 = vunpack.c.l.b16 %v1191
    %v1786 = vunpack.c.h.b16 %v1191
    %v1787 = vunpack.c.l.b16 %v1192
    %v1788 = vunpack.c.l.b16 %v1193
    %v1789 = vunpack.c.h.b16 %v1193
    %v1790 = vunpack.c.l.b16 %v1194
    %v1791 = vunpack.c.h.b16 %v1194
    %v1792 = vunpack.c.l.b16 %v1195
    %v1793 = vunpack.c.h.b16 %v1195
    %v1794 = vunpack.c.l.b16 %v1196
    %v1795 = vunpack.c.l.b16 %v1197
    %v1796 = vunpack.c.h.b16 %v1197
    %v1797 = vunpack.c.l.b16 %v1198
    %v1798 = vunpack.c.h.b16 %v1198
    %v1799 = vunpack.c.l.b16 %v1199
    %v1800 = vunpack.c.h.b16 %v1199
    %v1801 = vunpack.c.l.b16 %v1200
    %v1802 = vunpack.c.l.b16 %v1201
    %v1803 = vunpack.c.h.b16 %v1201
    %v1804 = vunpack.c.l.b16 %v1202
    %v1805 = vunpack.c.h.b16 %v1202
    %v1806 = vunpack.c.l.b16 %v1203
    %v1807 = vunpack.c.h.b16 %v1203
    %v1808 = vunpack.c.l.b16 %v1204
    %v1809 = vunpack.c.l.b16 %v1205
    %v1810 = vunpack.c.h.b16 %v1205
    %v1811 = vunpack.c.l.b16 %v1206
    %v1812 = vunpack.c.h.b16 %v1206
    %v1813 = vunpack.c.l.b16 %v1207
    %v1814 = vunpack.c.h.b16 %v1207
    %v1815 = vunpack.c.l.b16 %v1208
    %v1816 = vunpack.c.l.b16 %v1209
    %v1817 = vunpack.c.h.b16 %v1209
    %v1818 = vunpack.c.l.b16 %v1210
    %v1819 = vunpack.c.h.b16 %v1210
    %v1820 = vunpack.c.l.b16 %v1211
    %v1821 = vunpack.c.h.b16 %v1211
    %v1822 = vunpack.c.l.b16 %v1212
    %v1823 = vunpack.c.l.b16 %v1213
    %v1824 = vunpack.c.h.b16 %v1213
    %v1825 = vunpack.c.l.b16 %v1214
    %v1826 = vunpack.c.h.b16 %v1214
    %v1827 = vunpack.c.l.b16 %v1215
    %v1828 = vunpack.c.h.b16 %v1215
    %v1829 = vunpack.c.l.b16 %v1216
    %v1830 = vunpack.c.l.b16 %v1217
    %v1831 = vunpack.c.h.b16 %v1217
    %v1832 = vunpack.c.l.b16 %v1218
    %v1833 = vunpack.c.h.b16 %v1218
    %v1834 = vunpack.c.l.b16 %v1219
    %v1835 = vunpack.c.h.b16 %v1219
    %v1836 = vunpack.c.l.b16 %v1220
    %v1837 = vunpack.c.l.b16 %v1221
    %v1838 = vunpack.c.h.b16 %v1221
    %v1839 = vunpack.c.l.b16 %v1222
    %v1840 = vunpack.c.h.b16 %v1222
    %v1841 = vunpack.c.l.b16 %v1223
    %v1842 = vunpack.c.h.b16 %v1223
    %v1843 = vunpack.c.l.b16 %v1224
    %v1844 = vunpack.c.l.b16 %v1225
    %v1845 = vunpack.c.h.b16 %v1225
    %v1846 = vunpack.c.l.b16 %v1226
    %v1847 = vunpack.c.h.b16 %v1226
    %v1848 = vunpack.c.l.b16 %v1227
    %v1849 = vunpack.c.h.b16 %v1227
    %v1850 = vunpack.c.l.b16 %v1228
    %v1851 = vunpack.c.l.b16 %v1229
    %v1852 = vunpack.c.h.b16 %v1229
    %v1853 = vunpack.c.l.b16 %v1230
    %v1854 = vunpack.c.h.b16 %v1230
    %v1855 = vunpack.c.l.b16 %v1231
    %v1856 = vunpack.c.h.b16 %v1231
    %v1857 = vunpack.c.l.b16 %v1232
    %v1858 = vunpack.c.l.b16 %v1233
    %v1859 = vunpack.c.h.b16 %v1233
    %v1860 = vunpack.c.l.b16 %v1234
    %v1861 = vunpack.c.h.b16 %v1234
    %v1862 = vunpack.c.l.b16 %v1235
    %v1863 = vunpack.c.h.b16 %v1235
    %v1864 = vunpack.c.l.b16 %v1236
    %v1865 = vunpack.c.l.b16 %v1237
    %v1866 = vunpack.c.h.b16 %v1237
    %v1867 = vunpack.c.l.b16 %v1238
    %v1868 = vunpack.c.h.b16 %v1238
    %v1869 = vunpack.c.l.b16 %v1239
    %v1870 = vunpack.c.h.b16 %v1239
    %v1871 = vunpack.c.l.b16 %v1240
    %v1872 = vunpack.c.l.b16 %v1241
    %v1873 = vunpack.c.h.b16 %v1241
    %v1874 = vunpack.c.l.b16 %v1242
    %v1875 = vunpack.c.h.b16 %v1242
    %v1876 = vunpack.c.l.b16 %v1243
    %v1877 = vunpack.c.h.b16 %v1243
    %v1878 = vunpack.c.l.b16 %v1244
    %v1879 = vunpack.c.l.b16 %v1245
    %v1880 = vunpack.c.h.b16 %v1245
    %v1881 = vunpack.c.l.b16 %v1246
    %v1882 = vunpack.c.h.b16 %v1246
    %v1883 = vunpack.c.l.b16 %v1247
    %v1884 = vunpack.c.h.b16 %v1247
    %v1885 = vunpack.c.l.b16 %v1248
    %v1886 = vunpack.c.l.b16 %v1249
    %v1887 = vunpack.c.h.b16 %v1249
    %v1888 = vunpack.c.l.b16 %v1250
    %v1889 = vunpack.c.h.b16 %v1250
    %v1890 = vunpack.c.l.b16 %v1251
    %v1891 = vunpack.c.h.b16 %v1251
    %v1892 = vunpack.c.l.b16 %v1252
    %v1893 = vunpack.c.l.b16 %v1253
    %v1894 = vunpack.c.h.b16 %v1253
    %v1895 = vunpack.c.l.b16 %v1254
    %v1896 = vunpack.c.h.b16 %v1254
    %v1897 = vunpack.c.l.b16 %v1255
    %v1898 = vunpack.c.h.b16 %v1255
    %v1899 = vunpack.c.l.b16 %v1256
    %v1900 = vunpack.c.l.b16 %v1257
    %v1901 = vunpack.c.h.b16 %v1257
    %v1902 = vunpack.c.l.b16 %v1258
    %v1903 = vunpack.c.h.b16 %v1258
    %v1904 = vunpack.c.l.b16 %v1259
    %v1905 = vunpack.c.h.b16 %v1259
    %v1906 = vunpack.c.l.b16 %v1260
    %v1907 = vunpack.c.l.b16 %v1261
    %v1908 = vunpack.c.h.b16 %v1261
    %v1909 = vunpack.c.l.b16 %v1262
    %v1910 = vunpack.c.h.b16 %v1262
    %v1911 = vunpack.c.l.b16 %v1263
    %v1912 = vunpack.c.h.b16 %v1263
    %v1913 = vunpack.c.l.b16 %v1264
    %v1914 = vunpack.c.l.b16 %v1265
    %v1915 = vunpack.c.h.b16 %v1265
    %v1916 = vunpack.c.l.b16 %v1266
    %v1917 = vunpack.c.h.b16 %v1266
    %v1918 = vunpack.c.l.b16 %v1267
    %v1919 = vunpack.c.h.b16 %v1267
    %v1920 = vunpack.c.l.b16 %v1268
    %v1921 = vunpack.c.l.b16 %v1269
    %v1922 = vunpack.c.h.b16 %v1269
    %v1923 = vunpack.c.l.b16 %v1270
    %v1924 = vunpack.c.h.b16 %v1270
    %v1925 = vunpack.c.l.b16 %v1271
    %v1926 = vunpack.c.h.b16 %v1271
    %v1927 = vunpack.c.l.b16 %v1272
    %v1928 = vunpack.c.l.b16 %v1273
    %v1929 = vunpack.c.h.b16 %v1273
    %v1930 = vunpack.c.l.b16 %v1274
    %v1931 = vunpack.c.h.b16 %v1274
    %v1932 = vunpack.c.l.b16 %v1275
    %v1933 = vunpack.c.h.b16 %v1275
    %v1934 = vunpack.c.l.b16 %v1276
    %v1935 = vunpack.c.l.b16 %v1277
    %v1936 = vunpack.c.h.b16 %v1277
    %v1937 = vunpack.c.l.b16 %v1278
    %v1938 = vunpack.c.h.b16 %v1278
    %v1939 = vunpack.c.l.b16 %v1279
    %v1940 = vunpack.c.h.b16 %v1279
    %v1941 = vunpack.c.l.b16 %v1280
    %v1942 = vunpack.c.l.b16 %v1281
    %v1943 = vunpack.c.h.b16 %v1281
    %v1944 = vunpack.c.l.b16 %v1282
    %v1945 = vunpack.c.h.b16 %v1282
    %v1946 = vunpack.c.l.b16 %v1283
    %v1947 = vunpack.c.h.b16 %v1283
    %v1948 = vunpack.c.l.b16 %v1284
    %v1949 = vunpack.c.l.b16 %v1285
    %v1950 = vunpack.c.h.b16 %v1285
    %v1951 = vunpack.c.l.b16 %v1286
    %v1952 = vunpack.c.h.b16 %v1286
    %v1953 = vunpack.c.l.b16 %v1287
    %v1954 = vunpack.c.h.b16 %v1287
    %v1955 = vunpack.c.l.b16 %v1288
    %v1956 = vunpack.c.l.b16 %v1289
    %v1957 = vunpack.c.h.b16 %v1289
    %v1958 = vunpack.c.l.b16 %v1290
    %v1959 = vunpack.c.h.b16 %v1290
    %v1960 = vunpack.c.l.b16 %v1291
    %v1961 = vunpack.c.h.b16 %v1291
    %v1962 = vunpack.c.l.b16 %v1292
    %v1963 = vunpack.c.l.b16 %v1293
    %v1964 = vunpack.c.h.b16 %v1293
    %v1965 = vunpack.c.l.b16 %v1294
    %v1966 = vunpack.c.h.b16 %v1294
    %v1967 = vunpack.c.l.b16 %v1295
    %v1968 = vunpack.c.h.b16 %v1295
    %v1969 = vunpack.c.l.b16 %v1296
    %v1970 = vunpack.c.l.b16 %v1297
    %v1971 = vunpack.c.h.b16 %v1297
    %v1972 = vunpack.c.l.b16 %v1298
    %v1973 = vunpack.c.h.b16 %v1298
    %v1974 = vunpack.c.l.b16 %v1299
    %v1975 = vunpack.c.h.b16 %v1299
    %v1976 = vunpack.c.l.b16 %v1300
    %v1977 = vunpack.c.l.b16 %v1301
    %v1978 = vunpack.c.h.b16 %v1301
    %v1979 = vunpack.c.l.b16 %v1302
    %v1980 = vunpack.c.h.b16 %v1302
    %v1981 = vunpack.c.l.b16 %v1303
    %v1982 = vunpack.c.h.b16 %v1303
    %v1983 = vunpack.c.l.b16 %v1304
    %v1984 = vunpack.c.l.b16 %v1305
    %v1985 = vunpack.c.h.b16 %v1305
    %v1986 = vunpack.c.l.b16 %v1306
    %v1987 = vunpack.c.h.b16 %v1306
    %v1988 = vunpack.c.l.b16 %v1307
    %v1989 = vunpack.c.h.b16 %v1307
    %v1990 = vunpack.c.l.b16 %v1308
    %v1991 = vunpack.c.l.b16 %v1309
    %v1992 = vunpack.c.h.b16 %v1309
    %v1993 = vunpack.c.l.b16 %v1310
    %v1994 = vunpack.c.h.b16 %v1310
    %v1995 = vunpack.c.l.b16 %v1311
    %v1996 = vunpack.c.h.b16 %v1311
    %v1997 = vunpack.c.l.b16 %v1312
    %v1998 = vunpack.c.l.b16 %v1313
    %v1999 = vunpack.c.h.b16 %v1313
    %v2000 = vunpack.c.l.b16 %v1314
    %v2001 = vunpack.c.h.b16 %v1314
    %v2002 = vunpack.c.l.b16 %v1315
    %v2003 = vunpack.c.h.b16 %v1315
    %v2004 = vunpack.c.l.b16 %v1316
    %v2005 = vunpack.c.l.b16 %v1317
    %v2006 = vunpack.c.h.b16 %v1317
    %v2007 = vunpack.c.l.b16 %v1318
    %v2008 = vunpack.c.h.b16 %v1318
    %v2009 = vunpack.c.l.b16 %v1319
    %v2010 = vunpack.c.h.b16 %v1319
    %v2011 = vunpack.c.l.b16 %v1320
    %v2012 = vunpack.c.l.b16 %v1321
    %v2013 = vunpack.c.h.b16 %v1321
    %v2014 = vunpack.c.l.b16 %v1322
    %v2015 = vunpack.c.h.b16 %v1322
    %v2016 = vunpack.c.l.b16 %v1323
    %v2017 = vunpack.c.h.b16 %v1323
    %v2018 = vunpack.c.l.b16 %v1324
    %v2019 = vunpack.c.l.b16 %v1325
    %v2020 = vunpack.c.h.b16 %v1325
    %v2021 = vunpack.c.l.b16 %v1326
    %v2022 = vunpack.c.h.b16 %v1326
    %v2023 = vunpack.c.l.b16 %v1327
    %v2024 = vunpack.c.h.b16 %v1327
    %v2025 = vunpack.c.l.b16 %v1328
    %v2026 = vunpack.c.l.b16 %v1329
    %v2027 = vunpack.c.h.b16 %v1329
    %v2028 = vunpack.c.l.b16 %v1330
    %v2029 = vunpack.c.h.b16 %v1330
    %v2030 = vunpack.c.l.b16 %v1331
    %v2031 = vunpack.c.h.b16 %v1331
    %v2032 = vunpack.c.l.b16 %v1332
    %v2033 = vunpack.c.l.b16 %v1333
    %v2034 = vunpack.c.h.b16 %v1333
    %v2035 = vunpack.c.l.b16 %v1334
    %v2036 = vunpack.c.h.b16 %v1334
    %v2037 = vunpack.c.l.b16 %v1335
    %v2038 = vunpack.c.h.b16 %v1335
    %v2039 = vunpack.c.l.b16 %v1336
    %v2040 = vunpack.c.l.b16 %v1337
    %v2041 = vunpack.c.h.b16 %v1337
    %v2042 = vunpack.c.l.b16 %v1338
    %v2043 = vunpack.c.h.b16 %v1338
    %v2044 = vunpack.c.l.b16 %v1339
    %v2045 = vunpack.c.h.b16 %v1339
    %v2046 = vunpack.c.l.b16 %v1340
    %v2047 = vunpack.c.l.b16 %v1341
    %v2048 = vunpack.c.h.b16 %v1341
    %v2049 = vunpack.c.l.b16 %v1342
    %v2050 = vunpack.c.h.b16 %v1342
    %v2051 = vunpack.c.l.b16 %v1343
    %v2052 = vunpack.c.h.b16 %v1343
    %v2053 = vunpack.c.l.b16 %v1344
    %v2054 = vunpack.c.l.b16 %v1345
    %v2055 = vunpack.c.h.b16 %v1345
    %v2056 = vunpack.c.l.b16 %v1346
    %v2057 = vunpack.c.h.b16 %v1346
    %v2058 = vunpack.c.l.b16 %v1347
    %v2059 = vunpack.c.h.b16 %v1347
    %v2060 = vunpack.c.l.b16 %v1348
    %v2061 = vunpack.c.l.b16 %v1349
    %v2062 = vunpack.c.h.b16 %v1349
    %v2063 = vunpack.c.l.b16 %v1350
    %v2064 = vunpack.c.h.b16 %v1350
    %v2065 = vunpack.c.l.b16 %v1351
    %v2066 = vunpack.c.h.b16 %v1351
    %v2067 = vunpack.c.l.b16 %v1352
    %v2068 = vunpack.c.l.b16 %v1353
    %v2069 = vunpack.c.h.b16 %v1353
    %v2070 = vunpack.c.l.b16 %v1354
    %v2071 = vunpack.c.h.b16 %v1354
    %v2072 = vunpack.c.l.b16 %v1355
    %v2073 = vunpack.c.h.b16 %v1355
    %v2074 = vunpack.c.l.b16 %v1356
    %v2075 = vunpack.c.l.b16 %v1357
    %v2076 = vunpack.c.h.b16 %v1357
    %v2077 = vunpack.c.l.b16 %v1358
    %v2078 = vunpack.c.h.b16 %v1358
    %v2079 = vunpack.c.l.b16 %v1359
    %v2080 = vunpack.c.h.b16 %v1359
    %v2081 = vunpack.c.l.b16 %v1360
    %v2082 = vunpack.c.l.b16 %v1361
    %v2083 = vunpack.c.h.b16 %v1361
    %v2084 = vunpack.c.l.b16 %v1362
    %v2085 = vunpack.c.h.b16 %v1362
    %v2086 = vunpack.c.l.b16 %v1363
    %v2087 = vunpack.c.h.b16 %v1363
    %v2088 = vunpack.c.l.b16 %v1364
    %v2089 = vunpack.c.l.b16 %v1365
    %v2090 = vunpack.c.h.b16 %v1365
    %v2091 = vunpack.c.l.b16 %v1366
    %v2092 = vunpack.c.h.b16 %v1366
    %v2093 = vunpack.c.l.b16 %v1367
    %v2094 = vunpack.c.h.b16 %v1367
    %v2095 = vunpack.c.l.b16 %v1368
    %v2096 = vpack.c.b16 %v1655, %v1648
    %v2097 = vpack.c.b16 %v1656, %v1649
    %v2098 = vpack.c.b16 %v1657, %v1650
    %v2099 = vpack.c.b16 %v1658, %v1651
    %v2100 = vpack.c.b16 %v1659, %v1652
    %v2101 = vpack.c.b16 %v1660, %v1653
    %v2102 = vpack.c.b16 %v1661, %v1654
    %v2103 = vpack.c.b16 %v1669, %v1662
    %v2104 = vpack.c.b16 %v1670, %v1663
    %v2105 = vpack.c.b16 %v1671, %v1664
    %v2106 = vpack.c.b16 %v1672, %v1665
    %v2107 = vpack.c.b16 %v1673, %v1666
    %v2108 = vpack.c.b16 %v1674, %v1667
    %v2109 = vpack.c.b16 %v1675, %v1668
    %v2110 = vpack.c.b16 %v1683, %v1676
    %v2111 = vpack.c.b16 %v1684, %v1677
    %v2112 = vpack.c.b16 %v1685, %v1678
    %v2113 = vpack.c.b16 %v1686, %v1679
    %v2114 = vpack.c.b16 %v1687, %v1680
    %v2115 = vpack.c.b16 %v1688, %v1681
    %v2116 = vpack.c.b16 %v1689, %v1682
    %v2117 = vpack.c.b16 %v1697, %v1690
    %v2118 = vpack.c.b16 %v1698, %v1691
    %v2119 = vpack.c.b16 %v1699, %v1692
    %v2120 = vpack.c.b16 %v1700, %v1693
    %v2121 = vpack.c.b16 %v1701, %v1694
    %v2122 = vpack.c.b16 %v1702, %v1695
    %v2123 = vpack.c.b16 %v1703, %v1696
    %v2124 = vpack.c.b16 %v1711, %v1704
    %v2125 = vpack.c.b16 %v1712, %v1705
    %v2126 = vpack.c.b16 %v1713, %v1706
    %v2127 = vpack.c.b16 %v1714, %v1707
    %v2128 = vpack.c.b16 %v1715, %v1708
    %v2129 = vpack.c.b16 %v1716, %v1709
    %v2130 = vpack.c.b16 %v1717, %v1710
    %v2131 = vpack.c.b16 %v1725, %v1718
    %v2132 = vpack.c.b16 %v1726, %v1719
    %v2133 = vpack.c.b16 %v1727, %v1720
    %v2134 = vpack.c.b16 %v1728, %v1721
    %v2135 = vpack.c.b16 %v1729, %v1722
    %v2136 = vpack.c.b16 %v1730, %v1723
    %v2137 = vpack.c.b16 %v1731, %v1724
    %v2138 = vpack.c.b16 %v1739, %v1732
    %v2139 = vpack.c.b16 %v1740, %v1733
    %v2140 = vpack.c.b16 %v1741, %v1734
    %v2141 = vpack.c.b16 %v1742, %v1735
    %v2142 = vpack.c.b16 %v1743, %v1736
    %v2143 = vpack.c.b16 %v1744, %v1737
    %v2144 = vpack.c.b16 %v1745, %v1738
    %v2145 = vpack.c.b16 %v1753, %v1746
    %v2146 = vpack.c.b16 %v1754, %v1747
    %v2147 = vpack.c.b16 %v1755, %v1748
    %v2148 = vpack.c.b16 %v1756, %v1749
    %v2149 = vpack.c.b16 %v1757, %v1750
    %v2150 = vpack.c.b16 %v1758, %v1751
    %v2151 = vpack.c.b16 %v1759, %v1752
    %v2152 = vpack.c.b16 %v1767, %v1760
    %v2153 = vpack.c.b16 %v1768, %v1761
    %v2154 = vpack.c.b16 %v1769, %v1762
    %v2155 = vpack.c.b16 %v1770, %v1763
    %v2156 = vpack.c.b16 %v1771, %v1764
    %v2157 = vpack.c.b16 %v1772, %v1765
    %v2158 = vpack.c.b16 %v1773, %v1766
    %v2159 = vpack.c.b16 %v1781, %v1774
    %v2160 = vpack.c.b16 %v1782, %v1775
    %v2161 = vpack.c.b16 %v1783, %v1776
    %v2162 = vpack.c.b16 %v1784, %v1777
    %v2163 = vpack.c.b16 %v1785, %v1778
    %v2164 = vpack.c.b16 %v1786, %v1779
    %v2165 = vpack.c.b16 %v1787, %v1780
    %v2166 = vpack.c.b16 %v1795, %v1788
    %v2167 = vpack.c.b16 %v1796, %v1789
    %v2168 = vpack.c.b16 %v1797, %v1790
    %v2169 = vpack.c.b16 %v1798, %v1791
    %v2170 = vpack.c.b16 %v1799, %v1792
    %v2171 = vpack.c.b16 %v1800, %v1793
    %v2172 = vpack.c.b16 %v1801, %v1794
    %v2173 = vpack.c.b16 %v1809, %v1802
    %v2174 = vpack.c.b16 %v1810, %v1803
    %v2175 = vpack.c.b16 %v1811, %v1804
    %v2176 = vpack.c.b16 %v1812, %v1805
    %v2177 = vpack.c.b16 %v1813, %v1806
    %v2178 = vpack.c.b16 %v1814, %v1807
    %v2179 = vpack.c.b16 %v1815, %v1808
    %v2180 = vpack.c.b16 %v1823, %v1816
    %v2181 = vpack.c.b16 %v1824, %v1817
    %v2182 = vpack.c.b16 %v1825, %v1818
    %v2183 = vpack.c.b16 %v1826, %v1819
    %v2184 = vpack.c.b16 %v1827, %v1820
    %v2185 = vpack.c.b16 %v1828, %v1821
    %v2186 = vpack.c.b16 %v1829, %v1822
    %v2187 = vpack.c.b16 %v1837, %v1830
    %v2188 = vpack.c.b16 %v1838, %v1831
    %v2189 = vpack.c.b16 %v1839, %v1832
    %v2190 = vpack.c.b16 %v1840, %v1833
    %v2191 = vpack.c.b16 %v1841, %v1834
    %v2192 = vpack.c.b16 %v1842, %v1835
    %v2193 = vpack.c.b16 %v1843, %v1836
    %v2194 = vpack.c.b16 %v1851, %v1844
    %v2195 = vpack.c.b16 %v1852, %v1845
    %v2196 = vpack.c.b16 %v1853, %v1846
    %v2197 = vpack.c.b16 %v1854, %v1847
    %v2198 = vpack.c.b16 %v1855, %v1848
    %v2199 = vpack.c.b16 %v1856, %v1849
    %v2200 = vpack.c.b16 %v1857, %v1850
    %v2201 = vpack.c.b16 %v1865, %v1858
    %v2202 = vpack.c.b16 %v1866, %v1859
    %v2203 = vpack.c.b16 %v1867, %v1860
    %v2204 = vpack.c.b16 %v1868, %v1861
    %v2205 = vpack.c.b16 %v1869, %v1862
    %v2206 = vpack.c.b16 %v1870, %v1863
    %v2207 = vpack.c.b16 %v1871, %v1864
    %v2208 = vpack.c.b16 %v1879, %v1872
    %v2209 = vpack.c.b16 %v1880, %v1873
    %v2210 = vpack.c.b16 %v1881, %v1874
    %v2211 = vpack.c.b16 %v1882, %v1875
    %v2212 = vpack.c.b16 %v1883, %v1876
    %v2213 = vpack.c.b16 %v1884, %v1877
    %v2214 = vpack.c.b16 %v1885, %v1878
    %v2215 = vpack.c.b16 %v1893, %v1886
    %v2216 = vpack.c.b16 %v1894, %v1887
    %v2217 = vpack.c.b16 %v1895, %v1888
    %v2218 = vpack.c.b16 %v1896, %v1889
    %v2219 = vpack.c.b16 %v1897, %v1890
    %v2220 = vpack.c.b16 %v1898, %v1891
    %v2221 = vpack.c.b16 %v1899, %v1892
    %v2222 = vpack.c.b16 %v1907, %v1900
    %v2223 = vpack.c.b16 %v1908, %v1901
    %v2224 = vpack.c.b16 %v1909, %v1902
    %v2225 = vpack.c.b16 %v1910, %v1903
    %v2226 = vpack.c.b16 %v1911, %v1904
    %v2227 = vpack.c.b16 %v1912, %v1905
    %v2228 = vpack.c.b16 %v1913, %v1906
    %v2229 = vpack.c.b16 %v1921, %v1914
    %v2230 = vpack.c.b16 %v1922, %v1915
    %v2231 = vpack.c.b16 %v1923, %v1916
    %v2232 = vpack.c.b16 %v1924, %v1917
    %v2233 = vpack.c.b16 %v1925, %v1918
    %v2234 = vpack.c.b16 %v1926, %v1919
    %v2235 = vpack.c.b16 %v1927, %v1920
    %v2236 = vpack.c.b16 %v1935, %v1928
    %v2237 = vpack.c.b16 %v1936, %v1929
    %v2238 = vpack.c.b16 %v1937, %v1930
    %v2239 = vpack.c.b16 %v1938, %v1931
    %v2240 = vpack.c.b16 %v1939, %v1932
    %v2241 = vpack.c.b16 %v1940, %v1933
    %v2242 = vpack.c.b16 %v1941, %v1934
    %v2243 = vpack.c.b16 %v1949, %v1942
    %v2244 = vpack.c.b16 %v1950, %v1943
    %v2245 = vpack.c.b16 %v1951, %v1944
    %v2246 = vpack.c.b16 %v1952, %v1945
    %v2247 = vpack.c.b16 %v1953, %v1946
    %v2248 = vpack.c.b16 %v1954, %v1947
    %v2249 = vpack.c.b16 %v1955, %v1948
    %v2250 = vpack.c.b16 %v1963, %v1956
    %v2251 = vpack.c.b16 %v1964, %v1957
    %v2252 = vpack.c.b16 %v1965, %v1958
    %v2253 = vpack.c.b16 %v1966, %v1959
    %v2254 = vpack.c.b16 %v1967, %v1960
    %v2255 = vpack.c.b16 %v1968, %v1961
    %v2256 = vpack.c.b16 %v1969, %v1962
    %v2257 = vpack.c.b16 %v1977, %v1970
    %v2258 = vpack.c.b16 %v1978, %v1971
    %v2259 = vpack.c.b16 %v1979, %v1972
    %v2260 = vpack.c.b16 %v1980, %v1973
    %v2261 = vpack.c.b16 %v1981, %v1974
    %v2262 = vpack.c.b16 %v1982, %v1975
    %v2263 = vpack.c.b16 %v1983, %v1976
    %v2264 = vpack.c.b16 %v1991, %v1984
    %v2265 = vpack.c.b16 %v1992, %v1985
    %v2266 = vpack.c.b16 %v1993, %v1986
    %v2267 = vpack.c.b16 %v1994, %v1987
    %v2268 = vpack.c.b16 %v1995, %v1988
    %v2269 = vpack.c.b16 %v1996, %v1989
    %v2270 = vpack.c.b16 %v1997, %v1990
    %v2271 = vpack.c.b16 %v2005, %v1998
    %v2272 = vpack.c.b16 %v2006, %v1999
    %v2273 = vpack.c.b16 %v2007, %v2000
    %v2274 = vpack.c.b16 %v2008, %v2001
    %v2275 = vpack.c.b16 %v2009, %v2002
    %v2276 = vpack.c.b16 %v2010, %v2003
    %v2277 = vpack.c.b16 %v2011, %v2004
    %v2278 = vpack.c.b16 %v2019, %v2012
    %v2279 = vpack.c.b16 %v2020, %v2013
    %v2280 = vpack.c.b16 %v2021, %v2014
    %v2281 = vpack.c.b16 %v2022, %v2015
    %v2282 = vpack.c.b16 %v2023, %v2016
    %v2283 = vpack.c.b16 %v2024, %v2017
    %v2284 = vpack.c.b16 %v2025, %v2018
    %v2285 = vpack.c.b16 %v2033, %v2026
    %v2286 = vpack.c.b16 %v2034, %v2027
    %v2287 = vpack.c.b16 %v2035, %v2028
    %v2288 = vpack.c.b16 %v2036, %v2029
    %v2289 = vpack.c.b16 %v2037, %v2030
    %v2290 = vpack.c.b16 %v2038, %v2031
    %v2291 = vpack.c.b16 %v2039, %v2032
    %v2292 = vpack.c.b16 %v2047, %v2040
    %v2293 = vpack.c.b16 %v2048, %v2041
    %v2294 = vpack.c.b16 %v2049, %v2042
    %v2295 = vpack.c.b16 %v2050, %v2043
    %v2296 = vpack.c.b16 %v2051, %v2044
    %v2297 = vpack.c.b16 %v2052, %v2045
    %v2298 = vpack.c.b16 %v2053, %v2046
    %v2299 = vpack.c.b16 %v2061, %v2054
    %v2300 = vpack.c.b16 %v2062, %v2055
    %v2301 = vpack.c.b16 %v2063, %v2056
    %v2302 = vpack.c.b16 %v2064, %v2057
    %v2303 = vpack.c.b16 %v2065, %v2058
    %v2304 = vpack.c.b16 %v2066, %v2059
    %v2305 = vpack.c.b16 %v2067, %v2060
    %v2306 = vpack.c.b16 %v2075, %v2068
    %v2307 = vpack.c.b16 %v2076, %v2069
    %v2308 = vpack.c.b16 %v2077, %v2070
    %v2309 = vpack.c.b16 %v2078, %v2071
    %v2310 = vpack.c.b16 %v2079, %v2072
    %v2311 = vpack.c.b16 %v2080, %v2073
    %v2312 = vpack.c.b16 %v2081, %v2074
    %v2313 = vpack.c.b16 %v2089, %v2082
    %v2314 = vpack.c.b16 %v2090, %v2083
    %v2315 = vpack.c.b16 %v2091, %v2084
    %v2316 = vpack.c.b16 %v2092, %v2085
    %v2317 = vpack.c.b16 %v2093, %v2086
    %v2318 = vpack.c.b16 %v2094, %v2087
    %v2319 = vpack.c.b16 %v2095, %v2088
    %2544 = vmatpush.bf16.msra.mxu0 %v2145
    %2545 = vmatpush.bf16.msra.mxu0 %v2138
    %2546 = vmatpush.bf16.msra.mxu0 %v2131
    %2547 = vmatpush.bf16.msra.mxu0 %v2124
    %2548 = vmatpush.bf16.msra.mxu0 %v2117
    %2549 = vmatpush.bf16.msra.mxu0 %v2110
    %2550 = vmatpush.bf16.msra.mxu0 %v2103
    %2551 = vmatpush.bf16.msra.mxu0 %v2096
    %2552 = vmatmul.bf16.gmra.mxu0 %v1373
    %v2553 = vpop.f32.mrf.mxu0
    %v2554 = vadd.f32 %v1378, %v2553
    %v2555 = vpop.f32.mrf.mxu0
    %2556 = vdwg.mxu0
    %2557 = vmatpush.bf16.msra.mxu0 %v2201
    %2558 = vmatpush.bf16.msra.mxu0 %v2194
    %2559 = vmatpush.bf16.msra.mxu0 %v2187
    %2560 = vmatpush.bf16.msra.mxu0 %v2180
    %2561 = vmatpush.bf16.msra.mxu0 %v2173
    %2562 = vmatpush.bf16.msra.mxu0 %v2166
    %2563 = vmatpush.bf16.msra.mxu0 %v2159
    %2564 = vmatpush.bf16.msra.mxu0 %v2152
    %2565 = vmatmul.bf16.gmra.mxu0 %v1374
    %v2566 = vpop.f32.mrf.mxu0
    %v2567 = vadd.f32 %v2554, %v2566
    %v2568 = vpop.f32.mrf.mxu0
    %2569 = vdwg.mxu0
    %2570 = vmatpush.bf16.msra.mxu0 %v2257
    %2571 = vmatpush.bf16.msra.mxu0 %v2250
    %2572 = vmatpush.bf16.msra.mxu0 %v2243
    %2573 = vmatpush.bf16.msra.mxu0 %v2236
    %2574 = vmatpush.bf16.msra.mxu0 %v2229
    %2575 = vmatpush.bf16.msra.mxu0 %v2222
    %2576 = vmatpush.bf16.msra.mxu0 %v2215
    %2577 = vmatpush.bf16.msra.mxu0 %v2208
    %2578 = vmatmul.bf16.gmra.mxu0 %v1375
    %v2579 = vpop.f32.mrf.mxu0
    %v2580 = vadd.f32 %v2567, %v2579
    %v2581 = vpop.f32.mrf.mxu0
    %2582 = vdwg.mxu0
    %2583 = vmatpush.bf16.msra.mxu0 %v2313
    %2584 = vmatpush.bf16.msra.mxu0 %v2306
    %2585 = vmatpush.bf16.msra.mxu0 %v2299
    %2586 = vmatpush.bf16.msra.mxu0 %v2292
    %2587 = vmatpush.bf16.msra.mxu0 %v2285
    %2588 = vmatpush.bf16.msra.mxu0 %v2278
    %2589 = vmatpush.bf16.msra.mxu0 %v2271
    %2590 = vmatpush.bf16.msra.mxu0 %v2264
    %2591 = vmatmul.bf16.gmra.mxu0 %v1376
    %v2592 = vpop.f32.mrf.mxu0
    %v2593 = vadd.f32 %v2580, %v2592
    %v2594 = vpop.f32.mrf.mxu0
    %2595 = vdwg.mxu0
    %2596 = vmatpush.bf16.msra.mxu0 %v2146
    %2597 = vmatpush.bf16.msra.mxu0 %v2139
    %2598 = vmatpush.bf16.msra.mxu0 %v2132
    %2599 = vmatpush.bf16.msra.mxu0 %v2125
    %2600 = vmatpush.bf16.msra.mxu0 %v2118
    %2601 = vmatpush.bf16.msra.mxu0 %v2111
    %2602 = vmatpush.bf16.msra.mxu0 %v2104
    %2603 = vmatpush.bf16.msra.mxu0 %v2097
    %2604 = vmatmul.bf16.gmra.mxu0 %v1373
    %v2605 = vpop.f32.mrf.mxu0
    %v2606 = vadd.f32 %v1379, %v2605
    %v2607 = vpop.f32.mrf.mxu0
    %2608 = vdwg.mxu0
    %2609 = vmatpush.bf16.msra.mxu0 %v2202
    %2610 = vmatpush.bf16.msra.mxu0 %v2195
    %2611 = vmatpush.bf16.msra.mxu0 %v2188
    %2612 = vmatpush.bf16.msra.mxu0 %v2181
    %2613 = vmatpush.bf16.msra.mxu0 %v2174
    %2614 = vmatpush.bf16.msra.mxu0 %v2167
    %2615 = vmatpush.bf16.msra.mxu0 %v2160
    %2616 = vmatpush.bf16.msra.mxu0 %v2153
    %2617 = vmatmul.bf16.gmra.mxu0 %v1374
    %v2618 = vpop.f32.mrf.mxu0
    %v2619 = vadd.f32 %v2606, %v2618
    %v2620 = vpop.f32.mrf.mxu0
    %2621 = vdwg.mxu0
    %2622 = vmatpush.bf16.msra.mxu0 %v2258
    %2623 = vmatpush.bf16.msra.mxu0 %v2251
    %2624 = vmatpush.bf16.msra.mxu0 %v2244
    %2625 = vmatpush.bf16.msra.mxu0 %v2237
    %2626 = vmatpush.bf16.msra.mxu0 %v2230
    %2627 = vmatpush.bf16.msra.mxu0 %v2223
    %2628 = vmatpush.bf16.msra.mxu0 %v2216
    %2629 = vmatpush.bf16.msra.mxu0 %v2209
    %2630 = vmatmul.bf16.gmra.mxu0 %v1375
    %v2631 = vpop.f32.mrf.mxu0
    %v2632 = vadd.f32 %v2619, %v2631
    %v2633 = vpop.f32.mrf.mxu0
    %2634 = vdwg.mxu0
    %2635 = vmatpush.bf16.msra.mxu0 %v2314
    %2636 = vmatpush.bf16.msra.mxu0 %v2307
    %2637 = vmatpush.bf16.msra.mxu0 %v2300
    %2638 = vmatpush.bf16.msra.mxu0 %v2293
    %2639 = vmatpush.bf16.msra.mxu0 %v2286
    %2640 = vmatpush.bf16.msra.mxu0 %v2279
    %2641 = vmatpush.bf16.msra.mxu0 %v2272
    %2642 = vmatpush.bf16.msra.mxu0 %v2265
    %2643 = vmatmul.bf16.gmra.mxu0 %v1376
    %v2644 = vpop.f32.mrf.mxu0
    %v2645 = vadd.f32 %v2632, %v2644
    %v2646 = vpop.f32.mrf.mxu0
    %2647 = vdwg.mxu0
    %2648 = vmatpush.bf16.msra.mxu0 %v2147
    %2649 = vmatpush.bf16.msra.mxu0 %v2140
    %2650 = vmatpush.bf16.msra.mxu0 %v2133
    %2651 = vmatpush.bf16.msra.mxu0 %v2126
    %2652 = vmatpush.bf16.msra.mxu0 %v2119
    %2653 = vmatpush.bf16.msra.mxu0 %v2112
    %2654 = vmatpush.bf16.msra.mxu0 %v2105
    %2655 = vmatpush.bf16.msra.mxu0 %v2098
    %2656 = vmatmul.bf16.gmra.mxu0 %v1373
    %v2657 = vpop.f32.mrf.mxu0
    %v2658 = vadd.f32 %v1380, %v2657
    %v2659 = vpop.f32.mrf.mxu0
    %2660 = vdwg.mxu0
    %2661 = vmatpush.bf16.msra.mxu0 %v2203
    %2662 = vmatpush.bf16.msra.mxu0 %v2196
    %2663 = vmatpush.bf16.msra.mxu0 %v2189
    %2664 = vmatpush.bf16.msra.mxu0 %v2182
    %2665 = vmatpush.bf16.msra.mxu0 %v2175
    %2666 = vmatpush.bf16.msra.mxu0 %v2168
    %2667 = vmatpush.bf16.msra.mxu0 %v2161
    %2668 = vmatpush.bf16.msra.mxu0 %v2154
    %2669 = vmatmul.bf16.gmra.mxu0 %v1374
    %v2670 = vpop.f32.mrf.mxu0
    %v2671 = vadd.f32 %v2658, %v2670
    %v2672 = vpop.f32.mrf.mxu0
    %2673 = vdwg.mxu0
    %2674 = vmatpush.bf16.msra.mxu0 %v2259
    %2675 = vmatpush.bf16.msra.mxu0 %v2252
    %2676 = vmatpush.bf16.msra.mxu0 %v2245
    %2677 = vmatpush.bf16.msra.mxu0 %v2238
    %2678 = vmatpush.bf16.msra.mxu0 %v2231
    %2679 = vmatpush.bf16.msra.mxu0 %v2224
    %2680 = vmatpush.bf16.msra.mxu0 %v2217
    %2681 = vmatpush.bf16.msra.mxu0 %v2210
    %2682 = vmatmul.bf16.gmra.mxu0 %v1375
    %v2683 = vpop.f32.mrf.mxu0
    %v2684 = vadd.f32 %v2671, %v2683
    %v2685 = vpop.f32.mrf.mxu0
    %2686 = vdwg.mxu0
    %2687 = vmatpush.bf16.msra.mxu0 %v2315
    %2688 = vmatpush.bf16.msra.mxu0 %v2308
    %2689 = vmatpush.bf16.msra.mxu0 %v2301
    %2690 = vmatpush.bf16.msra.mxu0 %v2294
    %2691 = vmatpush.bf16.msra.mxu0 %v2287
    %2692 = vmatpush.bf16.msra.mxu0 %v2280
    %2693 = vmatpush.bf16.msra.mxu0 %v2273
    %2694 = vmatpush.bf16.msra.mxu0 %v2266
    %2695 = vmatmul.bf16.gmra.mxu0 %v1376
    %v2696 = vpop.f32.mrf.mxu0
    %v2697 = vadd.f32 %v2684, %v2696
    %v2698 = vpop.f32.mrf.mxu0
    %2699 = vdwg.mxu0
    %2700 = vmatpush.bf16.msra.mxu0 %v2148
    %2701 = vmatpush.bf16.msra.mxu0 %v2141
    %2702 = vmatpush.bf16.msra.mxu0 %v2134
    %2703 = vmatpush.bf16.msra.mxu0 %v2127
    %2704 = vmatpush.bf16.msra.mxu0 %v2120
    %2705 = vmatpush.bf16.msra.mxu0 %v2113
    %2706 = vmatpush.bf16.msra.mxu0 %v2106
    %2707 = vmatpush.bf16.msra.mxu0 %v2099
    %2708 = vmatmul.bf16.gmra.mxu0 %v1373
    %v2709 = vpop.f32.mrf.mxu0
    %v2710 = vadd.f32 %v1381, %v2709
    %v2711 = vpop.f32.mrf.mxu0
    %2712 = vdwg.mxu0
    %2713 = vmatpush.bf16.msra.mxu0 %v2204
    %2714 = vmatpush.bf16.msra.mxu0 %v2197
    %2715 = vmatpush.bf16.msra.mxu0 %v2190
    %2716 = vmatpush.bf16.msra.mxu0 %v2183
    %2717 = vmatpush.bf16.msra.mxu0 %v2176
    %2718 = vmatpush.bf16.msra.mxu0 %v2169
    %2719 = vmatpush.bf16.msra.mxu0 %v2162
    %2720 = vmatpush.bf16.msra.mxu0 %v2155
    %2721 = vmatmul.bf16.gmra.mxu0 %v1374
    %v2722 = vpop.f32.mrf.mxu0
    %v2723 = vadd.f32 %v2710, %v2722
    %v2724 = vpop.f32.mrf.mxu0
    %2725 = vdwg.mxu0
    %2726 = vmatpush.bf16.msra.mxu0 %v2260
    %2727 = vmatpush.bf16.msra.mxu0 %v2253
    %2728 = vmatpush.bf16.msra.mxu0 %v2246
    %2729 = vmatpush.bf16.msra.mxu0 %v2239
    %2730 = vmatpush.bf16.msra.mxu0 %v2232
    %2731 = vmatpush.bf16.msra.mxu0 %v2225
    %2732 = vmatpush.bf16.msra.mxu0 %v2218
    %2733 = vmatpush.bf16.msra.mxu0 %v2211
    %2734 = vmatmul.bf16.gmra.mxu0 %v1375
    %v2735 = vpop.f32.mrf.mxu0
    %v2736 = vadd.f32 %v2723, %v2735
    %v2737 = vpop.f32.mrf.mxu0
    %2738 = vdwg.mxu0
    %2739 = vmatpush.bf16.msra.mxu0 %v2316
    %2740 = vmatpush.bf16.msra.mxu0 %v2309
    %2741 = vmatpush.bf16.msra.mxu0 %v2302
    %2742 = vmatpush.bf16.msra.mxu0 %v2295
    %2743 = vmatpush.bf16.msra.mxu0 %v2288
    %2744 = vmatpush.bf16.msra.mxu0 %v2281
    %2745 = vmatpush.bf16.msra.mxu0 %v2274
    %2746 = vmatpush.bf16.msra.mxu0 %v2267
    %2747 = vmatmul.bf16.gmra.mxu0 %v1376
    %v2748 = vpop.f32.mrf.mxu0
    %v2749 = vadd.f32 %v2736, %v2748
    %v2750 = vpop.f32.mrf.mxu0
    %2751 = vdwg.mxu0
    %2752 = vmatpush.bf16.msra.mxu0 %v2149
    %2753 = vmatpush.bf16.msra.mxu0 %v2142
    %2754 = vmatpush.bf16.msra.mxu0 %v2135
    %2755 = vmatpush.bf16.msra.mxu0 %v2128
    %2756 = vmatpush.bf16.msra.mxu0 %v2121
    %2757 = vmatpush.bf16.msra.mxu0 %v2114
    %2758 = vmatpush.bf16.msra.mxu0 %v2107
    %2759 = vmatpush.bf16.msra.mxu0 %v2100
    %2760 = vmatmul.bf16.gmra.mxu0 %v1373
    %v2761 = vpop.f32.mrf.mxu0
    %v2762 = vadd.f32 %v1382, %v2761
    %v2763 = vpop.f32.mrf.mxu0
    %2764 = vdwg.mxu0
    %2765 = vmatpush.bf16.msra.mxu0 %v2205
    %2766 = vmatpush.bf16.msra.mxu0 %v2198
    %2767 = vmatpush.bf16.msra.mxu0 %v2191
    %2768 = vmatpush.bf16.msra.mxu0 %v2184
    %2769 = vmatpush.bf16.msra.mxu0 %v2177
    %2770 = vmatpush.bf16.msra.mxu0 %v2170
    %2771 = vmatpush.bf16.msra.mxu0 %v2163
    %2772 = vmatpush.bf16.msra.mxu0 %v2156
    %2773 = vmatmul.bf16.gmra.mxu0 %v1374
    %v2774 = vpop.f32.mrf.mxu0
    %v2775 = vadd.f32 %v2762, %v2774
    %v2776 = vpop.f32.mrf.mxu0
    %2777 = vdwg.mxu0
    %2778 = vmatpush.bf16.msra.mxu0 %v2261
    %2779 = vmatpush.bf16.msra.mxu0 %v2254
    %2780 = vmatpush.bf16.msra.mxu0 %v2247
    %2781 = vmatpush.bf16.msra.mxu0 %v2240
    %2782 = vmatpush.bf16.msra.mxu0 %v2233
    %2783 = vmatpush.bf16.msra.mxu0 %v2226
    %2784 = vmatpush.bf16.msra.mxu0 %v2219
    %2785 = vmatpush.bf16.msra.mxu0 %v2212
    %2786 = vmatmul.bf16.gmra.mxu0 %v1375
    %v2787 = vpop.f32.mrf.mxu0
    %v2788 = vadd.f32 %v2775, %v2787
    %v2789 = vpop.f32.mrf.mxu0
    %2790 = vdwg.mxu0
    %2791 = vmatpush.bf16.msra.mxu0 %v2317
    %2792 = vmatpush.bf16.msra.mxu0 %v2310
    %2793 = vmatpush.bf16.msra.mxu0 %v2303
    %2794 = vmatpush.bf16.msra.mxu0 %v2296
    %2795 = vmatpush.bf16.msra.mxu0 %v2289
    %2796 = vmatpush.bf16.msra.mxu0 %v2282
    %2797 = vmatpush.bf16.msra.mxu0 %v2275
    %2798 = vmatpush.bf16.msra.mxu0 %v2268
    %2799 = vmatmul.bf16.gmra.mxu0 %v1376
    %v2800 = vpop.f32.mrf.mxu0
    %v2801 = vadd.f32 %v2788, %v2800
    %v2802 = vpop.f32.mrf.mxu0
    %2803 = vdwg.mxu0
    %2804 = vmatpush.bf16.msra.mxu0 %v2150
    %2805 = vmatpush.bf16.msra.mxu0 %v2143
    %2806 = vmatpush.bf16.msra.mxu0 %v2136
    %2807 = vmatpush.bf16.msra.mxu0 %v2129
    %2808 = vmatpush.bf16.msra.mxu0 %v2122
    %2809 = vmatpush.bf16.msra.mxu0 %v2115
    %2810 = vmatpush.bf16.msra.mxu0 %v2108
    %2811 = vmatpush.bf16.msra.mxu0 %v2101
    %2812 = vmatmul.bf16.gmra.mxu0 %v1373
    %v2813 = vpop.f32.mrf.mxu0
    %v2814 = vadd.f32 %v1383, %v2813
    %v2815 = vpop.f32.mrf.mxu0
    %2816 = vdwg.mxu0
    %2817 = vmatpush.bf16.msra.mxu0 %v2206
    %2818 = vmatpush.bf16.msra.mxu0 %v2199
    %2819 = vmatpush.bf16.msra.mxu0 %v2192
    %2820 = vmatpush.bf16.msra.mxu0 %v2185
    %2821 = vmatpush.bf16.msra.mxu0 %v2178
    %2822 = vmatpush.bf16.msra.mxu0 %v2171
    %2823 = vmatpush.bf16.msra.mxu0 %v2164
    %2824 = vmatpush.bf16.msra.mxu0 %v2157
    %2825 = vmatmul.bf16.gmra.mxu0 %v1374
    %v2826 = vpop.f32.mrf.mxu0
    %v2827 = vadd.f32 %v2814, %v2826
    %v2828 = vpop.f32.mrf.mxu0
    %2829 = vdwg.mxu0
    %2830 = vmatpush.bf16.msra.mxu0 %v2262
    %2831 = vmatpush.bf16.msra.mxu0 %v2255
    %2832 = vmatpush.bf16.msra.mxu0 %v2248
    %2833 = vmatpush.bf16.msra.mxu0 %v2241
    %2834 = vmatpush.bf16.msra.mxu0 %v2234
    %2835 = vmatpush.bf16.msra.mxu0 %v2227
    %2836 = vmatpush.bf16.msra.mxu0 %v2220
    %2837 = vmatpush.bf16.msra.mxu0 %v2213
    %2838 = vmatmul.bf16.gmra.mxu0 %v1375
    %v2839 = vpop.f32.mrf.mxu0
    %v2840 = vadd.f32 %v2827, %v2839
    %v2841 = vpop.f32.mrf.mxu0
    %2842 = vdwg.mxu0
    %2843 = vmatpush.bf16.msra.mxu0 %v2318
    %2844 = vmatpush.bf16.msra.mxu0 %v2311
    %2845 = vmatpush.bf16.msra.mxu0 %v2304
    %2846 = vmatpush.bf16.msra.mxu0 %v2297
    %2847 = vmatpush.bf16.msra.mxu0 %v2290
    %2848 = vmatpush.bf16.msra.mxu0 %v2283
    %2849 = vmatpush.bf16.msra.mxu0 %v2276
    %2850 = vmatpush.bf16.msra.mxu0 %v2269
    %2851 = vmatmul.bf16.gmra.mxu0 %v1376
    %v2852 = vpop.f32.mrf.mxu0
    %v2853 = vadd.f32 %v2840, %v2852
    %v2854 = vpop.f32.mrf.mxu0
    %2855 = vdwg.mxu0
    %2856 = vmatpush.bf16.msra.mxu0 %v2151
    %2857 = vmatpush.bf16.msra.mxu0 %v2144
    %2858 = vmatpush.bf16.msra.mxu0 %v2137
    %2859 = vmatpush.bf16.msra.mxu0 %v2130
    %2860 = vmatpush.bf16.msra.mxu0 %v2123
    %2861 = vmatpush.bf16.msra.mxu0 %v2116
    %2862 = vmatpush.bf16.msra.mxu0 %v2109
    %2863 = vmatpush.bf16.msra.mxu0 %v2102
    %2864 = vmatmul.bf16.gmra.mxu0 %v1373
    %v2865 = vpop.f32.mrf.mxu0
    %v2866 = vadd.f32 %v1384, %v2865
    %v2867 = vpop.f32.mrf.mxu0
    %2868 = vdwg.mxu0
    %2869 = vmatpush.bf16.msra.mxu0 %v2207
    %2870 = vmatpush.bf16.msra.mxu0 %v2200
    %2871 = vmatpush.bf16.msra.mxu0 %v2193
    %2872 = vmatpush.bf16.msra.mxu0 %v2186
    %2873 = vmatpush.bf16.msra.mxu0 %v2179
    %2874 = vmatpush.bf16.msra.mxu0 %v2172
    %2875 = vmatpush.bf16.msra.mxu0 %v2165
    %2876 = vmatpush.bf16.msra.mxu0 %v2158
    %2877 = vmatmul.bf16.gmra.mxu0 %v1374
    %v2878 = vpop.f32.mrf.mxu0
    %v2879 = vadd.f32 %v2866, %v2878
    %v2880 = vpop.f32.mrf.mxu0
    %2881 = vdwg.mxu0
    %2882 = vmatpush.bf16.msra.mxu0 %v2263
    %2883 = vmatpush.bf16.msra.mxu0 %v2256
    %2884 = vmatpush.bf16.msra.mxu0 %v2249
    %2885 = vmatpush.bf16.msra.mxu0 %v2242
    %2886 = vmatpush.bf16.msra.mxu0 %v2235
    %2887 = vmatpush.bf16.msra.mxu0 %v2228
    %2888 = vmatpush.bf16.msra.mxu0 %v2221
    %2889 = vmatpush.bf16.msra.mxu0 %v2214
    %2890 = vmatmul.bf16.gmra.mxu0 %v1375
    %v2891 = vpop.f32.mrf.mxu0
    %v2892 = vadd.f32 %v2879, %v2891
    %v2893 = vpop.f32.mrf.mxu0
    %2894 = vdwg.mxu0
    %2895 = vmatpush.bf16.msra.mxu0 %v2319
    %2896 = vmatpush.bf16.msra.mxu0 %v2312
    %2897 = vmatpush.bf16.msra.mxu0 %v2305
    %2898 = vmatpush.bf16.msra.mxu0 %v2298
    %2899 = vmatpush.bf16.msra.mxu0 %v2291
    %2900 = vmatpush.bf16.msra.mxu0 %v2284
    %2901 = vmatpush.bf16.msra.mxu0 %v2277
    %2902 = vmatpush.bf16.msra.mxu0 %v2270
    %2903 = vmatmul.bf16.gmra.mxu0 %v1376
    %v2904 = vpop.f32.mrf.mxu0
    %v2905 = vadd.f32 %v2892, %v2904
    %v2906 = vpop.f32.mrf.mxu0
    %2907 = vdwg.mxu0
    %v2908 = vadd.f32 %v2593, %v2645
    %v2909 = vadd.f32 %v2908, %v2697
    %v2910 = vadd.f32 %v2909, %v2749
    %v2911 = vadd.f32 %v2910, %v2801
    %v2912 = vadd.f32 %v2911, %v2853
    %v2913 = vadd.f32 %v2912, %v2905
    %2914 = vadd.xlane.f32.xlu0 %v2913
    %v2915 = vpop.xlane.xlu0 %2914
    %v2916 = vmul.f32 %v2915, 0.00125
    %v2917 = vmul.f32 %v2593, %v2593
    %v2918 = vmul.f32 %v2645, %v2645
    %v2919 = vmul.f32 %v2697, %v2697
    %v2920 = vmul.f32 %v2749, %v2749
    %v2921 = vmul.f32 %v2801, %v2801
    %v2922 = vmul.f32 %v2853, %v2853
    %v2923 = vmul.f32 %v2905, %v2905
    %v2924 = vadd.f32 %v2917, %v2918
    %v2925 = vadd.f32 %v2924, %v2919
    %v2926 = vadd.f32 %v2925, %v2920
    %v2927 = vadd.f32 %v2926, %v2921
    %v2928 = vadd.f32 %v2927, %v2922
    %v2929 = vadd.f32 %v2928, %v2923
    %2930 = vadd.xlane.f32.xlu0 %v2929
    %v2931 = vpop.xlane.xlu0 %2930
    %v2932 = vmul.f32 %v2931, 0.00125
    %v2933 = vmul.f32 %v2916, %v2916
    %v2934 = vsub.f32 %v2932, %v2933
    %v2935 = vsub.f32 %v2593, %v2916
    %v2936 = vsub.f32 %v2645, %v2916
    %v2937 = vsub.f32 %v2697, %v2916
    %v2938 = vsub.f32 %v2749, %v2916
    %v2939 = vsub.f32 %v2801, %v2916
    %v2940 = vsub.f32 %v2853, %v2916
    %v2941 = vsub.f32 %v2905, %v2916
    %v2942 = vadd.f32 %v2934, 1e-05
    %v2943 = vrsqrt.pop %v2942
    %v2944 = vmul.f32 %v2943, %v2942
    %v2945 = vmul.f32 %v2944, %v2943
    %v2946 = vmul.f32 0.5, %v2945
    %v2947 = vsub.f32 1.5, %v2946
    %v2948 = vmul.f32 %v2943, %v2947
    %vm2949 = vweird.f32 %v2942
    %vm2950 = vweird.f32 %v2943
    %vm2951 = vmor %vm2949, %vm2950
    %v2952 = vsel %vm2951, %v2943, %v2948
    %v2953 = vmul.f32 %v2935, %v2952
    %v2954 = vmul.f32 %v2936, %v2952
    %v2955 = vmul.f32 %v2937, %v2952
    %v2956 = vmul.f32 %v2938, %v2952
    %v2957 = vmul.f32 %v2939, %v2952
    %v2958 = vmul.f32 %v2940, %v2952
    %v2959 = vmul.f32 %v2941, %v2952
    %s2960 = scalar_lea.vmem [#allocation10], 60
    %v2961 = vld [vmem:[%s2960] ss:$8 sm:$0xf]
    %v2962 = vld [vmem:[%s2960] ss:$8 sm:$0xf0]
    %v2963 = vor.u32 %v2961, %v2962
    %s2964 = scalar_lea.vmem [#allocation10], 61
    %v2965 = vld [vmem:[%s2964] ss:$8 sm:$0xf]
    %v2966 = vld [vmem:[%s2964] ss:$8 sm:$0xf0]
    %v2967 = vor.u32 %v2965, %v2966
    %v2969 = vperm.slane %v2963, 0
    %v2970 = vperm.slane %v2963, 1
    %v2971 = vperm.slane %v2963, 2
    %v2972 = vperm.slane %v2963, 3
    %v2973 = vperm.slane %v2963, 4
    %v2974 = vperm.slane %v2963, 5
    %v2975 = vperm.slane %v2963, 6
    %v2983 = vmul.f32 %v2953, %v2969
    %v2984 = vmul.f32 %v2954, %v2970
    %v2985 = vmul.f32 %v2955, %v2971
    %v2986 = vmul.f32 %v2956, %v2972
    %v2987 = vmul.f32 %v2957, %v2973
    %v2988 = vmul.f32 %v2958, %v2974
    %v2989 = vmul.f32 %v2959, %v2975
    %v2991 = vperm.slane %v2967, 0
    %v2992 = vperm.slane %v2967, 1
    %v2993 = vperm.slane %v2967, 2
    %v2994 = vperm.slane %v2967, 3
    %v2995 = vperm.slane %v2967, 4
    %v2996 = vperm.slane %v2967, 5
    %v2997 = vperm.slane %v2967, 6
    %v3005 = vadd.f32 %v2983, %v2991
    %v3006 = vadd.f32 %v2984, %v2992
    %v3007 = vadd.f32 %v2985, %v2993
    %v3008 = vadd.f32 %v2986, %v2994
    %v3009 = vadd.f32 %v2987, %v2995
    %v3010 = vadd.f32 %v2988, %v2996
    %v3011 = vadd.f32 %v2989, %v2997
    %v3012 = vxor.u32 %v3005, 2147483648
    %v3013 = vxor.u32 %v3006, 2147483648
    %v3014 = vxor.u32 %v3007, 2147483648
    %v3015 = vxor.u32 %v3008, 2147483648
    %v3016 = vxor.u32 %v3009, 2147483648
    %v3017 = vxor.u32 %v3010, 2147483648
    %v3018 = vxor.u32 %v3011, 2147483648
    %v3019 = vmul.f32 %v3012, 1.442695
    %v3020 = vpow.pop %v3019
    %v3021 = vmul.f32 %v3013, 1.442695
    %v3022 = vpow.pop %v3021
    %v3023 = vmul.f32 %v3014, 1.442695
    %v3024 = vpow.pop %v3023
    %v3025 = vmul.f32 %v3015, 1.442695
    %v3026 = vpow.pop %v3025
    %v3027 = vmul.f32 %v3016, 1.442695
    %v3028 = vpow.pop %v3027
    %v3029 = vmul.f32 %v3017, 1.442695
    %v3030 = vpow.pop %v3029
    %v3031 = vmul.f32 %v3018, 1.442695
    %v3032 = vpow.pop %v3031
    %v3033 = vadd.f32 %v3020, 1.0
    %v3034 = vadd.f32 %v3022, 1.0
    %v3035 = vadd.f32 %v3024, 1.0
    %v3036 = vadd.f32 %v3026, 1.0
    %v3037 = vadd.f32 %v3028, 1.0
    %v3038 = vadd.f32 %v3030, 1.0
    %v3039 = vadd.f32 %v3032, 1.0
    %v3040 = vrcp.pop %v3033
    %v3041 = vmul.f32 %v3033, %v3040
    %v3042 = vsub.f32 1.0, %v3041
    %v3043 = vmul.f32 %v3040, %v3042
    %v3044 = vadd.f32 %v3040, %v3043
    %vm3045 = vweird.f32 %v3033
    %vm3046 = vweird.f32 %v3040
    %vm3047 = vmor %vm3045, %vm3046
    %v3048 = vsel %vm3047, %v3040, %v3044
    %v3049 = vand.u32 2147483647, %v3033
    %vm3050 = vcmp.eq.f32.partialorder %v3049, 8.507059e+37
    %v3051 = vand.u32 %v3033, 2147483648
    %v3052 = vor.u32 1.1754944e-38, %v3051
    %v3053 = vsel %vm3050, %v3052, %v3048
    %v3054 = vmul.f32 1.0, %v3053
    %v3055 = vrcp.pop %v3034
    %v3056 = vmul.f32 %v3034, %v3055
    %v3057 = vsub.f32 1.0, %v3056
    %v3058 = vmul.f32 %v3055, %v3057
    %v3059 = vadd.f32 %v3055, %v3058
    %vm3060 = vweird.f32 %v3034
    %vm3061 = vweird.f32 %v3055
    %vm3062 = vmor %vm3060, %vm3061
    %v3063 = vsel %vm3062, %v3055, %v3059
    %v3064 = vand.u32 2147483647, %v3034
    %vm3065 = vcmp.eq.f32.partialorder %v3064, 8.507059e+37
    %v3066 = vand.u32 %v3034, 2147483648
    %v3067 = vor.u32 1.1754944e-38, %v3066
    %v3068 = vsel %vm3065, %v3067, %v3063
    %v3069 = vmul.f32 1.0, %v3068
    %v3070 = vrcp.pop %v3035
    %v3071 = vmul.f32 %v3035, %v3070
    %v3072 = vsub.f32 1.0, %v3071
    %v3073 = vmul.f32 %v3070, %v3072
    %v3074 = vadd.f32 %v3070, %v3073
    %vm3075 = vweird.f32 %v3035
    %vm3076 = vweird.f32 %v3070
    %vm3077 = vmor %vm3075, %vm3076
    %v3078 = vsel %vm3077, %v3070, %v3074
    %v3079 = vand.u32 2147483647, %v3035
    %vm3080 = vcmp.eq.f32.partialorder %v3079, 8.507059e+37
    %v3081 = vand.u32 %v3035, 2147483648
    %v3082 = vor.u32 1.1754944e-38, %v3081
    %v3083 = vsel %vm3080, %v3082, %v3078
    %v3084 = vmul.f32 1.0, %v3083
    %v3085 = vrcp.pop %v3036
    %v3086 = vmul.f32 %v3036, %v3085
    %v3087 = vsub.f32 1.0, %v3086
    %v3088 = vmul.f32 %v3085, %v3087
    %v3089 = vadd.f32 %v3085, %v3088
    %vm3090 = vweird.f32 %v3036
    %vm3091 = vweird.f32 %v3085
    %vm3092 = vmor %vm3090, %vm3091
    %v3093 = vsel %vm3092, %v3085, %v3089
    %v3094 = vand.u32 2147483647, %v3036
    %vm3095 = vcmp.eq.f32.partialorder %v3094, 8.507059e+37
    %v3096 = vand.u32 %v3036, 2147483648
    %v3097 = vor.u32 1.1754944e-38, %v3096
    %v3098 = vsel %vm3095, %v3097, %v3093
    %v3099 = vmul.f32 1.0, %v3098
    %v3100 = vrcp.pop %v3037
    %v3101 = vmul.f32 %v3037, %v3100
    %v3102 = vsub.f32 1.0, %v3101
    %v3103 = vmul.f32 %v3100, %v3102
    %v3104 = vadd.f32 %v3100, %v3103
    %vm3105 = vweird.f32 %v3037
    %vm3106 = vweird.f32 %v3100
    %vm3107 = vmor %vm3105, %vm3106
    %v3108 = vsel %vm3107, %v3100, %v3104
    %v3109 = vand.u32 2147483647, %v3037
    %vm3110 = vcmp.eq.f32.partialorder %v3109, 8.507059e+37
    %v3111 = vand.u32 %v3037, 2147483648
    %v3112 = vor.u32 1.1754944e-38, %v3111
    %v3113 = vsel %vm3110, %v3112, %v3108
    %v3114 = vmul.f32 1.0, %v3113
    %v3115 = vrcp.pop %v3038
    %v3116 = vmul.f32 %v3038, %v3115
    %v3117 = vsub.f32 1.0, %v3116
    %v3118 = vmul.f32 %v3115, %v3117
    %v3119 = vadd.f32 %v3115, %v3118
    %vm3120 = vweird.f32 %v3038
    %vm3121 = vweird.f32 %v3115
    %vm3122 = vmor %vm3120, %vm3121
    %v3123 = vsel %vm3122, %v3115, %v3119
    %v3124 = vand.u32 2147483647, %v3038
    %vm3125 = vcmp.eq.f32.partialorder %v3124, 8.507059e+37
    %v3126 = vand.u32 %v3038, 2147483648
    %v3127 = vor.u32 1.1754944e-38, %v3126
    %v3128 = vsel %vm3125, %v3127, %v3123
    %v3129 = vmul.f32 1.0, %v3128
    %v3130 = vrcp.pop %v3039
    %v3131 = vmul.f32 %v3039, %v3130
    %v3132 = vsub.f32 1.0, %v3131
    %v3133 = vmul.f32 %v3130, %v3132
    %v3134 = vadd.f32 %v3130, %v3133
    %vm3135 = vweird.f32 %v3039
    %vm3136 = vweird.f32 %v3130
    %vm3137 = vmor %vm3135, %vm3136
    %v3138 = vsel %vm3137, %v3130, %v3134
    %v3139 = vand.u32 2147483647, %v3039
    %vm3140 = vcmp.eq.f32.partialorder %v3139, 8.507059e+37
    %v3141 = vand.u32 %v3039, 2147483648
    %v3142 = vor.u32 1.1754944e-38, %v3141
    %v3143 = vsel %vm3140, %v3142, %v3138
    %v3144 = vmul.f32 1.0, %v3143
    %v3145 = vmul.f32 %v3005, %v3054
    %v3146 = vmul.f32 %v3006, %v3069
    %v3147 = vmul.f32 %v3007, %v3084
    %v3148 = vmul.f32 %v3008, %v3099
    %v3149 = vmul.f32 %v3009, %v3114
    %v3150 = vmul.f32 %v3010, %v3129
    %v3151 = vmul.f32 %v3011, %v3144
    %v3152 = vld [vmem:[#allocation8] sm:$0xff]
    %v3153 = vld [vmem:[#allocation8 + $0x8] sm:$0xff]
    %v3154 = vld [vmem:[#allocation8 + $0x10] sm:$0xff]
    %v3155 = vld [vmem:[#allocation8 + $0x18] sm:$0xf]
    %v3156 = vld [vmem:[#allocation8 + $0x2c] sm:$0xff]
    %v3157 = vld [vmem:[#allocation8 + $0x34] sm:$0xff]
    %v3158 = vld [vmem:[#allocation8 + $0x3c] sm:$0xff]
    %v3159 = vld [vmem:[#allocation8 + $0x44] sm:$0xf]
    %v3160 = vld [vmem:[#allocation8 + $0x58] sm:$0xff]
    %v3161 = vld [vmem:[#allocation8 + $0x60] sm:$0xff]
    %v3162 = vld [vmem:[#allocation8 + $0x68] sm:$0xff]
    %v3163 = vld [vmem:[#allocation8 + $0x70] sm:$0xf]
    %v3164 = vld [vmem:[#allocation8 + $0x84] sm:$0xff]
    %v3165 = vld [vmem:[#allocation8 + $0x8c] sm:$0xff]
    %v3166 = vld [vmem:[#allocation8 + $0x94] sm:$0xff]
    %v3167 = vld [vmem:[#allocation8 + $0x9c] sm:$0xf]
    %v3168 = vld [vmem:[#allocation8 + $0xb0] sm:$0xff]
    %v3169 = vld [vmem:[#allocation8 + $0xb8] sm:$0xff]
    %v3170 = vld [vmem:[#allocation8 + $0xc0] sm:$0xff]
    %v3171 = vld [vmem:[#allocation8 + $0xc8] sm:$0xf]
    %v3172 = vld [vmem:[#allocation8 + $0xdc] sm:$0xff]
    %v3173 = vld [vmem:[#allocation8 + $0xe4] sm:$0xff]
    %v3174 = vld [vmem:[#allocation8 + $0xec] sm:$0xff]
    %v3175 = vld [vmem:[#allocation8 + $0xf4] sm:$0xf]
    %v3176 = vld [vmem:[#allocation8 + $0x108] sm:$0xff]
    %v3177 = vld [vmem:[#allocation8 + $0x110] sm:$0xff]
    %v3178 = vld [vmem:[#allocation8 + $0x118] sm:$0xff]
    %v3179 = vld [vmem:[#allocation8 + $0x120] sm:$0xf]
    %v3180 = vld [vmem:[#allocation8 + $0x134] sm:$0xff]
    %v3181 = vld [vmem:[#allocation8 + $0x13c] sm:$0xff]
    %v3182 = vld [vmem:[#allocation8 + $0x144] sm:$0xff]
    %v3183 = vld [vmem:[#allocation8 + $0x14c] sm:$0xf]
    %v3184 = vld [vmem:[#allocation8 + $0x160] sm:$0xff]
    %v3185 = vld [vmem:[#allocation8 + $0x168] sm:$0xff]
    %v3186 = vld [vmem:[#allocation8 + $0x170] sm:$0xff]
    %v3187 = vld [vmem:[#allocation8 + $0x178] sm:$0xf]
    %v3188 = vld [vmem:[#allocation8 + $0x18c] sm:$0xff]
    %v3189 = vld [vmem:[#allocation8 + $0x194] sm:$0xff]
    %v3190 = vld [vmem:[#allocation8 + $0x19c] sm:$0xff]
    %v3191 = vld [vmem:[#allocation8 + $0x1a4] sm:$0xf]
    %v3192 = vld [vmem:[#allocation8 + $0x1b8] sm:$0xff]
    %v3193 = vld [vmem:[#allocation8 + $0x1c0] sm:$0xff]
    %v3194 = vld [vmem:[#allocation8 + $0x1c8] sm:$0xff]
    %v3195 = vld [vmem:[#allocation8 + $0x1d0] sm:$0xf]
    %v3196 = vld [vmem:[#allocation8 + $0x1e4] sm:$0xff]
    %v3197 = vld [vmem:[#allocation8 + $0x1ec] sm:$0xff]
    %v3198 = vld [vmem:[#allocation8 + $0x1f4] sm:$0xff]
    %v3199 = vld [vmem:[#allocation8 + $0x1fc] sm:$0xf]
    %v3200 = vld [vmem:[#allocation8 + $0x210] sm:$0xff]
    %v3201 = vld [vmem:[#allocation8 + $0x218] sm:$0xff]
    %v3202 = vld [vmem:[#allocation8 + $0x220] sm:$0xff]
    %v3203 = vld [vmem:[#allocation8 + $0x228] sm:$0xf]
    %v3204 = vld [vmem:[#allocation8 + $0x23c] sm:$0xff]
    %v3205 = vld [vmem:[#allocation8 + $0x244] sm:$0xff]
    %v3206 = vld [vmem:[#allocation8 + $0x24c] sm:$0xff]
    %v3207 = vld [vmem:[#allocation8 + $0x254] sm:$0xf]
    %v3208 = vld [vmem:[#allocation8 + $0x268] sm:$0xff]
    %v3209 = vld [vmem:[#allocation8 + $0x270] sm:$0xff]
    %v3210 = vld [vmem:[#allocation8 + $0x278] sm:$0xff]
    %v3211 = vld [vmem:[#allocation8 + $0x280] sm:$0xf]
    %v3212 = vld [vmem:[#allocation8 + $0x294] sm:$0xff]
    %v3213 = vld [vmem:[#allocation8 + $0x29c] sm:$0xff]
    %v3214 = vld [vmem:[#allocation8 + $0x2a4] sm:$0xff]
    %v3215 = vld [vmem:[#allocation8 + $0x2ac] sm:$0xf]
    %v3216 = vld [vmem:[#allocation8 + $0x2c0] sm:$0xff]
    %v3217 = vld [vmem:[#allocation8 + $0x2c8] sm:$0xff]
    %v3218 = vld [vmem:[#allocation8 + $0x2d0] sm:$0xff]
    %v3219 = vld [vmem:[#allocation8 + $0x2d8] sm:$0xf]
    %v3220 = vld [vmem:[#allocation8 + $0x2ec] sm:$0xff]
    %v3221 = vld [vmem:[#allocation8 + $0x2f4] sm:$0xff]
    %v3222 = vld [vmem:[#allocation8 + $0x2fc] sm:$0xff]
    %v3223 = vld [vmem:[#allocation8 + $0x304] sm:$0xf]
    %v3224 = vld [vmem:[#allocation8 + $0x318] sm:$0xff]
    %v3225 = vld [vmem:[#allocation8 + $0x320] sm:$0xff]
    %v3226 = vld [vmem:[#allocation8 + $0x328] sm:$0xff]
    %v3227 = vld [vmem:[#allocation8 + $0x330] sm:$0xf]
    %v3228 = vld [vmem:[#allocation8 + $0x344] sm:$0xff]
    %v3229 = vld [vmem:[#allocation8 + $0x34c] sm:$0xff]
    %v3230 = vld [vmem:[#allocation8 + $0x354] sm:$0xff]
    %v3231 = vld [vmem:[#allocation8 + $0x35c] sm:$0xf]
    %v3232 = vld [vmem:[#allocation8 + $0x370] sm:$0xff]
    %v3233 = vld [vmem:[#allocation8 + $0x378] sm:$0xff]
    %v3234 = vld [vmem:[#allocation8 + $0x380] sm:$0xff]
    %v3235 = vld [vmem:[#allocation8 + $0x388] sm:$0xf]
    %v3236 = vld [vmem:[#allocation8 + $0x39c] sm:$0xff]
    %v3237 = vld [vmem:[#allocation8 + $0x3a4] sm:$0xff]
    %v3238 = vld [vmem:[#allocation8 + $0x3ac] sm:$0xff]
    %v3239 = vld [vmem:[#allocation8 + $0x3b4] sm:$0xf]
    %v3240 = vld [vmem:[#allocation8 + $0x3c8] sm:$0xff]
    %v3241 = vld [vmem:[#allocation8 + $0x3d0] sm:$0xff]
    %v3242 = vld [vmem:[#allocation8 + $0x3d8] sm:$0xff]
    %v3243 = vld [vmem:[#allocation8 + $0x3e0] sm:$0xf]
    %v3244 = vld [vmem:[#allocation8 + $0x3f4] sm:$0xff]
    %v3245 = vld [vmem:[#allocation8 + $0x3fc] sm:$0xff]
    %v3246 = vld [vmem:[#allocation8 + $0x404] sm:$0xff]
    %v3247 = vld [vmem:[#allocation8 + $0x40c] sm:$0xf]
    %v3248 = vld [vmem:[#allocation8 + $0x420] sm:$0xff]
    %v3249 = vld [vmem:[#allocation8 + $0x428] sm:$0xff]
    %v3250 = vld [vmem:[#allocation8 + $0x430] sm:$0xff]
    %v3251 = vld [vmem:[#allocation8 + $0x438] sm:$0xf]
    %v3252 = vld [vmem:[#allocation8 + $0x44c] sm:$0xff]
    %v3253 = vld [vmem:[#allocation8 + $0x454] sm:$0xff]
    %v3254 = vld [vmem:[#allocation8 + $0x45c] sm:$0xff]
    %v3255 = vld [vmem:[#allocation8 + $0x464] sm:$0xf]
    %v3256 = vld [vmem:[#allocation8 + $0x478] sm:$0xff]
    %v3257 = vld [vmem:[#allocation8 + $0x480] sm:$0xff]
    %v3258 = vld [vmem:[#allocation8 + $0x488] sm:$0xff]
    %v3259 = vld [vmem:[#allocation8 + $0x490] sm:$0xf]
    %v3260 = vld [vmem:[#allocation8 + $0x4a4] sm:$0xff]
    %v3261 = vld [vmem:[#allocation8 + $0x4ac] sm:$0xff]
    %v3262 = vld [vmem:[#allocation8 + $0x4b4] sm:$0xff]
    %v3263 = vld [vmem:[#allocation8 + $0x4bc] sm:$0xf]
    %v3264 = vld [vmem:[#allocation8 + $0x4d0] sm:$0xff]
    %v3265 = vld [vmem:[#allocation8 + $0x4d8] sm:$0xff]
    %v3266 = vld [vmem:[#allocation8 + $0x4e0] sm:$0xff]
    %v3267 = vld [vmem:[#allocation8 + $0x4e8] sm:$0xf]
    %v3268 = vld [vmem:[#allocation8 + $0x4fc] sm:$0xff]
    %v3269 = vld [vmem:[#allocation8 + $0x504] sm:$0xff]
    %v3270 = vld [vmem:[#allocation8 + $0x50c] sm:$0xff]
    %v3271 = vld [vmem:[#allocation8 + $0x514] sm:$0xf]
    %v3272 = vld [vmem:[#allocation8 + $0x528] sm:$0xff]
    %v3273 = vld [vmem:[#allocation8 + $0x530] sm:$0xff]
    %v3274 = vld [vmem:[#allocation8 + $0x538] sm:$0xff]
    %v3275 = vld [vmem:[#allocation8 + $0x540] sm:$0xf]
    %v3276 = vld [vmem:[#allocation8 + $0x554] sm:$0xff]
    %v3277 = vld [vmem:[#allocation8 + $0x55c] sm:$0xff]
    %v3278 = vld [vmem:[#allocation8 + $0x564] sm:$0xff]
    %v3279 = vld [vmem:[#allocation8 + $0x56c] sm:$0xf]
    %v3280 = vld [vmem:[#allocation8 + $0x580] sm:$0xff]
    %v3281 = vld [vmem:[#allocation8 + $0x588] sm:$0xff]
    %v3282 = vld [vmem:[#allocation8 + $0x590] sm:$0xff]
    %v3283 = vld [vmem:[#allocation8 + $0x598] sm:$0xf]
    %v3284 = vld [vmem:[#allocation8 + $0x5ac] sm:$0xff]
    %v3285 = vld [vmem:[#allocation8 + $0x5b4] sm:$0xff]
    %v3286 = vld [vmem:[#allocation8 + $0x5bc] sm:$0xff]
    %v3287 = vld [vmem:[#allocation8 + $0x5c4] sm:$0xf]
    %v3288 = vld [vmem:[#allocation8 + $0x5d8] sm:$0xff]
    %v3289 = vld [vmem:[#allocation8 + $0x5e0] sm:$0xff]
    %v3290 = vld [vmem:[#allocation8 + $0x5e8] sm:$0xff]
    %v3291 = vld [vmem:[#allocation8 + $0x5f0] sm:$0xf]
    %v3292 = vld [vmem:[#allocation8 + $0x604] sm:$0xff]
    %v3293 = vld [vmem:[#allocation8 + $0x60c] sm:$0xff]
    %v3294 = vld [vmem:[#allocation8 + $0x614] sm:$0xff]
    %v3295 = vld [vmem:[#allocation8 + $0x61c] sm:$0xf]
    %v3296 = vld [vmem:[#allocation8 + $0x630] sm:$0xff]
    %v3297 = vld [vmem:[#allocation8 + $0x638] sm:$0xff]
    %v3298 = vld [vmem:[#allocation8 + $0x640] sm:$0xff]
    %v3299 = vld [vmem:[#allocation8 + $0x648] sm:$0xf]
    %v3300 = vld [vmem:[#allocation8 + $0x65c] sm:$0xff]
    %v3301 = vld [vmem:[#allocation8 + $0x664] sm:$0xff]
    %v3302 = vld [vmem:[#allocation8 + $0x66c] sm:$0xff]
    %v3303 = vld [vmem:[#allocation8 + $0x674] sm:$0xf]
    %v3304 = vld [vmem:[#allocation8 + $0x688] sm:$0xff]
    %v3305 = vld [vmem:[#allocation8 + $0x690] sm:$0xff]
    %v3306 = vld [vmem:[#allocation8 + $0x698] sm:$0xff]
    %v3307 = vld [vmem:[#allocation8 + $0x6a0] sm:$0xf]
    %v3308 = vld [vmem:[#allocation8 + $0x6b4] sm:$0xff]
    %v3309 = vld [vmem:[#allocation8 + $0x6bc] sm:$0xff]
    %v3310 = vld [vmem:[#allocation8 + $0x6c4] sm:$0xff]
    %v3311 = vld [vmem:[#allocation8 + $0x6cc] sm:$0xf]
    %v3312 = vld [vmem:[#allocation8 + $0x6e0] sm:$0xff]
    %v3313 = vld [vmem:[#allocation8 + $0x6e8] sm:$0xff]
    %v3314 = vld [vmem:[#allocation8 + $0x6f0] sm:$0xff]
    %v3315 = vld [vmem:[#allocation8 + $0x6f8] sm:$0xf]
    %v3316 = vld [vmem:[#allocation8 + $0x70c] sm:$0xff]
    %v3317 = vld [vmem:[#allocation8 + $0x714] sm:$0xff]
    %v3318 = vld [vmem:[#allocation8 + $0x71c] sm:$0xff]
    %v3319 = vld [vmem:[#allocation8 + $0x724] sm:$0xf]
    %v3320 = vld [vmem:[#allocation8 + $0x738] sm:$0xff]
    %v3321 = vld [vmem:[#allocation8 + $0x740] sm:$0xff]
    %v3322 = vld [vmem:[#allocation8 + $0x748] sm:$0xff]
    %v3323 = vld [vmem:[#allocation8 + $0x750] sm:$0xf]
    %v3324 = vld [vmem:[#allocation8 + $0x764] sm:$0xff]
    %v3325 = vld [vmem:[#allocation8 + $0x76c] sm:$0xff]
    %v3326 = vld [vmem:[#allocation8 + $0x774] sm:$0xff]
    %v3327 = vld [vmem:[#allocation8 + $0x77c] sm:$0xf]
    %v3328 = vld [vmem:[#allocation8 + $0x790] sm:$0xff]
    %v3329 = vld [vmem:[#allocation8 + $0x798] sm:$0xff]
    %v3330 = vld [vmem:[#allocation8 + $0x7a0] sm:$0xff]
    %v3331 = vld [vmem:[#allocation8 + $0x7a8] sm:$0xf]
    %v3332 = vld [vmem:[#allocation8 + $0x7bc] sm:$0xff]
    %v3333 = vld [vmem:[#allocation8 + $0x7c4] sm:$0xff]
    %v3334 = vld [vmem:[#allocation8 + $0x7cc] sm:$0xff]
    %v3335 = vld [vmem:[#allocation8 + $0x7d4] sm:$0xf]
    %v3336 = vld [vmem:[#allocation8 + $0x7e8] sm:$0xff]
    %v3337 = vld [vmem:[#allocation8 + $0x7f0] sm:$0xff]
    %v3338 = vld [vmem:[#allocation8 + $0x7f8] sm:$0xff]
    %v3339 = vld [vmem:[#allocation8 + $0x800] sm:$0xf]
    %v3340 = vld [vmem:[#allocation8 + $0x814] sm:$0xff]
    %v3341 = vld [vmem:[#allocation8 + $0x81c] sm:$0xff]
    %v3342 = vld [vmem:[#allocation8 + $0x824] sm:$0xff]
    %v3343 = vld [vmem:[#allocation8 + $0x82c] sm:$0xf]
    %v3344 = vld [vmem:[#allocation8 + $0x840] sm:$0xff]
    %v3345 = vld [vmem:[#allocation8 + $0x848] sm:$0xff]
    %v3346 = vld [vmem:[#allocation8 + $0x850] sm:$0xff]
    %v3347 = vld [vmem:[#allocation8 + $0x858] sm:$0xf]
    %v3348 = vld [vmem:[#allocation8 + $0x86c] sm:$0xff]
    %v3349 = vld [vmem:[#allocation8 + $0x874] sm:$0xff]
    %v3350 = vld [vmem:[#allocation8 + $0x87c] sm:$0xff]
    %v3351 = vld [vmem:[#allocation8 + $0x884] sm:$0xf]
    %v3352 = vld [vmem:[#allocation8 + $0x898] sm:$0xff]
    %v3353 = vld [vmem:[#allocation8 + $0x8a0] sm:$0xff]
    %v3354 = vld [vmem:[#allocation8 + $0x8a8] sm:$0xff]
    %v3355 = vld [vmem:[#allocation8 + $0x8b0] sm:$0xf]
    %v3356 = vld [vmem:[#allocation8 + $0x8c4] sm:$0xff]
    %v3357 = vld [vmem:[#allocation8 + $0x8cc] sm:$0xff]
    %v3358 = vld [vmem:[#allocation8 + $0x8d4] sm:$0xff]
    %v3359 = vld [vmem:[#allocation8 + $0x8dc] sm:$0xf]
    %v3360 = vld [vmem:[#allocation8 + $0x8f0] sm:$0xff]
    %v3361 = vld [vmem:[#allocation8 + $0x8f8] sm:$0xff]
    %v3362 = vld [vmem:[#allocation8 + $0x900] sm:$0xff]
    %v3363 = vld [vmem:[#allocation8 + $0x908] sm:$0xf]
    %v3364 = vld [vmem:[#allocation8 + $0x91c] sm:$0xff]
    %v3365 = vld [vmem:[#allocation8 + $0x924] sm:$0xff]
    %v3366 = vld [vmem:[#allocation8 + $0x92c] sm:$0xff]
    %v3367 = vld [vmem:[#allocation8 + $0x934] sm:$0xf]
    %v3368 = vld [vmem:[#allocation8 + $0x948] sm:$0xff]
    %v3369 = vld [vmem:[#allocation8 + $0x950] sm:$0xff]
    %v3370 = vld [vmem:[#allocation8 + $0x958] sm:$0xff]
    %v3371 = vld [vmem:[#allocation8 + $0x960] sm:$0xf]
    %v3372 = vld [vmem:[#allocation8 + $0x974] sm:$0xff]
    %v3373 = vld [vmem:[#allocation8 + $0x97c] sm:$0xff]
    %v3374 = vld [vmem:[#allocation8 + $0x984] sm:$0xff]
    %v3375 = vld [vmem:[#allocation8 + $0x98c] sm:$0xf]
    %v3376 = vld [vmem:[#allocation8 + $0x9a0] sm:$0xff]
    %v3377 = vld [vmem:[#allocation8 + $0x9a8] sm:$0xff]
    %v3378 = vld [vmem:[#allocation8 + $0x9b0] sm:$0xff]
    %v3379 = vld [vmem:[#allocation8 + $0x9b8] sm:$0xf]
    %v3380 = vld [vmem:[#allocation8 + $0x9cc] sm:$0xff]
    %v3381 = vld [vmem:[#allocation8 + $0x9d4] sm:$0xff]
    %v3382 = vld [vmem:[#allocation8 + $0x9dc] sm:$0xff]
    %v3383 = vld [vmem:[#allocation8 + $0x9e4] sm:$0xf]
    %v3384 = vld [vmem:[#allocation8 + $0x9f8] sm:$0xff]
    %v3385 = vld [vmem:[#allocation8 + $0xa00] sm:$0xff]
    %v3386 = vld [vmem:[#allocation8 + $0xa08] sm:$0xff]
    %v3387 = vld [vmem:[#allocation8 + $0xa10] sm:$0xf]
    %v3388 = vld [vmem:[#allocation8 + $0xa24] sm:$0xff]
    %v3389 = vld [vmem:[#allocation8 + $0xa2c] sm:$0xff]
    %v3390 = vld [vmem:[#allocation8 + $0xa34] sm:$0xff]
    %v3391 = vld [vmem:[#allocation8 + $0xa3c] sm:$0xf]
    %v3392 = vld [vmem:[#allocation8 + $0xa50] sm:$0xff]
    %v3393 = vld [vmem:[#allocation8 + $0xa58] sm:$0xff]
    %v3394 = vld [vmem:[#allocation8 + $0xa60] sm:$0xff]
    %v3395 = vld [vmem:[#allocation8 + $0xa68] sm:$0xf]
    %v3396 = vld [vmem:[#allocation8 + $0xa7c] sm:$0xff]
    %v3397 = vld [vmem:[#allocation8 + $0xa84] sm:$0xff]
    %v3398 = vld [vmem:[#allocation8 + $0xa8c] sm:$0xff]
    %v3399 = vld [vmem:[#allocation8 + $0xa94] sm:$0xf]
    %v3400 = vld [vmem:[#allocation8 + $0xaa8] sm:$0xff]
    %v3401 = vld [vmem:[#allocation8 + $0xab0] sm:$0xff]
    %v3402 = vld [vmem:[#allocation8 + $0xab8] sm:$0xff]
    %v3403 = vld [vmem:[#allocation8 + $0xac0] sm:$0xf]
    %v3404 = vld [vmem:[#allocation8 + $0xad4] sm:$0xff]
    %v3405 = vld [vmem:[#allocation8 + $0xadc] sm:$0xff]
    %v3406 = vld [vmem:[#allocation8 + $0xae4] sm:$0xff]
    %v3407 = vld [vmem:[#allocation8 + $0xaec] sm:$0xf]
    %v3408 = vld [vmem:[#allocation8 + $0xb00] sm:$0xff]
    %v3409 = vld [vmem:[#allocation8 + $0xb08] sm:$0xff]
    %v3410 = vld [vmem:[#allocation8 + $0xb10] sm:$0xff]
    %v3411 = vld [vmem:[#allocation8 + $0xb18] sm:$0xf]
    %v3412 = vld [vmem:[#allocation8 + $0xb2c] sm:$0xff]
    %v3413 = vld [vmem:[#allocation8 + $0xb34] sm:$0xff]
    %v3414 = vld [vmem:[#allocation8 + $0xb3c] sm:$0xff]
    %v3415 = vld [vmem:[#allocation8 + $0xb44] sm:$0xf]
    %v3416 = vld [vmem:[#allocation8 + $0xb58] sm:$0xff]
    %v3417 = vld [vmem:[#allocation8 + $0xb60] sm:$0xff]
    %v3418 = vld [vmem:[#allocation8 + $0xb68] sm:$0xff]
    %v3419 = vld [vmem:[#allocation8 + $0xb70] sm:$0xf]
    %v3420 = vld [vmem:[#allocation8 + $0xb84] sm:$0xff]
    %v3421 = vld [vmem:[#allocation8 + $0xb8c] sm:$0xff]
    %v3422 = vld [vmem:[#allocation8 + $0xb94] sm:$0xff]
    %v3423 = vld [vmem:[#allocation8 + $0xb9c] sm:$0xf]
    %v3424 = vld [vmem:[#allocation8 + $0xbb0] sm:$0xff]
    %v3425 = vld [vmem:[#allocation8 + $0xbb8] sm:$0xff]
    %v3426 = vld [vmem:[#allocation8 + $0xbc0] sm:$0xff]
    %v3427 = vld [vmem:[#allocation8 + $0xbc8] sm:$0xf]
    %v3428 = vld [vmem:[#allocation8 + $0xbdc] sm:$0xff]
    %v3429 = vld [vmem:[#allocation8 + $0xbe4] sm:$0xff]
    %v3430 = vld [vmem:[#allocation8 + $0xbec] sm:$0xff]
    %v3431 = vld [vmem:[#allocation8 + $0xbf4] sm:$0xf]
    %v3432 = vld [vmem:[#allocation8 + $0xc08] sm:$0xff]
    %v3433 = vld [vmem:[#allocation8 + $0xc10] sm:$0xff]
    %v3434 = vld [vmem:[#allocation8 + $0xc18] sm:$0xff]
    %v3435 = vld [vmem:[#allocation8 + $0xc20] sm:$0xf]
    %v3436 = vld [vmem:[#allocation8 + $0xc34] sm:$0xff]
    %v3437 = vld [vmem:[#allocation8 + $0xc3c] sm:$0xff]
    %v3438 = vld [vmem:[#allocation8 + $0xc44] sm:$0xff]
    %v3439 = vld [vmem:[#allocation8 + $0xc4c] sm:$0xf]
    %v3440 = vld [vmem:[#allocation8 + $0xc60] sm:$0xff]
    %v3441 = vld [vmem:[#allocation8 + $0xc68] sm:$0xff]
    %v3442 = vld [vmem:[#allocation8 + $0xc70] sm:$0xff]
    %v3443 = vld [vmem:[#allocation8 + $0xc78] sm:$0xf]
    %v3444 = vld [vmem:[#allocation8 + $0xc8c] sm:$0xff]
    %v3445 = vld [vmem:[#allocation8 + $0xc94] sm:$0xff]
    %v3446 = vld [vmem:[#allocation8 + $0xc9c] sm:$0xff]
    %v3447 = vld [vmem:[#allocation8 + $0xca4] sm:$0xf]
    %v3448 = vld [vmem:[#allocation8 + $0xcb8] sm:$0xff]
    %v3449 = vld [vmem:[#allocation8 + $0xcc0] sm:$0xff]
    %v3450 = vld [vmem:[#allocation8 + $0xcc8] sm:$0xff]
    %v3451 = vld [vmem:[#allocation8 + $0xcd0] sm:$0xf]
    %v3452 = vld [vmem:[#allocation8 + $0xce4] sm:$0xff]
    %v3453 = vld [vmem:[#allocation8 + $0xcec] sm:$0xff]
    %v3454 = vld [vmem:[#allocation8 + $0xcf4] sm:$0xff]
    %v3455 = vld [vmem:[#allocation8 + $0xcfc] sm:$0xf]
    %v3456 = vld [vmem:[#allocation8 + $0xd10] sm:$0xff]
    %v3457 = vld [vmem:[#allocation8 + $0xd18] sm:$0xff]
    %v3458 = vld [vmem:[#allocation8 + $0xd20] sm:$0xff]
    %v3459 = vld [vmem:[#allocation8 + $0xd28] sm:$0xf]
    %v3460 = vld [vmem:[#allocation8 + $0xd3c] sm:$0xff]
    %v3461 = vld [vmem:[#allocation8 + $0xd44] sm:$0xff]
    %v3462 = vld [vmem:[#allocation8 + $0xd4c] sm:$0xff]
    %v3463 = vld [vmem:[#allocation8 + $0xd54] sm:$0xf]
    %v3464 = vld [vmem:[#allocation8 + $0xd68] sm:$0xff]
    %v3465 = vld [vmem:[#allocation8 + $0xd70] sm:$0xff]
    %v3466 = vld [vmem:[#allocation8 + $0xd78] sm:$0xff]
    %v3467 = vld [vmem:[#allocation8 + $0xd80] sm:$0xf]
    %v3468 = vld [vmem:[#allocation8 + $0xd94] sm:$0xff]
    %v3469 = vld [vmem:[#allocation8 + $0xd9c] sm:$0xff]
    %v3470 = vld [vmem:[#allocation8 + $0xda4] sm:$0xff]
    %v3471 = vld [vmem:[#allocation8 + $0xdac] sm:$0xf]
    %v3472 = vld [vmem:[#allocation8 + $0xdc0] sm:$0xff]
    %v3473 = vld [vmem:[#allocation8 + $0xdc8] sm:$0xff]
    %v3474 = vld [vmem:[#allocation8 + $0xdd0] sm:$0xff]
    %v3475 = vld [vmem:[#allocation8 + $0xdd8] sm:$0xf]
    %v3476 = vld [vmem:[#allocation8 + $0xdec] sm:$0xff]
    %v3477 = vld [vmem:[#allocation8 + $0xdf4] sm:$0xff]
    %v3478 = vld [vmem:[#allocation8 + $0xdfc] sm:$0xff]
    %v3479 = vld [vmem:[#allocation8 + $0xe04] sm:$0xf]
    %v3480 = vld [vmem:[#allocation8 + $0xe18] sm:$0xff]
    %v3481 = vld [vmem:[#allocation8 + $0xe20] sm:$0xff]
    %v3482 = vld [vmem:[#allocation8 + $0xe28] sm:$0xff]
    %v3483 = vld [vmem:[#allocation8 + $0xe30] sm:$0xf]
    %v3484 = vld [vmem:[#allocation8 + $0xe44] sm:$0xff]
    %v3485 = vld [vmem:[#allocation8 + $0xe4c] sm:$0xff]
    %v3486 = vld [vmem:[#allocation8 + $0xe54] sm:$0xff]
    %v3487 = vld [vmem:[#allocation8 + $0xe5c] sm:$0xf]
    %v3488 = vld [vmem:[#allocation8 + $0xe70] sm:$0xff]
    %v3489 = vld [vmem:[#allocation8 + $0xe78] sm:$0xff]
    %v3490 = vld [vmem:[#allocation8 + $0xe80] sm:$0xff]
    %v3491 = vld [vmem:[#allocation8 + $0xe88] sm:$0xf]
    %v3492 = vld [vmem:[#allocation8 + $0xe9c] sm:$0xff]
    %v3493 = vld [vmem:[#allocation8 + $0xea4] sm:$0xff]
    %v3494 = vld [vmem:[#allocation8 + $0xeac] sm:$0xff]
    %v3495 = vld [vmem:[#allocation8 + $0xeb4] sm:$0xf]
    %v3496 = vld [vmem:[#allocation8 + $0xec8] sm:$0xff]
    %v3497 = vld [vmem:[#allocation8 + $0xed0] sm:$0xff]
    %v3498 = vld [vmem:[#allocation8 + $0xed8] sm:$0xff]
    %v3499 = vld [vmem:[#allocation8 + $0xee0] sm:$0xf]
    %v3500 = vld [vmem:[#allocation8 + $0xef4] sm:$0xff]
    %v3501 = vld [vmem:[#allocation8 + $0xefc] sm:$0xff]
    %v3502 = vld [vmem:[#allocation8 + $0xf04] sm:$0xff]
    %v3503 = vld [vmem:[#allocation8 + $0xf0c] sm:$0xf]
    %v3504 = vld [vmem:[#allocation8 + $0xf20] sm:$0xff]
    %v3505 = vld [vmem:[#allocation8 + $0xf28] sm:$0xff]
    %v3506 = vld [vmem:[#allocation8 + $0xf30] sm:$0xff]
    %v3507 = vld [vmem:[#allocation8 + $0xf38] sm:$0xf]
    %v3508 = vld [vmem:[#allocation8 + $0xf4c] sm:$0xff]
    %v3509 = vld [vmem:[#allocation8 + $0xf54] sm:$0xff]
    %v3510 = vld [vmem:[#allocation8 + $0xf5c] sm:$0xff]
    %v3511 = vld [vmem:[#allocation8 + $0xf64] sm:$0xf]
    %v3512 = vld [vmem:[#allocation8 + $0xf78] sm:$0xff]
    %v3513 = vld [vmem:[#allocation8 + $0xf80] sm:$0xff]
    %v3514 = vld [vmem:[#allocation8 + $0xf88] sm:$0xff]
    %v3515 = vld [vmem:[#allocation8 + $0xf90] sm:$0xf]
    %v3516 = vld [vmem:[#allocation8 + $0xfa4] sm:$0xff]
    %v3517 = vld [vmem:[#allocation8 + $0xfac] sm:$0xff]
    %v3518 = vld [vmem:[#allocation8 + $0xfb4] sm:$0xff]
    %v3519 = vld [vmem:[#allocation8 + $0xfbc] sm:$0xf]
    %v3520 = vld [vmem:[#allocation8 + $0xfd0] sm:$0xff]
    %v3521 = vld [vmem:[#allocation8 + $0xfd8] sm:$0xff]
    %v3522 = vld [vmem:[#allocation8 + $0xfe0] sm:$0xff]
    %v3523 = vld [vmem:[#allocation8 + $0xfe8] sm:$0xf]
    %v3524 = vld [vmem:[#allocation8 + $0xffc] sm:$0xff]
    %v3525 = vld [vmem:[#allocation8 + $0x1004] sm:$0xff]
    %v3526 = vld [vmem:[#allocation8 + $0x100c] sm:$0xff]
    %v3527 = vld [vmem:[#allocation8 + $0x1014] sm:$0xf]
    %v3528 = vld [vmem:[#allocation8 + $0x1028] sm:$0xff]
    %v3529 = vld [vmem:[#allocation8 + $0x1030] sm:$0xff]
    %v3530 = vld [vmem:[#allocation8 + $0x1038] sm:$0xff]
    %v3531 = vld [vmem:[#allocation8 + $0x1040] sm:$0xf]
    %v3532 = vld [vmem:[#allocation8 + $0x1054] sm:$0xff]
    %v3533 = vld [vmem:[#allocation8 + $0x105c] sm:$0xff]
    %v3534 = vld [vmem:[#allocation8 + $0x1064] sm:$0xff]
    %v3535 = vld [vmem:[#allocation8 + $0x106c] sm:$0xf]
    %v3536 = vld [vmem:[#allocation8 + $0x1080] sm:$0xff]
    %v3537 = vld [vmem:[#allocation8 + $0x1088] sm:$0xff]
    %v3538 = vld [vmem:[#allocation8 + $0x1090] sm:$0xff]
    %v3539 = vld [vmem:[#allocation8 + $0x1098] sm:$0xf]
    %v3540 = vld [vmem:[#allocation8 + $0x10ac] sm:$0xff]
    %v3541 = vld [vmem:[#allocation8 + $0x10b4] sm:$0xff]
    %v3542 = vld [vmem:[#allocation8 + $0x10bc] sm:$0xff]
    %v3543 = vld [vmem:[#allocation8 + $0x10c4] sm:$0xf]
    %v3544 = vld [vmem:[#allocation8 + $0x10d8] sm:$0xff]
    %v3545 = vld [vmem:[#allocation8 + $0x10e0] sm:$0xff]
    %v3546 = vld [vmem:[#allocation8 + $0x10e8] sm:$0xff]
    %v3547 = vld [vmem:[#allocation8 + $0x10f0] sm:$0xf]
    %v3548 = vld [vmem:[#allocation8 + $0x1104] sm:$0xff]
    %v3549 = vld [vmem:[#allocation8 + $0x110c] sm:$0xff]
    %v3550 = vld [vmem:[#allocation8 + $0x1114] sm:$0xff]
    %v3551 = vld [vmem:[#allocation8 + $0x111c] sm:$0xf]
    %v3552 = vld [vmem:[#allocation8 + $0x1130] sm:$0xff]
    %v3553 = vld [vmem:[#allocation8 + $0x1138] sm:$0xff]
    %v3554 = vld [vmem:[#allocation8 + $0x1140] sm:$0xff]
    %v3555 = vld [vmem:[#allocation8 + $0x1148] sm:$0xf]
    %v3556 = vld [vmem:[#allocation8 + $0x115c] sm:$0xff]
    %v3557 = vld [vmem:[#allocation8 + $0x1164] sm:$0xff]
    %v3558 = vld [vmem:[#allocation8 + $0x116c] sm:$0xff]
    %v3559 = vld [vmem:[#allocation8 + $0x1174] sm:$0xf]
    %v3560 = vld [vmem:[#allocation8 + $0x1188] sm:$0xff]
    %v3561 = vld [vmem:[#allocation8 + $0x1190] sm:$0xff]
    %v3562 = vld [vmem:[#allocation8 + $0x1198] sm:$0xff]
    %v3563 = vld [vmem:[#allocation8 + $0x11a0] sm:$0xf]
    %v3564 = vld [vmem:[#allocation8 + $0x11b4] sm:$0xff]
    %v3565 = vld [vmem:[#allocation8 + $0x11bc] sm:$0xff]
    %v3566 = vld [vmem:[#allocation8 + $0x11c4] sm:$0xff]
    %v3567 = vld [vmem:[#allocation8 + $0x11cc] sm:$0xf]
    %v3568 = vld [vmem:[#allocation8 + $0x11e0] sm:$0xff]
    %v3569 = vld [vmem:[#allocation8 + $0x11e8] sm:$0xff]
    %v3570 = vld [vmem:[#allocation8 + $0x11f0] sm:$0xff]
    %v3571 = vld [vmem:[#allocation8 + $0x11f8] sm:$0xf]
    %v3572 = vld [vmem:[#allocation8 + $0x120c] sm:$0xff]
    %v3573 = vld [vmem:[#allocation8 + $0x1214] sm:$0xff]
    %v3574 = vld [vmem:[#allocation8 + $0x121c] sm:$0xff]
    %v3575 = vld [vmem:[#allocation8 + $0x1224] sm:$0xf]
    %v3576 = vld [vmem:[#allocation8 + $0x1238] sm:$0xff]
    %v3577 = vld [vmem:[#allocation8 + $0x1240] sm:$0xff]
    %v3578 = vld [vmem:[#allocation8 + $0x1248] sm:$0xff]
    %v3579 = vld [vmem:[#allocation8 + $0x1250] sm:$0xf]
    %v3580 = vld [vmem:[#allocation8 + $0x1264] sm:$0xff]
    %v3581 = vld [vmem:[#allocation8 + $0x126c] sm:$0xff]
    %v3582 = vld [vmem:[#allocation8 + $0x1274] sm:$0xff]
    %v3583 = vld [vmem:[#allocation8 + $0x127c] sm:$0xf]
    %v3584 = vld [vmem:[#allocation8 + $0x1290] sm:$0xff]
    %v3585 = vld [vmem:[#allocation8 + $0x1298] sm:$0xff]
    %v3586 = vld [vmem:[#allocation8 + $0x12a0] sm:$0xff]
    %v3587 = vld [vmem:[#allocation8 + $0x12a8] sm:$0xf]
    %v3588 = vld [vmem:[#allocation8 + $0x12bc] sm:$0xff]
    %v3589 = vld [vmem:[#allocation8 + $0x12c4] sm:$0xff]
    %v3590 = vld [vmem:[#allocation8 + $0x12cc] sm:$0xff]
    %v3591 = vld [vmem:[#allocation8 + $0x12d4] sm:$0xf]
    %v3592 = vld [vmem:[#allocation8 + $0x12e8] sm:$0xff]
    %v3593 = vld [vmem:[#allocation8 + $0x12f0] sm:$0xff]
    %v3594 = vld [vmem:[#allocation8 + $0x12f8] sm:$0xff]
    %v3595 = vld [vmem:[#allocation8 + $0x1300] sm:$0xf]
    %v3596 = vld [vmem:[#allocation8 + $0x1314] sm:$0xff]
    %v3597 = vld [vmem:[#allocation8 + $0x131c] sm:$0xff]
    %v3598 = vld [vmem:[#allocation8 + $0x1324] sm:$0xff]
    %v3599 = vld [vmem:[#allocation8 + $0x132c] sm:$0xf]
    %s3600 = scalar_lea.vmem [#allocation10], 62
    %v3601 = vld [vmem:[%s3600] ss:$8 sm:$0xf]
    %v3602 = vld [vmem:[%s3600] ss:$8 sm:$0xf0]
    %v3603 = vor.u32 %v3601, %v3602
    %v3604 = vpack.c.bf16 %v3145, %v3145
    %v3605 = vpack.c.bf16 %v3146, %v3146
    %v3606 = vpack.c.bf16 %v3147, %v3147
    %v3607 = vpack.c.bf16 %v3148, %v3148
    %v3608 = vpack.c.bf16 %v3149, %v3149
    %v3609 = vpack.c.bf16 %v3150, %v3150
    %v3610 = vpack.c.bf16 %v3151, %v3151
    %v3612 = vperm.slane %v3603, 0
    %v3613 = vperm.slane %v3603, 1
    %v3614 = vperm.slane %v3603, 2
    %v3615 = vperm.slane %v3603, 3
    %v3616 = vperm.slane %v3603, 4
    %v3617 = vperm.slane %v3603, 5
    %v3618 = vperm.slane %v3603, 6
    %v4074 = vunpack.c.l.b16 %v3152
    %v4075 = vunpack.c.h.b16 %v3152
    %v4076 = vunpack.c.l.b16 %v3153
    %v4077 = vunpack.c.h.b16 %v3153
    %v4078 = vunpack.c.l.b16 %v3154
    %v4079 = vunpack.c.h.b16 %v3154
    %v4080 = vunpack.c.l.b16 %v3155
    %v4081 = vunpack.c.l.b16 %v3156
    %v4082 = vunpack.c.h.b16 %v3156
    %v4083 = vunpack.c.l.b16 %v3157
    %v4084 = vunpack.c.h.b16 %v3157
    %v4085 = vunpack.c.l.b16 %v3158
    %v4086 = vunpack.c.h.b16 %v3158
    %v4087 = vunpack.c.l.b16 %v3159
    %v4088 = vunpack.c.l.b16 %v3160
    %v4089 = vunpack.c.h.b16 %v3160
    %v4090 = vunpack.c.l.b16 %v3161
    %v4091 = vunpack.c.h.b16 %v3161
    %v4092 = vunpack.c.l.b16 %v3162
    %v4093 = vunpack.c.h.b16 %v3162
    %v4094 = vunpack.c.l.b16 %v3163
    %v4095 = vunpack.c.l.b16 %v3164
    %v4096 = vunpack.c.h.b16 %v3164
    %v4097 = vunpack.c.l.b16 %v3165
    %v4098 = vunpack.c.h.b16 %v3165
    %v4099 = vunpack.c.l.b16 %v3166
    %v4100 = vunpack.c.h.b16 %v3166
    %v4101 = vunpack.c.l.b16 %v3167
    %v4102 = vunpack.c.l.b16 %v3168
    %v4103 = vunpack.c.h.b16 %v3168
    %v4104 = vunpack.c.l.b16 %v3169
    %v4105 = vunpack.c.h.b16 %v3169
    %v4106 = vunpack.c.l.b16 %v3170
    %v4107 = vunpack.c.h.b16 %v3170
    %v4108 = vunpack.c.l.b16 %v3171
    %v4109 = vunpack.c.l.b16 %v3172
    %v4110 = vunpack.c.h.b16 %v3172
    %v4111 = vunpack.c.l.b16 %v3173
    %v4112 = vunpack.c.h.b16 %v3173
    %v4113 = vunpack.c.l.b16 %v3174
    %v4114 = vunpack.c.h.b16 %v3174
    %v4115 = vunpack.c.l.b16 %v3175
    %v4116 = vunpack.c.l.b16 %v3176
    %v4117 = vunpack.c.h.b16 %v3176
    %v4118 = vunpack.c.l.b16 %v3177
    %v4119 = vunpack.c.h.b16 %v3177
    %v4120 = vunpack.c.l.b16 %v3178
    %v4121 = vunpack.c.h.b16 %v3178
    %v4122 = vunpack.c.l.b16 %v3179
    %v4123 = vunpack.c.l.b16 %v3180
    %v4124 = vunpack.c.h.b16 %v3180
    %v4125 = vunpack.c.l.b16 %v3181
    %v4126 = vunpack.c.h.b16 %v3181
    %v4127 = vunpack.c.l.b16 %v3182
    %v4128 = vunpack.c.h.b16 %v3182
    %v4129 = vunpack.c.l.b16 %v3183
    %v4130 = vunpack.c.l.b16 %v3184
    %v4131 = vunpack.c.h.b16 %v3184
    %v4132 = vunpack.c.l.b16 %v3185
    %v4133 = vunpack.c.h.b16 %v3185
    %v4134 = vunpack.c.l.b16 %v3186
    %v4135 = vunpack.c.h.b16 %v3186
    %v4136 = vunpack.c.l.b16 %v3187
    %v4137 = vunpack.c.l.b16 %v3188
    %v4138 = vunpack.c.h.b16 %v3188
    %v4139 = vunpack.c.l.b16 %v3189
    %v4140 = vunpack.c.h.b16 %v3189
    %v4141 = vunpack.c.l.b16 %v3190
    %v4142 = vunpack.c.h.b16 %v3190
    %v4143 = vunpack.c.l.b16 %v3191
    %v4144 = vunpack.c.l.b16 %v3192
    %v4145 = vunpack.c.h.b16 %v3192
    %v4146 = vunpack.c.l.b16 %v3193
    %v4147 = vunpack.c.h.b16 %v3193
    %v4148 = vunpack.c.l.b16 %v3194
    %v4149 = vunpack.c.h.b16 %v3194
    %v4150 = vunpack.c.l.b16 %v3195
    %v4151 = vunpack.c.l.b16 %v3196
    %v4152 = vunpack.c.h.b16 %v3196
    %v4153 = vunpack.c.l.b16 %v3197
    %v4154 = vunpack.c.h.b16 %v3197
    %v4155 = vunpack.c.l.b16 %v3198
    %v4156 = vunpack.c.h.b16 %v3198
    %v4157 = vunpack.c.l.b16 %v3199
    %v4158 = vunpack.c.l.b16 %v3200
    %v4159 = vunpack.c.h.b16 %v3200
    %v4160 = vunpack.c.l.b16 %v3201
    %v4161 = vunpack.c.h.b16 %v3201
    %v4162 = vunpack.c.l.b16 %v3202
    %v4163 = vunpack.c.h.b16 %v3202
    %v4164 = vunpack.c.l.b16 %v3203
    %v4165 = vunpack.c.l.b16 %v3204
    %v4166 = vunpack.c.h.b16 %v3204
    %v4167 = vunpack.c.l.b16 %v3205
    %v4168 = vunpack.c.h.b16 %v3205
    %v4169 = vunpack.c.l.b16 %v3206
    %v4170 = vunpack.c.h.b16 %v3206
    %v4171 = vunpack.c.l.b16 %v3207
    %v4172 = vunpack.c.l.b16 %v3208
    %v4173 = vunpack.c.h.b16 %v3208
    %v4174 = vunpack.c.l.b16 %v3209
    %v4175 = vunpack.c.h.b16 %v3209
    %v4176 = vunpack.c.l.b16 %v3210
    %v4177 = vunpack.c.h.b16 %v3210
    %v4178 = vunpack.c.l.b16 %v3211
    %v4179 = vunpack.c.l.b16 %v3212
    %v4180 = vunpack.c.h.b16 %v3212
    %v4181 = vunpack.c.l.b16 %v3213
    %v4182 = vunpack.c.h.b16 %v3213
    %v4183 = vunpack.c.l.b16 %v3214
    %v4184 = vunpack.c.h.b16 %v3214
    %v4185 = vunpack.c.l.b16 %v3215
    %v4186 = vunpack.c.l.b16 %v3216
    %v4187 = vunpack.c.h.b16 %v3216
    %v4188 = vunpack.c.l.b16 %v3217
    %v4189 = vunpack.c.h.b16 %v3217
    %v4190 = vunpack.c.l.b16 %v3218
    %v4191 = vunpack.c.h.b16 %v3218
    %v4192 = vunpack.c.l.b16 %v3219
    %v4193 = vunpack.c.l.b16 %v3220
    %v4194 = vunpack.c.h.b16 %v3220
    %v4195 = vunpack.c.l.b16 %v3221
    %v4196 = vunpack.c.h.b16 %v3221
    %v4197 = vunpack.c.l.b16 %v3222
    %v4198 = vunpack.c.h.b16 %v3222
    %v4199 = vunpack.c.l.b16 %v3223
    %v4200 = vunpack.c.l.b16 %v3224
    %v4201 = vunpack.c.h.b16 %v3224
    %v4202 = vunpack.c.l.b16 %v3225
    %v4203 = vunpack.c.h.b16 %v3225
    %v4204 = vunpack.c.l.b16 %v3226
    %v4205 = vunpack.c.h.b16 %v3226
    %v4206 = vunpack.c.l.b16 %v3227
    %v4207 = vunpack.c.l.b16 %v3228
    %v4208 = vunpack.c.h.b16 %v3228
    %v4209 = vunpack.c.l.b16 %v3229
    %v4210 = vunpack.c.h.b16 %v3229
    %v4211 = vunpack.c.l.b16 %v3230
    %v4212 = vunpack.c.h.b16 %v3230
    %v4213 = vunpack.c.l.b16 %v3231
    %v4214 = vunpack.c.l.b16 %v3232
    %v4215 = vunpack.c.h.b16 %v3232
    %v4216 = vunpack.c.l.b16 %v3233
    %v4217 = vunpack.c.h.b16 %v3233
    %v4218 = vunpack.c.l.b16 %v3234
    %v4219 = vunpack.c.h.b16 %v3234
    %v4220 = vunpack.c.l.b16 %v3235
    %v4221 = vunpack.c.l.b16 %v3236
    %v4222 = vunpack.c.h.b16 %v3236
    %v4223 = vunpack.c.l.b16 %v3237
    %v4224 = vunpack.c.h.b16 %v3237
    %v4225 = vunpack.c.l.b16 %v3238
    %v4226 = vunpack.c.h.b16 %v3238
    %v4227 = vunpack.c.l.b16 %v3239
    %v4228 = vunpack.c.l.b16 %v3240
    %v4229 = vunpack.c.h.b16 %v3240
    %v4230 = vunpack.c.l.b16 %v3241
    %v4231 = vunpack.c.h.b16 %v3241
    %v4232 = vunpack.c.l.b16 %v3242
    %v4233 = vunpack.c.h.b16 %v3242
    %v4234 = vunpack.c.l.b16 %v3243
    %v4235 = vunpack.c.l.b16 %v3244
    %v4236 = vunpack.c.h.b16 %v3244
    %v4237 = vunpack.c.l.b16 %v3245
    %v4238 = vunpack.c.h.b16 %v3245
    %v4239 = vunpack.c.l.b16 %v3246
    %v4240 = vunpack.c.h.b16 %v3246
    %v4241 = vunpack.c.l.b16 %v3247
    %v4242 = vunpack.c.l.b16 %v3248
    %v4243 = vunpack.c.h.b16 %v3248
    %v4244 = vunpack.c.l.b16 %v3249
    %v4245 = vunpack.c.h.b16 %v3249
    %v4246 = vunpack.c.l.b16 %v3250
    %v4247 = vunpack.c.h.b16 %v3250
    %v4248 = vunpack.c.l.b16 %v3251
    %v4249 = vunpack.c.l.b16 %v3252
    %v4250 = vunpack.c.h.b16 %v3252
    %v4251 = vunpack.c.l.b16 %v3253
    %v4252 = vunpack.c.h.b16 %v3253
    %v4253 = vunpack.c.l.b16 %v3254
    %v4254 = vunpack.c.h.b16 %v3254
    %v4255 = vunpack.c.l.b16 %v3255
    %v4256 = vunpack.c.l.b16 %v3256
    %v4257 = vunpack.c.h.b16 %v3256
    %v4258 = vunpack.c.l.b16 %v3257
    %v4259 = vunpack.c.h.b16 %v3257
    %v4260 = vunpack.c.l.b16 %v3258
    %v4261 = vunpack.c.h.b16 %v3258
    %v4262 = vunpack.c.l.b16 %v3259
    %v4263 = vunpack.c.l.b16 %v3260
    %v4264 = vunpack.c.h.b16 %v3260
    %v4265 = vunpack.c.l.b16 %v3261
    %v4266 = vunpack.c.h.b16 %v3261
    %v4267 = vunpack.c.l.b16 %v3262
    %v4268 = vunpack.c.h.b16 %v3262
    %v4269 = vunpack.c.l.b16 %v3263
    %v4270 = vunpack.c.l.b16 %v3264
    %v4271 = vunpack.c.h.b16 %v3264
    %v4272 = vunpack.c.l.b16 %v3265
    %v4273 = vunpack.c.h.b16 %v3265
    %v4274 = vunpack.c.l.b16 %v3266
    %v4275 = vunpack.c.h.b16 %v3266
    %v4276 = vunpack.c.l.b16 %v3267
    %v4277 = vunpack.c.l.b16 %v3268
    %v4278 = vunpack.c.h.b16 %v3268
    %v4279 = vunpack.c.l.b16 %v3269
    %v4280 = vunpack.c.h.b16 %v3269
    %v4281 = vunpack.c.l.b16 %v3270
    %v4282 = vunpack.c.h.b16 %v3270
    %v4283 = vunpack.c.l.b16 %v3271
    %v4284 = vunpack.c.l.b16 %v3272
    %v4285 = vunpack.c.h.b16 %v3272
    %v4286 = vunpack.c.l.b16 %v3273
    %v4287 = vunpack.c.h.b16 %v3273
    %v4288 = vunpack.c.l.b16 %v3274
    %v4289 = vunpack.c.h.b16 %v3274
    %v4290 = vunpack.c.l.b16 %v3275
    %v4291 = vunpack.c.l.b16 %v3276
    %v4292 = vunpack.c.h.b16 %v3276
    %v4293 = vunpack.c.l.b16 %v3277
    %v4294 = vunpack.c.h.b16 %v3277
    %v4295 = vunpack.c.l.b16 %v3278
    %v4296 = vunpack.c.h.b16 %v3278
    %v4297 = vunpack.c.l.b16 %v3279
    %v4298 = vunpack.c.l.b16 %v3280
    %v4299 = vunpack.c.h.b16 %v3280
    %v4300 = vunpack.c.l.b16 %v3281
    %v4301 = vunpack.c.h.b16 %v3281
    %v4302 = vunpack.c.l.b16 %v3282
    %v4303 = vunpack.c.h.b16 %v3282
    %v4304 = vunpack.c.l.b16 %v3283
    %v4305 = vunpack.c.l.b16 %v3284
    %v4306 = vunpack.c.h.b16 %v3284
    %v4307 = vunpack.c.l.b16 %v3285
    %v4308 = vunpack.c.h.b16 %v3285
    %v4309 = vunpack.c.l.b16 %v3286
    %v4310 = vunpack.c.h.b16 %v3286
    %v4311 = vunpack.c.l.b16 %v3287
    %v4312 = vunpack.c.l.b16 %v3288
    %v4313 = vunpack.c.h.b16 %v3288
    %v4314 = vunpack.c.l.b16 %v3289
    %v4315 = vunpack.c.h.b16 %v3289
    %v4316 = vunpack.c.l.b16 %v3290
    %v4317 = vunpack.c.h.b16 %v3290
    %v4318 = vunpack.c.l.b16 %v3291
    %v4319 = vunpack.c.l.b16 %v3292
    %v4320 = vunpack.c.h.b16 %v3292
    %v4321 = vunpack.c.l.b16 %v3293
    %v4322 = vunpack.c.h.b16 %v3293
    %v4323 = vunpack.c.l.b16 %v3294
    %v4324 = vunpack.c.h.b16 %v3294
    %v4325 = vunpack.c.l.b16 %v3295
    %v4326 = vunpack.c.l.b16 %v3296
    %v4327 = vunpack.c.h.b16 %v3296
    %v4328 = vunpack.c.l.b16 %v3297
    %v4329 = vunpack.c.h.b16 %v3297
    %v4330 = vunpack.c.l.b16 %v3298
    %v4331 = vunpack.c.h.b16 %v3298
    %v4332 = vunpack.c.l.b16 %v3299
    %v4333 = vunpack.c.l.b16 %v3300
    %v4334 = vunpack.c.h.b16 %v3300
    %v4335 = vunpack.c.l.b16 %v3301
    %v4336 = vunpack.c.h.b16 %v3301
    %v4337 = vunpack.c.l.b16 %v3302
    %v4338 = vunpack.c.h.b16 %v3302
    %v4339 = vunpack.c.l.b16 %v3303
    %v4340 = vunpack.c.l.b16 %v3304
    %v4341 = vunpack.c.h.b16 %v3304
    %v4342 = vunpack.c.l.b16 %v3305
    %v4343 = vunpack.c.h.b16 %v3305
    %v4344 = vunpack.c.l.b16 %v3306
    %v4345 = vunpack.c.h.b16 %v3306
    %v4346 = vunpack.c.l.b16 %v3307
    %v4347 = vunpack.c.l.b16 %v3308
    %v4348 = vunpack.c.h.b16 %v3308
    %v4349 = vunpack.c.l.b16 %v3309
    %v4350 = vunpack.c.h.b16 %v3309
    %v4351 = vunpack.c.l.b16 %v3310
    %v4352 = vunpack.c.h.b16 %v3310
    %v4353 = vunpack.c.l.b16 %v3311
    %v4354 = vunpack.c.l.b16 %v3312
    %v4355 = vunpack.c.h.b16 %v3312
    %v4356 = vunpack.c.l.b16 %v3313
    %v4357 = vunpack.c.h.b16 %v3313
    %v4358 = vunpack.c.l.b16 %v3314
    %v4359 = vunpack.c.h.b16 %v3314
    %v4360 = vunpack.c.l.b16 %v3315
    %v4361 = vunpack.c.l.b16 %v3316
    %v4362 = vunpack.c.h.b16 %v3316
    %v4363 = vunpack.c.l.b16 %v3317
    %v4364 = vunpack.c.h.b16 %v3317
    %v4365 = vunpack.c.l.b16 %v3318
    %v4366 = vunpack.c.h.b16 %v3318
    %v4367 = vunpack.c.l.b16 %v3319
    %v4368 = vunpack.c.l.b16 %v3320
    %v4369 = vunpack.c.h.b16 %v3320
    %v4370 = vunpack.c.l.b16 %v3321
    %v4371 = vunpack.c.h.b16 %v3321
    %v4372 = vunpack.c.l.b16 %v3322
    %v4373 = vunpack.c.h.b16 %v3322
    %v4374 = vunpack.c.l.b16 %v3323
    %v4375 = vunpack.c.l.b16 %v3324
    %v4376 = vunpack.c.h.b16 %v3324
    %v4377 = vunpack.c.l.b16 %v3325
    %v4378 = vunpack.c.h.b16 %v3325
    %v4379 = vunpack.c.l.b16 %v3326
    %v4380 = vunpack.c.h.b16 %v3326
    %v4381 = vunpack.c.l.b16 %v3327
    %v4382 = vunpack.c.l.b16 %v3328
    %v4383 = vunpack.c.h.b16 %v3328
    %v4384 = vunpack.c.l.b16 %v3329
    %v4385 = vunpack.c.h.b16 %v3329
    %v4386 = vunpack.c.l.b16 %v3330
    %v4387 = vunpack.c.h.b16 %v3330
    %v4388 = vunpack.c.l.b16 %v3331
    %v4389 = vunpack.c.l.b16 %v3332
    %v4390 = vunpack.c.h.b16 %v3332
    %v4391 = vunpack.c.l.b16 %v3333
    %v4392 = vunpack.c.h.b16 %v3333
    %v4393 = vunpack.c.l.b16 %v3334
    %v4394 = vunpack.c.h.b16 %v3334
    %v4395 = vunpack.c.l.b16 %v3335
    %v4396 = vunpack.c.l.b16 %v3336
    %v4397 = vunpack.c.h.b16 %v3336
    %v4398 = vunpack.c.l.b16 %v3337
    %v4399 = vunpack.c.h.b16 %v3337
    %v4400 = vunpack.c.l.b16 %v3338
    %v4401 = vunpack.c.h.b16 %v3338
    %v4402 = vunpack.c.l.b16 %v3339
    %v4403 = vunpack.c.l.b16 %v3340
    %v4404 = vunpack.c.h.b16 %v3340
    %v4405 = vunpack.c.l.b16 %v3341
    %v4406 = vunpack.c.h.b16 %v3341
    %v4407 = vunpack.c.l.b16 %v3342
    %v4408 = vunpack.c.h.b16 %v3342
    %v4409 = vunpack.c.l.b16 %v3343
    %v4410 = vunpack.c.l.b16 %v3344
    %v4411 = vunpack.c.h.b16 %v3344
    %v4412 = vunpack.c.l.b16 %v3345
    %v4413 = vunpack.c.h.b16 %v3345
    %v4414 = vunpack.c.l.b16 %v3346
    %v4415 = vunpack.c.h.b16 %v3346
    %v4416 = vunpack.c.l.b16 %v3347
    %v4417 = vunpack.c.l.b16 %v3348
    %v4418 = vunpack.c.h.b16 %v3348
    %v4419 = vunpack.c.l.b16 %v3349
    %v4420 = vunpack.c.h.b16 %v3349
    %v4421 = vunpack.c.l.b16 %v3350
    %v4422 = vunpack.c.h.b16 %v3350
    %v4423 = vunpack.c.l.b16 %v3351
    %v4424 = vunpack.c.l.b16 %v3352
    %v4425 = vunpack.c.h.b16 %v3352
    %v4426 = vunpack.c.l.b16 %v3353
    %v4427 = vunpack.c.h.b16 %v3353
    %v4428 = vunpack.c.l.b16 %v3354
    %v4429 = vunpack.c.h.b16 %v3354
    %v4430 = vunpack.c.l.b16 %v3355
    %v4431 = vunpack.c.l.b16 %v3356
    %v4432 = vunpack.c.h.b16 %v3356
    %v4433 = vunpack.c.l.b16 %v3357
    %v4434 = vunpack.c.h.b16 %v3357
    %v4435 = vunpack.c.l.b16 %v3358
    %v4436 = vunpack.c.h.b16 %v3358
    %v4437 = vunpack.c.l.b16 %v3359
    %v4438 = vunpack.c.l.b16 %v3360
    %v4439 = vunpack.c.h.b16 %v3360
    %v4440 = vunpack.c.l.b16 %v3361
    %v4441 = vunpack.c.h.b16 %v3361
    %v4442 = vunpack.c.l.b16 %v3362
    %v4443 = vunpack.c.h.b16 %v3362
    %v4444 = vunpack.c.l.b16 %v3363
    %v4445 = vunpack.c.l.b16 %v3364
    %v4446 = vunpack.c.h.b16 %v3364
    %v4447 = vunpack.c.l.b16 %v3365
    %v4448 = vunpack.c.h.b16 %v3365
    %v4449 = vunpack.c.l.b16 %v3366
    %v4450 = vunpack.c.h.b16 %v3366
    %v4451 = vunpack.c.l.b16 %v3367
    %v4452 = vunpack.c.l.b16 %v3368
    %v4453 = vunpack.c.h.b16 %v3368
    %v4454 = vunpack.c.l.b16 %v3369
    %v4455 = vunpack.c.h.b16 %v3369
    %v4456 = vunpack.c.l.b16 %v3370
    %v4457 = vunpack.c.h.b16 %v3370
    %v4458 = vunpack.c.l.b16 %v3371
    %v4459 = vunpack.c.l.b16 %v3372
    %v4460 = vunpack.c.h.b16 %v3372
    %v4461 = vunpack.c.l.b16 %v3373
    %v4462 = vunpack.c.h.b16 %v3373
    %v4463 = vunpack.c.l.b16 %v3374
    %v4464 = vunpack.c.h.b16 %v3374
    %v4465 = vunpack.c.l.b16 %v3375
    %v4466 = vunpack.c.l.b16 %v3376
    %v4467 = vunpack.c.h.b16 %v3376
    %v4468 = vunpack.c.l.b16 %v3377
    %v4469 = vunpack.c.h.b16 %v3377
    %v4470 = vunpack.c.l.b16 %v3378
    %v4471 = vunpack.c.h.b16 %v3378
    %v4472 = vunpack.c.l.b16 %v3379
    %v4473 = vunpack.c.l.b16 %v3380
    %v4474 = vunpack.c.h.b16 %v3380
    %v4475 = vunpack.c.l.b16 %v3381
    %v4476 = vunpack.c.h.b16 %v3381
    %v4477 = vunpack.c.l.b16 %v3382
    %v4478 = vunpack.c.h.b16 %v3382
    %v4479 = vunpack.c.l.b16 %v3383
    %v4480 = vunpack.c.l.b16 %v3384
    %v4481 = vunpack.c.h.b16 %v3384
    %v4482 = vunpack.c.l.b16 %v3385
    %v4483 = vunpack.c.h.b16 %v3385
    %v4484 = vunpack.c.l.b16 %v3386
    %v4485 = vunpack.c.h.b16 %v3386
    %v4486 = vunpack.c.l.b16 %v3387
    %v4487 = vunpack.c.l.b16 %v3388
    %v4488 = vunpack.c.h.b16 %v3388
    %v4489 = vunpack.c.l.b16 %v3389
    %v4490 = vunpack.c.h.b16 %v3389
    %v4491 = vunpack.c.l.b16 %v3390
    %v4492 = vunpack.c.h.b16 %v3390
    %v4493 = vunpack.c.l.b16 %v3391
    %v4494 = vunpack.c.l.b16 %v3392
    %v4495 = vunpack.c.h.b16 %v3392
    %v4496 = vunpack.c.l.b16 %v3393
    %v4497 = vunpack.c.h.b16 %v3393
    %v4498 = vunpack.c.l.b16 %v3394
    %v4499 = vunpack.c.h.b16 %v3394
    %v4500 = vunpack.c.l.b16 %v3395
    %v4501 = vunpack.c.l.b16 %v3396
    %v4502 = vunpack.c.h.b16 %v3396
    %v4503 = vunpack.c.l.b16 %v3397
    %v4504 = vunpack.c.h.b16 %v3397
    %v4505 = vunpack.c.l.b16 %v3398
    %v4506 = vunpack.c.h.b16 %v3398
    %v4507 = vunpack.c.l.b16 %v3399
    %v4508 = vunpack.c.l.b16 %v3400
    %v4509 = vunpack.c.h.b16 %v3400
    %v4510 = vunpack.c.l.b16 %v3401
    %v4511 = vunpack.c.h.b16 %v3401
    %v4512 = vunpack.c.l.b16 %v3402
    %v4513 = vunpack.c.h.b16 %v3402
    %v4514 = vunpack.c.l.b16 %v3403
    %v4515 = vunpack.c.l.b16 %v3404
    %v4516 = vunpack.c.h.b16 %v3404
    %v4517 = vunpack.c.l.b16 %v3405
    %v4518 = vunpack.c.h.b16 %v3405
    %v4519 = vunpack.c.l.b16 %v3406
    %v4520 = vunpack.c.h.b16 %v3406
    %v4521 = vunpack.c.l.b16 %v3407
    %v4522 = vunpack.c.l.b16 %v3408
    %v4523 = vunpack.c.h.b16 %v3408
    %v4524 = vunpack.c.l.b16 %v3409
    %v4525 = vunpack.c.h.b16 %v3409
    %v4526 = vunpack.c.l.b16 %v3410
    %v4527 = vunpack.c.h.b16 %v3410
    %v4528 = vunpack.c.l.b16 %v3411
    %v4529 = vunpack.c.l.b16 %v3412
    %v4530 = vunpack.c.h.b16 %v3412
    %v4531 = vunpack.c.l.b16 %v3413
    %v4532 = vunpack.c.h.b16 %v3413
    %v4533 = vunpack.c.l.b16 %v3414
    %v4534 = vunpack.c.h.b16 %v3414
    %v4535 = vunpack.c.l.b16 %v3415
    %v4536 = vunpack.c.l.b16 %v3416
    %v4537 = vunpack.c.h.b16 %v3416
    %v4538 = vunpack.c.l.b16 %v3417
    %v4539 = vunpack.c.h.b16 %v3417
    %v4540 = vunpack.c.l.b16 %v3418
    %v4541 = vunpack.c.h.b16 %v3418
    %v4542 = vunpack.c.l.b16 %v3419
    %v4543 = vunpack.c.l.b16 %v3420
    %v4544 = vunpack.c.h.b16 %v3420
    %v4545 = vunpack.c.l.b16 %v3421
    %v4546 = vunpack.c.h.b16 %v3421
    %v4547 = vunpack.c.l.b16 %v3422
    %v4548 = vunpack.c.h.b16 %v3422
    %v4549 = vunpack.c.l.b16 %v3423
    %v4550 = vunpack.c.l.b16 %v3424
    %v4551 = vunpack.c.h.b16 %v3424
    %v4552 = vunpack.c.l.b16 %v3425
    %v4553 = vunpack.c.h.b16 %v3425
    %v4554 = vunpack.c.l.b16 %v3426
    %v4555 = vunpack.c.h.b16 %v3426
    %v4556 = vunpack.c.l.b16 %v3427
    %v4557 = vunpack.c.l.b16 %v3428
    %v4558 = vunpack.c.h.b16 %v3428
    %v4559 = vunpack.c.l.b16 %v3429
    %v4560 = vunpack.c.h.b16 %v3429
    %v4561 = vunpack.c.l.b16 %v3430
    %v4562 = vunpack.c.h.b16 %v3430
    %v4563 = vunpack.c.l.b16 %v3431
    %v4564 = vunpack.c.l.b16 %v3432
    %v4565 = vunpack.c.h.b16 %v3432
    %v4566 = vunpack.c.l.b16 %v3433
    %v4567 = vunpack.c.h.b16 %v3433
    %v4568 = vunpack.c.l.b16 %v3434
    %v4569 = vunpack.c.h.b16 %v3434
    %v4570 = vunpack.c.l.b16 %v3435
    %v4571 = vunpack.c.l.b16 %v3436
    %v4572 = vunpack.c.h.b16 %v3436
    %v4573 = vunpack.c.l.b16 %v3437
    %v4574 = vunpack.c.h.b16 %v3437
    %v4575 = vunpack.c.l.b16 %v3438
    %v4576 = vunpack.c.h.b16 %v3438
    %v4577 = vunpack.c.l.b16 %v3439
    %v4578 = vunpack.c.l.b16 %v3440
    %v4579 = vunpack.c.h.b16 %v3440
    %v4580 = vunpack.c.l.b16 %v3441
    %v4581 = vunpack.c.h.b16 %v3441
    %v4582 = vunpack.c.l.b16 %v3442
    %v4583 = vunpack.c.h.b16 %v3442
    %v4584 = vunpack.c.l.b16 %v3443
    %v4585 = vunpack.c.l.b16 %v3444
    %v4586 = vunpack.c.h.b16 %v3444
    %v4587 = vunpack.c.l.b16 %v3445
    %v4588 = vunpack.c.h.b16 %v3445
    %v4589 = vunpack.c.l.b16 %v3446
    %v4590 = vunpack.c.h.b16 %v3446
    %v4591 = vunpack.c.l.b16 %v3447
    %v4592 = vunpack.c.l.b16 %v3448
    %v4593 = vunpack.c.h.b16 %v3448
    %v4594 = vunpack.c.l.b16 %v3449
    %v4595 = vunpack.c.h.b16 %v3449
    %v4596 = vunpack.c.l.b16 %v3450
    %v4597 = vunpack.c.h.b16 %v3450
    %v4598 = vunpack.c.l.b16 %v3451
    %v4599 = vunpack.c.l.b16 %v3452
    %v4600 = vunpack.c.h.b16 %v3452
    %v4601 = vunpack.c.l.b16 %v3453
    %v4602 = vunpack.c.h.b16 %v3453
    %v4603 = vunpack.c.l.b16 %v3454
    %v4604 = vunpack.c.h.b16 %v3454
    %v4605 = vunpack.c.l.b16 %v3455
    %v4606 = vunpack.c.l.b16 %v3456
    %v4607 = vunpack.c.h.b16 %v3456
    %v4608 = vunpack.c.l.b16 %v3457
    %v4609 = vunpack.c.h.b16 %v3457
    %v4610 = vunpack.c.l.b16 %v3458
    %v4611 = vunpack.c.h.b16 %v3458
    %v4612 = vunpack.c.l.b16 %v3459
    %v4613 = vunpack.c.l.b16 %v3460
    %v4614 = vunpack.c.h.b16 %v3460
    %v4615 = vunpack.c.l.b16 %v3461
    %v4616 = vunpack.c.h.b16 %v3461
    %v4617 = vunpack.c.l.b16 %v3462
    %v4618 = vunpack.c.h.b16 %v3462
    %v4619 = vunpack.c.l.b16 %v3463
    %v4620 = vunpack.c.l.b16 %v3464
    %v4621 = vunpack.c.h.b16 %v3464
    %v4622 = vunpack.c.l.b16 %v3465
    %v4623 = vunpack.c.h.b16 %v3465
    %v4624 = vunpack.c.l.b16 %v3466
    %v4625 = vunpack.c.h.b16 %v3466
    %v4626 = vunpack.c.l.b16 %v3467
    %v4627 = vunpack.c.l.b16 %v3468
    %v4628 = vunpack.c.h.b16 %v3468
    %v4629 = vunpack.c.l.b16 %v3469
    %v4630 = vunpack.c.h.b16 %v3469
    %v4631 = vunpack.c.l.b16 %v3470
    %v4632 = vunpack.c.h.b16 %v3470
    %v4633 = vunpack.c.l.b16 %v3471
    %v4634 = vunpack.c.l.b16 %v3472
    %v4635 = vunpack.c.h.b16 %v3472
    %v4636 = vunpack.c.l.b16 %v3473
    %v4637 = vunpack.c.h.b16 %v3473
    %v4638 = vunpack.c.l.b16 %v3474
    %v4639 = vunpack.c.h.b16 %v3474
    %v4640 = vunpack.c.l.b16 %v3475
    %v4641 = vunpack.c.l.b16 %v3476
    %v4642 = vunpack.c.h.b16 %v3476
    %v4643 = vunpack.c.l.b16 %v3477
    %v4644 = vunpack.c.h.b16 %v3477
    %v4645 = vunpack.c.l.b16 %v3478
    %v4646 = vunpack.c.h.b16 %v3478
    %v4647 = vunpack.c.l.b16 %v3479
    %v4648 = vunpack.c.l.b16 %v3480
    %v4649 = vunpack.c.h.b16 %v3480
    %v4650 = vunpack.c.l.b16 %v3481
    %v4651 = vunpack.c.h.b16 %v3481
    %v4652 = vunpack.c.l.b16 %v3482
    %v4653 = vunpack.c.h.b16 %v3482
    %v4654 = vunpack.c.l.b16 %v3483
    %v4655 = vunpack.c.l.b16 %v3484
    %v4656 = vunpack.c.h.b16 %v3484
    %v4657 = vunpack.c.l.b16 %v3485
    %v4658 = vunpack.c.h.b16 %v3485
    %v4659 = vunpack.c.l.b16 %v3486
    %v4660 = vunpack.c.h.b16 %v3486
    %v4661 = vunpack.c.l.b16 %v3487
    %v4662 = vunpack.c.l.b16 %v3488
    %v4663 = vunpack.c.h.b16 %v3488
    %v4664 = vunpack.c.l.b16 %v3489
    %v4665 = vunpack.c.h.b16 %v3489
    %v4666 = vunpack.c.l.b16 %v3490
    %v4667 = vunpack.c.h.b16 %v3490
    %v4668 = vunpack.c.l.b16 %v3491
    %v4669 = vunpack.c.l.b16 %v3492
    %v4670 = vunpack.c.h.b16 %v3492
    %v4671 = vunpack.c.l.b16 %v3493
    %v4672 = vunpack.c.h.b16 %v3493
    %v4673 = vunpack.c.l.b16 %v3494
    %v4674 = vunpack.c.h.b16 %v3494
    %v4675 = vunpack.c.l.b16 %v3495
    %v4676 = vunpack.c.l.b16 %v3496
    %v4677 = vunpack.c.h.b16 %v3496
    %v4678 = vunpack.c.l.b16 %v3497
    %v4679 = vunpack.c.h.b16 %v3497
    %v4680 = vunpack.c.l.b16 %v3498
    %v4681 = vunpack.c.h.b16 %v3498
    %v4682 = vunpack.c.l.b16 %v3499
    %v4683 = vunpack.c.l.b16 %v3500
    %v4684 = vunpack.c.h.b16 %v3500
    %v4685 = vunpack.c.l.b16 %v3501
    %v4686 = vunpack.c.h.b16 %v3501
    %v4687 = vunpack.c.l.b16 %v3502
    %v4688 = vunpack.c.h.b16 %v3502
    %v4689 = vunpack.c.l.b16 %v3503
    %v4690 = vunpack.c.l.b16 %v3504
    %v4691 = vunpack.c.h.b16 %v3504
    %v4692 = vunpack.c.l.b16 %v3505
    %v4693 = vunpack.c.h.b16 %v3505
    %v4694 = vunpack.c.l.b16 %v3506
    %v4695 = vunpack.c.h.b16 %v3506
    %v4696 = vunpack.c.l.b16 %v3507
    %v4697 = vunpack.c.l.b16 %v3508
    %v4698 = vunpack.c.h.b16 %v3508
    %v4699 = vunpack.c.l.b16 %v3509
    %v4700 = vunpack.c.h.b16 %v3509
    %v4701 = vunpack.c.l.b16 %v3510
    %v4702 = vunpack.c.h.b16 %v3510
    %v4703 = vunpack.c.l.b16 %v3511
    %v4704 = vunpack.c.l.b16 %v3512
    %v4705 = vunpack.c.h.b16 %v3512
    %v4706 = vunpack.c.l.b16 %v3513
    %v4707 = vunpack.c.h.b16 %v3513
    %v4708 = vunpack.c.l.b16 %v3514
    %v4709 = vunpack.c.h.b16 %v3514
    %v4710 = vunpack.c.l.b16 %v3515
    %v4711 = vunpack.c.l.b16 %v3516
    %v4712 = vunpack.c.h.b16 %v3516
    %v4713 = vunpack.c.l.b16 %v3517
    %v4714 = vunpack.c.h.b16 %v3517
    %v4715 = vunpack.c.l.b16 %v3518
    %v4716 = vunpack.c.h.b16 %v3518
    %v4717 = vunpack.c.l.b16 %v3519
    %v4718 = vunpack.c.l.b16 %v3520
    %v4719 = vunpack.c.h.b16 %v3520
    %v4720 = vunpack.c.l.b16 %v3521
    %v4721 = vunpack.c.h.b16 %v3521
    %v4722 = vunpack.c.l.b16 %v3522
    %v4723 = vunpack.c.h.b16 %v3522
    %v4724 = vunpack.c.l.b16 %v3523
    %v4725 = vunpack.c.l.b16 %v3524
    %v4726 = vunpack.c.h.b16 %v3524
    %v4727 = vunpack.c.l.b16 %v3525
    %v4728 = vunpack.c.h.b16 %v3525
    %v4729 = vunpack.c.l.b16 %v3526
    %v4730 = vunpack.c.h.b16 %v3526
    %v4731 = vunpack.c.l.b16 %v3527
    %v4732 = vunpack.c.l.b16 %v3528
    %v4733 = vunpack.c.h.b16 %v3528
    %v4734 = vunpack.c.l.b16 %v3529
    %v4735 = vunpack.c.h.b16 %v3529
    %v4736 = vunpack.c.l.b16 %v3530
    %v4737 = vunpack.c.h.b16 %v3530
    %v4738 = vunpack.c.l.b16 %v3531
    %v4739 = vunpack.c.l.b16 %v3532
    %v4740 = vunpack.c.h.b16 %v3532
    %v4741 = vunpack.c.l.b16 %v3533
    %v4742 = vunpack.c.h.b16 %v3533
    %v4743 = vunpack.c.l.b16 %v3534
    %v4744 = vunpack.c.h.b16 %v3534
    %v4745 = vunpack.c.l.b16 %v3535
    %v4746 = vunpack.c.l.b16 %v3536
    %v4747 = vunpack.c.h.b16 %v3536
    %v4748 = vunpack.c.l.b16 %v3537
    %v4749 = vunpack.c.h.b16 %v3537
    %v4750 = vunpack.c.l.b16 %v3538
    %v4751 = vunpack.c.h.b16 %v3538
    %v4752 = vunpack.c.l.b16 %v3539
    %v4753 = vunpack.c.l.b16 %v3540
    %v4754 = vunpack.c.h.b16 %v3540
    %v4755 = vunpack.c.l.b16 %v3541
    %v4756 = vunpack.c.h.b16 %v3541
    %v4757 = vunpack.c.l.b16 %v3542
    %v4758 = vunpack.c.h.b16 %v3542
    %v4759 = vunpack.c.l.b16 %v3543
    %v4760 = vunpack.c.l.b16 %v3544
    %v4761 = vunpack.c.h.b16 %v3544
    %v4762 = vunpack.c.l.b16 %v3545
    %v4763 = vunpack.c.h.b16 %v3545
    %v4764 = vunpack.c.l.b16 %v3546
    %v4765 = vunpack.c.h.b16 %v3546
    %v4766 = vunpack.c.l.b16 %v3547
    %v4767 = vunpack.c.l.b16 %v3548
    %v4768 = vunpack.c.h.b16 %v3548
    %v4769 = vunpack.c.l.b16 %v3549
    %v4770 = vunpack.c.h.b16 %v3549
    %v4771 = vunpack.c.l.b16 %v3550
    %v4772 = vunpack.c.h.b16 %v3550
    %v4773 = vunpack.c.l.b16 %v3551
    %v4774 = vunpack.c.l.b16 %v3552
    %v4775 = vunpack.c.h.b16 %v3552
    %v4776 = vunpack.c.l.b16 %v3553
    %v4777 = vunpack.c.h.b16 %v3553
    %v4778 = vunpack.c.l.b16 %v3554
    %v4779 = vunpack.c.h.b16 %v3554
    %v4780 = vunpack.c.l.b16 %v3555
    %v4781 = vunpack.c.l.b16 %v3556
    %v4782 = vunpack.c.h.b16 %v3556
    %v4783 = vunpack.c.l.b16 %v3557
    %v4784 = vunpack.c.h.b16 %v3557
    %v4785 = vunpack.c.l.b16 %v3558
    %v4786 = vunpack.c.h.b16 %v3558
    %v4787 = vunpack.c.l.b16 %v3559
    %v4788 = vunpack.c.l.b16 %v3560
    %v4789 = vunpack.c.h.b16 %v3560
    %v4790 = vunpack.c.l.b16 %v3561
    %v4791 = vunpack.c.h.b16 %v3561
    %v4792 = vunpack.c.l.b16 %v3562
    %v4793 = vunpack.c.h.b16 %v3562
    %v4794 = vunpack.c.l.b16 %v3563
    %v4795 = vunpack.c.l.b16 %v3564
    %v4796 = vunpack.c.h.b16 %v3564
    %v4797 = vunpack.c.l.b16 %v3565
    %v4798 = vunpack.c.h.b16 %v3565
    %v4799 = vunpack.c.l.b16 %v3566
    %v4800 = vunpack.c.h.b16 %v3566
    %v4801 = vunpack.c.l.b16 %v3567
    %v4802 = vunpack.c.l.b16 %v3568
    %v4803 = vunpack.c.h.b16 %v3568
    %v4804 = vunpack.c.l.b16 %v3569
    %v4805 = vunpack.c.h.b16 %v3569
    %v4806 = vunpack.c.l.b16 %v3570
    %v4807 = vunpack.c.h.b16 %v3570
    %v4808 = vunpack.c.l.b16 %v3571
    %v4809 = vunpack.c.l.b16 %v3572
    %v4810 = vunpack.c.h.b16 %v3572
    %v4811 = vunpack.c.l.b16 %v3573
    %v4812 = vunpack.c.h.b16 %v3573
    %v4813 = vunpack.c.l.b16 %v3574
    %v4814 = vunpack.c.h.b16 %v3574
    %v4815 = vunpack.c.l.b16 %v3575
    %v4816 = vunpack.c.l.b16 %v3576
    %v4817 = vunpack.c.h.b16 %v3576
    %v4818 = vunpack.c.l.b16 %v3577
    %v4819 = vunpack.c.h.b16 %v3577
    %v4820 = vunpack.c.l.b16 %v3578
    %v4821 = vunpack.c.h.b16 %v3578
    %v4822 = vunpack.c.l.b16 %v3579
    %v4823 = vunpack.c.l.b16 %v3580
    %v4824 = vunpack.c.h.b16 %v3580
    %v4825 = vunpack.c.l.b16 %v3581
    %v4826 = vunpack.c.h.b16 %v3581
    %v4827 = vunpack.c.l.b16 %v3582
    %v4828 = vunpack.c.h.b16 %v3582
    %v4829 = vunpack.c.l.b16 %v3583
    %v4830 = vunpack.c.l.b16 %v3584
    %v4831 = vunpack.c.h.b16 %v3584
    %v4832 = vunpack.c.l.b16 %v3585
    %v4833 = vunpack.c.h.b16 %v3585
    %v4834 = vunpack.c.l.b16 %v3586
    %v4835 = vunpack.c.h.b16 %v3586
    %v4836 = vunpack.c.l.b16 %v3587
    %v4837 = vunpack.c.l.b16 %v3588
    %v4838 = vunpack.c.h.b16 %v3588
    %v4839 = vunpack.c.l.b16 %v3589
    %v4840 = vunpack.c.h.b16 %v3589
    %v4841 = vunpack.c.l.b16 %v3590
    %v4842 = vunpack.c.h.b16 %v3590
    %v4843 = vunpack.c.l.b16 %v3591
    %v4844 = vunpack.c.l.b16 %v3592
    %v4845 = vunpack.c.h.b16 %v3592
    %v4846 = vunpack.c.l.b16 %v3593
    %v4847 = vunpack.c.h.b16 %v3593
    %v4848 = vunpack.c.l.b16 %v3594
    %v4849 = vunpack.c.h.b16 %v3594
    %v4850 = vunpack.c.l.b16 %v3595
    %v4851 = vunpack.c.l.b16 %v3596
    %v4852 = vunpack.c.h.b16 %v3596
    %v4853 = vunpack.c.l.b16 %v3597
    %v4854 = vunpack.c.h.b16 %v3597
    %v4855 = vunpack.c.l.b16 %v3598
    %v4856 = vunpack.c.h.b16 %v3598
    %v4857 = vunpack.c.l.b16 %v3599
    %v4858 = vpack.c.b16 %v4081, %v4074
    %v4859 = vpack.c.b16 %v4082, %v4075
    %v4860 = vpack.c.b16 %v4083, %v4076
    %v4861 = vpack.c.b16 %v4084, %v4077
    %v4862 = vpack.c.b16 %v4085, %v4078
    %v4863 = vpack.c.b16 %v4086, %v4079
    %v4864 = vpack.c.b16 %v4087, %v4080
    %v4865 = vpack.c.b16 %v4095, %v4088
    %v4866 = vpack.c.b16 %v4096, %v4089
    %v4867 = vpack.c.b16 %v4097, %v4090
    %v4868 = vpack.c.b16 %v4098, %v4091
    %v4869 = vpack.c.b16 %v4099, %v4092
    %v4870 = vpack.c.b16 %v4100, %v4093
    %v4871 = vpack.c.b16 %v4101, %v4094
    %v4872 = vpack.c.b16 %v4109, %v4102
    %v4873 = vpack.c.b16 %v4110, %v4103
    %v4874 = vpack.c.b16 %v4111, %v4104
    %v4875 = vpack.c.b16 %v4112, %v4105
    %v4876 = vpack.c.b16 %v4113, %v4106
    %v4877 = vpack.c.b16 %v4114, %v4107
    %v4878 = vpack.c.b16 %v4115, %v4108
    %v4879 = vpack.c.b16 %v4123, %v4116
    %v4880 = vpack.c.b16 %v4124, %v4117
    %v4881 = vpack.c.b16 %v4125, %v4118
    %v4882 = vpack.c.b16 %v4126, %v4119
    %v4883 = vpack.c.b16 %v4127, %v4120
    %v4884 = vpack.c.b16 %v4128, %v4121
    %v4885 = vpack.c.b16 %v4129, %v4122
    %v4886 = vpack.c.b16 %v4137, %v4130
    %v4887 = vpack.c.b16 %v4138, %v4131
    %v4888 = vpack.c.b16 %v4139, %v4132
    %v4889 = vpack.c.b16 %v4140, %v4133
    %v4890 = vpack.c.b16 %v4141, %v4134
    %v4891 = vpack.c.b16 %v4142, %v4135
    %v4892 = vpack.c.b16 %v4143, %v4136
    %v4893 = vpack.c.b16 %v4151, %v4144
    %v4894 = vpack.c.b16 %v4152, %v4145
    %v4895 = vpack.c.b16 %v4153, %v4146
    %v4896 = vpack.c.b16 %v4154, %v4147
    %v4897 = vpack.c.b16 %v4155, %v4148
    %v4898 = vpack.c.b16 %v4156, %v4149
    %v4899 = vpack.c.b16 %v4157, %v4150
    %v4900 = vpack.c.b16 %v4165, %v4158
    %v4901 = vpack.c.b16 %v4166, %v4159
    %v4902 = vpack.c.b16 %v4167, %v4160
    %v4903 = vpack.c.b16 %v4168, %v4161
    %v4904 = vpack.c.b16 %v4169, %v4162
    %v4905 = vpack.c.b16 %v4170, %v4163
    %v4906 = vpack.c.b16 %v4171, %v4164
    %v4907 = vpack.c.b16 %v4179, %v4172
    %v4908 = vpack.c.b16 %v4180, %v4173
    %v4909 = vpack.c.b16 %v4181, %v4174
    %v4910 = vpack.c.b16 %v4182, %v4175
    %v4911 = vpack.c.b16 %v4183, %v4176
    %v4912 = vpack.c.b16 %v4184, %v4177
    %v4913 = vpack.c.b16 %v4185, %v4178
    %v4914 = vpack.c.b16 %v4193, %v4186
    %v4915 = vpack.c.b16 %v4194, %v4187
    %v4916 = vpack.c.b16 %v4195, %v4188
    %v4917 = vpack.c.b16 %v4196, %v4189
    %v4918 = vpack.c.b16 %v4197, %v4190
    %v4919 = vpack.c.b16 %v4198, %v4191
    %v4920 = vpack.c.b16 %v4199, %v4192
    %v4921 = vpack.c.b16 %v4207, %v4200
    %v4922 = vpack.c.b16 %v4208, %v4201
    %v4923 = vpack.c.b16 %v4209, %v4202
    %v4924 = vpack.c.b16 %v4210, %v4203
    %v4925 = vpack.c.b16 %v4211, %v4204
    %v4926 = vpack.c.b16 %v4212, %v4205
    %v4927 = vpack.c.b16 %v4213, %v4206
    %v4928 = vpack.c.b16 %v4221, %v4214
    %v4929 = vpack.c.b16 %v4222, %v4215
    %v4930 = vpack.c.b16 %v4223, %v4216
    %v4931 = vpack.c.b16 %v4224, %v4217
    %v4932 = vpack.c.b16 %v4225, %v4218
    %v4933 = vpack.c.b16 %v4226, %v4219
    %v4934 = vpack.c.b16 %v4227, %v4220
    %v4935 = vpack.c.b16 %v4235, %v4228
    %v4936 = vpack.c.b16 %v4236, %v4229
    %v4937 = vpack.c.b16 %v4237, %v4230
    %v4938 = vpack.c.b16 %v4238, %v4231
    %v4939 = vpack.c.b16 %v4239, %v4232
    %v4940 = vpack.c.b16 %v4240, %v4233
    %v4941 = vpack.c.b16 %v4241, %v4234
    %v4942 = vpack.c.b16 %v4249, %v4242
    %v4943 = vpack.c.b16 %v4250, %v4243
    %v4944 = vpack.c.b16 %v4251, %v4244
    %v4945 = vpack.c.b16 %v4252, %v4245
    %v4946 = vpack.c.b16 %v4253, %v4246
    %v4947 = vpack.c.b16 %v4254, %v4247
    %v4948 = vpack.c.b16 %v4255, %v4248
    %v4949 = vpack.c.b16 %v4263, %v4256
    %v4950 = vpack.c.b16 %v4264, %v4257
    %v4951 = vpack.c.b16 %v4265, %v4258
    %v4952 = vpack.c.b16 %v4266, %v4259
    %v4953 = vpack.c.b16 %v4267, %v4260
    %v4954 = vpack.c.b16 %v4268, %v4261
    %v4955 = vpack.c.b16 %v4269, %v4262
    %v4956 = vpack.c.b16 %v4277, %v4270
    %v4957 = vpack.c.b16 %v4278, %v4271
    %v4958 = vpack.c.b16 %v4279, %v4272
    %v4959 = vpack.c.b16 %v4280, %v4273
    %v4960 = vpack.c.b16 %v4281, %v4274
    %v4961 = vpack.c.b16 %v4282, %v4275
    %v4962 = vpack.c.b16 %v4283, %v4276
    %v4963 = vpack.c.b16 %v4291, %v4284
    %v4964 = vpack.c.b16 %v4292, %v4285
    %v4965 = vpack.c.b16 %v4293, %v4286
    %v4966 = vpack.c.b16 %v4294, %v4287
    %v4967 = vpack.c.b16 %v4295, %v4288
    %v4968 = vpack.c.b16 %v4296, %v4289
    %v4969 = vpack.c.b16 %v4297, %v4290
    %v4970 = vpack.c.b16 %v4305, %v4298
    %v4971 = vpack.c.b16 %v4306, %v4299
    %v4972 = vpack.c.b16 %v4307, %v4300
    %v4973 = vpack.c.b16 %v4308, %v4301
    %v4974 = vpack.c.b16 %v4309, %v4302
    %v4975 = vpack.c.b16 %v4310, %v4303
    %v4976 = vpack.c.b16 %v4311, %v4304
    %v4977 = vpack.c.b16 %v4319, %v4312
    %v4978 = vpack.c.b16 %v4320, %v4313
    %v4979 = vpack.c.b16 %v4321, %v4314
    %v4980 = vpack.c.b16 %v4322, %v4315
    %v4981 = vpack.c.b16 %v4323, %v4316
    %v4982 = vpack.c.b16 %v4324, %v4317
    %v4983 = vpack.c.b16 %v4325, %v4318
    %v4984 = vpack.c.b16 %v4333, %v4326
    %v4985 = vpack.c.b16 %v4334, %v4327
    %v4986 = vpack.c.b16 %v4335, %v4328
    %v4987 = vpack.c.b16 %v4336, %v4329
    %v4988 = vpack.c.b16 %v4337, %v4330
    %v4989 = vpack.c.b16 %v4338, %v4331
    %v4990 = vpack.c.b16 %v4339, %v4332
    %v4991 = vpack.c.b16 %v4347, %v4340
    %v4992 = vpack.c.b16 %v4348, %v4341
    %v4993 = vpack.c.b16 %v4349, %v4342
    %v4994 = vpack.c.b16 %v4350, %v4343
    %v4995 = vpack.c.b16 %v4351, %v4344
    %v4996 = vpack.c.b16 %v4352, %v4345
    %v4997 = vpack.c.b16 %v4353, %v4346
    %v4998 = vpack.c.b16 %v4361, %v4354
    %v4999 = vpack.c.b16 %v4362, %v4355
    %v5000 = vpack.c.b16 %v4363, %v4356
    %v5001 = vpack.c.b16 %v4364, %v4357
    %v5002 = vpack.c.b16 %v4365, %v4358
    %v5003 = vpack.c.b16 %v4366, %v4359
    %v5004 = vpack.c.b16 %v4367, %v4360
    %v5005 = vpack.c.b16 %v4375, %v4368
    %v5006 = vpack.c.b16 %v4376, %v4369
    %v5007 = vpack.c.b16 %v4377, %v4370
    %v5008 = vpack.c.b16 %v4378, %v4371
    %v5009 = vpack.c.b16 %v4379, %v4372
    %v5010 = vpack.c.b16 %v4380, %v4373
    %v5011 = vpack.c.b16 %v4381, %v4374
    %v5012 = vpack.c.b16 %v4389, %v4382
    %v5013 = vpack.c.b16 %v4390, %v4383
    %v5014 = vpack.c.b16 %v4391, %v4384
    %v5015 = vpack.c.b16 %v4392, %v4385
    %v5016 = vpack.c.b16 %v4393, %v4386
    %v5017 = vpack.c.b16 %v4394, %v4387
    %v5018 = vpack.c.b16 %v4395, %v4388
    %v5019 = vpack.c.b16 %v4403, %v4396
    %v5020 = vpack.c.b16 %v4404, %v4397
    %v5021 = vpack.c.b16 %v4405, %v4398
    %v5022 = vpack.c.b16 %v4406, %v4399
    %v5023 = vpack.c.b16 %v4407, %v4400
    %v5024 = vpack.c.b16 %v4408, %v4401
    %v5025 = vpack.c.b16 %v4409, %v4402
    %v5026 = vpack.c.b16 %v4417, %v4410
    %v5027 = vpack.c.b16 %v4418, %v4411
    %v5028 = vpack.c.b16 %v4419, %v4412
    %v5029 = vpack.c.b16 %v4420, %v4413
    %v5030 = vpack.c.b16 %v4421, %v4414
    %v5031 = vpack.c.b16 %v4422, %v4415
    %v5032 = vpack.c.b16 %v4423, %v4416
    %v5033 = vpack.c.b16 %v4431, %v4424
    %v5034 = vpack.c.b16 %v4432, %v4425
    %v5035 = vpack.c.b16 %v4433, %v4426
    %v5036 = vpack.c.b16 %v4434, %v4427
    %v5037 = vpack.c.b16 %v4435, %v4428
    %v5038 = vpack.c.b16 %v4436, %v4429
    %v5039 = vpack.c.b16 %v4437, %v4430
    %v5040 = vpack.c.b16 %v4445, %v4438
    %v5041 = vpack.c.b16 %v4446, %v4439
    %v5042 = vpack.c.b16 %v4447, %v4440
    %v5043 = vpack.c.b16 %v4448, %v4441
    %v5044 = vpack.c.b16 %v4449, %v4442
    %v5045 = vpack.c.b16 %v4450, %v4443
    %v5046 = vpack.c.b16 %v4451, %v4444
    %v5047 = vpack.c.b16 %v4459, %v4452
    %v5048 = vpack.c.b16 %v4460, %v4453
    %v5049 = vpack.c.b16 %v4461, %v4454
    %v5050 = vpack.c.b16 %v4462, %v4455
    %v5051 = vpack.c.b16 %v4463, %v4456
    %v5052 = vpack.c.b16 %v4464, %v4457
    %v5053 = vpack.c.b16 %v4465, %v4458
    %v5054 = vpack.c.b16 %v4473, %v4466
    %v5055 = vpack.c.b16 %v4474, %v4467
    %v5056 = vpack.c.b16 %v4475, %v4468
    %v5057 = vpack.c.b16 %v4476, %v4469
    %v5058 = vpack.c.b16 %v4477, %v4470
    %v5059 = vpack.c.b16 %v4478, %v4471
    %v5060 = vpack.c.b16 %v4479, %v4472
    %v5061 = vpack.c.b16 %v4487, %v4480
    %v5062 = vpack.c.b16 %v4488, %v4481
    %v5063 = vpack.c.b16 %v4489, %v4482
    %v5064 = vpack.c.b16 %v4490, %v4483
    %v5065 = vpack.c.b16 %v4491, %v4484
    %v5066 = vpack.c.b16 %v4492, %v4485
    %v5067 = vpack.c.b16 %v4493, %v4486
    %v5068 = vpack.c.b16 %v4501, %v4494
    %v5069 = vpack.c.b16 %v4502, %v4495
    %v5070 = vpack.c.b16 %v4503, %v4496
    %v5071 = vpack.c.b16 %v4504, %v4497
    %v5072 = vpack.c.b16 %v4505, %v4498
    %v5073 = vpack.c.b16 %v4506, %v4499
    %v5074 = vpack.c.b16 %v4507, %v4500
    %v5075 = vpack.c.b16 %v4515, %v4508
    %v5076 = vpack.c.b16 %v4516, %v4509
    %v5077 = vpack.c.b16 %v4517, %v4510
    %v5078 = vpack.c.b16 %v4518, %v4511
    %v5079 = vpack.c.b16 %v4519, %v4512
    %v5080 = vpack.c.b16 %v4520, %v4513
    %v5081 = vpack.c.b16 %v4521, %v4514
    %v5082 = vpack.c.b16 %v4529, %v4522
    %v5083 = vpack.c.b16 %v4530, %v4523
    %v5084 = vpack.c.b16 %v4531, %v4524
    %v5085 = vpack.c.b16 %v4532, %v4525
    %v5086 = vpack.c.b16 %v4533, %v4526
    %v5087 = vpack.c.b16 %v4534, %v4527
    %v5088 = vpack.c.b16 %v4535, %v4528
    %v5089 = vpack.c.b16 %v4543, %v4536
    %v5090 = vpack.c.b16 %v4544, %v4537
    %v5091 = vpack.c.b16 %v4545, %v4538
    %v5092 = vpack.c.b16 %v4546, %v4539
    %v5093 = vpack.c.b16 %v4547, %v4540
    %v5094 = vpack.c.b16 %v4548, %v4541
    %v5095 = vpack.c.b16 %v4549, %v4542
    %v5096 = vpack.c.b16 %v4557, %v4550
    %v5097 = vpack.c.b16 %v4558, %v4551
    %v5098 = vpack.c.b16 %v4559, %v4552
    %v5099 = vpack.c.b16 %v4560, %v4553
    %v5100 = vpack.c.b16 %v4561, %v4554
    %v5101 = vpack.c.b16 %v4562, %v4555
    %v5102 = vpack.c.b16 %v4563, %v4556
    %v5103 = vpack.c.b16 %v4571, %v4564
    %v5104 = vpack.c.b16 %v4572, %v4565
    %v5105 = vpack.c.b16 %v4573, %v4566
    %v5106 = vpack.c.b16 %v4574, %v4567
    %v5107 = vpack.c.b16 %v4575, %v4568
    %v5108 = vpack.c.b16 %v4576, %v4569
    %v5109 = vpack.c.b16 %v4577, %v4570
    %v5110 = vpack.c.b16 %v4585, %v4578
    %v5111 = vpack.c.b16 %v4586, %v4579
    %v5112 = vpack.c.b16 %v4587, %v4580
    %v5113 = vpack.c.b16 %v4588, %v4581
    %v5114 = vpack.c.b16 %v4589, %v4582
    %v5115 = vpack.c.b16 %v4590, %v4583
    %v5116 = vpack.c.b16 %v4591, %v4584
    %v5117 = vpack.c.b16 %v4599, %v4592
    %v5118 = vpack.c.b16 %v4600, %v4593
    %v5119 = vpack.c.b16 %v4601, %v4594
    %v5120 = vpack.c.b16 %v4602, %v4595
    %v5121 = vpack.c.b16 %v4603, %v4596
    %v5122 = vpack.c.b16 %v4604, %v4597
    %v5123 = vpack.c.b16 %v4605, %v4598
    %v5124 = vpack.c.b16 %v4613, %v4606
    %v5125 = vpack.c.b16 %v4614, %v4607
    %v5126 = vpack.c.b16 %v4615, %v4608
    %v5127 = vpack.c.b16 %v4616, %v4609
    %v5128 = vpack.c.b16 %v4617, %v4610
    %v5129 = vpack.c.b16 %v4618, %v4611
    %v5130 = vpack.c.b16 %v4619, %v4612
    %v5131 = vpack.c.b16 %v4627, %v4620
    %v5132 = vpack.c.b16 %v4628, %v4621
    %v5133 = vpack.c.b16 %v4629, %v4622
    %v5134 = vpack.c.b16 %v4630, %v4623
    %v5135 = vpack.c.b16 %v4631, %v4624
    %v5136 = vpack.c.b16 %v4632, %v4625
    %v5137 = vpack.c.b16 %v4633, %v4626
    %v5138 = vpack.c.b16 %v4641, %v4634
    %v5139 = vpack.c.b16 %v4642, %v4635
    %v5140 = vpack.c.b16 %v4643, %v4636
    %v5141 = vpack.c.b16 %v4644, %v4637
    %v5142 = vpack.c.b16 %v4645, %v4638
    %v5143 = vpack.c.b16 %v4646, %v4639
    %v5144 = vpack.c.b16 %v4647, %v4640
    %v5145 = vpack.c.b16 %v4655, %v4648
    %v5146 = vpack.c.b16 %v4656, %v4649
    %v5147 = vpack.c.b16 %v4657, %v4650
    %v5148 = vpack.c.b16 %v4658, %v4651
    %v5149 = vpack.c.b16 %v4659, %v4652
    %v5150 = vpack.c.b16 %v4660, %v4653
    %v5151 = vpack.c.b16 %v4661, %v4654
    %v5152 = vpack.c.b16 %v4669, %v4662
    %v5153 = vpack.c.b16 %v4670, %v4663
    %v5154 = vpack.c.b16 %v4671, %v4664
    %v5155 = vpack.c.b16 %v4672, %v4665
    %v5156 = vpack.c.b16 %v4673, %v4666
    %v5157 = vpack.c.b16 %v4674, %v4667
    %v5158 = vpack.c.b16 %v4675, %v4668
    %v5159 = vpack.c.b16 %v4683, %v4676
    %v5160 = vpack.c.b16 %v4684, %v4677
    %v5161 = vpack.c.b16 %v4685, %v4678
    %v5162 = vpack.c.b16 %v4686, %v4679
    %v5163 = vpack.c.b16 %v4687, %v4680
    %v5164 = vpack.c.b16 %v4688, %v4681
    %v5165 = vpack.c.b16 %v4689, %v4682
    %v5166 = vpack.c.b16 %v4697, %v4690
    %v5167 = vpack.c.b16 %v4698, %v4691
    %v5168 = vpack.c.b16 %v4699, %v4692
    %v5169 = vpack.c.b16 %v4700, %v4693
    %v5170 = vpack.c.b16 %v4701, %v4694
    %v5171 = vpack.c.b16 %v4702, %v4695
    %v5172 = vpack.c.b16 %v4703, %v4696
    %v5173 = vpack.c.b16 %v4711, %v4704
    %v5174 = vpack.c.b16 %v4712, %v4705
    %v5175 = vpack.c.b16 %v4713, %v4706
    %v5176 = vpack.c.b16 %v4714, %v4707
    %v5177 = vpack.c.b16 %v4715, %v4708
    %v5178 = vpack.c.b16 %v4716, %v4709
    %v5179 = vpack.c.b16 %v4717, %v4710
    %v5180 = vpack.c.b16 %v4725, %v4718
    %v5181 = vpack.c.b16 %v4726, %v4719
    %v5182 = vpack.c.b16 %v4727, %v4720
    %v5183 = vpack.c.b16 %v4728, %v4721
    %v5184 = vpack.c.b16 %v4729, %v4722
    %v5185 = vpack.c.b16 %v4730, %v4723
    %v5186 = vpack.c.b16 %v4731, %v4724
    %v5187 = vpack.c.b16 %v4739, %v4732
    %v5188 = vpack.c.b16 %v4740, %v4733
    %v5189 = vpack.c.b16 %v4741, %v4734
    %v5190 = vpack.c.b16 %v4742, %v4735
    %v5191 = vpack.c.b16 %v4743, %v4736
    %v5192 = vpack.c.b16 %v4744, %v4737
    %v5193 = vpack.c.b16 %v4745, %v4738
    %v5194 = vpack.c.b16 %v4753, %v4746
    %v5195 = vpack.c.b16 %v4754, %v4747
    %v5196 = vpack.c.b16 %v4755, %v4748
    %v5197 = vpack.c.b16 %v4756, %v4749
    %v5198 = vpack.c.b16 %v4757, %v4750
    %v5199 = vpack.c.b16 %v4758, %v4751
    %v5200 = vpack.c.b16 %v4759, %v4752
    %v5201 = vpack.c.b16 %v4767, %v4760
    %v5202 = vpack.c.b16 %v4768, %v4761
    %v5203 = vpack.c.b16 %v4769, %v4762
    %v5204 = vpack.c.b16 %v4770, %v4763
    %v5205 = vpack.c.b16 %v4771, %v4764
    %v5206 = vpack.c.b16 %v4772, %v4765
    %v5207 = vpack.c.b16 %v4773, %v4766
    %v5208 = vpack.c.b16 %v4781, %v4774
    %v5209 = vpack.c.b16 %v4782, %v4775
    %v5210 = vpack.c.b16 %v4783, %v4776
    %v5211 = vpack.c.b16 %v4784, %v4777
    %v5212 = vpack.c.b16 %v4785, %v4778
    %v5213 = vpack.c.b16 %v4786, %v4779
    %v5214 = vpack.c.b16 %v4787, %v4780
    %v5215 = vpack.c.b16 %v4795, %v4788
    %v5216 = vpack.c.b16 %v4796, %v4789
    %v5217 = vpack.c.b16 %v4797, %v4790
    %v5218 = vpack.c.b16 %v4798, %v4791
    %v5219 = vpack.c.b16 %v4799, %v4792
    %v5220 = vpack.c.b16 %v4800, %v4793
    %v5221 = vpack.c.b16 %v4801, %v4794
    %v5222 = vpack.c.b16 %v4809, %v4802
    %v5223 = vpack.c.b16 %v4810, %v4803
    %v5224 = vpack.c.b16 %v4811, %v4804
    %v5225 = vpack.c.b16 %v4812, %v4805
    %v5226 = vpack.c.b16 %v4813, %v4806
    %v5227 = vpack.c.b16 %v4814, %v4807
    %v5228 = vpack.c.b16 %v4815, %v4808
    %v5229 = vpack.c.b16 %v4823, %v4816
    %v5230 = vpack.c.b16 %v4824, %v4817
    %v5231 = vpack.c.b16 %v4825, %v4818
    %v5232 = vpack.c.b16 %v4826, %v4819
    %v5233 = vpack.c.b16 %v4827, %v4820
    %v5234 = vpack.c.b16 %v4828, %v4821
    %v5235 = vpack.c.b16 %v4829, %v4822
    %v5236 = vpack.c.b16 %v4837, %v4830
    %v5237 = vpack.c.b16 %v4838, %v4831
    %v5238 = vpack.c.b16 %v4839, %v4832
    %v5239 = vpack.c.b16 %v4840, %v4833
    %v5240 = vpack.c.b16 %v4841, %v4834
    %v5241 = vpack.c.b16 %v4842, %v4835
    %v5242 = vpack.c.b16 %v4843, %v4836
    %v5243 = vpack.c.b16 %v4851, %v4844
    %v5244 = vpack.c.b16 %v4852, %v4845
    %v5245 = vpack.c.b16 %v4853, %v4846
    %v5246 = vpack.c.b16 %v4854, %v4847
    %v5247 = vpack.c.b16 %v4855, %v4848
    %v5248 = vpack.c.b16 %v4856, %v4849
    %v5249 = vpack.c.b16 %v4857, %v4850
    %5642 = vmatpush.bf16.msra.mxu0 %v4907
    %5643 = vmatpush.bf16.msra.mxu0 %v4900
    %5644 = vmatpush.bf16.msra.mxu0 %v4893
    %5645 = vmatpush.bf16.msra.mxu0 %v4886
    %5646 = vmatpush.bf16.msra.mxu0 %v4879
    %5647 = vmatpush.bf16.msra.mxu0 %v4872
    %5648 = vmatpush.bf16.msra.mxu0 %v4865
    %5649 = vmatpush.bf16.msra.mxu0 %v4858
    %5650 = vmatmul.bf16.gmra.mxu0 %v3604
    %v5651 = vpop.f32.mrf.mxu0
    %v5652 = vadd.f32 %v3612, %v5651
    %v5653 = vpop.f32.mrf.mxu0
    %5654 = vdwg.mxu0
    %5655 = vmatpush.bf16.msra.mxu0 %v4963
    %5656 = vmatpush.bf16.msra.mxu0 %v4956
    %5657 = vmatpush.bf16.msra.mxu0 %v4949
    %5658 = vmatpush.bf16.msra.mxu0 %v4942
    %5659 = vmatpush.bf16.msra.mxu0 %v4935
    %5660 = vmatpush.bf16.msra.mxu0 %v4928
    %5661 = vmatpush.bf16.msra.mxu0 %v4921
    %5662 = vmatpush.bf16.msra.mxu0 %v4914
    %5663 = vmatmul.bf16.gmra.mxu0 %v3605
    %v5664 = vpop.f32.mrf.mxu0
    %v5665 = vadd.f32 %v5652, %v5664
    %v5666 = vpop.f32.mrf.mxu0
    %5667 = vdwg.mxu0
    %5668 = vmatpush.bf16.msra.mxu0 %v5019
    %5669 = vmatpush.bf16.msra.mxu0 %v5012
    %5670 = vmatpush.bf16.msra.mxu0 %v5005
    %5671 = vmatpush.bf16.msra.mxu0 %v4998
    %5672 = vmatpush.bf16.msra.mxu0 %v4991
    %5673 = vmatpush.bf16.msra.mxu0 %v4984
    %5674 = vmatpush.bf16.msra.mxu0 %v4977
    %5675 = vmatpush.bf16.msra.mxu0 %v4970
    %5676 = vmatmul.bf16.gmra.mxu0 %v3606
    %v5677 = vpop.f32.mrf.mxu0
    %v5678 = vadd.f32 %v5665, %v5677
    %v5679 = vpop.f32.mrf.mxu0
    %5680 = vdwg.mxu0
    %5681 = vmatpush.bf16.msra.mxu0 %v5075
    %5682 = vmatpush.bf16.msra.mxu0 %v5068
    %5683 = vmatpush.bf16.msra.mxu0 %v5061
    %5684 = vmatpush.bf16.msra.mxu0 %v5054
    %5685 = vmatpush.bf16.msra.mxu0 %v5047
    %5686 = vmatpush.bf16.msra.mxu0 %v5040
    %5687 = vmatpush.bf16.msra.mxu0 %v5033
    %5688 = vmatpush.bf16.msra.mxu0 %v5026
    %5689 = vmatmul.bf16.gmra.mxu0 %v3607
    %v5690 = vpop.f32.mrf.mxu0
    %v5691 = vadd.f32 %v5678, %v5690
    %v5692 = vpop.f32.mrf.mxu0
    %5693 = vdwg.mxu0
    %5694 = vmatpush.bf16.msra.mxu0 %v5131
    %5695 = vmatpush.bf16.msra.mxu0 %v5124
    %5696 = vmatpush.bf16.msra.mxu0 %v5117
    %5697 = vmatpush.bf16.msra.mxu0 %v5110
    %5698 = vmatpush.bf16.msra.mxu0 %v5103
    %5699 = vmatpush.bf16.msra.mxu0 %v5096
    %5700 = vmatpush.bf16.msra.mxu0 %v5089
    %5701 = vmatpush.bf16.msra.mxu0 %v5082
    %5702 = vmatmul.bf16.gmra.mxu0 %v3608
    %v5703 = vpop.f32.mrf.mxu0
    %v5704 = vadd.f32 %v5691, %v5703
    %v5705 = vpop.f32.mrf.mxu0
    %5706 = vdwg.mxu0
    %5707 = vmatpush.bf16.msra.mxu0 %v5187
    %5708 = vmatpush.bf16.msra.mxu0 %v5180
    %5709 = vmatpush.bf16.msra.mxu0 %v5173
    %5710 = vmatpush.bf16.msra.mxu0 %v5166
    %5711 = vmatpush.bf16.msra.mxu0 %v5159
    %5712 = vmatpush.bf16.msra.mxu0 %v5152
    %5713 = vmatpush.bf16.msra.mxu0 %v5145
    %5714 = vmatpush.bf16.msra.mxu0 %v5138
    %5715 = vmatmul.bf16.gmra.mxu0 %v3609
    %v5716 = vpop.f32.mrf.mxu0
    %v5717 = vadd.f32 %v5704, %v5716
    %v5718 = vpop.f32.mrf.mxu0
    %5719 = vdwg.mxu0
    %5720 = vmatpush.bf16.msra.mxu0 %v5243
    %5721 = vmatpush.bf16.msra.mxu0 %v5236
    %5722 = vmatpush.bf16.msra.mxu0 %v5229
    %5723 = vmatpush.bf16.msra.mxu0 %v5222
    %5724 = vmatpush.bf16.msra.mxu0 %v5215
    %5725 = vmatpush.bf16.msra.mxu0 %v5208
    %5726 = vmatpush.bf16.msra.mxu0 %v5201
    %5727 = vmatpush.bf16.msra.mxu0 %v5194
    %5728 = vmatmul.bf16.gmra.mxu0 %v3610
    %v5729 = vpop.f32.mrf.mxu0
    %v5730 = vadd.f32 %v5717, %v5729
    %v5731 = vpop.f32.mrf.mxu0
    %5732 = vdwg.mxu0
    %5733 = vmatpush.bf16.msra.mxu0 %v4908
    %5734 = vmatpush.bf16.msra.mxu0 %v4901
    %5735 = vmatpush.bf16.msra.mxu0 %v4894
    %5736 = vmatpush.bf16.msra.mxu0 %v4887
    %5737 = vmatpush.bf16.msra.mxu0 %v4880
    %5738 = vmatpush.bf16.msra.mxu0 %v4873
    %5739 = vmatpush.bf16.msra.mxu0 %v4866
    %5740 = vmatpush.bf16.msra.mxu0 %v4859
    %5741 = vmatmul.bf16.gmra.mxu0 %v3604
    %v5742 = vpop.f32.mrf.mxu0
    %v5743 = vadd.f32 %v3613, %v5742
    %v5744 = vpop.f32.mrf.mxu0
    %5745 = vdwg.mxu0
    %5746 = vmatpush.bf16.msra.mxu0 %v4964
    %5747 = vmatpush.bf16.msra.mxu0 %v4957
    %5748 = vmatpush.bf16.msra.mxu0 %v4950
    %5749 = vmatpush.bf16.msra.mxu0 %v4943
    %5750 = vmatpush.bf16.msra.mxu0 %v4936
    %5751 = vmatpush.bf16.msra.mxu0 %v4929
    %5752 = vmatpush.bf16.msra.mxu0 %v4922
    %5753 = vmatpush.bf16.msra.mxu0 %v4915
    %5754 = vmatmul.bf16.gmra.mxu0 %v3605
    %v5755 = vpop.f32.mrf.mxu0
    %v5756 = vadd.f32 %v5743, %v5755
    %v5757 = vpop.f32.mrf.mxu0
    %5758 = vdwg.mxu0
    %5759 = vmatpush.bf16.msra.mxu0 %v5020
    %5760 = vmatpush.bf16.msra.mxu0 %v5013
    %5761 = vmatpush.bf16.msra.mxu0 %v5006
    %5762 = vmatpush.bf16.msra.mxu0 %v4999
    %5763 = vmatpush.bf16.msra.mxu0 %v4992
    %5764 = vmatpush.bf16.msra.mxu0 %v4985
    %5765 = vmatpush.bf16.msra.mxu0 %v4978
    %5766 = vmatpush.bf16.msra.mxu0 %v4971
    %5767 = vmatmul.bf16.gmra.mxu0 %v3606
    %v5768 = vpop.f32.mrf.mxu0
    %v5769 = vadd.f32 %v5756, %v5768
    %v5770 = vpop.f32.mrf.mxu0
    %5771 = vdwg.mxu0
    %5772 = vmatpush.bf16.msra.mxu0 %v5076
    %5773 = vmatpush.bf16.msra.mxu0 %v5069
    %5774 = vmatpush.bf16.msra.mxu0 %v5062
    %5775 = vmatpush.bf16.msra.mxu0 %v5055
    %5776 = vmatpush.bf16.msra.mxu0 %v5048
    %5777 = vmatpush.bf16.msra.mxu0 %v5041
    %5778 = vmatpush.bf16.msra.mxu0 %v5034
    %5779 = vmatpush.bf16.msra.mxu0 %v5027
    %5780 = vmatmul.bf16.gmra.mxu0 %v3607
    %v5781 = vpop.f32.mrf.mxu0
    %v5782 = vadd.f32 %v5769, %v5781
    %v5783 = vpop.f32.mrf.mxu0
    %5784 = vdwg.mxu0
    %5785 = vmatpush.bf16.msra.mxu0 %v5132
    %5786 = vmatpush.bf16.msra.mxu0 %v5125
    %5787 = vmatpush.bf16.msra.mxu0 %v5118
    %5788 = vmatpush.bf16.msra.mxu0 %v5111
    %5789 = vmatpush.bf16.msra.mxu0 %v5104
    %5790 = vmatpush.bf16.msra.mxu0 %v5097
    %5791 = vmatpush.bf16.msra.mxu0 %v5090
    %5792 = vmatpush.bf16.msra.mxu0 %v5083
    %5793 = vmatmul.bf16.gmra.mxu0 %v3608
    %v5794 = vpop.f32.mrf.mxu0
    %v5795 = vadd.f32 %v5782, %v5794
    %v5796 = vpop.f32.mrf.mxu0
    %5797 = vdwg.mxu0
    %5798 = vmatpush.bf16.msra.mxu0 %v5188
    %5799 = vmatpush.bf16.msra.mxu0 %v5181
    %5800 = vmatpush.bf16.msra.mxu0 %v5174
    %5801 = vmatpush.bf16.msra.mxu0 %v5167
    %5802 = vmatpush.bf16.msra.mxu0 %v5160
    %5803 = vmatpush.bf16.msra.mxu0 %v5153
    %5804 = vmatpush.bf16.msra.mxu0 %v5146
    %5805 = vmatpush.bf16.msra.mxu0 %v5139
    %5806 = vmatmul.bf16.gmra.mxu0 %v3609
    %v5807 = vpop.f32.mrf.mxu0
    %v5808 = vadd.f32 %v5795, %v5807
    %v5809 = vpop.f32.mrf.mxu0
    %5810 = vdwg.mxu0
    %5811 = vmatpush.bf16.msra.mxu0 %v5244
    %5812 = vmatpush.bf16.msra.mxu0 %v5237
    %5813 = vmatpush.bf16.msra.mxu0 %v5230
    %5814 = vmatpush.bf16.msra.mxu0 %v5223
    %5815 = vmatpush.bf16.msra.mxu0 %v5216
    %5816 = vmatpush.bf16.msra.mxu0 %v5209
    %5817 = vmatpush.bf16.msra.mxu0 %v5202
    %5818 = vmatpush.bf16.msra.mxu0 %v5195
    %5819 = vmatmul.bf16.gmra.mxu0 %v3610
    %v5820 = vpop.f32.mrf.mxu0
    %v5821 = vadd.f32 %v5808, %v5820
    %v5822 = vpop.f32.mrf.mxu0
    %5823 = vdwg.mxu0
    %5824 = vmatpush.bf16.msra.mxu0 %v4909
    %5825 = vmatpush.bf16.msra.mxu0 %v4902
    %5826 = vmatpush.bf16.msra.mxu0 %v4895
    %5827 = vmatpush.bf16.msra.mxu0 %v4888
    %5828 = vmatpush.bf16.msra.mxu0 %v4881
    %5829 = vmatpush.bf16.msra.mxu0 %v4874
    %5830 = vmatpush.bf16.msra.mxu0 %v4867
    %5831 = vmatpush.bf16.msra.mxu0 %v4860
    %5832 = vmatmul.bf16.gmra.mxu0 %v3604
    %v5833 = vpop.f32.mrf.mxu0
    %v5834 = vadd.f32 %v3614, %v5833
    %v5835 = vpop.f32.mrf.mxu0
    %5836 = vdwg.mxu0
    %5837 = vmatpush.bf16.msra.mxu0 %v4965
    %5838 = vmatpush.bf16.msra.mxu0 %v4958
    %5839 = vmatpush.bf16.msra.mxu0 %v4951
    %5840 = vmatpush.bf16.msra.mxu0 %v4944
    %5841 = vmatpush.bf16.msra.mxu0 %v4937
    %5842 = vmatpush.bf16.msra.mxu0 %v4930
    %5843 = vmatpush.bf16.msra.mxu0 %v4923
    %5844 = vmatpush.bf16.msra.mxu0 %v4916
    %5845 = vmatmul.bf16.gmra.mxu0 %v3605
    %v5846 = vpop.f32.mrf.mxu0
    %v5847 = vadd.f32 %v5834, %v5846
    %v5848 = vpop.f32.mrf.mxu0
    %5849 = vdwg.mxu0
    %5850 = vmatpush.bf16.msra.mxu0 %v5021
    %5851 = vmatpush.bf16.msra.mxu0 %v5014
    %5852 = vmatpush.bf16.msra.mxu0 %v5007
    %5853 = vmatpush.bf16.msra.mxu0 %v5000
    %5854 = vmatpush.bf16.msra.mxu0 %v4993
    %5855 = vmatpush.bf16.msra.mxu0 %v4986
    %5856 = vmatpush.bf16.msra.mxu0 %v4979
    %5857 = vmatpush.bf16.msra.mxu0 %v4972
    %5858 = vmatmul.bf16.gmra.mxu0 %v3606
    %v5859 = vpop.f32.mrf.mxu0
    %v5860 = vadd.f32 %v5847, %v5859
    %v5861 = vpop.f32.mrf.mxu0
    %5862 = vdwg.mxu0
    %5863 = vmatpush.bf16.msra.mxu0 %v5077
    %5864 = vmatpush.bf16.msra.mxu0 %v5070
    %5865 = vmatpush.bf16.msra.mxu0 %v5063
    %5866 = vmatpush.bf16.msra.mxu0 %v5056
    %5867 = vmatpush.bf16.msra.mxu0 %v5049
    %5868 = vmatpush.bf16.msra.mxu0 %v5042
    %5869 = vmatpush.bf16.msra.mxu0 %v5035
    %5870 = vmatpush.bf16.msra.mxu0 %v5028
    %5871 = vmatmul.bf16.gmra.mxu0 %v3607
    %v5872 = vpop.f32.mrf.mxu0
    %v5873 = vadd.f32 %v5860, %v5872
    %v5874 = vpop.f32.mrf.mxu0
    %5875 = vdwg.mxu0
    %5876 = vmatpush.bf16.msra.mxu0 %v5133
    %5877 = vmatpush.bf16.msra.mxu0 %v5126
    %5878 = vmatpush.bf16.msra.mxu0 %v5119
    %5879 = vmatpush.bf16.msra.mxu0 %v5112
    %5880 = vmatpush.bf16.msra.mxu0 %v5105
    %5881 = vmatpush.bf16.msra.mxu0 %v5098
    %5882 = vmatpush.bf16.msra.mxu0 %v5091
    %5883 = vmatpush.bf16.msra.mxu0 %v5084
    %5884 = vmatmul.bf16.gmra.mxu0 %v3608
    %v5885 = vpop.f32.mrf.mxu0
    %v5886 = vadd.f32 %v5873, %v5885
    %v5887 = vpop.f32.mrf.mxu0
    %5888 = vdwg.mxu0
    %5889 = vmatpush.bf16.msra.mxu0 %v5189
    %5890 = vmatpush.bf16.msra.mxu0 %v5182
    %5891 = vmatpush.bf16.msra.mxu0 %v5175
    %5892 = vmatpush.bf16.msra.mxu0 %v5168
    %5893 = vmatpush.bf16.msra.mxu0 %v5161
    %5894 = vmatpush.bf16.msra.mxu0 %v5154
    %5895 = vmatpush.bf16.msra.mxu0 %v5147
    %5896 = vmatpush.bf16.msra.mxu0 %v5140
    %5897 = vmatmul.bf16.gmra.mxu0 %v3609
    %v5898 = vpop.f32.mrf.mxu0
    %v5899 = vadd.f32 %v5886, %v5898
    %v5900 = vpop.f32.mrf.mxu0
    %5901 = vdwg.mxu0
    %5902 = vmatpush.bf16.msra.mxu0 %v5245
    %5903 = vmatpush.bf16.msra.mxu0 %v5238
    %5904 = vmatpush.bf16.msra.mxu0 %v5231
    %5905 = vmatpush.bf16.msra.mxu0 %v5224
    %5906 = vmatpush.bf16.msra.mxu0 %v5217
    %5907 = vmatpush.bf16.msra.mxu0 %v5210
    %5908 = vmatpush.bf16.msra.mxu0 %v5203
    %5909 = vmatpush.bf16.msra.mxu0 %v5196
    %5910 = vmatmul.bf16.gmra.mxu0 %v3610
    %v5911 = vpop.f32.mrf.mxu0
    %v5912 = vadd.f32 %v5899, %v5911
    %v5913 = vpop.f32.mrf.mxu0
    %5914 = vdwg.mxu0
    %5915 = vmatpush.bf16.msra.mxu0 %v4910
    %5916 = vmatpush.bf16.msra.mxu0 %v4903
    %5917 = vmatpush.bf16.msra.mxu0 %v4896
    %5918 = vmatpush.bf16.msra.mxu0 %v4889
    %5919 = vmatpush.bf16.msra.mxu0 %v4882
    %5920 = vmatpush.bf16.msra.mxu0 %v4875
    %5921 = vmatpush.bf16.msra.mxu0 %v4868
    %5922 = vmatpush.bf16.msra.mxu0 %v4861
    %5923 = vmatmul.bf16.gmra.mxu0 %v3604
    %v5924 = vpop.f32.mrf.mxu0
    %v5925 = vadd.f32 %v3615, %v5924
    %v5926 = vpop.f32.mrf.mxu0
    %5927 = vdwg.mxu0
    %5928 = vmatpush.bf16.msra.mxu0 %v4966
    %5929 = vmatpush.bf16.msra.mxu0 %v4959
    %5930 = vmatpush.bf16.msra.mxu0 %v4952
    %5931 = vmatpush.bf16.msra.mxu0 %v4945
    %5932 = vmatpush.bf16.msra.mxu0 %v4938
    %5933 = vmatpush.bf16.msra.mxu0 %v4931
    %5934 = vmatpush.bf16.msra.mxu0 %v4924
    %5935 = vmatpush.bf16.msra.mxu0 %v4917
    %5936 = vmatmul.bf16.gmra.mxu0 %v3605
    %v5937 = vpop.f32.mrf.mxu0
    %v5938 = vadd.f32 %v5925, %v5937
    %v5939 = vpop.f32.mrf.mxu0
    %5940 = vdwg.mxu0
    %5941 = vmatpush.bf16.msra.mxu0 %v5022
    %5942 = vmatpush.bf16.msra.mxu0 %v5015
    %5943 = vmatpush.bf16.msra.mxu0 %v5008
    %5944 = vmatpush.bf16.msra.mxu0 %v5001
    %5945 = vmatpush.bf16.msra.mxu0 %v4994
    %5946 = vmatpush.bf16.msra.mxu0 %v4987
    %5947 = vmatpush.bf16.msra.mxu0 %v4980
    %5948 = vmatpush.bf16.msra.mxu0 %v4973
    %5949 = vmatmul.bf16.gmra.mxu0 %v3606
    %v5950 = vpop.f32.mrf.mxu0
    %v5951 = vadd.f32 %v5938, %v5950
    %v5952 = vpop.f32.mrf.mxu0
    %5953 = vdwg.mxu0
    %5954 = vmatpush.bf16.msra.mxu0 %v5078
    %5955 = vmatpush.bf16.msra.mxu0 %v5071
    %5956 = vmatpush.bf16.msra.mxu0 %v5064
    %5957 = vmatpush.bf16.msra.mxu0 %v5057
    %5958 = vmatpush.bf16.msra.mxu0 %v5050
    %5959 = vmatpush.bf16.msra.mxu0 %v5043
    %5960 = vmatpush.bf16.msra.mxu0 %v5036
    %5961 = vmatpush.bf16.msra.mxu0 %v5029
    %5962 = vmatmul.bf16.gmra.mxu0 %v3607
    %v5963 = vpop.f32.mrf.mxu0
    %v5964 = vadd.f32 %v5951, %v5963
    %v5965 = vpop.f32.mrf.mxu0
    %5966 = vdwg.mxu0
    %5967 = vmatpush.bf16.msra.mxu0 %v5134
    %5968 = vmatpush.bf16.msra.mxu0 %v5127
    %5969 = vmatpush.bf16.msra.mxu0 %v5120
    %5970 = vmatpush.bf16.msra.mxu0 %v5113
    %5971 = vmatpush.bf16.msra.mxu0 %v5106
    %5972 = vmatpush.bf16.msra.mxu0 %v5099
    %5973 = vmatpush.bf16.msra.mxu0 %v5092
    %5974 = vmatpush.bf16.msra.mxu0 %v5085
    %5975 = vmatmul.bf16.gmra.mxu0 %v3608
    %v5976 = vpop.f32.mrf.mxu0
    %v5977 = vadd.f32 %v5964, %v5976
    %v5978 = vpop.f32.mrf.mxu0
    %5979 = vdwg.mxu0
    %5980 = vmatpush.bf16.msra.mxu0 %v5190
    %5981 = vmatpush.bf16.msra.mxu0 %v5183
    %5982 = vmatpush.bf16.msra.mxu0 %v5176
    %5983 = vmatpush.bf16.msra.mxu0 %v5169
    %5984 = vmatpush.bf16.msra.mxu0 %v5162
    %5985 = vmatpush.bf16.msra.mxu0 %v5155
    %5986 = vmatpush.bf16.msra.mxu0 %v5148
    %5987 = vmatpush.bf16.msra.mxu0 %v5141
    %5988 = vmatmul.bf16.gmra.mxu0 %v3609
    %v5989 = vpop.f32.mrf.mxu0
    %v5990 = vadd.f32 %v5977, %v5989
    %v5991 = vpop.f32.mrf.mxu0
    %5992 = vdwg.mxu0
    %5993 = vmatpush.bf16.msra.mxu0 %v5246
    %5994 = vmatpush.bf16.msra.mxu0 %v5239
    %5995 = vmatpush.bf16.msra.mxu0 %v5232
    %5996 = vmatpush.bf16.msra.mxu0 %v5225
    %5997 = vmatpush.bf16.msra.mxu0 %v5218
    %5998 = vmatpush.bf16.msra.mxu0 %v5211
    %5999 = vmatpush.bf16.msra.mxu0 %v5204
    %6000 = vmatpush.bf16.msra.mxu0 %v5197
    %6001 = vmatmul.bf16.gmra.mxu0 %v3610
    %v6002 = vpop.f32.mrf.mxu0
    %v6003 = vadd.f32 %v5990, %v6002
    %v6004 = vpop.f32.mrf.mxu0
    %6005 = vdwg.mxu0
    %6006 = vmatpush.bf16.msra.mxu0 %v4911
    %6007 = vmatpush.bf16.msra.mxu0 %v4904
    %6008 = vmatpush.bf16.msra.mxu0 %v4897
    %6009 = vmatpush.bf16.msra.mxu0 %v4890
    %6010 = vmatpush.bf16.msra.mxu0 %v4883
    %6011 = vmatpush.bf16.msra.mxu0 %v4876
    %6012 = vmatpush.bf16.msra.mxu0 %v4869
    %6013 = vmatpush.bf16.msra.mxu0 %v4862
    %6014 = vmatmul.bf16.gmra.mxu0 %v3604
    %v6015 = vpop.f32.mrf.mxu0
    %v6016 = vadd.f32 %v3616, %v6015
    %v6017 = vpop.f32.mrf.mxu0
    %6018 = vdwg.mxu0
    %6019 = vmatpush.bf16.msra.mxu0 %v4967
    %6020 = vmatpush.bf16.msra.mxu0 %v4960
    %6021 = vmatpush.bf16.msra.mxu0 %v4953
    %6022 = vmatpush.bf16.msra.mxu0 %v4946
    %6023 = vmatpush.bf16.msra.mxu0 %v4939
    %6024 = vmatpush.bf16.msra.mxu0 %v4932
    %6025 = vmatpush.bf16.msra.mxu0 %v4925
    %6026 = vmatpush.bf16.msra.mxu0 %v4918
    %6027 = vmatmul.bf16.gmra.mxu0 %v3605
    %v6028 = vpop.f32.mrf.mxu0
    %v6029 = vadd.f32 %v6016, %v6028
    %v6030 = vpop.f32.mrf.mxu0
    %6031 = vdwg.mxu0
    %6032 = vmatpush.bf16.msra.mxu0 %v5023
    %6033 = vmatpush.bf16.msra.mxu0 %v5016
    %6034 = vmatpush.bf16.msra.mxu0 %v5009
    %6035 = vmatpush.bf16.msra.mxu0 %v5002
    %6036 = vmatpush.bf16.msra.mxu0 %v4995
    %6037 = vmatpush.bf16.msra.mxu0 %v4988
    %6038 = vmatpush.bf16.msra.mxu0 %v4981
    %6039 = vmatpush.bf16.msra.mxu0 %v4974
    %6040 = vmatmul.bf16.gmra.mxu0 %v3606
    %v6041 = vpop.f32.mrf.mxu0
    %v6042 = vadd.f32 %v6029, %v6041
    %v6043 = vpop.f32.mrf.mxu0
    %6044 = vdwg.mxu0
    %6045 = vmatpush.bf16.msra.mxu0 %v5079
    %6046 = vmatpush.bf16.msra.mxu0 %v5072
    %6047 = vmatpush.bf16.msra.mxu0 %v5065
    %6048 = vmatpush.bf16.msra.mxu0 %v5058
    %6049 = vmatpush.bf16.msra.mxu0 %v5051
    %6050 = vmatpush.bf16.msra.mxu0 %v5044
    %6051 = vmatpush.bf16.msra.mxu0 %v5037
    %6052 = vmatpush.bf16.msra.mxu0 %v5030
    %6053 = vmatmul.bf16.gmra.mxu0 %v3607
    %v6054 = vpop.f32.mrf.mxu0
    %v6055 = vadd.f32 %v6042, %v6054
    %v6056 = vpop.f32.mrf.mxu0
    %6057 = vdwg.mxu0
    %6058 = vmatpush.bf16.msra.mxu0 %v5135
    %6059 = vmatpush.bf16.msra.mxu0 %v5128
    %6060 = vmatpush.bf16.msra.mxu0 %v5121
    %6061 = vmatpush.bf16.msra.mxu0 %v5114
    %6062 = vmatpush.bf16.msra.mxu0 %v5107
    %6063 = vmatpush.bf16.msra.mxu0 %v5100
    %6064 = vmatpush.bf16.msra.mxu0 %v5093
    %6065 = vmatpush.bf16.msra.mxu0 %v5086
    %6066 = vmatmul.bf16.gmra.mxu0 %v3608
    %v6067 = vpop.f32.mrf.mxu0
    %v6068 = vadd.f32 %v6055, %v6067
    %v6069 = vpop.f32.mrf.mxu0
    %6070 = vdwg.mxu0
    %6071 = vmatpush.bf16.msra.mxu0 %v5191
    %6072 = vmatpush.bf16.msra.mxu0 %v5184
    %6073 = vmatpush.bf16.msra.mxu0 %v5177
    %6074 = vmatpush.bf16.msra.mxu0 %v5170
    %6075 = vmatpush.bf16.msra.mxu0 %v5163
    %6076 = vmatpush.bf16.msra.mxu0 %v5156
    %6077 = vmatpush.bf16.msra.mxu0 %v5149
    %6078 = vmatpush.bf16.msra.mxu0 %v5142
    %6079 = vmatmul.bf16.gmra.mxu0 %v3609
    %v6080 = vpop.f32.mrf.mxu0
    %v6081 = vadd.f32 %v6068, %v6080
    %v6082 = vpop.f32.mrf.mxu0
    %6083 = vdwg.mxu0
    %6084 = vmatpush.bf16.msra.mxu0 %v5247
    %6085 = vmatpush.bf16.msra.mxu0 %v5240
    %6086 = vmatpush.bf16.msra.mxu0 %v5233
    %6087 = vmatpush.bf16.msra.mxu0 %v5226
    %6088 = vmatpush.bf16.msra.mxu0 %v5219
    %6089 = vmatpush.bf16.msra.mxu0 %v5212
    %6090 = vmatpush.bf16.msra.mxu0 %v5205
    %6091 = vmatpush.bf16.msra.mxu0 %v5198
    %6092 = vmatmul.bf16.gmra.mxu0 %v3610
    %v6093 = vpop.f32.mrf.mxu0
    %v6094 = vadd.f32 %v6081, %v6093
    %v6095 = vpop.f32.mrf.mxu0
    %6096 = vdwg.mxu0
    %6097 = vmatpush.bf16.msra.mxu0 %v4912
    %6098 = vmatpush.bf16.msra.mxu0 %v4905
    %6099 = vmatpush.bf16.msra.mxu0 %v4898
    %6100 = vmatpush.bf16.msra.mxu0 %v4891
    %6101 = vmatpush.bf16.msra.mxu0 %v4884
    %6102 = vmatpush.bf16.msra.mxu0 %v4877
    %6103 = vmatpush.bf16.msra.mxu0 %v4870
    %6104 = vmatpush.bf16.msra.mxu0 %v4863
    %6105 = vmatmul.bf16.gmra.mxu0 %v3604
    %v6106 = vpop.f32.mrf.mxu0
    %v6107 = vadd.f32 %v3617, %v6106
    %v6108 = vpop.f32.mrf.mxu0
    %6109 = vdwg.mxu0
    %6110 = vmatpush.bf16.msra.mxu0 %v4968
    %6111 = vmatpush.bf16.msra.mxu0 %v4961
    %6112 = vmatpush.bf16.msra.mxu0 %v4954
    %6113 = vmatpush.bf16.msra.mxu0 %v4947
    %6114 = vmatpush.bf16.msra.mxu0 %v4940
    %6115 = vmatpush.bf16.msra.mxu0 %v4933
    %6116 = vmatpush.bf16.msra.mxu0 %v4926
    %6117 = vmatpush.bf16.msra.mxu0 %v4919
    %6118 = vmatmul.bf16.gmra.mxu0 %v3605
    %v6119 = vpop.f32.mrf.mxu0
    %v6120 = vadd.f32 %v6107, %v6119
    %v6121 = vpop.f32.mrf.mxu0
    %6122 = vdwg.mxu0
    %6123 = vmatpush.bf16.msra.mxu0 %v5024
    %6124 = vmatpush.bf16.msra.mxu0 %v5017
    %6125 = vmatpush.bf16.msra.mxu0 %v5010
    %6126 = vmatpush.bf16.msra.mxu0 %v5003
    %6127 = vmatpush.bf16.msra.mxu0 %v4996
    %6128 = vmatpush.bf16.msra.mxu0 %v4989
    %6129 = vmatpush.bf16.msra.mxu0 %v4982
    %6130 = vmatpush.bf16.msra.mxu0 %v4975
    %6131 = vmatmul.bf16.gmra.mxu0 %v3606
    %v6132 = vpop.f32.mrf.mxu0
    %v6133 = vadd.f32 %v6120, %v6132
    %v6134 = vpop.f32.mrf.mxu0
    %6135 = vdwg.mxu0
    %6136 = vmatpush.bf16.msra.mxu0 %v5080
    %6137 = vmatpush.bf16.msra.mxu0 %v5073
    %6138 = vmatpush.bf16.msra.mxu0 %v5066
    %6139 = vmatpush.bf16.msra.mxu0 %v5059
    %6140 = vmatpush.bf16.msra.mxu0 %v5052
    %6141 = vmatpush.bf16.msra.mxu0 %v5045
    %6142 = vmatpush.bf16.msra.mxu0 %v5038
    %6143 = vmatpush.bf16.msra.mxu0 %v5031
    %6144 = vmatmul.bf16.gmra.mxu0 %v3607
    %v6145 = vpop.f32.mrf.mxu0
    %v6146 = vadd.f32 %v6133, %v6145
    %v6147 = vpop.f32.mrf.mxu0
    %6148 = vdwg.mxu0
    %6149 = vmatpush.bf16.msra.mxu0 %v5136
    %6150 = vmatpush.bf16.msra.mxu0 %v5129
    %6151 = vmatpush.bf16.msra.mxu0 %v5122
    %6152 = vmatpush.bf16.msra.mxu0 %v5115
    %6153 = vmatpush.bf16.msra.mxu0 %v5108
    %6154 = vmatpush.bf16.msra.mxu0 %v5101
    %6155 = vmatpush.bf16.msra.mxu0 %v5094
    %6156 = vmatpush.bf16.msra.mxu0 %v5087
    %6157 = vmatmul.bf16.gmra.mxu0 %v3608
    %v6158 = vpop.f32.mrf.mxu0
    %v6159 = vadd.f32 %v6146, %v6158
    %v6160 = vpop.f32.mrf.mxu0
    %6161 = vdwg.mxu0
    %6162 = vmatpush.bf16.msra.mxu0 %v5192
    %6163 = vmatpush.bf16.msra.mxu0 %v5185
    %6164 = vmatpush.bf16.msra.mxu0 %v5178
    %6165 = vmatpush.bf16.msra.mxu0 %v5171
    %6166 = vmatpush.bf16.msra.mxu0 %v5164
    %6167 = vmatpush.bf16.msra.mxu0 %v5157
    %6168 = vmatpush.bf16.msra.mxu0 %v5150
    %6169 = vmatpush.bf16.msra.mxu0 %v5143
    %6170 = vmatmul.bf16.gmra.mxu0 %v3609
    %v6171 = vpop.f32.mrf.mxu0
    %v6172 = vadd.f32 %v6159, %v6171
    %v6173 = vpop.f32.mrf.mxu0
    %6174 = vdwg.mxu0
    %6175 = vmatpush.bf16.msra.mxu0 %v5248
    %6176 = vmatpush.bf16.msra.mxu0 %v5241
    %6177 = vmatpush.bf16.msra.mxu0 %v5234
    %6178 = vmatpush.bf16.msra.mxu0 %v5227
    %6179 = vmatpush.bf16.msra.mxu0 %v5220
    %6180 = vmatpush.bf16.msra.mxu0 %v5213
    %6181 = vmatpush.bf16.msra.mxu0 %v5206
    %6182 = vmatpush.bf16.msra.mxu0 %v5199
    %6183 = vmatmul.bf16.gmra.mxu0 %v3610
    %v6184 = vpop.f32.mrf.mxu0
    %v6185 = vadd.f32 %v6172, %v6184
    %v6186 = vpop.f32.mrf.mxu0
    %6187 = vdwg.mxu0
    %6188 = vmatpush.bf16.msra.mxu0 %v4913
    %6189 = vmatpush.bf16.msra.mxu0 %v4906
    %6190 = vmatpush.bf16.msra.mxu0 %v4899
    %6191 = vmatpush.bf16.msra.mxu0 %v4892
    %6192 = vmatpush.bf16.msra.mxu0 %v4885
    %6193 = vmatpush.bf16.msra.mxu0 %v4878
    %6194 = vmatpush.bf16.msra.mxu0 %v4871
    %6195 = vmatpush.bf16.msra.mxu0 %v4864
    %6196 = vmatmul.bf16.gmra.mxu0 %v3604
    %v6197 = vpop.f32.mrf.mxu0
    %v6198 = vadd.f32 %v3618, %v6197
    %v6199 = vpop.f32.mrf.mxu0
    %6200 = vdwg.mxu0
    %6201 = vmatpush.bf16.msra.mxu0 %v4969
    %6202 = vmatpush.bf16.msra.mxu0 %v4962
    %6203 = vmatpush.bf16.msra.mxu0 %v4955
    %6204 = vmatpush.bf16.msra.mxu0 %v4948
    %6205 = vmatpush.bf16.msra.mxu0 %v4941
    %6206 = vmatpush.bf16.msra.mxu0 %v4934
    %6207 = vmatpush.bf16.msra.mxu0 %v4927
    %6208 = vmatpush.bf16.msra.mxu0 %v4920
    %6209 = vmatmul.bf16.gmra.mxu0 %v3605
    %v6210 = vpop.f32.mrf.mxu0
    %v6211 = vadd.f32 %v6198, %v6210
    %v6212 = vpop.f32.mrf.mxu0
    %6213 = vdwg.mxu0
    %6214 = vmatpush.bf16.msra.mxu0 %v5025
    %6215 = vmatpush.bf16.msra.mxu0 %v5018
    %6216 = vmatpush.bf16.msra.mxu0 %v5011
    %6217 = vmatpush.bf16.msra.mxu0 %v5004
    %6218 = vmatpush.bf16.msra.mxu0 %v4997
    %6219 = vmatpush.bf16.msra.mxu0 %v4990
    %6220 = vmatpush.bf16.msra.mxu0 %v4983
    %6221 = vmatpush.bf16.msra.mxu0 %v4976
    %6222 = vmatmul.bf16.gmra.mxu0 %v3606
    %v6223 = vpop.f32.mrf.mxu0
    %v6224 = vadd.f32 %v6211, %v6223
    %v6225 = vpop.f32.mrf.mxu0
    %6226 = vdwg.mxu0
    %6227 = vmatpush.bf16.msra.mxu0 %v5081
    %6228 = vmatpush.bf16.msra.mxu0 %v5074
    %6229 = vmatpush.bf16.msra.mxu0 %v5067
    %6230 = vmatpush.bf16.msra.mxu0 %v5060
    %6231 = vmatpush.bf16.msra.mxu0 %v5053
    %6232 = vmatpush.bf16.msra.mxu0 %v5046
    %6233 = vmatpush.bf16.msra.mxu0 %v5039
    %6234 = vmatpush.bf16.msra.mxu0 %v5032
    %6235 = vmatmul.bf16.gmra.mxu0 %v3607
    %v6236 = vpop.f32.mrf.mxu0
    %v6237 = vadd.f32 %v6224, %v6236
    %v6238 = vpop.f32.mrf.mxu0
    %6239 = vdwg.mxu0
    %6240 = vmatpush.bf16.msra.mxu0 %v5137
    %6241 = vmatpush.bf16.msra.mxu0 %v5130
    %6242 = vmatpush.bf16.msra.mxu0 %v5123
    %6243 = vmatpush.bf16.msra.mxu0 %v5116
    %6244 = vmatpush.bf16.msra.mxu0 %v5109
    %6245 = vmatpush.bf16.msra.mxu0 %v5102
    %6246 = vmatpush.bf16.msra.mxu0 %v5095
    %6247 = vmatpush.bf16.msra.mxu0 %v5088
    %6248 = vmatmul.bf16.gmra.mxu0 %v3608
    %v6249 = vpop.f32.mrf.mxu0
    %v6250 = vadd.f32 %v6237, %v6249
    %v6251 = vpop.f32.mrf.mxu0
    %6252 = vdwg.mxu0
    %6253 = vmatpush.bf16.msra.mxu0 %v5193
    %6254 = vmatpush.bf16.msra.mxu0 %v5186
    %6255 = vmatpush.bf16.msra.mxu0 %v5179
    %6256 = vmatpush.bf16.msra.mxu0 %v5172
    %6257 = vmatpush.bf16.msra.mxu0 %v5165
    %6258 = vmatpush.bf16.msra.mxu0 %v5158
    %6259 = vmatpush.bf16.msra.mxu0 %v5151
    %6260 = vmatpush.bf16.msra.mxu0 %v5144
    %6261 = vmatmul.bf16.gmra.mxu0 %v3609
    %v6262 = vpop.f32.mrf.mxu0
    %v6263 = vadd.f32 %v6250, %v6262
    %v6264 = vpop.f32.mrf.mxu0
    %6265 = vdwg.mxu0
    %6266 = vmatpush.bf16.msra.mxu0 %v5249
    %6267 = vmatpush.bf16.msra.mxu0 %v5242
    %6268 = vmatpush.bf16.msra.mxu0 %v5235
    %6269 = vmatpush.bf16.msra.mxu0 %v5228
    %6270 = vmatpush.bf16.msra.mxu0 %v5221
    %6271 = vmatpush.bf16.msra.mxu0 %v5214
    %6272 = vmatpush.bf16.msra.mxu0 %v5207
    %6273 = vmatpush.bf16.msra.mxu0 %v5200
    %6274 = vmatmul.bf16.gmra.mxu0 %v3610
    %v6275 = vpop.f32.mrf.mxu0
    %v6276 = vadd.f32 %v6263, %v6275
    %v6277 = vpop.f32.mrf.mxu0
    %6278 = vdwg.mxu0
    %v6279 = vadd.f32 %v5730, %v5821
    %v6280 = vadd.f32 %v6279, %v5912
    %v6281 = vadd.f32 %v6280, %v6003
    %v6282 = vadd.f32 %v6281, %v6094
    %v6283 = vadd.f32 %v6282, %v6185
    %v6284 = vadd.f32 %v6283, %v6276
    %6285 = vadd.xlane.f32.xlu0 %v6284
    %v6286 = vpop.xlane.xlu0 %6285
    %v6287 = vmul.f32 %v6286, 0.00125
    %v6288 = vmul.f32 %v5730, %v5730
    %v6289 = vmul.f32 %v5821, %v5821
    %v6290 = vmul.f32 %v5912, %v5912
    %v6291 = vmul.f32 %v6003, %v6003
    %v6292 = vmul.f32 %v6094, %v6094
    %v6293 = vmul.f32 %v6185, %v6185
    %v6294 = vmul.f32 %v6276, %v6276
    %v6295 = vadd.f32 %v6288, %v6289
    %v6296 = vadd.f32 %v6295, %v6290
    %v6297 = vadd.f32 %v6296, %v6291
    %v6298 = vadd.f32 %v6297, %v6292
    %v6299 = vadd.f32 %v6298, %v6293
    %v6300 = vadd.f32 %v6299, %v6294
    %6301 = vadd.xlane.f32.xlu0 %v6300
    %v6302 = vpop.xlane.xlu0 %6301
    %v6303 = vmul.f32 %v6302, 0.00125
    %v6304 = vmul.f32 %v6287, %v6287
    %v6305 = vsub.f32 %v6303, %v6304
    %v6306 = vsub.f32 %v5730, %v6287
    %v6307 = vsub.f32 %v5821, %v6287
    %v6308 = vsub.f32 %v5912, %v6287
    %v6309 = vsub.f32 %v6003, %v6287
    %v6310 = vsub.f32 %v6094, %v6287
    %v6311 = vsub.f32 %v6185, %v6287
    %v6312 = vsub.f32 %v6276, %v6287
    %v6313 = vadd.f32 %v6305, 1e-05
    %v6314 = vrsqrt.pop %v6313
    %v6315 = vmul.f32 %v6314, %v6313
    %v6316 = vmul.f32 %v6315, %v6314
    %v6317 = vmul.f32 0.5, %v6316
    %v6318 = vsub.f32 1.5, %v6317
    %v6319 = vmul.f32 %v6314, %v6318
    %vm6320 = vweird.f32 %v6313
    %vm6321 = vweird.f32 %v6314
    %vm6322 = vmor %vm6320, %vm6321
    %v6323 = vsel %vm6322, %v6314, %v6319
    %v6324 = vmul.f32 %v6306, %v6323
    %v6325 = vmul.f32 %v6307, %v6323
    %v6326 = vmul.f32 %v6308, %v6323
    %v6327 = vmul.f32 %v6309, %v6323
    %v6328 = vmul.f32 %v6310, %v6323
    %v6329 = vmul.f32 %v6311, %v6323
    %v6330 = vmul.f32 %v6312, %v6323
    %s6331 = scalar_lea.vmem [#allocation10], 63
    %v6332 = vld [vmem:[%s6331] ss:$8 sm:$0xf]
    %v6333 = vld [vmem:[%s6331] ss:$8 sm:$0xf0]
    %v6334 = vor.u32 %v6332, %v6333
    %s6335 = scalar_lea.vmem [#allocation10], 112
    %v6336 = vld [vmem:[%s6335] ss:$8 sm:$0xf]
    %v6337 = vld [vmem:[%s6335] ss:$8 sm:$0xf0]
    %v6338 = vor.u32 %v6336, %v6337
    %v6340 = vperm.slane %v6334, 0
    %v6341 = vperm.slane %v6334, 1
    %v6342 = vperm.slane %v6334, 2
    %v6343 = vperm.slane %v6334, 3
    %v6344 = vperm.slane %v6334, 4
    %v6345 = vperm.slane %v6334, 5
    %v6346 = vperm.slane %v6334, 6
    %v6354 = vmul.f32 %v6324, %v6340
    %v6355 = vmul.f32 %v6325, %v6341
    %v6356 = vmul.f32 %v6326, %v6342
    %v6357 = vmul.f32 %v6327, %v6343
    %v6358 = vmul.f32 %v6328, %v6344
    %v6359 = vmul.f32 %v6329, %v6345
    %v6360 = vmul.f32 %v6330, %v6346
    %v6362 = vperm.slane %v6338, 0
    %v6363 = vperm.slane %v6338, 1
    %v6364 = vperm.slane %v6338, 2
    %v6365 = vperm.slane %v6338, 3
    %v6366 = vperm.slane %v6338, 4
    %v6367 = vperm.slane %v6338, 5
    %v6368 = vperm.slane %v6338, 6
    %v6376 = vadd.f32 %v6354, %v6362
    %v6377 = vadd.f32 %v6355, %v6363
    %v6378 = vadd.f32 %v6356, %v6364
    %v6379 = vadd.f32 %v6357, %v6365
    %v6380 = vadd.f32 %v6358, %v6366
    %v6381 = vadd.f32 %v6359, %v6367
    %v6382 = vadd.f32 %v6360, %v6368
    %v6383 = vxor.u32 %v6376, 2147483648
    %v6384 = vxor.u32 %v6377, 2147483648
    %v6385 = vxor.u32 %v6378, 2147483648
    %v6386 = vxor.u32 %v6379, 2147483648
    %v6387 = vxor.u32 %v6380, 2147483648
    %v6388 = vxor.u32 %v6381, 2147483648
    %v6389 = vxor.u32 %v6382, 2147483648
    %v6390 = vmul.f32 %v6383, 1.442695
    %v6391 = vpow.pop %v6390
    %v6392 = vmul.f32 %v6384, 1.442695
    %v6393 = vpow.pop %v6392
    %v6394 = vmul.f32 %v6385, 1.442695
    %v6395 = vpow.pop %v6394
    %v6396 = vmul.f32 %v6386, 1.442695
    %v6397 = vpow.pop %v6396
    %v6398 = vmul.f32 %v6387, 1.442695
    %v6399 = vpow.pop %v6398
    %v6400 = vmul.f32 %v6388, 1.442695
    %v6401 = vpow.pop %v6400
    %v6402 = vmul.f32 %v6389, 1.442695
    %v6403 = vpow.pop %v6402
    %v6404 = vadd.f32 %v6391, 1.0
    %v6405 = vadd.f32 %v6393, 1.0
    %v6406 = vadd.f32 %v6395, 1.0
    %v6407 = vadd.f32 %v6397, 1.0
    %v6408 = vadd.f32 %v6399, 1.0
    %v6409 = vadd.f32 %v6401, 1.0
    %v6410 = vadd.f32 %v6403, 1.0
    %v6411 = vrcp.pop %v6404
    %v6412 = vmul.f32 %v6404, %v6411
    %v6413 = vsub.f32 1.0, %v6412
    %v6414 = vmul.f32 %v6411, %v6413
    %v6415 = vadd.f32 %v6411, %v6414
    %vm6416 = vweird.f32 %v6404
    %vm6417 = vweird.f32 %v6411
    %vm6418 = vmor %vm6416, %vm6417
    %v6419 = vsel %vm6418, %v6411, %v6415
    %v6420 = vand.u32 2147483647, %v6404
    %vm6421 = vcmp.eq.f32.partialorder %v6420, 8.507059e+37
    %v6422 = vand.u32 %v6404, 2147483648
    %v6423 = vor.u32 1.1754944e-38, %v6422
    %v6424 = vsel %vm6421, %v6423, %v6419
    %v6425 = vmul.f32 1.0, %v6424
    %v6426 = vrcp.pop %v6405
    %v6427 = vmul.f32 %v6405, %v6426
    %v6428 = vsub.f32 1.0, %v6427
    %v6429 = vmul.f32 %v6426, %v6428
    %v6430 = vadd.f32 %v6426, %v6429
    %vm6431 = vweird.f32 %v6405
    %vm6432 = vweird.f32 %v6426
    %vm6433 = vmor %vm6431, %vm6432
    %v6434 = vsel %vm6433, %v6426, %v6430
    %v6435 = vand.u32 2147483647, %v6405
    %vm6436 = vcmp.eq.f32.partialorder %v6435, 8.507059e+37
    %v6437 = vand.u32 %v6405, 2147483648
    %v6438 = vor.u32 1.1754944e-38, %v6437
    %v6439 = vsel %vm6436, %v6438, %v6434
    %v6440 = vmul.f32 1.0, %v6439
    %v6441 = vrcp.pop %v6406
    %v6442 = vmul.f32 %v6406, %v6441
    %v6443 = vsub.f32 1.0, %v6442
    %v6444 = vmul.f32 %v6441, %v6443
    %v6445 = vadd.f32 %v6441, %v6444
    %vm6446 = vweird.f32 %v6406
    %vm6447 = vweird.f32 %v6441
    %vm6448 = vmor %vm6446, %vm6447
    %v6449 = vsel %vm6448, %v6441, %v6445
    %v6450 = vand.u32 2147483647, %v6406
    %vm6451 = vcmp.eq.f32.partialorder %v6450, 8.507059e+37
    %v6452 = vand.u32 %v6406, 2147483648
    %v6453 = vor.u32 1.1754944e-38, %v6452
    %v6454 = vsel %vm6451, %v6453, %v6449
    %v6455 = vmul.f32 1.0, %v6454
    %v6456 = vrcp.pop %v6407
    %v6457 = vmul.f32 %v6407, %v6456
    %v6458 = vsub.f32 1.0, %v6457
    %v6459 = vmul.f32 %v6456, %v6458
    %v6460 = vadd.f32 %v6456, %v6459
    %vm6461 = vweird.f32 %v6407
    %vm6462 = vweird.f32 %v6456
    %vm6463 = vmor %vm6461, %vm6462
    %v6464 = vsel %vm6463, %v6456, %v6460
    %v6465 = vand.u32 2147483647, %v6407
    %vm6466 = vcmp.eq.f32.partialorder %v6465, 8.507059e+37
    %v6467 = vand.u32 %v6407, 2147483648
    %v6468 = vor.u32 1.1754944e-38, %v6467
    %v6469 = vsel %vm6466, %v6468, %v6464
    %v6470 = vmul.f32 1.0, %v6469
    %v6471 = vrcp.pop %v6408
    %v6472 = vmul.f32 %v6408, %v6471
    %v6473 = vsub.f32 1.0, %v6472
    %v6474 = vmul.f32 %v6471, %v6473
    %v6475 = vadd.f32 %v6471, %v6474
    %vm6476 = vweird.f32 %v6408
    %vm6477 = vweird.f32 %v6471
    %vm6478 = vmor %vm6476, %vm6477
    %v6479 = vsel %vm6478, %v6471, %v6475
    %v6480 = vand.u32 2147483647, %v6408
    %vm6481 = vcmp.eq.f32.partialorder %v6480, 8.507059e+37
    %v6482 = vand.u32 %v6408, 2147483648
    %v6483 = vor.u32 1.1754944e-38, %v6482
    %v6484 = vsel %vm6481, %v6483, %v6479
    %v6485 = vmul.f32 1.0, %v6484
    %v6486 = vrcp.pop %v6409
    %v6487 = vmul.f32 %v6409, %v6486
    %v6488 = vsub.f32 1.0, %v6487
    %v6489 = vmul.f32 %v6486, %v6488
    %v6490 = vadd.f32 %v6486, %v6489
    %vm6491 = vweird.f32 %v6409
    %vm6492 = vweird.f32 %v6486
    %vm6493 = vmor %vm6491, %vm6492
    %v6494 = vsel %vm6493, %v6486, %v6490
    %v6495 = vand.u32 2147483647, %v6409
    %vm6496 = vcmp.eq.f32.partialorder %v6495, 8.507059e+37
    %v6497 = vand.u32 %v6409, 2147483648
    %v6498 = vor.u32 1.1754944e-38, %v6497
    %v6499 = vsel %vm6496, %v6498, %v6494
    %v6500 = vmul.f32 1.0, %v6499
    %v6501 = vrcp.pop %v6410
    %v6502 = vmul.f32 %v6410, %v6501
    %v6503 = vsub.f32 1.0, %v6502
    %v6504 = vmul.f32 %v6501, %v6503
    %v6505 = vadd.f32 %v6501, %v6504
    %vm6506 = vweird.f32 %v6410
    %vm6507 = vweird.f32 %v6501
    %vm6508 = vmor %vm6506, %vm6507
    %v6509 = vsel %vm6508, %v6501, %v6505
    %v6510 = vand.u32 2147483647, %v6410
    %vm6511 = vcmp.eq.f32.partialorder %v6510, 8.507059e+37
    %v6512 = vand.u32 %v6410, 2147483648
    %v6513 = vor.u32 1.1754944e-38, %v6512
    %v6514 = vsel %vm6511, %v6513, %v6509
    %v6515 = vmul.f32 1.0, %v6514
    %v6516 = vmul.f32 %v6376, %v6425
    %v6517 = vmul.f32 %v6377, %v6440
    %v6518 = vmul.f32 %v6378, %v6455
    %v6519 = vmul.f32 %v6379, %v6470
    %v6520 = vmul.f32 %v6380, %v6485
    %v6521 = vmul.f32 %v6381, %v6500
    %v6522 = vmul.f32 %v6382, %v6515
    %v6523 = vld [vmem:[#allocation8 + $0x1c] sm:$0xff]
    %v6524 = vld [vmem:[#allocation8 + $0x24] sm:$0xff]
    %v6525 = vld [vmem:[#allocation8 + $0x48] sm:$0xff]
    %v6526 = vld [vmem:[#allocation8 + $0x50] sm:$0xff]
    %v6527 = vld [vmem:[#allocation8 + $0x74] sm:$0xff]
    %v6528 = vld [vmem:[#allocation8 + $0x7c] sm:$0xff]
    %v6529 = vld [vmem:[#allocation8 + $0xa0] sm:$0xff]
    %v6530 = vld [vmem:[#allocation8 + $0xa8] sm:$0xff]
    %v6531 = vld [vmem:[#allocation8 + $0xcc] sm:$0xff]
    %v6532 = vld [vmem:[#allocation8 + $0xd4] sm:$0xff]
    %v6533 = vld [vmem:[#allocation8 + $0xf8] sm:$0xff]
    %v6534 = vld [vmem:[#allocation8 + $0x100] sm:$0xff]
    %v6535 = vld [vmem:[#allocation8 + $0x124] sm:$0xff]
    %v6536 = vld [vmem:[#allocation8 + $0x12c] sm:$0xff]
    %v6537 = vld [vmem:[#allocation8 + $0x150] sm:$0xff]
    %v6538 = vld [vmem:[#allocation8 + $0x158] sm:$0xff]
    %v6539 = vld [vmem:[#allocation8 + $0x17c] sm:$0xff]
    %v6540 = vld [vmem:[#allocation8 + $0x184] sm:$0xff]
    %v6541 = vld [vmem:[#allocation8 + $0x1a8] sm:$0xff]
    %v6542 = vld [vmem:[#allocation8 + $0x1b0] sm:$0xff]
    %v6543 = vld [vmem:[#allocation8 + $0x1d4] sm:$0xff]
    %v6544 = vld [vmem:[#allocation8 + $0x1dc] sm:$0xff]
    %v6545 = vld [vmem:[#allocation8 + $0x200] sm:$0xff]
    %v6546 = vld [vmem:[#allocation8 + $0x208] sm:$0xff]
    %v6547 = vld [vmem:[#allocation8 + $0x22c] sm:$0xff]
    %v6548 = vld [vmem:[#allocation8 + $0x234] sm:$0xff]
    %v6549 = vld [vmem:[#allocation8 + $0x258] sm:$0xff]
    %v6550 = vld [vmem:[#allocation8 + $0x260] sm:$0xff]
    %v6551 = vld [vmem:[#allocation8 + $0x284] sm:$0xff]
    %v6552 = vld [vmem:[#allocation8 + $0x28c] sm:$0xff]
    %v6553 = vld [vmem:[#allocation8 + $0x2b0] sm:$0xff]
    %v6554 = vld [vmem:[#allocation8 + $0x2b8] sm:$0xff]
    %v6555 = vld [vmem:[#allocation8 + $0x2dc] sm:$0xff]
    %v6556 = vld [vmem:[#allocation8 + $0x2e4] sm:$0xff]
    %v6557 = vld [vmem:[#allocation8 + $0x308] sm:$0xff]
    %v6558 = vld [vmem:[#allocation8 + $0x310] sm:$0xff]
    %v6559 = vld [vmem:[#allocation8 + $0x334] sm:$0xff]
    %v6560 = vld [vmem:[#allocation8 + $0x33c] sm:$0xff]
    %v6561 = vld [vmem:[#allocation8 + $0x360] sm:$0xff]
    %v6562 = vld [vmem:[#allocation8 + $0x368] sm:$0xff]
    %v6563 = vld [vmem:[#allocation8 + $0x38c] sm:$0xff]
    %v6564 = vld [vmem:[#allocation8 + $0x394] sm:$0xff]
    %v6565 = vld [vmem:[#allocation8 + $0x3b8] sm:$0xff]
    %v6566 = vld [vmem:[#allocation8 + $0x3c0] sm:$0xff]
    %v6567 = vld [vmem:[#allocation8 + $0x3e4] sm:$0xff]
    %v6568 = vld [vmem:[#allocation8 + $0x3ec] sm:$0xff]
    %v6569 = vld [vmem:[#allocation8 + $0x410] sm:$0xff]
    %v6570 = vld [vmem:[#allocation8 + $0x418] sm:$0xff]
    %v6571 = vld [vmem:[#allocation8 + $0x43c] sm:$0xff]
    %v6572 = vld [vmem:[#allocation8 + $0x444] sm:$0xff]
    %v6573 = vld [vmem:[#allocation8 + $0x468] sm:$0xff]
    %v6574 = vld [vmem:[#allocation8 + $0x470] sm:$0xff]
    %v6575 = vld [vmem:[#allocation8 + $0x494] sm:$0xff]
    %v6576 = vld [vmem:[#allocation8 + $0x49c] sm:$0xff]
    %v6577 = vld [vmem:[#allocation8 + $0x4c0] sm:$0xff]
    %v6578 = vld [vmem:[#allocation8 + $0x4c8] sm:$0xff]
    %v6579 = vld [vmem:[#allocation8 + $0x4ec] sm:$0xff]
    %v6580 = vld [vmem:[#allocation8 + $0x4f4] sm:$0xff]
    %v6581 = vld [vmem:[#allocation8 + $0x518] sm:$0xff]
    %v6582 = vld [vmem:[#allocation8 + $0x520] sm:$0xff]
    %v6583 = vld [vmem:[#allocation8 + $0x544] sm:$0xff]
    %v6584 = vld [vmem:[#allocation8 + $0x54c] sm:$0xff]
    %v6585 = vld [vmem:[#allocation8 + $0x570] sm:$0xff]
    %v6586 = vld [vmem:[#allocation8 + $0x578] sm:$0xff]
    %v6587 = vld [vmem:[#allocation8 + $0x59c] sm:$0xff]
    %v6588 = vld [vmem:[#allocation8 + $0x5a4] sm:$0xff]
    %v6589 = vld [vmem:[#allocation8 + $0x5c8] sm:$0xff]
    %v6590 = vld [vmem:[#allocation8 + $0x5d0] sm:$0xff]
    %v6591 = vld [vmem:[#allocation8 + $0x5f4] sm:$0xff]
    %v6592 = vld [vmem:[#allocation8 + $0x5fc] sm:$0xff]
    %v6593 = vld [vmem:[#allocation8 + $0x620] sm:$0xff]
    %v6594 = vld [vmem:[#allocation8 + $0x628] sm:$0xff]
    %v6595 = vld [vmem:[#allocation8 + $0x64c] sm:$0xff]
    %v6596 = vld [vmem:[#allocation8 + $0x654] sm:$0xff]
    %v6597 = vld [vmem:[#allocation8 + $0x678] sm:$0xff]
    %v6598 = vld [vmem:[#allocation8 + $0x680] sm:$0xff]
    %v6599 = vld [vmem:[#allocation8 + $0x6a4] sm:$0xff]
    %v6600 = vld [vmem:[#allocation8 + $0x6ac] sm:$0xff]
    %v6601 = vld [vmem:[#allocation8 + $0x6d0] sm:$0xff]
    %v6602 = vld [vmem:[#allocation8 + $0x6d8] sm:$0xff]
    %v6603 = vld [vmem:[#allocation8 + $0x6fc] sm:$0xff]
    %v6604 = vld [vmem:[#allocation8 + $0x704] sm:$0xff]
    %v6605 = vld [vmem:[#allocation8 + $0x728] sm:$0xff]
    %v6606 = vld [vmem:[#allocation8 + $0x730] sm:$0xff]
    %v6607 = vld [vmem:[#allocation8 + $0x754] sm:$0xff]
    %v6608 = vld [vmem:[#allocation8 + $0x75c] sm:$0xff]
    %v6609 = vld [vmem:[#allocation8 + $0x780] sm:$0xff]
    %v6610 = vld [vmem:[#allocation8 + $0x788] sm:$0xff]
    %v6611 = vld [vmem:[#allocation8 + $0x7ac] sm:$0xff]
    %v6612 = vld [vmem:[#allocation8 + $0x7b4] sm:$0xff]
    %v6613 = vld [vmem:[#allocation8 + $0x7d8] sm:$0xff]
    %v6614 = vld [vmem:[#allocation8 + $0x7e0] sm:$0xff]
    %v6615 = vld [vmem:[#allocation8 + $0x804] sm:$0xff]
    %v6616 = vld [vmem:[#allocation8 + $0x80c] sm:$0xff]
    %v6617 = vld [vmem:[#allocation8 + $0x830] sm:$0xff]
    %v6618 = vld [vmem:[#allocation8 + $0x838] sm:$0xff]
    %v6619 = vld [vmem:[#allocation8 + $0x85c] sm:$0xff]
    %v6620 = vld [vmem:[#allocation8 + $0x864] sm:$0xff]
    %v6621 = vld [vmem:[#allocation8 + $0x888] sm:$0xff]
    %v6622 = vld [vmem:[#allocation8 + $0x890] sm:$0xff]
    %v6623 = vld [vmem:[#allocation8 + $0x8b4] sm:$0xff]
    %v6624 = vld [vmem:[#allocation8 + $0x8bc] sm:$0xff]
    %v6625 = vld [vmem:[#allocation8 + $0x8e0] sm:$0xff]
    %v6626 = vld [vmem:[#allocation8 + $0x8e8] sm:$0xff]
    %v6627 = vld [vmem:[#allocation8 + $0x90c] sm:$0xff]
    %v6628 = vld [vmem:[#allocation8 + $0x914] sm:$0xff]
    %v6629 = vld [vmem:[#allocation8 + $0x938] sm:$0xff]
    %v6630 = vld [vmem:[#allocation8 + $0x940] sm:$0xff]
    %v6631 = vld [vmem:[#allocation8 + $0x964] sm:$0xff]
    %v6632 = vld [vmem:[#allocation8 + $0x96c] sm:$0xff]
    %v6633 = vld [vmem:[#allocation8 + $0x990] sm:$0xff]
    %v6634 = vld [vmem:[#allocation8 + $0x998] sm:$0xff]
    %v6635 = vld [vmem:[#allocation8 + $0x9bc] sm:$0xff]
    %v6636 = vld [vmem:[#allocation8 + $0x9c4] sm:$0xff]
    %v6637 = vld [vmem:[#allocation8 + $0x9e8] sm:$0xff]
    %v6638 = vld [vmem:[#allocation8 + $0x9f0] sm:$0xff]
    %v6639 = vld [vmem:[#allocation8 + $0xa14] sm:$0xff]
    %v6640 = vld [vmem:[#allocation8 + $0xa1c] sm:$0xff]
    %v6641 = vld [vmem:[#allocation8 + $0xa40] sm:$0xff]
    %v6642 = vld [vmem:[#allocation8 + $0xa48] sm:$0xff]
    %v6643 = vld [vmem:[#allocation8 + $0xa6c] sm:$0xff]
    %v6644 = vld [vmem:[#allocation8 + $0xa74] sm:$0xff]
    %v6645 = vld [vmem:[#allocation8 + $0xa98] sm:$0xff]
    %v6646 = vld [vmem:[#allocation8 + $0xaa0] sm:$0xff]
    %v6647 = vld [vmem:[#allocation8 + $0xac4] sm:$0xff]
    %v6648 = vld [vmem:[#allocation8 + $0xacc] sm:$0xff]
    %v6649 = vld [vmem:[#allocation8 + $0xaf0] sm:$0xff]
    %v6650 = vld [vmem:[#allocation8 + $0xaf8] sm:$0xff]
    %v6651 = vld [vmem:[#allocation8 + $0xb1c] sm:$0xff]
    %v6652 = vld [vmem:[#allocation8 + $0xb24] sm:$0xff]
    %v6653 = vld [vmem:[#allocation8 + $0xb48] sm:$0xff]
    %v6654 = vld [vmem:[#allocation8 + $0xb50] sm:$0xff]
    %v6655 = vld [vmem:[#allocation8 + $0xb74] sm:$0xff]
    %v6656 = vld [vmem:[#allocation8 + $0xb7c] sm:$0xff]
    %v6657 = vld [vmem:[#allocation8 + $0xba0] sm:$0xff]
    %v6658 = vld [vmem:[#allocation8 + $0xba8] sm:$0xff]
    %v6659 = vld [vmem:[#allocation8 + $0xbcc] sm:$0xff]
    %v6660 = vld [vmem:[#allocation8 + $0xbd4] sm:$0xff]
    %v6661 = vld [vmem:[#allocation8 + $0xbf8] sm:$0xff]
    %v6662 = vld [vmem:[#allocation8 + $0xc00] sm:$0xff]
    %v6663 = vld [vmem:[#allocation8 + $0xc24] sm:$0xff]
    %v6664 = vld [vmem:[#allocation8 + $0xc2c] sm:$0xff]
    %v6665 = vld [vmem:[#allocation8 + $0xc50] sm:$0xff]
    %v6666 = vld [vmem:[#allocation8 + $0xc58] sm:$0xff]
    %v6667 = vld [vmem:[#allocation8 + $0xc7c] sm:$0xff]
    %v6668 = vld [vmem:[#allocation8 + $0xc84] sm:$0xff]
    %v6669 = vld [vmem:[#allocation8 + $0xca8] sm:$0xff]
    %v6670 = vld [vmem:[#allocation8 + $0xcb0] sm:$0xff]
    %v6671 = vld [vmem:[#allocation8 + $0xcd4] sm:$0xff]
    %v6672 = vld [vmem:[#allocation8 + $0xcdc] sm:$0xff]
    %v6673 = vld [vmem:[#allocation8 + $0xd00] sm:$0xff]
    %v6674 = vld [vmem:[#allocation8 + $0xd08] sm:$0xff]
    %v6675 = vld [vmem:[#allocation8 + $0xd2c] sm:$0xff]
    %v6676 = vld [vmem:[#allocation8 + $0xd34] sm:$0xff]
    %v6677 = vld [vmem:[#allocation8 + $0xd58] sm:$0xff]
    %v6678 = vld [vmem:[#allocation8 + $0xd60] sm:$0xff]
    %v6679 = vld [vmem:[#allocation8 + $0xd84] sm:$0xff]
    %v6680 = vld [vmem:[#allocation8 + $0xd8c] sm:$0xff]
    %v6681 = vld [vmem:[#allocation8 + $0xdb0] sm:$0xff]
    %v6682 = vld [vmem:[#allocation8 + $0xdb8] sm:$0xff]
    %v6683 = vld [vmem:[#allocation8 + $0xddc] sm:$0xff]
    %v6684 = vld [vmem:[#allocation8 + $0xde4] sm:$0xff]
    %v6685 = vld [vmem:[#allocation8 + $0xe08] sm:$0xff]
    %v6686 = vld [vmem:[#allocation8 + $0xe10] sm:$0xff]
    %v6687 = vld [vmem:[#allocation8 + $0xe34] sm:$0xff]
    %v6688 = vld [vmem:[#allocation8 + $0xe3c] sm:$0xff]
    %v6689 = vld [vmem:[#allocation8 + $0xe60] sm:$0xff]
    %v6690 = vld [vmem:[#allocation8 + $0xe68] sm:$0xff]
    %v6691 = vld [vmem:[#allocation8 + $0xe8c] sm:$0xff]
    %v6692 = vld [vmem:[#allocation8 + $0xe94] sm:$0xff]
    %v6693 = vld [vmem:[#allocation8 + $0xeb8] sm:$0xff]
    %v6694 = vld [vmem:[#allocation8 + $0xec0] sm:$0xff]
    %v6695 = vld [vmem:[#allocation8 + $0xee4] sm:$0xff]
    %v6696 = vld [vmem:[#allocation8 + $0xeec] sm:$0xff]
    %v6697 = vld [vmem:[#allocation8 + $0xf10] sm:$0xff]
    %v6698 = vld [vmem:[#allocation8 + $0xf18] sm:$0xff]
    %v6699 = vld [vmem:[#allocation8 + $0xf3c] sm:$0xff]
    %v6700 = vld [vmem:[#allocation8 + $0xf44] sm:$0xff]
    %v6701 = vld [vmem:[#allocation8 + $0xf68] sm:$0xff]
    %v6702 = vld [vmem:[#allocation8 + $0xf70] sm:$0xff]
    %v6703 = vld [vmem:[#allocation8 + $0xf94] sm:$0xff]
    %v6704 = vld [vmem:[#allocation8 + $0xf9c] sm:$0xff]
    %v6705 = vld [vmem:[#allocation8 + $0xfc0] sm:$0xff]
    %v6706 = vld [vmem:[#allocation8 + $0xfc8] sm:$0xff]
    %v6707 = vld [vmem:[#allocation8 + $0xfec] sm:$0xff]
    %v6708 = vld [vmem:[#allocation8 + $0xff4] sm:$0xff]
    %v6709 = vld [vmem:[#allocation8 + $0x1018] sm:$0xff]
    %v6710 = vld [vmem:[#allocation8 + $0x1020] sm:$0xff]
    %v6711 = vld [vmem:[#allocation8 + $0x1044] sm:$0xff]
    %v6712 = vld [vmem:[#allocation8 + $0x104c] sm:$0xff]
    %v6713 = vld [vmem:[#allocation8 + $0x1070] sm:$0xff]
    %v6714 = vld [vmem:[#allocation8 + $0x1078] sm:$0xff]
    %v6715 = vld [vmem:[#allocation8 + $0x109c] sm:$0xff]
    %v6716 = vld [vmem:[#allocation8 + $0x10a4] sm:$0xff]
    %v6717 = vld [vmem:[#allocation8 + $0x10c8] sm:$0xff]
    %v6718 = vld [vmem:[#allocation8 + $0x10d0] sm:$0xff]
    %v6719 = vld [vmem:[#allocation8 + $0x10f4] sm:$0xff]
    %v6720 = vld [vmem:[#allocation8 + $0x10fc] sm:$0xff]
    %v6721 = vld [vmem:[#allocation8 + $0x1120] sm:$0xff]
    %v6722 = vld [vmem:[#allocation8 + $0x1128] sm:$0xff]
    %v6723 = vld [vmem:[#allocation8 + $0x114c] sm:$0xff]
    %v6724 = vld [vmem:[#allocation8 + $0x1154] sm:$0xff]
    %v6725 = vld [vmem:[#allocation8 + $0x1178] sm:$0xff]
    %v6726 = vld [vmem:[#allocation8 + $0x1180] sm:$0xff]
    %v6727 = vld [vmem:[#allocation8 + $0x11a4] sm:$0xff]
    %v6728 = vld [vmem:[#allocation8 + $0x11ac] sm:$0xff]
    %v6729 = vld [vmem:[#allocation8 + $0x11d0] sm:$0xff]
    %v6730 = vld [vmem:[#allocation8 + $0x11d8] sm:$0xff]
    %v6731 = vld [vmem:[#allocation8 + $0x11fc] sm:$0xff]
    %v6732 = vld [vmem:[#allocation8 + $0x1204] sm:$0xff]
    %v6733 = vld [vmem:[#allocation8 + $0x1228] sm:$0xff]
    %v6734 = vld [vmem:[#allocation8 + $0x1230] sm:$0xff]
    %v6735 = vld [vmem:[#allocation8 + $0x1254] sm:$0xff]
    %v6736 = vld [vmem:[#allocation8 + $0x125c] sm:$0xff]
    %v6737 = vld [vmem:[#allocation8 + $0x1280] sm:$0xff]
    %v6738 = vld [vmem:[#allocation8 + $0x1288] sm:$0xff]
    %v6739 = vld [vmem:[#allocation8 + $0x12ac] sm:$0xff]
    %v6740 = vld [vmem:[#allocation8 + $0x12b4] sm:$0xff]
    %v6741 = vld [vmem:[#allocation8 + $0x12d8] sm:$0xff]
    %v6742 = vld [vmem:[#allocation8 + $0x12e0] sm:$0xff]
    %v6743 = vld [vmem:[#allocation8 + $0x1304] sm:$0xff]
    %v6744 = vld [vmem:[#allocation8 + $0x130c] sm:$0xff]
    %v6745 = vld [vmem:[#allocation8 + $0x1330] sm:$0xff]
    %v6746 = vld [vmem:[#allocation8 + $0x1338] sm:$0xff]
    %s6747 = scalar_lea.vmem [#allocation10], 113
    %v6748 = vld [vmem:[%s6747] ss:$8 sm:$0xf]
    %v6749 = vpack.c.bf16 %v6516, %v6516
    %v6750 = vpack.c.bf16 %v6517, %v6517
    %v6751 = vpack.c.bf16 %v6518, %v6518
    %v6752 = vpack.c.bf16 %v6519, %v6519
    %v6753 = vpack.c.bf16 %v6520, %v6520
    %v6754 = vpack.c.bf16 %v6521, %v6521
    %v6755 = vpack.c.bf16 %v6522, %v6522
    %v6757 = vperm.slane %v6748, 0
    %v6758 = vperm.slane %v6748, 1
    %v6759 = vperm.slane %v6748, 2
    %v6760 = vperm.slane %v6748, 3
    %v6989 = vunpack.c.l.b16 %v6523
    %v6990 = vunpack.c.h.b16 %v6523
    %v6991 = vunpack.c.l.b16 %v6524
    %v6992 = vunpack.c.h.b16 %v6524
    %v6993 = vunpack.c.l.b16 %v6525
    %v6994 = vunpack.c.h.b16 %v6525
    %v6995 = vunpack.c.l.b16 %v6526
    %v6996 = vunpack.c.h.b16 %v6526
    %v6997 = vunpack.c.l.b16 %v6527
    %v6998 = vunpack.c.h.b16 %v6527
    %v6999 = vunpack.c.l.b16 %v6528
    %v7000 = vunpack.c.h.b16 %v6528
    %v7001 = vunpack.c.l.b16 %v6529
    %v7002 = vunpack.c.h.b16 %v6529
    %v7003 = vunpack.c.l.b16 %v6530
    %v7004 = vunpack.c.h.b16 %v6530
    %v7005 = vunpack.c.l.b16 %v6531
    %v7006 = vunpack.c.h.b16 %v6531
    %v7007 = vunpack.c.l.b16 %v6532
    %v7008 = vunpack.c.h.b16 %v6532
    %v7009 = vunpack.c.l.b16 %v6533
    %v7010 = vunpack.c.h.b16 %v6533
    %v7011 = vunpack.c.l.b16 %v6534
    %v7012 = vunpack.c.h.b16 %v6534
    %v7013 = vunpack.c.l.b16 %v6535
    %v7014 = vunpack.c.h.b16 %v6535
    %v7015 = vunpack.c.l.b16 %v6536
    %v7016 = vunpack.c.h.b16 %v6536
    %v7017 = vunpack.c.l.b16 %v6537
    %v7018 = vunpack.c.h.b16 %v6537
    %v7019 = vunpack.c.l.b16 %v6538
    %v7020 = vunpack.c.h.b16 %v6538
    %v7021 = vunpack.c.l.b16 %v6539
    %v7022 = vunpack.c.h.b16 %v6539
    %v7023 = vunpack.c.l.b16 %v6540
    %v7024 = vunpack.c.h.b16 %v6540
    %v7025 = vunpack.c.l.b16 %v6541
    %v7026 = vunpack.c.h.b16 %v6541
    %v7027 = vunpack.c.l.b16 %v6542
    %v7028 = vunpack.c.h.b16 %v6542
    %v7029 = vunpack.c.l.b16 %v6543
    %v7030 = vunpack.c.h.b16 %v6543
    %v7031 = vunpack.c.l.b16 %v6544
    %v7032 = vunpack.c.h.b16 %v6544
    %v7033 = vunpack.c.l.b16 %v6545
    %v7034 = vunpack.c.h.b16 %v6545
    %v7035 = vunpack.c.l.b16 %v6546
    %v7036 = vunpack.c.h.b16 %v6546
    %v7037 = vunpack.c.l.b16 %v6547
    %v7038 = vunpack.c.h.b16 %v6547
    %v7039 = vunpack.c.l.b16 %v6548
    %v7040 = vunpack.c.h.b16 %v6548
    %v7041 = vunpack.c.l.b16 %v6549
    %v7042 = vunpack.c.h.b16 %v6549
    %v7043 = vunpack.c.l.b16 %v6550
    %v7044 = vunpack.c.h.b16 %v6550
    %v7045 = vunpack.c.l.b16 %v6551
    %v7046 = vunpack.c.h.b16 %v6551
    %v7047 = vunpack.c.l.b16 %v6552
    %v7048 = vunpack.c.h.b16 %v6552
    %v7049 = vunpack.c.l.b16 %v6553
    %v7050 = vunpack.c.h.b16 %v6553
    %v7051 = vunpack.c.l.b16 %v6554
    %v7052 = vunpack.c.h.b16 %v6554
    %v7053 = vunpack.c.l.b16 %v6555
    %v7054 = vunpack.c.h.b16 %v6555
    %v7055 = vunpack.c.l.b16 %v6556
    %v7056 = vunpack.c.h.b16 %v6556
    %v7057 = vunpack.c.l.b16 %v6557
    %v7058 = vunpack.c.h.b16 %v6557
    %v7059 = vunpack.c.l.b16 %v6558
    %v7060 = vunpack.c.h.b16 %v6558
    %v7061 = vunpack.c.l.b16 %v6559
    %v7062 = vunpack.c.h.b16 %v6559
    %v7063 = vunpack.c.l.b16 %v6560
    %v7064 = vunpack.c.h.b16 %v6560
    %v7065 = vunpack.c.l.b16 %v6561
    %v7066 = vunpack.c.h.b16 %v6561
    %v7067 = vunpack.c.l.b16 %v6562
    %v7068 = vunpack.c.h.b16 %v6562
    %v7069 = vunpack.c.l.b16 %v6563
    %v7070 = vunpack.c.h.b16 %v6563
    %v7071 = vunpack.c.l.b16 %v6564
    %v7072 = vunpack.c.h.b16 %v6564
    %v7073 = vunpack.c.l.b16 %v6565
    %v7074 = vunpack.c.h.b16 %v6565
    %v7075 = vunpack.c.l.b16 %v6566
    %v7076 = vunpack.c.h.b16 %v6566
    %v7077 = vunpack.c.l.b16 %v6567
    %v7078 = vunpack.c.h.b16 %v6567
    %v7079 = vunpack.c.l.b16 %v6568
    %v7080 = vunpack.c.h.b16 %v6568
    %v7081 = vunpack.c.l.b16 %v6569
    %v7082 = vunpack.c.h.b16 %v6569
    %v7083 = vunpack.c.l.b16 %v6570
    %v7084 = vunpack.c.h.b16 %v6570
    %v7085 = vunpack.c.l.b16 %v6571
    %v7086 = vunpack.c.h.b16 %v6571
    %v7087 = vunpack.c.l.b16 %v6572
    %v7088 = vunpack.c.h.b16 %v6572
    %v7089 = vunpack.c.l.b16 %v6573
    %v7090 = vunpack.c.h.b16 %v6573
    %v7091 = vunpack.c.l.b16 %v6574
    %v7092 = vunpack.c.h.b16 %v6574
    %v7093 = vunpack.c.l.b16 %v6575
    %v7094 = vunpack.c.h.b16 %v6575
    %v7095 = vunpack.c.l.b16 %v6576
    %v7096 = vunpack.c.h.b16 %v6576
    %v7097 = vunpack.c.l.b16 %v6577
    %v7098 = vunpack.c.h.b16 %v6577
    %v7099 = vunpack.c.l.b16 %v6578
    %v7100 = vunpack.c.h.b16 %v6578
    %v7101 = vunpack.c.l.b16 %v6579
    %v7102 = vunpack.c.h.b16 %v6579
    %v7103 = vunpack.c.l.b16 %v6580
    %v7104 = vunpack.c.h.b16 %v6580
    %v7105 = vunpack.c.l.b16 %v6581
    %v7106 = vunpack.c.h.b16 %v6581
    %v7107 = vunpack.c.l.b16 %v6582
    %v7108 = vunpack.c.h.b16 %v6582
    %v7109 = vunpack.c.l.b16 %v6583
    %v7110 = vunpack.c.h.b16 %v6583
    %v7111 = vunpack.c.l.b16 %v6584
    %v7112 = vunpack.c.h.b16 %v6584
    %v7113 = vunpack.c.l.b16 %v6585
    %v7114 = vunpack.c.h.b16 %v6585
    %v7115 = vunpack.c.l.b16 %v6586
    %v7116 = vunpack.c.h.b16 %v6586
    %v7117 = vunpack.c.l.b16 %v6587
    %v7118 = vunpack.c.h.b16 %v6587
    %v7119 = vunpack.c.l.b16 %v6588
    %v7120 = vunpack.c.h.b16 %v6588
    %v7121 = vunpack.c.l.b16 %v6589
    %v7122 = vunpack.c.h.b16 %v6589
    %v7123 = vunpack.c.l.b16 %v6590
    %v7124 = vunpack.c.h.b16 %v6590
    %v7125 = vunpack.c.l.b16 %v6591
    %v7126 = vunpack.c.h.b16 %v6591
    %v7127 = vunpack.c.l.b16 %v6592
    %v7128 = vunpack.c.h.b16 %v6592
    %v7129 = vunpack.c.l.b16 %v6593
    %v7130 = vunpack.c.h.b16 %v6593
    %v7131 = vunpack.c.l.b16 %v6594
    %v7132 = vunpack.c.h.b16 %v6594
    %v7133 = vunpack.c.l.b16 %v6595
    %v7134 = vunpack.c.h.b16 %v6595
    %v7135 = vunpack.c.l.b16 %v6596
    %v7136 = vunpack.c.h.b16 %v6596
    %v7137 = vunpack.c.l.b16 %v6597
    %v7138 = vunpack.c.h.b16 %v6597
    %v7139 = vunpack.c.l.b16 %v6598
    %v7140 = vunpack.c.h.b16 %v6598
    %v7141 = vunpack.c.l.b16 %v6599
    %v7142 = vunpack.c.h.b16 %v6599
    %v7143 = vunpack.c.l.b16 %v6600
    %v7144 = vunpack.c.h.b16 %v6600
    %v7145 = vunpack.c.l.b16 %v6601
    %v7146 = vunpack.c.h.b16 %v6601
    %v7147 = vunpack.c.l.b16 %v6602
    %v7148 = vunpack.c.h.b16 %v6602
    %v7149 = vunpack.c.l.b16 %v6603
    %v7150 = vunpack.c.h.b16 %v6603
    %v7151 = vunpack.c.l.b16 %v6604
    %v7152 = vunpack.c.h.b16 %v6604
    %v7153 = vunpack.c.l.b16 %v6605
    %v7154 = vunpack.c.h.b16 %v6605
    %v7155 = vunpack.c.l.b16 %v6606
    %v7156 = vunpack.c.h.b16 %v6606
    %v7157 = vunpack.c.l.b16 %v6607
    %v7158 = vunpack.c.h.b16 %v6607
    %v7159 = vunpack.c.l.b16 %v6608
    %v7160 = vunpack.c.h.b16 %v6608
    %v7161 = vunpack.c.l.b16 %v6609
    %v7162 = vunpack.c.h.b16 %v6609
    %v7163 = vunpack.c.l.b16 %v6610
    %v7164 = vunpack.c.h.b16 %v6610
    %v7165 = vunpack.c.l.b16 %v6611
    %v7166 = vunpack.c.h.b16 %v6611
    %v7167 = vunpack.c.l.b16 %v6612
    %v7168 = vunpack.c.h.b16 %v6612
    %v7169 = vunpack.c.l.b16 %v6613
    %v7170 = vunpack.c.h.b16 %v6613
    %v7171 = vunpack.c.l.b16 %v6614
    %v7172 = vunpack.c.h.b16 %v6614
    %v7173 = vunpack.c.l.b16 %v6615
    %v7174 = vunpack.c.h.b16 %v6615
    %v7175 = vunpack.c.l.b16 %v6616
    %v7176 = vunpack.c.h.b16 %v6616
    %v7177 = vunpack.c.l.b16 %v6617
    %v7178 = vunpack.c.h.b16 %v6617
    %v7179 = vunpack.c.l.b16 %v6618
    %v7180 = vunpack.c.h.b16 %v6618
    %v7181 = vunpack.c.l.b16 %v6619
    %v7182 = vunpack.c.h.b16 %v6619
    %v7183 = vunpack.c.l.b16 %v6620
    %v7184 = vunpack.c.h.b16 %v6620
    %v7185 = vunpack.c.l.b16 %v6621
    %v7186 = vunpack.c.h.b16 %v6621
    %v7187 = vunpack.c.l.b16 %v6622
    %v7188 = vunpack.c.h.b16 %v6622
    %v7189 = vunpack.c.l.b16 %v6623
    %v7190 = vunpack.c.h.b16 %v6623
    %v7191 = vunpack.c.l.b16 %v6624
    %v7192 = vunpack.c.h.b16 %v6624
    %v7193 = vunpack.c.l.b16 %v6625
    %v7194 = vunpack.c.h.b16 %v6625
    %v7195 = vunpack.c.l.b16 %v6626
    %v7196 = vunpack.c.h.b16 %v6626
    %v7197 = vunpack.c.l.b16 %v6627
    %v7198 = vunpack.c.h.b16 %v6627
    %v7199 = vunpack.c.l.b16 %v6628
    %v7200 = vunpack.c.h.b16 %v6628
    %v7201 = vunpack.c.l.b16 %v6629
    %v7202 = vunpack.c.h.b16 %v6629
    %v7203 = vunpack.c.l.b16 %v6630
    %v7204 = vunpack.c.h.b16 %v6630
    %v7205 = vunpack.c.l.b16 %v6631
    %v7206 = vunpack.c.h.b16 %v6631
    %v7207 = vunpack.c.l.b16 %v6632
    %v7208 = vunpack.c.h.b16 %v6632
    %v7209 = vunpack.c.l.b16 %v6633
    %v7210 = vunpack.c.h.b16 %v6633
    %v7211 = vunpack.c.l.b16 %v6634
    %v7212 = vunpack.c.h.b16 %v6634
    %v7213 = vunpack.c.l.b16 %v6635
    %v7214 = vunpack.c.h.b16 %v6635
    %v7215 = vunpack.c.l.b16 %v6636
    %v7216 = vunpack.c.h.b16 %v6636
    %v7217 = vunpack.c.l.b16 %v6637
    %v7218 = vunpack.c.h.b16 %v6637
    %v7219 = vunpack.c.l.b16 %v6638
    %v7220 = vunpack.c.h.b16 %v6638
    %v7221 = vunpack.c.l.b16 %v6639
    %v7222 = vunpack.c.h.b16 %v6639
    %v7223 = vunpack.c.l.b16 %v6640
    %v7224 = vunpack.c.h.b16 %v6640
    %v7225 = vunpack.c.l.b16 %v6641
    %v7226 = vunpack.c.h.b16 %v6641
    %v7227 = vunpack.c.l.b16 %v6642
    %v7228 = vunpack.c.h.b16 %v6642
    %v7229 = vunpack.c.l.b16 %v6643
    %v7230 = vunpack.c.h.b16 %v6643
    %v7231 = vunpack.c.l.b16 %v6644
    %v7232 = vunpack.c.h.b16 %v6644
    %v7233 = vunpack.c.l.b16 %v6645
    %v7234 = vunpack.c.h.b16 %v6645
    %v7235 = vunpack.c.l.b16 %v6646
    %v7236 = vunpack.c.h.b16 %v6646
    %v7237 = vunpack.c.l.b16 %v6647
    %v7238 = vunpack.c.h.b16 %v6647
    %v7239 = vunpack.c.l.b16 %v6648
    %v7240 = vunpack.c.h.b16 %v6648
    %v7241 = vunpack.c.l.b16 %v6649
    %v7242 = vunpack.c.h.b16 %v6649
    %v7243 = vunpack.c.l.b16 %v6650
    %v7244 = vunpack.c.h.b16 %v6650
    %v7245 = vunpack.c.l.b16 %v6651
    %v7246 = vunpack.c.h.b16 %v6651
    %v7247 = vunpack.c.l.b16 %v6652
    %v7248 = vunpack.c.h.b16 %v6652
    %v7249 = vunpack.c.l.b16 %v6653
    %v7250 = vunpack.c.h.b16 %v6653
    %v7251 = vunpack.c.l.b16 %v6654
    %v7252 = vunpack.c.h.b16 %v6654
    %v7253 = vunpack.c.l.b16 %v6655
    %v7254 = vunpack.c.h.b16 %v6655
    %v7255 = vunpack.c.l.b16 %v6656
    %v7256 = vunpack.c.h.b16 %v6656
    %v7257 = vunpack.c.l.b16 %v6657
    %v7258 = vunpack.c.h.b16 %v6657
    %v7259 = vunpack.c.l.b16 %v6658
    %v7260 = vunpack.c.h.b16 %v6658
    %v7261 = vunpack.c.l.b16 %v6659
    %v7262 = vunpack.c.h.b16 %v6659
    %v7263 = vunpack.c.l.b16 %v6660
    %v7264 = vunpack.c.h.b16 %v6660
    %v7265 = vunpack.c.l.b16 %v6661
    %v7266 = vunpack.c.h.b16 %v6661
    %v7267 = vunpack.c.l.b16 %v6662
    %v7268 = vunpack.c.h.b16 %v6662
    %v7269 = vunpack.c.l.b16 %v6663
    %v7270 = vunpack.c.h.b16 %v6663
    %v7271 = vunpack.c.l.b16 %v6664
    %v7272 = vunpack.c.h.b16 %v6664
    %v7273 = vunpack.c.l.b16 %v6665
    %v7274 = vunpack.c.h.b16 %v6665
    %v7275 = vunpack.c.l.b16 %v6666
    %v7276 = vunpack.c.h.b16 %v6666
    %v7277 = vunpack.c.l.b16 %v6667
    %v7278 = vunpack.c.h.b16 %v6667
    %v7279 = vunpack.c.l.b16 %v6668
    %v7280 = vunpack.c.h.b16 %v6668
    %v7281 = vunpack.c.l.b16 %v6669
    %v7282 = vunpack.c.h.b16 %v6669
    %v7283 = vunpack.c.l.b16 %v6670
    %v7284 = vunpack.c.h.b16 %v6670
    %v7285 = vunpack.c.l.b16 %v6671
    %v7286 = vunpack.c.h.b16 %v6671
    %v7287 = vunpack.c.l.b16 %v6672
    %v7288 = vunpack.c.h.b16 %v6672
    %v7289 = vunpack.c.l.b16 %v6673
    %v7290 = vunpack.c.h.b16 %v6673
    %v7291 = vunpack.c.l.b16 %v6674
    %v7292 = vunpack.c.h.b16 %v6674
    %v7293 = vunpack.c.l.b16 %v6675
    %v7294 = vunpack.c.h.b16 %v6675
    %v7295 = vunpack.c.l.b16 %v6676
    %v7296 = vunpack.c.h.b16 %v6676
    %v7297 = vunpack.c.l.b16 %v6677
    %v7298 = vunpack.c.h.b16 %v6677
    %v7299 = vunpack.c.l.b16 %v6678
    %v7300 = vunpack.c.h.b16 %v6678
    %v7301 = vunpack.c.l.b16 %v6679
    %v7302 = vunpack.c.h.b16 %v6679
    %v7303 = vunpack.c.l.b16 %v6680
    %v7304 = vunpack.c.h.b16 %v6680
    %v7305 = vunpack.c.l.b16 %v6681
    %v7306 = vunpack.c.h.b16 %v6681
    %v7307 = vunpack.c.l.b16 %v6682
    %v7308 = vunpack.c.h.b16 %v6682
    %v7309 = vunpack.c.l.b16 %v6683
    %v7310 = vunpack.c.h.b16 %v6683
    %v7311 = vunpack.c.l.b16 %v6684
    %v7312 = vunpack.c.h.b16 %v6684
    %v7313 = vunpack.c.l.b16 %v6685
    %v7314 = vunpack.c.h.b16 %v6685
    %v7315 = vunpack.c.l.b16 %v6686
    %v7316 = vunpack.c.h.b16 %v6686
    %v7317 = vunpack.c.l.b16 %v6687
    %v7318 = vunpack.c.h.b16 %v6687
    %v7319 = vunpack.c.l.b16 %v6688
    %v7320 = vunpack.c.h.b16 %v6688
    %v7321 = vunpack.c.l.b16 %v6689
    %v7322 = vunpack.c.h.b16 %v6689
    %v7323 = vunpack.c.l.b16 %v6690
    %v7324 = vunpack.c.h.b16 %v6690
    %v7325 = vunpack.c.l.b16 %v6691
    %v7326 = vunpack.c.h.b16 %v6691
    %v7327 = vunpack.c.l.b16 %v6692
    %v7328 = vunpack.c.h.b16 %v6692
    %v7329 = vunpack.c.l.b16 %v6693
    %v7330 = vunpack.c.h.b16 %v6693
    %v7331 = vunpack.c.l.b16 %v6694
    %v7332 = vunpack.c.h.b16 %v6694
    %v7333 = vunpack.c.l.b16 %v6695
    %v7334 = vunpack.c.h.b16 %v6695
    %v7335 = vunpack.c.l.b16 %v6696
    %v7336 = vunpack.c.h.b16 %v6696
    %v7337 = vunpack.c.l.b16 %v6697
    %v7338 = vunpack.c.h.b16 %v6697
    %v7339 = vunpack.c.l.b16 %v6698
    %v7340 = vunpack.c.h.b16 %v6698
    %v7341 = vunpack.c.l.b16 %v6699
    %v7342 = vunpack.c.h.b16 %v6699
    %v7343 = vunpack.c.l.b16 %v6700
    %v7344 = vunpack.c.h.b16 %v6700
    %v7345 = vunpack.c.l.b16 %v6701
    %v7346 = vunpack.c.h.b16 %v6701
    %v7347 = vunpack.c.l.b16 %v6702
    %v7348 = vunpack.c.h.b16 %v6702
    %v7349 = vunpack.c.l.b16 %v6703
    %v7350 = vunpack.c.h.b16 %v6703
    %v7351 = vunpack.c.l.b16 %v6704
    %v7352 = vunpack.c.h.b16 %v6704
    %v7353 = vunpack.c.l.b16 %v6705
    %v7354 = vunpack.c.h.b16 %v6705
    %v7355 = vunpack.c.l.b16 %v6706
    %v7356 = vunpack.c.h.b16 %v6706
    %v7357 = vunpack.c.l.b16 %v6707
    %v7358 = vunpack.c.h.b16 %v6707
    %v7359 = vunpack.c.l.b16 %v6708
    %v7360 = vunpack.c.h.b16 %v6708
    %v7361 = vunpack.c.l.b16 %v6709
    %v7362 = vunpack.c.h.b16 %v6709
    %v7363 = vunpack.c.l.b16 %v6710
    %v7364 = vunpack.c.h.b16 %v6710
    %v7365 = vunpack.c.l.b16 %v6711
    %v7366 = vunpack.c.h.b16 %v6711
    %v7367 = vunpack.c.l.b16 %v6712
    %v7368 = vunpack.c.h.b16 %v6712
    %v7369 = vunpack.c.l.b16 %v6713
    %v7370 = vunpack.c.h.b16 %v6713
    %v7371 = vunpack.c.l.b16 %v6714
    %v7372 = vunpack.c.h.b16 %v6714
    %v7373 = vunpack.c.l.b16 %v6715
    %v7374 = vunpack.c.h.b16 %v6715
    %v7375 = vunpack.c.l.b16 %v6716
    %v7376 = vunpack.c.h.b16 %v6716
    %v7377 = vunpack.c.l.b16 %v6717
    %v7378 = vunpack.c.h.b16 %v6717
    %v7379 = vunpack.c.l.b16 %v6718
    %v7380 = vunpack.c.h.b16 %v6718
    %v7381 = vunpack.c.l.b16 %v6719
    %v7382 = vunpack.c.h.b16 %v6719
    %v7383 = vunpack.c.l.b16 %v6720
    %v7384 = vunpack.c.h.b16 %v6720
    %v7385 = vunpack.c.l.b16 %v6721
    %v7386 = vunpack.c.h.b16 %v6721
    %v7387 = vunpack.c.l.b16 %v6722
    %v7388 = vunpack.c.h.b16 %v6722
    %v7389 = vunpack.c.l.b16 %v6723
    %v7390 = vunpack.c.h.b16 %v6723
    %v7391 = vunpack.c.l.b16 %v6724
    %v7392 = vunpack.c.h.b16 %v6724
    %v7393 = vunpack.c.l.b16 %v6725
    %v7394 = vunpack.c.h.b16 %v6725
    %v7395 = vunpack.c.l.b16 %v6726
    %v7396 = vunpack.c.h.b16 %v6726
    %v7397 = vunpack.c.l.b16 %v6727
    %v7398 = vunpack.c.h.b16 %v6727
    %v7399 = vunpack.c.l.b16 %v6728
    %v7400 = vunpack.c.h.b16 %v6728
    %v7401 = vunpack.c.l.b16 %v6729
    %v7402 = vunpack.c.h.b16 %v6729
    %v7403 = vunpack.c.l.b16 %v6730
    %v7404 = vunpack.c.h.b16 %v6730
    %v7405 = vunpack.c.l.b16 %v6731
    %v7406 = vunpack.c.h.b16 %v6731
    %v7407 = vunpack.c.l.b16 %v6732
    %v7408 = vunpack.c.h.b16 %v6732
    %v7409 = vunpack.c.l.b16 %v6733
    %v7410 = vunpack.c.h.b16 %v6733
    %v7411 = vunpack.c.l.b16 %v6734
    %v7412 = vunpack.c.h.b16 %v6734
    %v7413 = vunpack.c.l.b16 %v6735
    %v7414 = vunpack.c.h.b16 %v6735
    %v7415 = vunpack.c.l.b16 %v6736
    %v7416 = vunpack.c.h.b16 %v6736
    %v7417 = vunpack.c.l.b16 %v6737
    %v7418 = vunpack.c.h.b16 %v6737
    %v7419 = vunpack.c.l.b16 %v6738
    %v7420 = vunpack.c.h.b16 %v6738
    %v7421 = vunpack.c.l.b16 %v6739
    %v7422 = vunpack.c.h.b16 %v6739
    %v7423 = vunpack.c.l.b16 %v6740
    %v7424 = vunpack.c.h.b16 %v6740
    %v7425 = vunpack.c.l.b16 %v6741
    %v7426 = vunpack.c.h.b16 %v6741
    %v7427 = vunpack.c.l.b16 %v6742
    %v7428 = vunpack.c.h.b16 %v6742
    %v7429 = vunpack.c.l.b16 %v6743
    %v7430 = vunpack.c.h.b16 %v6743
    %v7431 = vunpack.c.l.b16 %v6744
    %v7432 = vunpack.c.h.b16 %v6744
    %v7433 = vunpack.c.l.b16 %v6745
    %v7434 = vunpack.c.h.b16 %v6745
    %v7435 = vunpack.c.l.b16 %v6746
    %v7436 = vunpack.c.h.b16 %v6746
    %v7437 = vpack.c.b16 %v6993, %v6989
    %v7438 = vpack.c.b16 %v6994, %v6990
    %v7439 = vpack.c.b16 %v6995, %v6991
    %v7440 = vpack.c.b16 %v6996, %v6992
    %v7441 = vpack.c.b16 %v7001, %v6997
    %v7442 = vpack.c.b16 %v7002, %v6998
    %v7443 = vpack.c.b16 %v7003, %v6999
    %v7444 = vpack.c.b16 %v7004, %v7000
    %v7445 = vpack.c.b16 %v7009, %v7005
    %v7446 = vpack.c.b16 %v7010, %v7006
    %v7447 = vpack.c.b16 %v7011, %v7007
    %v7448 = vpack.c.b16 %v7012, %v7008
    %v7449 = vpack.c.b16 %v7017, %v7013
    %v7450 = vpack.c.b16 %v7018, %v7014
    %v7451 = vpack.c.b16 %v7019, %v7015
    %v7452 = vpack.c.b16 %v7020, %v7016
    %v7453 = vpack.c.b16 %v7025, %v7021
    %v7454 = vpack.c.b16 %v7026, %v7022
    %v7455 = vpack.c.b16 %v7027, %v7023
    %v7456 = vpack.c.b16 %v7028, %v7024
    %v7457 = vpack.c.b16 %v7033, %v7029
    %v7458 = vpack.c.b16 %v7034, %v7030
    %v7459 = vpack.c.b16 %v7035, %v7031
    %v7460 = vpack.c.b16 %v7036, %v7032
    %v7461 = vpack.c.b16 %v7041, %v7037
    %v7462 = vpack.c.b16 %v7042, %v7038
    %v7463 = vpack.c.b16 %v7043, %v7039
    %v7464 = vpack.c.b16 %v7044, %v7040
    %v7465 = vpack.c.b16 %v7049, %v7045
    %v7466 = vpack.c.b16 %v7050, %v7046
    %v7467 = vpack.c.b16 %v7051, %v7047
    %v7468 = vpack.c.b16 %v7052, %v7048
    %v7469 = vpack.c.b16 %v7057, %v7053
    %v7470 = vpack.c.b16 %v7058, %v7054
    %v7471 = vpack.c.b16 %v7059, %v7055
    %v7472 = vpack.c.b16 %v7060, %v7056
    %v7473 = vpack.c.b16 %v7065, %v7061
    %v7474 = vpack.c.b16 %v7066, %v7062
    %v7475 = vpack.c.b16 %v7067, %v7063
    %v7476 = vpack.c.b16 %v7068, %v7064
    %v7477 = vpack.c.b16 %v7073, %v7069
    %v7478 = vpack.c.b16 %v7074, %v7070
    %v7479 = vpack.c.b16 %v7075, %v7071
    %v7480 = vpack.c.b16 %v7076, %v7072
    %v7481 = vpack.c.b16 %v7081, %v7077
    %v7482 = vpack.c.b16 %v7082, %v7078
    %v7483 = vpack.c.b16 %v7083, %v7079
    %v7484 = vpack.c.b16 %v7084, %v7080
    %v7485 = vpack.c.b16 %v7089, %v7085
    %v7486 = vpack.c.b16 %v7090, %v7086
    %v7487 = vpack.c.b16 %v7091, %v7087
    %v7488 = vpack.c.b16 %v7092, %v7088
    %v7489 = vpack.c.b16 %v7097, %v7093
    %v7490 = vpack.c.b16 %v7098, %v7094
    %v7491 = vpack.c.b16 %v7099, %v7095
    %v7492 = vpack.c.b16 %v7100, %v7096
    %v7493 = vpack.c.b16 %v7105, %v7101
    %v7494 = vpack.c.b16 %v7106, %v7102
    %v7495 = vpack.c.b16 %v7107, %v7103
    %v7496 = vpack.c.b16 %v7108, %v7104
    %v7497 = vpack.c.b16 %v7113, %v7109
    %v7498 = vpack.c.b16 %v7114, %v7110
    %v7499 = vpack.c.b16 %v7115, %v7111
    %v7500 = vpack.c.b16 %v7116, %v7112
    %v7501 = vpack.c.b16 %v7121, %v7117
    %v7502 = vpack.c.b16 %v7122, %v7118
    %v7503 = vpack.c.b16 %v7123, %v7119
    %v7504 = vpack.c.b16 %v7124, %v7120
    %v7505 = vpack.c.b16 %v7129, %v7125
    %v7506 = vpack.c.b16 %v7130, %v7126
    %v7507 = vpack.c.b16 %v7131, %v7127
    %v7508 = vpack.c.b16 %v7132, %v7128
    %v7509 = vpack.c.b16 %v7137, %v7133
    %v7510 = vpack.c.b16 %v7138, %v7134
    %v7511 = vpack.c.b16 %v7139, %v7135
    %v7512 = vpack.c.b16 %v7140, %v7136
    %v7513 = vpack.c.b16 %v7145, %v7141
    %v7514 = vpack.c.b16 %v7146, %v7142
    %v7515 = vpack.c.b16 %v7147, %v7143
    %v7516 = vpack.c.b16 %v7148, %v7144
    %v7517 = vpack.c.b16 %v7153, %v7149
    %v7518 = vpack.c.b16 %v7154, %v7150
    %v7519 = vpack.c.b16 %v7155, %v7151
    %v7520 = vpack.c.b16 %v7156, %v7152
    %v7521 = vpack.c.b16 %v7161, %v7157
    %v7522 = vpack.c.b16 %v7162, %v7158
    %v7523 = vpack.c.b16 %v7163, %v7159
    %v7524 = vpack.c.b16 %v7164, %v7160
    %v7525 = vpack.c.b16 %v7169, %v7165
    %v7526 = vpack.c.b16 %v7170, %v7166
    %v7527 = vpack.c.b16 %v7171, %v7167
    %v7528 = vpack.c.b16 %v7172, %v7168
    %v7529 = vpack.c.b16 %v7177, %v7173
    %v7530 = vpack.c.b16 %v7178, %v7174
    %v7531 = vpack.c.b16 %v7179, %v7175
    %v7532 = vpack.c.b16 %v7180, %v7176
    %v7533 = vpack.c.b16 %v7185, %v7181
    %v7534 = vpack.c.b16 %v7186, %v7182
    %v7535 = vpack.c.b16 %v7187, %v7183
    %v7536 = vpack.c.b16 %v7188, %v7184
    %v7537 = vpack.c.b16 %v7193, %v7189
    %v7538 = vpack.c.b16 %v7194, %v7190
    %v7539 = vpack.c.b16 %v7195, %v7191
    %v7540 = vpack.c.b16 %v7196, %v7192
    %v7541 = vpack.c.b16 %v7201, %v7197
    %v7542 = vpack.c.b16 %v7202, %v7198
    %v7543 = vpack.c.b16 %v7203, %v7199
    %v7544 = vpack.c.b16 %v7204, %v7200
    %v7545 = vpack.c.b16 %v7209, %v7205
    %v7546 = vpack.c.b16 %v7210, %v7206
    %v7547 = vpack.c.b16 %v7211, %v7207
    %v7548 = vpack.c.b16 %v7212, %v7208
    %v7549 = vpack.c.b16 %v7217, %v7213
    %v7550 = vpack.c.b16 %v7218, %v7214
    %v7551 = vpack.c.b16 %v7219, %v7215
    %v7552 = vpack.c.b16 %v7220, %v7216
    %v7553 = vpack.c.b16 %v7225, %v7221
    %v7554 = vpack.c.b16 %v7226, %v7222
    %v7555 = vpack.c.b16 %v7227, %v7223
    %v7556 = vpack.c.b16 %v7228, %v7224
    %v7557 = vpack.c.b16 %v7233, %v7229
    %v7558 = vpack.c.b16 %v7234, %v7230
    %v7559 = vpack.c.b16 %v7235, %v7231
    %v7560 = vpack.c.b16 %v7236, %v7232
    %v7561 = vpack.c.b16 %v7241, %v7237
    %v7562 = vpack.c.b16 %v7242, %v7238
    %v7563 = vpack.c.b16 %v7243, %v7239
    %v7564 = vpack.c.b16 %v7244, %v7240
    %v7565 = vpack.c.b16 %v7249, %v7245
    %v7566 = vpack.c.b16 %v7250, %v7246
    %v7567 = vpack.c.b16 %v7251, %v7247
    %v7568 = vpack.c.b16 %v7252, %v7248
    %v7569 = vpack.c.b16 %v7257, %v7253
    %v7570 = vpack.c.b16 %v7258, %v7254
    %v7571 = vpack.c.b16 %v7259, %v7255
    %v7572 = vpack.c.b16 %v7260, %v7256
    %v7573 = vpack.c.b16 %v7265, %v7261
    %v7574 = vpack.c.b16 %v7266, %v7262
    %v7575 = vpack.c.b16 %v7267, %v7263
    %v7576 = vpack.c.b16 %v7268, %v7264
    %v7577 = vpack.c.b16 %v7273, %v7269
    %v7578 = vpack.c.b16 %v7274, %v7270
    %v7579 = vpack.c.b16 %v7275, %v7271
    %v7580 = vpack.c.b16 %v7276, %v7272
    %v7581 = vpack.c.b16 %v7281, %v7277
    %v7582 = vpack.c.b16 %v7282, %v7278
    %v7583 = vpack.c.b16 %v7283, %v7279
    %v7584 = vpack.c.b16 %v7284, %v7280
    %v7585 = vpack.c.b16 %v7289, %v7285
    %v7586 = vpack.c.b16 %v7290, %v7286
    %v7587 = vpack.c.b16 %v7291, %v7287
    %v7588 = vpack.c.b16 %v7292, %v7288
    %v7589 = vpack.c.b16 %v7297, %v7293
    %v7590 = vpack.c.b16 %v7298, %v7294
    %v7591 = vpack.c.b16 %v7299, %v7295
    %v7592 = vpack.c.b16 %v7300, %v7296
    %v7593 = vpack.c.b16 %v7305, %v7301
    %v7594 = vpack.c.b16 %v7306, %v7302
    %v7595 = vpack.c.b16 %v7307, %v7303
    %v7596 = vpack.c.b16 %v7308, %v7304
    %v7597 = vpack.c.b16 %v7313, %v7309
    %v7598 = vpack.c.b16 %v7314, %v7310
    %v7599 = vpack.c.b16 %v7315, %v7311
    %v7600 = vpack.c.b16 %v7316, %v7312
    %v7601 = vpack.c.b16 %v7321, %v7317
    %v7602 = vpack.c.b16 %v7322, %v7318
    %v7603 = vpack.c.b16 %v7323, %v7319
    %v7604 = vpack.c.b16 %v7324, %v7320
    %v7605 = vpack.c.b16 %v7329, %v7325
    %v7606 = vpack.c.b16 %v7330, %v7326
    %v7607 = vpack.c.b16 %v7331, %v7327
    %v7608 = vpack.c.b16 %v7332, %v7328
    %v7609 = vpack.c.b16 %v7337, %v7333
    %v7610 = vpack.c.b16 %v7338, %v7334
    %v7611 = vpack.c.b16 %v7339, %v7335
    %v7612 = vpack.c.b16 %v7340, %v7336
    %v7613 = vpack.c.b16 %v7345, %v7341
    %v7614 = vpack.c.b16 %v7346, %v7342
    %v7615 = vpack.c.b16 %v7347, %v7343
    %v7616 = vpack.c.b16 %v7348, %v7344
    %v7617 = vpack.c.b16 %v7353, %v7349
    %v7618 = vpack.c.b16 %v7354, %v7350
    %v7619 = vpack.c.b16 %v7355, %v7351
    %v7620 = vpack.c.b16 %v7356, %v7352
    %v7621 = vpack.c.b16 %v7361, %v7357
    %v7622 = vpack.c.b16 %v7362, %v7358
    %v7623 = vpack.c.b16 %v7363, %v7359
    %v7624 = vpack.c.b16 %v7364, %v7360
    %v7625 = vpack.c.b16 %v7369, %v7365
    %v7626 = vpack.c.b16 %v7370, %v7366
    %v7627 = vpack.c.b16 %v7371, %v7367
    %v7628 = vpack.c.b16 %v7372, %v7368
    %v7629 = vpack.c.b16 %v7377, %v7373
    %v7630 = vpack.c.b16 %v7378, %v7374
    %v7631 = vpack.c.b16 %v7379, %v7375
    %v7632 = vpack.c.b16 %v7380, %v7376
    %v7633 = vpack.c.b16 %v7385, %v7381
    %v7634 = vpack.c.b16 %v7386, %v7382
    %v7635 = vpack.c.b16 %v7387, %v7383
    %v7636 = vpack.c.b16 %v7388, %v7384
    %v7637 = vpack.c.b16 %v7393, %v7389
    %v7638 = vpack.c.b16 %v7394, %v7390
    %v7639 = vpack.c.b16 %v7395, %v7391
    %v7640 = vpack.c.b16 %v7396, %v7392
    %v7641 = vpack.c.b16 %v7401, %v7397
    %v7642 = vpack.c.b16 %v7402, %v7398
    %v7643 = vpack.c.b16 %v7403, %v7399
    %v7644 = vpack.c.b16 %v7404, %v7400
    %v7645 = vpack.c.b16 %v7409, %v7405
    %v7646 = vpack.c.b16 %v7410, %v7406
    %v7647 = vpack.c.b16 %v7411, %v7407
    %v7648 = vpack.c.b16 %v7412, %v7408
    %v7649 = vpack.c.b16 %v7417, %v7413
    %v7650 = vpack.c.b16 %v7418, %v7414
    %v7651 = vpack.c.b16 %v7419, %v7415
    %v7652 = vpack.c.b16 %v7420, %v7416
    %v7653 = vpack.c.b16 %v7425, %v7421
    %v7654 = vpack.c.b16 %v7426, %v7422
    %v7655 = vpack.c.b16 %v7427, %v7423
    %v7656 = vpack.c.b16 %v7428, %v7424
    %v7657 = vpack.c.b16 %v7433, %v7429
    %v7658 = vpack.c.b16 %v7434, %v7430
    %v7659 = vpack.c.b16 %v7435, %v7431
    %v7660 = vpack.c.b16 %v7436, %v7432
    %7885 = vmatpush.bf16.msra.mxu0 %v7465
    %7886 = vmatpush.bf16.msra.mxu0 %v7461
    %7887 = vmatpush.bf16.msra.mxu0 %v7457
    %7888 = vmatpush.bf16.msra.mxu0 %v7453
    %7889 = vmatpush.bf16.msra.mxu0 %v7449
    %7890 = vmatpush.bf16.msra.mxu0 %v7445
    %7891 = vmatpush.bf16.msra.mxu0 %v7441
    %7892 = vmatpush.bf16.msra.mxu0 %v7437
    %7893 = vmatmul.bf16.gmra.mxu0 %v6749
    %v7894 = vpop.f32.mrf.mxu0
    %v7895 = vadd.f32 %v6757, %v7894
    %v7896 = vpop.f32.mrf.mxu0
    %7897 = vdwg.mxu0
    %7898 = vmatpush.bf16.msra.mxu0 %v7497
    %7899 = vmatpush.bf16.msra.mxu0 %v7493
    %7900 = vmatpush.bf16.msra.mxu0 %v7489
    %7901 = vmatpush.bf16.msra.mxu0 %v7485
    %7902 = vmatpush.bf16.msra.mxu0 %v7481
    %7903 = vmatpush.bf16.msra.mxu0 %v7477
    %7904 = vmatpush.bf16.msra.mxu0 %v7473
    %7905 = vmatpush.bf16.msra.mxu0 %v7469
    %7906 = vmatmul.bf16.gmra.mxu0 %v6750
    %v7907 = vpop.f32.mrf.mxu0
    %v7908 = vadd.f32 %v7895, %v7907
    %v7909 = vpop.f32.mrf.mxu0
    %7910 = vdwg.mxu0
    %7911 = vmatpush.bf16.msra.mxu0 %v7529
    %7912 = vmatpush.bf16.msra.mxu0 %v7525
    %7913 = vmatpush.bf16.msra.mxu0 %v7521
    %7914 = vmatpush.bf16.msra.mxu0 %v7517
    %7915 = vmatpush.bf16.msra.mxu0 %v7513
    %7916 = vmatpush.bf16.msra.mxu0 %v7509
    %7917 = vmatpush.bf16.msra.mxu0 %v7505
    %7918 = vmatpush.bf16.msra.mxu0 %v7501
    %7919 = vmatmul.bf16.gmra.mxu0 %v6751
    %v7920 = vpop.f32.mrf.mxu0
    %v7921 = vadd.f32 %v7908, %v7920
    %v7922 = vpop.f32.mrf.mxu0
    %7923 = vdwg.mxu0
    %7924 = vmatpush.bf16.msra.mxu0 %v7561
    %7925 = vmatpush.bf16.msra.mxu0 %v7557
    %7926 = vmatpush.bf16.msra.mxu0 %v7553
    %7927 = vmatpush.bf16.msra.mxu0 %v7549
    %7928 = vmatpush.bf16.msra.mxu0 %v7545
    %7929 = vmatpush.bf16.msra.mxu0 %v7541
    %7930 = vmatpush.bf16.msra.mxu0 %v7537
    %7931 = vmatpush.bf16.msra.mxu0 %v7533
    %7932 = vmatmul.bf16.gmra.mxu0 %v6752
    %v7933 = vpop.f32.mrf.mxu0
    %v7934 = vadd.f32 %v7921, %v7933
    %v7935 = vpop.f32.mrf.mxu0
    %7936 = vdwg.mxu0
    %7937 = vmatpush.bf16.msra.mxu0 %v7593
    %7938 = vmatpush.bf16.msra.mxu0 %v7589
    %7939 = vmatpush.bf16.msra.mxu0 %v7585
    %7940 = vmatpush.bf16.msra.mxu0 %v7581
    %7941 = vmatpush.bf16.msra.mxu0 %v7577
    %7942 = vmatpush.bf16.msra.mxu0 %v7573
    %7943 = vmatpush.bf16.msra.mxu0 %v7569
    %7944 = vmatpush.bf16.msra.mxu0 %v7565
    %7945 = vmatmul.bf16.gmra.mxu0 %v6753
    %v7946 = vpop.f32.mrf.mxu0
    %v7947 = vadd.f32 %v7934, %v7946
    %v7948 = vpop.f32.mrf.mxu0
    %7949 = vdwg.mxu0
    %7950 = vmatpush.bf16.msra.mxu0 %v7625
    %7951 = vmatpush.bf16.msra.mxu0 %v7621
    %7952 = vmatpush.bf16.msra.mxu0 %v7617
    %7953 = vmatpush.bf16.msra.mxu0 %v7613
    %7954 = vmatpush.bf16.msra.mxu0 %v7609
    %7955 = vmatpush.bf16.msra.mxu0 %v7605
    %7956 = vmatpush.bf16.msra.mxu0 %v7601
    %7957 = vmatpush.bf16.msra.mxu0 %v7597
    %7958 = vmatmul.bf16.gmra.mxu0 %v6754
    %v7959 = vpop.f32.mrf.mxu0
    %v7960 = vadd.f32 %v7947, %v7959
    %v7961 = vpop.f32.mrf.mxu0
    %7962 = vdwg.mxu0
    %7963 = vmatpush.bf16.msra.mxu0 %v7657
    %7964 = vmatpush.bf16.msra.mxu0 %v7653
    %7965 = vmatpush.bf16.msra.mxu0 %v7649
    %7966 = vmatpush.bf16.msra.mxu0 %v7645
    %7967 = vmatpush.bf16.msra.mxu0 %v7641
    %7968 = vmatpush.bf16.msra.mxu0 %v7637
    %7969 = vmatpush.bf16.msra.mxu0 %v7633
    %7970 = vmatpush.bf16.msra.mxu0 %v7629
    %7971 = vmatmul.bf16.gmra.mxu0 %v6755
    %v7972 = vpop.f32.mrf.mxu0
    %v7973 = vadd.f32 %v7960, %v7972
    %v7974 = vpop.f32.mrf.mxu0
    %7975 = vdwg.mxu0
    %7976 = vmatpush.bf16.msra.mxu0 %v7466
    %7977 = vmatpush.bf16.msra.mxu0 %v7462
    %7978 = vmatpush.bf16.msra.mxu0 %v7458
    %7979 = vmatpush.bf16.msra.mxu0 %v7454
    %7980 = vmatpush.bf16.msra.mxu0 %v7450
    %7981 = vmatpush.bf16.msra.mxu0 %v7446
    %7982 = vmatpush.bf16.msra.mxu0 %v7442
    %7983 = vmatpush.bf16.msra.mxu0 %v7438
    %7984 = vmatmul.bf16.gmra.mxu0 %v6749
    %v7985 = vpop.f32.mrf.mxu0
    %v7986 = vadd.f32 %v6758, %v7985
    %v7987 = vpop.f32.mrf.mxu0
    %7988 = vdwg.mxu0
    %7989 = vmatpush.bf16.msra.mxu0 %v7498
    %7990 = vmatpush.bf16.msra.mxu0 %v7494
    %7991 = vmatpush.bf16.msra.mxu0 %v7490
    %7992 = vmatpush.bf16.msra.mxu0 %v7486
    %7993 = vmatpush.bf16.msra.mxu0 %v7482
    %7994 = vmatpush.bf16.msra.mxu0 %v7478
    %7995 = vmatpush.bf16.msra.mxu0 %v7474
    %7996 = vmatpush.bf16.msra.mxu0 %v7470
    %7997 = vmatmul.bf16.gmra.mxu0 %v6750
    %v7998 = vpop.f32.mrf.mxu0
    %v7999 = vadd.f32 %v7986, %v7998
    %v8000 = vpop.f32.mrf.mxu0
    %8001 = vdwg.mxu0
    %8002 = vmatpush.bf16.msra.mxu0 %v7530
    %8003 = vmatpush.bf16.msra.mxu0 %v7526
    %8004 = vmatpush.bf16.msra.mxu0 %v7522
    %8005 = vmatpush.bf16.msra.mxu0 %v7518
    %8006 = vmatpush.bf16.msra.mxu0 %v7514
    %8007 = vmatpush.bf16.msra.mxu0 %v7510
    %8008 = vmatpush.bf16.msra.mxu0 %v7506
    %8009 = vmatpush.bf16.msra.mxu0 %v7502
    %8010 = vmatmul.bf16.gmra.mxu0 %v6751
    %v8011 = vpop.f32.mrf.mxu0
    %v8012 = vadd.f32 %v7999, %v8011
    %v8013 = vpop.f32.mrf.mxu0
    %8014 = vdwg.mxu0
    %8015 = vmatpush.bf16.msra.mxu0 %v7562
    %8016 = vmatpush.bf16.msra.mxu0 %v7558
    %8017 = vmatpush.bf16.msra.mxu0 %v7554
    %8018 = vmatpush.bf16.msra.mxu0 %v7550
    %8019 = vmatpush.bf16.msra.mxu0 %v7546
    %8020 = vmatpush.bf16.msra.mxu0 %v7542
    %8021 = vmatpush.bf16.msra.mxu0 %v7538
    %8022 = vmatpush.bf16.msra.mxu0 %v7534
    %8023 = vmatmul.bf16.gmra.mxu0 %v6752
    %v8024 = vpop.f32.mrf.mxu0
    %v8025 = vadd.f32 %v8012, %v8024
    %v8026 = vpop.f32.mrf.mxu0
    %8027 = vdwg.mxu0
    %8028 = vmatpush.bf16.msra.mxu0 %v7594
    %8029 = vmatpush.bf16.msra.mxu0 %v7590
    %8030 = vmatpush.bf16.msra.mxu0 %v7586
    %8031 = vmatpush.bf16.msra.mxu0 %v7582
    %8032 = vmatpush.bf16.msra.mxu0 %v7578
    %8033 = vmatpush.bf16.msra.mxu0 %v7574
    %8034 = vmatpush.bf16.msra.mxu0 %v7570
    %8035 = vmatpush.bf16.msra.mxu0 %v7566
    %8036 = vmatmul.bf16.gmra.mxu0 %v6753
    %v8037 = vpop.f32.mrf.mxu0
    %v8038 = vadd.f32 %v8025, %v8037
    %v8039 = vpop.f32.mrf.mxu0
    %8040 = vdwg.mxu0
    %8041 = vmatpush.bf16.msra.mxu0 %v7626
    %8042 = vmatpush.bf16.msra.mxu0 %v7622
    %8043 = vmatpush.bf16.msra.mxu0 %v7618
    %8044 = vmatpush.bf16.msra.mxu0 %v7614
    %8045 = vmatpush.bf16.msra.mxu0 %v7610
    %8046 = vmatpush.bf16.msra.mxu0 %v7606
    %8047 = vmatpush.bf16.msra.mxu0 %v7602
    %8048 = vmatpush.bf16.msra.mxu0 %v7598
    %8049 = vmatmul.bf16.gmra.mxu0 %v6754
    %v8050 = vpop.f32.mrf.mxu0
    %v8051 = vadd.f32 %v8038, %v8050
    %v8052 = vpop.f32.mrf.mxu0
    %8053 = vdwg.mxu0
    %8054 = vmatpush.bf16.msra.mxu0 %v7658
    %8055 = vmatpush.bf16.msra.mxu0 %v7654
    %8056 = vmatpush.bf16.msra.mxu0 %v7650
    %8057 = vmatpush.bf16.msra.mxu0 %v7646
    %8058 = vmatpush.bf16.msra.mxu0 %v7642
    %8059 = vmatpush.bf16.msra.mxu0 %v7638
    %8060 = vmatpush.bf16.msra.mxu0 %v7634
    %8061 = vmatpush.bf16.msra.mxu0 %v7630
    %8062 = vmatmul.bf16.gmra.mxu0 %v6755
    %v8063 = vpop.f32.mrf.mxu0
    %v8064 = vadd.f32 %v8051, %v8063
    %v8065 = vpop.f32.mrf.mxu0
    %8066 = vdwg.mxu0
    %8067 = vmatpush.bf16.msra.mxu0 %v7467
    %8068 = vmatpush.bf16.msra.mxu0 %v7463
    %8069 = vmatpush.bf16.msra.mxu0 %v7459
    %8070 = vmatpush.bf16.msra.mxu0 %v7455
    %8071 = vmatpush.bf16.msra.mxu0 %v7451
    %8072 = vmatpush.bf16.msra.mxu0 %v7447
    %8073 = vmatpush.bf16.msra.mxu0 %v7443
    %8074 = vmatpush.bf16.msra.mxu0 %v7439
    %8075 = vmatmul.bf16.gmra.mxu0 %v6749
    %v8076 = vpop.f32.mrf.mxu0
    %v8077 = vadd.f32 %v6759, %v8076
    %v8078 = vpop.f32.mrf.mxu0
    %8079 = vdwg.mxu0
    %8080 = vmatpush.bf16.msra.mxu0 %v7499
    %8081 = vmatpush.bf16.msra.mxu0 %v7495
    %8082 = vmatpush.bf16.msra.mxu0 %v7491
    %8083 = vmatpush.bf16.msra.mxu0 %v7487
    %8084 = vmatpush.bf16.msra.mxu0 %v7483
    %8085 = vmatpush.bf16.msra.mxu0 %v7479
    %8086 = vmatpush.bf16.msra.mxu0 %v7475
    %8087 = vmatpush.bf16.msra.mxu0 %v7471
    %8088 = vmatmul.bf16.gmra.mxu0 %v6750
    %v8089 = vpop.f32.mrf.mxu0
    %v8090 = vadd.f32 %v8077, %v8089
    %v8091 = vpop.f32.mrf.mxu0
    %8092 = vdwg.mxu0
    %8093 = vmatpush.bf16.msra.mxu0 %v7531
    %8094 = vmatpush.bf16.msra.mxu0 %v7527
    %8095 = vmatpush.bf16.msra.mxu0 %v7523
    %8096 = vmatpush.bf16.msra.mxu0 %v7519
    %8097 = vmatpush.bf16.msra.mxu0 %v7515
    %8098 = vmatpush.bf16.msra.mxu0 %v7511
    %8099 = vmatpush.bf16.msra.mxu0 %v7507
    %8100 = vmatpush.bf16.msra.mxu0 %v7503
    %8101 = vmatmul.bf16.gmra.mxu0 %v6751
    %v8102 = vpop.f32.mrf.mxu0
    %v8103 = vadd.f32 %v8090, %v8102
    %v8104 = vpop.f32.mrf.mxu0
    %8105 = vdwg.mxu0
    %8106 = vmatpush.bf16.msra.mxu0 %v7563
    %8107 = vmatpush.bf16.msra.mxu0 %v7559
    %8108 = vmatpush.bf16.msra.mxu0 %v7555
    %8109 = vmatpush.bf16.msra.mxu0 %v7551
    %8110 = vmatpush.bf16.msra.mxu0 %v7547
    %8111 = vmatpush.bf16.msra.mxu0 %v7543
    %8112 = vmatpush.bf16.msra.mxu0 %v7539
    %8113 = vmatpush.bf16.msra.mxu0 %v7535
    %8114 = vmatmul.bf16.gmra.mxu0 %v6752
    %v8115 = vpop.f32.mrf.mxu0
    %v8116 = vadd.f32 %v8103, %v8115
    %v8117 = vpop.f32.mrf.mxu0
    %8118 = vdwg.mxu0
    %8119 = vmatpush.bf16.msra.mxu0 %v7595
    %8120 = vmatpush.bf16.msra.mxu0 %v7591
    %8121 = vmatpush.bf16.msra.mxu0 %v7587
    %8122 = vmatpush.bf16.msra.mxu0 %v7583
    %8123 = vmatpush.bf16.msra.mxu0 %v7579
    %8124 = vmatpush.bf16.msra.mxu0 %v7575
    %8125 = vmatpush.bf16.msra.mxu0 %v7571
    %8126 = vmatpush.bf16.msra.mxu0 %v7567
    %8127 = vmatmul.bf16.gmra.mxu0 %v6753
    %v8128 = vpop.f32.mrf.mxu0
    %v8129 = vadd.f32 %v8116, %v8128
    %v8130 = vpop.f32.mrf.mxu0
    %8131 = vdwg.mxu0
    %8132 = vmatpush.bf16.msra.mxu0 %v7627
    %8133 = vmatpush.bf16.msra.mxu0 %v7623
    %8134 = vmatpush.bf16.msra.mxu0 %v7619
    %8135 = vmatpush.bf16.msra.mxu0 %v7615
    %8136 = vmatpush.bf16.msra.mxu0 %v7611
    %8137 = vmatpush.bf16.msra.mxu0 %v7607
    %8138 = vmatpush.bf16.msra.mxu0 %v7603
    %8139 = vmatpush.bf16.msra.mxu0 %v7599
    %8140 = vmatmul.bf16.gmra.mxu0 %v6754
    %v8141 = vpop.f32.mrf.mxu0
    %v8142 = vadd.f32 %v8129, %v8141
    %v8143 = vpop.f32.mrf.mxu0
    %8144 = vdwg.mxu0
    %8145 = vmatpush.bf16.msra.mxu0 %v7659
    %8146 = vmatpush.bf16.msra.mxu0 %v7655
    %8147 = vmatpush.bf16.msra.mxu0 %v7651
    %8148 = vmatpush.bf16.msra.mxu0 %v7647
    %8149 = vmatpush.bf16.msra.mxu0 %v7643
    %8150 = vmatpush.bf16.msra.mxu0 %v7639
    %8151 = vmatpush.bf16.msra.mxu0 %v7635
    %8152 = vmatpush.bf16.msra.mxu0 %v7631
    %8153 = vmatmul.bf16.gmra.mxu0 %v6755
    %v8154 = vpop.f32.mrf.mxu0
    %v8155 = vadd.f32 %v8142, %v8154
    %v8156 = vpop.f32.mrf.mxu0
    %8157 = vdwg.mxu0
    %8158 = vmatpush.bf16.msra.mxu0 %v7468
    %8159 = vmatpush.bf16.msra.mxu0 %v7464
    %8160 = vmatpush.bf16.msra.mxu0 %v7460
    %8161 = vmatpush.bf16.msra.mxu0 %v7456
    %8162 = vmatpush.bf16.msra.mxu0 %v7452
    %8163 = vmatpush.bf16.msra.mxu0 %v7448
    %8164 = vmatpush.bf16.msra.mxu0 %v7444
    %8165 = vmatpush.bf16.msra.mxu0 %v7440
    %8166 = vmatmul.bf16.gmra.mxu0 %v6749
    %v8167 = vpop.f32.mrf.mxu0
    %v8168 = vadd.f32 %v6760, %v8167
    %v8169 = vpop.f32.mrf.mxu0
    %8170 = vdwg.mxu0
    %8171 = vmatpush.bf16.msra.mxu0 %v7500
    %8172 = vmatpush.bf16.msra.mxu0 %v7496
    %8173 = vmatpush.bf16.msra.mxu0 %v7492
    %8174 = vmatpush.bf16.msra.mxu0 %v7488
    %8175 = vmatpush.bf16.msra.mxu0 %v7484
    %8176 = vmatpush.bf16.msra.mxu0 %v7480
    %8177 = vmatpush.bf16.msra.mxu0 %v7476
    %8178 = vmatpush.bf16.msra.mxu0 %v7472
    %8179 = vmatmul.bf16.gmra.mxu0 %v6750
    %v8180 = vpop.f32.mrf.mxu0
    %v8181 = vadd.f32 %v8168, %v8180
    %v8182 = vpop.f32.mrf.mxu0
    %8183 = vdwg.mxu0
    %8184 = vmatpush.bf16.msra.mxu0 %v7532
    %8185 = vmatpush.bf16.msra.mxu0 %v7528
    %8186 = vmatpush.bf16.msra.mxu0 %v7524
    %8187 = vmatpush.bf16.msra.mxu0 %v7520
    %8188 = vmatpush.bf16.msra.mxu0 %v7516
    %8189 = vmatpush.bf16.msra.mxu0 %v7512
    %8190 = vmatpush.bf16.msra.mxu0 %v7508
    %8191 = vmatpush.bf16.msra.mxu0 %v7504
    %8192 = vmatmul.bf16.gmra.mxu0 %v6751
    %v8193 = vpop.f32.mrf.mxu0
    %v8194 = vadd.f32 %v8181, %v8193
    %v8195 = vpop.f32.mrf.mxu0
    %8196 = vdwg.mxu0
    %8197 = vmatpush.bf16.msra.mxu0 %v7564
    %8198 = vmatpush.bf16.msra.mxu0 %v7560
    %8199 = vmatpush.bf16.msra.mxu0 %v7556
    %8200 = vmatpush.bf16.msra.mxu0 %v7552
    %8201 = vmatpush.bf16.msra.mxu0 %v7548
    %8202 = vmatpush.bf16.msra.mxu0 %v7544
    %8203 = vmatpush.bf16.msra.mxu0 %v7540
    %8204 = vmatpush.bf16.msra.mxu0 %v7536
    %8205 = vmatmul.bf16.gmra.mxu0 %v6752
    %v8206 = vpop.f32.mrf.mxu0
    %v8207 = vadd.f32 %v8194, %v8206
    %v8208 = vpop.f32.mrf.mxu0
    %8209 = vdwg.mxu0
    %8210 = vmatpush.bf16.msra.mxu0 %v7596
    %8211 = vmatpush.bf16.msra.mxu0 %v7592
    %8212 = vmatpush.bf16.msra.mxu0 %v7588
    %8213 = vmatpush.bf16.msra.mxu0 %v7584
    %8214 = vmatpush.bf16.msra.mxu0 %v7580
    %8215 = vmatpush.bf16.msra.mxu0 %v7576
    %8216 = vmatpush.bf16.msra.mxu0 %v7572
    %8217 = vmatpush.bf16.msra.mxu0 %v7568
    %8218 = vmatmul.bf16.gmra.mxu0 %v6753
    %v8219 = vpop.f32.mrf.mxu0
    %v8220 = vadd.f32 %v8207, %v8219
    %v8221 = vpop.f32.mrf.mxu0
    %8222 = vdwg.mxu0
    %8223 = vmatpush.bf16.msra.mxu0 %v7628
    %8224 = vmatpush.bf16.msra.mxu0 %v7624
    %8225 = vmatpush.bf16.msra.mxu0 %v7620
    %8226 = vmatpush.bf16.msra.mxu0 %v7616
    %8227 = vmatpush.bf16.msra.mxu0 %v7612
    %8228 = vmatpush.bf16.msra.mxu0 %v7608
    %8229 = vmatpush.bf16.msra.mxu0 %v7604
    %8230 = vmatpush.bf16.msra.mxu0 %v7600
    %8231 = vmatmul.bf16.gmra.mxu0 %v6754
    %v8232 = vpop.f32.mrf.mxu0
    %v8233 = vadd.f32 %v8220, %v8232
    %v8234 = vpop.f32.mrf.mxu0
    %8235 = vdwg.mxu0
    %8236 = vmatpush.bf16.msra.mxu0 %v7660
    %8237 = vmatpush.bf16.msra.mxu0 %v7656
    %8238 = vmatpush.bf16.msra.mxu0 %v7652
    %8239 = vmatpush.bf16.msra.mxu0 %v7648
    %8240 = vmatpush.bf16.msra.mxu0 %v7644
    %8241 = vmatpush.bf16.msra.mxu0 %v7640
    %8242 = vmatpush.bf16.msra.mxu0 %v7636
    %8243 = vmatpush.bf16.msra.mxu0 %v7632
    %8244 = vmatmul.bf16.gmra.mxu0 %v6755
    %v8245 = vpop.f32.mrf.mxu0
    %v8246 = vadd.f32 %v8233, %v8245
    %v8247 = vpop.f32.mrf.mxu0
    %8248 = vdwg.mxu0
    %v8249 = vadd.f32 %v7973, %v8064
    %v8250 = vadd.f32 %v8249, %v8155
    %v8251 = vadd.f32 %v8250, %v8246
    %8252 = vadd.xlane.f32.xlu0 %v8251
    %v8253 = vpop.xlane.xlu0 %8252
    %v8254 = vmul.f32 %v8253, 0.0025
    %v8255 = vmul.f32 %v7973, %v7973
    %v8256 = vmul.f32 %v8064, %v8064
    %v8257 = vmul.f32 %v8155, %v8155
    %v8258 = vmul.f32 %v8246, %v8246
    %v8259 = vadd.f32 %v8255, %v8256
    %v8260 = vadd.f32 %v8259, %v8257
    %v8261 = vadd.f32 %v8260, %v8258
    %8262 = vadd.xlane.f32.xlu0 %v8261
    %v8263 = vpop.xlane.xlu0 %8262
    %v8264 = vmul.f32 %v8263, 0.0025
    %v8265 = vmul.f32 %v8254, %v8254
    %v8266 = vsub.f32 %v8264, %v8265
    %v8267 = vsub.f32 %v7973, %v8254
    %v8268 = vsub.f32 %v8064, %v8254
    %v8269 = vsub.f32 %v8155, %v8254
    %v8270 = vsub.f32 %v8246, %v8254
    %v8271 = vadd.f32 %v8266, 1e-05
    %v8272 = vrsqrt.pop %v8271
    %v8273 = vmul.f32 %v8272, %v8271
    %v8274 = vmul.f32 %v8273, %v8272
    %v8275 = vmul.f32 0.5, %v8274
    %v8276 = vsub.f32 1.5, %v8275
    %v8277 = vmul.f32 %v8272, %v8276
    %vm8278 = vweird.f32 %v8271
    %vm8279 = vweird.f32 %v8272
    %vm8280 = vmor %vm8278, %vm8279
    %v8281 = vsel %vm8280, %v8272, %v8277
    %v8282 = vmul.f32 %v8267, %v8281
    %v8283 = vmul.f32 %v8268, %v8281
    %v8284 = vmul.f32 %v8269, %v8281
    %v8285 = vmul.f32 %v8270, %v8281
    %s8286 = scalar_lea.vmem [#allocation10], 114
    %v8287 = vld [vmem:[%s8286] ss:$8 sm:$0xf]
    %s8288 = scalar_lea.vmem [#allocation10], 115
    %v8289 = vld [vmem:[%s8288] ss:$8 sm:$0xf]
    %v8291 = vperm.slane %v8287, 0
    %v8292 = vperm.slane %v8287, 1
    %v8293 = vperm.slane %v8287, 2
    %v8294 = vperm.slane %v8287, 3
    %v8299 = vmul.f32 %v8282, %v8291
    %v8300 = vmul.f32 %v8283, %v8292
    %v8301 = vmul.f32 %v8284, %v8293
    %v8302 = vmul.f32 %v8285, %v8294
    %v8304 = vperm.slane %v8289, 0
    %v8305 = vperm.slane %v8289, 1
    %v8306 = vperm.slane %v8289, 2
    %v8307 = vperm.slane %v8289, 3
    %v8312 = vadd.f32 %v8299, %v8304
    %v8313 = vadd.f32 %v8300, %v8305
    %v8314 = vadd.f32 %v8301, %v8306
    %v8315 = vadd.f32 %v8302, %v8307
    %v8316 = vxor.u32 %v8312, 2147483648
    %v8317 = vxor.u32 %v8313, 2147483648
    %v8318 = vxor.u32 %v8314, 2147483648
    %v8319 = vxor.u32 %v8315, 2147483648
    %v8320 = vmul.f32 %v8316, 1.442695
    %v8321 = vpow.pop %v8320
    %v8322 = vmul.f32 %v8317, 1.442695
    %v8323 = vpow.pop %v8322
    %v8324 = vmul.f32 %v8318, 1.442695
    %v8325 = vpow.pop %v8324
    %v8326 = vmul.f32 %v8319, 1.442695
    %v8327 = vpow.pop %v8326
    %v8328 = vadd.f32 %v8321, 1.0
    %v8329 = vadd.f32 %v8323, 1.0
    %v8330 = vadd.f32 %v8325, 1.0
    %v8331 = vadd.f32 %v8327, 1.0
    %v8332 = vrcp.pop %v8328
    %v8333 = vmul.f32 %v8328, %v8332
    %v8334 = vsub.f32 1.0, %v8333
    %v8335 = vmul.f32 %v8332, %v8334
    %v8336 = vadd.f32 %v8332, %v8335
    %vm8337 = vweird.f32 %v8328
    %vm8338 = vweird.f32 %v8332
    %vm8339 = vmor %vm8337, %vm8338
    %v8340 = vsel %vm8339, %v8332, %v8336
    %v8341 = vand.u32 2147483647, %v8328
    %vm8342 = vcmp.eq.f32.partialorder %v8341, 8.507059e+37
    %v8343 = vand.u32 %v8328, 2147483648
    %v8344 = vor.u32 1.1754944e-38, %v8343
    %v8345 = vsel %vm8342, %v8344, %v8340
    %v8346 = vmul.f32 1.0, %v8345
    %v8347 = vrcp.pop %v8329
    %v8348 = vmul.f32 %v8329, %v8347
    %v8349 = vsub.f32 1.0, %v8348
    %v8350 = vmul.f32 %v8347, %v8349
    %v8351 = vadd.f32 %v8347, %v8350
    %vm8352 = vweird.f32 %v8329
    %vm8353 = vweird.f32 %v8347
    %vm8354 = vmor %vm8352, %vm8353
    %v8355 = vsel %vm8354, %v8347, %v8351
    %v8356 = vand.u32 2147483647, %v8329
    %vm8357 = vcmp.eq.f32.partialorder %v8356, 8.507059e+37
    %v8358 = vand.u32 %v8329, 2147483648
    %v8359 = vor.u32 1.1754944e-38, %v8358
    %v8360 = vsel %vm8357, %v8359, %v8355
    %v8361 = vmul.f32 1.0, %v8360
    %v8362 = vrcp.pop %v8330
    %v8363 = vmul.f32 %v8330, %v8362
    %v8364 = vsub.f32 1.0, %v8363
    %v8365 = vmul.f32 %v8362, %v8364
    %v8366 = vadd.f32 %v8362, %v8365
    %vm8367 = vweird.f32 %v8330
    %vm8368 = vweird.f32 %v8362
    %vm8369 = vmor %vm8367, %vm8368
    %v8370 = vsel %vm8369, %v8362, %v8366
    %v8371 = vand.u32 2147483647, %v8330
    %vm8372 = vcmp.eq.f32.partialorder %v8371, 8.507059e+37
    %v8373 = vand.u32 %v8330, 2147483648
    %v8374 = vor.u32 1.1754944e-38, %v8373
    %v8375 = vsel %vm8372, %v8374, %v8370
    %v8376 = vmul.f32 1.0, %v8375
    %v8377 = vrcp.pop %v8331
    %v8378 = vmul.f32 %v8331, %v8377
    %v8379 = vsub.f32 1.0, %v8378
    %v8380 = vmul.f32 %v8377, %v8379
    %v8381 = vadd.f32 %v8377, %v8380
    %vm8382 = vweird.f32 %v8331
    %vm8383 = vweird.f32 %v8377
    %vm8384 = vmor %vm8382, %vm8383
    %v8385 = vsel %vm8384, %v8377, %v8381
    %v8386 = vand.u32 2147483647, %v8331
    %vm8387 = vcmp.eq.f32.partialorder %v8386, 8.507059e+37
    %v8388 = vand.u32 %v8331, 2147483648
    %v8389 = vor.u32 1.1754944e-38, %v8388
    %v8390 = vsel %vm8387, %v8389, %v8385
    %v8391 = vmul.f32 1.0, %v8390
    %v8392 = vmul.f32 %v8312, %v8346
    %v8393 = vmul.f32 %v8313, %v8361
    %v8394 = vmul.f32 %v8314, %v8376
    %v8395 = vmul.f32 %v8315, %v8391
    %v8396 = vld [vmem:[#allocation7 + $0x1c] sm:$0xff]
    %v8397 = vld [vmem:[#allocation7 + $0x40] sm:$0xff]
    %v8398 = vld [vmem:[#allocation7 + $0x64] sm:$0xff]
    %v8399 = vld [vmem:[#allocation7 + $0x88] sm:$0xff]
    %v8400 = vld [vmem:[#allocation7 + $0xac] sm:$0xff]
    %v8401 = vld [vmem:[#allocation7 + $0xd0] sm:$0xff]
    %v8402 = vld [vmem:[#allocation7 + $0xf4] sm:$0xff]
    %v8403 = vld [vmem:[#allocation7 + $0x118] sm:$0xff]
    %v8404 = vld [vmem:[#allocation7 + $0x13c] sm:$0xff]
    %v8405 = vld [vmem:[#allocation7 + $0x160] sm:$0xff]
    %v8406 = vld [vmem:[#allocation7 + $0x184] sm:$0xff]
    %v8407 = vld [vmem:[#allocation7 + $0x1a8] sm:$0xff]
    %v8408 = vld [vmem:[#allocation7 + $0x1cc] sm:$0xff]
    %v8409 = vld [vmem:[#allocation7 + $0x1f0] sm:$0xff]
    %v8410 = vld [vmem:[#allocation7 + $0x214] sm:$0xff]
    %v8411 = vld [vmem:[#allocation7 + $0x238] sm:$0xff]
    %v8412 = vld [vmem:[#allocation7 + $0x25c] sm:$0xff]
    %v8413 = vld [vmem:[#allocation7 + $0x280] sm:$0xff]
    %v8414 = vld [vmem:[#allocation7 + $0x2a4] sm:$0xff]
    %v8415 = vld [vmem:[#allocation7 + $0x2c8] sm:$0xff]
    %v8416 = vld [vmem:[#allocation7 + $0x2ec] sm:$0xff]
    %v8417 = vld [vmem:[#allocation7 + $0x310] sm:$0xff]
    %v8418 = vld [vmem:[#allocation7 + $0x334] sm:$0xff]
    %v8419 = vld [vmem:[#allocation7 + $0x358] sm:$0xff]
    %v8420 = vld [vmem:[#allocation7 + $0x37c] sm:$0xff]
    %v8421 = vld [vmem:[#allocation7 + $0x3a0] sm:$0xff]
    %v8422 = vld [vmem:[#allocation7 + $0x3c4] sm:$0xff]
    %v8423 = vld [vmem:[#allocation7 + $0x3e8] sm:$0xff]
    %v8424 = vld [vmem:[#allocation7 + $0x40c] sm:$0xff]
    %v8425 = vld [vmem:[#allocation7 + $0x430] sm:$0xff]
    %v8426 = vld [vmem:[#allocation7 + $0x454] sm:$0xff]
    %v8427 = vld [vmem:[#allocation7 + $0x478] sm:$0xff]
    %v8428 = vld [vmem:[#allocation7 + $0x49c] sm:$0xff]
    %v8429 = vld [vmem:[#allocation7 + $0x4c0] sm:$0xff]
    %v8430 = vld [vmem:[#allocation7 + $0x4e4] sm:$0xff]
    %v8431 = vld [vmem:[#allocation7 + $0x508] sm:$0xff]
    %v8432 = vld [vmem:[#allocation7 + $0x52c] sm:$0xff]
    %v8433 = vld [vmem:[#allocation7 + $0x550] sm:$0xff]
    %v8434 = vld [vmem:[#allocation7 + $0x574] sm:$0xff]
    %v8435 = vld [vmem:[#allocation7 + $0x598] sm:$0xff]
    %v8436 = vld [vmem:[#allocation7 + $0x5bc] sm:$0xff]
    %v8437 = vld [vmem:[#allocation7 + $0x5e0] sm:$0xff]
    %v8438 = vld [vmem:[#allocation7 + $0x604] sm:$0xff]
    %v8439 = vld [vmem:[#allocation7 + $0x628] sm:$0xff]
    %v8440 = vld [vmem:[#allocation7 + $0x64c] sm:$0xff]
    %v8441 = vld [vmem:[#allocation7 + $0x670] sm:$0xff]
    %v8442 = vld [vmem:[#allocation7 + $0x694] sm:$0xff]
    %v8443 = vld [vmem:[#allocation7 + $0x6b8] sm:$0xff]
    %v8444 = vld [vmem:[#allocation7 + $0x6dc] sm:$0xff]
    %v8445 = vld [vmem:[#allocation7 + $0x700] sm:$0xff]
    %v8446 = vld [vmem:[#allocation7 + $0x724] sm:$0xff]
    %v8447 = vld [vmem:[#allocation7 + $0x748] sm:$0xff]
    %v8448 = vld [vmem:[#allocation7 + $0x76c] sm:$0xff]
    %v8449 = vld [vmem:[#allocation7 + $0x790] sm:$0xff]
    %v8450 = vld [vmem:[#allocation7 + $0x7b4] sm:$0xff]
    %v8451 = vld [vmem:[#allocation7 + $0x7d8] sm:$0xff]
    %v8452 = vld [vmem:[#allocation7 + $0x7fc] sm:$0xff]
    %v8453 = vld [vmem:[#allocation7 + $0x820] sm:$0xff]
    %v8454 = vld [vmem:[#allocation7 + $0x844] sm:$0xff]
    %v8455 = vld [vmem:[#allocation7 + $0x868] sm:$0xff]
    %v8456 = vld [vmem:[#allocation7 + $0x88c] sm:$0xff]
    %v8457 = vld [vmem:[#allocation7 + $0x8b0] sm:$0xff]
    %v8458 = vld [vmem:[#allocation7 + $0x8d4] sm:$0xff]
    %v8459 = vld [vmem:[#allocation7 + $0x8f8] sm:$0xff]
    %s8460 = scalar_lea.vmem [#allocation10], 116
    %v8461 = vld [vmem:[%s8460] ss:$8 sm:$0x3]
    %v8462 = vpack.c.bf16 %v8392, %v8392
    %v8463 = vpack.c.bf16 %v8393, %v8393
    %v8464 = vpack.c.bf16 %v8394, %v8394
    %v8465 = vpack.c.bf16 %v8395, %v8395
    %v8467 = vperm.slane %v8461, 0
    %v8468 = vperm.slane %v8461, 1
    %v8535 = vunpack.c.l.b16 %v8396
    %v8536 = vunpack.c.h.b16 %v8396
    %v8537 = vunpack.c.l.b16 %v8397
    %v8538 = vunpack.c.h.b16 %v8397
    %v8539 = vunpack.c.l.b16 %v8398
    %v8540 = vunpack.c.h.b16 %v8398
    %v8541 = vunpack.c.l.b16 %v8399
    %v8542 = vunpack.c.h.b16 %v8399
    %v8543 = vunpack.c.l.b16 %v8400
    %v8544 = vunpack.c.h.b16 %v8400
    %v8545 = vunpack.c.l.b16 %v8401
    %v8546 = vunpack.c.h.b16 %v8401
    %v8547 = vunpack.c.l.b16 %v8402
    %v8548 = vunpack.c.h.b16 %v8402
    %v8549 = vunpack.c.l.b16 %v8403
    %v8550 = vunpack.c.h.b16 %v8403
    %v8551 = vunpack.c.l.b16 %v8404
    %v8552 = vunpack.c.h.b16 %v8404
    %v8553 = vunpack.c.l.b16 %v8405
    %v8554 = vunpack.c.h.b16 %v8405
    %v8555 = vunpack.c.l.b16 %v8406
    %v8556 = vunpack.c.h.b16 %v8406
    %v8557 = vunpack.c.l.b16 %v8407
    %v8558 = vunpack.c.h.b16 %v8407
    %v8559 = vunpack.c.l.b16 %v8408
    %v8560 = vunpack.c.h.b16 %v8408
    %v8561 = vunpack.c.l.b16 %v8409
    %v8562 = vunpack.c.h.b16 %v8409
    %v8563 = vunpack.c.l.b16 %v8410
    %v8564 = vunpack.c.h.b16 %v8410
    %v8565 = vunpack.c.l.b16 %v8411
    %v8566 = vunpack.c.h.b16 %v8411
    %v8567 = vunpack.c.l.b16 %v8412
    %v8568 = vunpack.c.h.b16 %v8412
    %v8569 = vunpack.c.l.b16 %v8413
    %v8570 = vunpack.c.h.b16 %v8413
    %v8571 = vunpack.c.l.b16 %v8414
    %v8572 = vunpack.c.h.b16 %v8414
    %v8573 = vunpack.c.l.b16 %v8415
    %v8574 = vunpack.c.h.b16 %v8415
    %v8575 = vunpack.c.l.b16 %v8416
    %v8576 = vunpack.c.h.b16 %v8416
    %v8577 = vunpack.c.l.b16 %v8417
    %v8578 = vunpack.c.h.b16 %v8417
    %v8579 = vunpack.c.l.b16 %v8418
    %v8580 = vunpack.c.h.b16 %v8418
    %v8581 = vunpack.c.l.b16 %v8419
    %v8582 = vunpack.c.h.b16 %v8419
    %v8583 = vunpack.c.l.b16 %v8420
    %v8584 = vunpack.c.h.b16 %v8420
    %v8585 = vunpack.c.l.b16 %v8421
    %v8586 = vunpack.c.h.b16 %v8421
    %v8587 = vunpack.c.l.b16 %v8422
    %v8588 = vunpack.c.h.b16 %v8422
    %v8589 = vunpack.c.l.b16 %v8423
    %v8590 = vunpack.c.h.b16 %v8423
    %v8591 = vunpack.c.l.b16 %v8424
    %v8592 = vunpack.c.h.b16 %v8424
    %v8593 = vunpack.c.l.b16 %v8425
    %v8594 = vunpack.c.h.b16 %v8425
    %v8595 = vunpack.c.l.b16 %v8426
    %v8596 = vunpack.c.h.b16 %v8426
    %v8597 = vunpack.c.l.b16 %v8427
    %v8598 = vunpack.c.h.b16 %v8427
    %v8599 = vunpack.c.l.b16 %v8428
    %v8600 = vunpack.c.h.b16 %v8428
    %v8601 = vunpack.c.l.b16 %v8429
    %v8602 = vunpack.c.h.b16 %v8429
    %v8603 = vunpack.c.l.b16 %v8430
    %v8604 = vunpack.c.h.b16 %v8430
    %v8605 = vunpack.c.l.b16 %v8431
    %v8606 = vunpack.c.h.b16 %v8431
    %v8607 = vunpack.c.l.b16 %v8432
    %v8608 = vunpack.c.h.b16 %v8432
    %v8609 = vunpack.c.l.b16 %v8433
    %v8610 = vunpack.c.h.b16 %v8433
    %v8611 = vunpack.c.l.b16 %v8434
    %v8612 = vunpack.c.h.b16 %v8434
    %v8613 = vunpack.c.l.b16 %v8435
    %v8614 = vunpack.c.h.b16 %v8435
    %v8615 = vunpack.c.l.b16 %v8436
    %v8616 = vunpack.c.h.b16 %v8436
    %v8617 = vunpack.c.l.b16 %v8437
    %v8618 = vunpack.c.h.b16 %v8437
    %v8619 = vunpack.c.l.b16 %v8438
    %v8620 = vunpack.c.h.b16 %v8438
    %v8621 = vunpack.c.l.b16 %v8439
    %v8622 = vunpack.c.h.b16 %v8439
    %v8623 = vunpack.c.l.b16 %v8440
    %v8624 = vunpack.c.h.b16 %v8440
    %v8625 = vunpack.c.l.b16 %v8441
    %v8626 = vunpack.c.h.b16 %v8441
    %v8627 = vunpack.c.l.b16 %v8442
    %v8628 = vunpack.c.h.b16 %v8442
    %v8629 = vunpack.c.l.b16 %v8443
    %v8630 = vunpack.c.h.b16 %v8443
    %v8631 = vunpack.c.l.b16 %v8444
    %v8632 = vunpack.c.h.b16 %v8444
    %v8633 = vunpack.c.l.b16 %v8445
    %v8634 = vunpack.c.h.b16 %v8445
    %v8635 = vunpack.c.l.b16 %v8446
    %v8636 = vunpack.c.h.b16 %v8446
    %v8637 = vunpack.c.l.b16 %v8447
    %v8638 = vunpack.c.h.b16 %v8447
    %v8639 = vunpack.c.l.b16 %v8448
    %v8640 = vunpack.c.h.b16 %v8448
    %v8641 = vunpack.c.l.b16 %v8449
    %v8642 = vunpack.c.h.b16 %v8449
    %v8643 = vunpack.c.l.b16 %v8450
    %v8644 = vunpack.c.h.b16 %v8450
    %v8645 = vunpack.c.l.b16 %v8451
    %v8646 = vunpack.c.h.b16 %v8451
    %v8647 = vunpack.c.l.b16 %v8452
    %v8648 = vunpack.c.h.b16 %v8452
    %v8649 = vunpack.c.l.b16 %v8453
    %v8650 = vunpack.c.h.b16 %v8453
    %v8651 = vunpack.c.l.b16 %v8454
    %v8652 = vunpack.c.h.b16 %v8454
    %v8653 = vunpack.c.l.b16 %v8455
    %v8654 = vunpack.c.h.b16 %v8455
    %v8655 = vunpack.c.l.b16 %v8456
    %v8656 = vunpack.c.h.b16 %v8456
    %v8657 = vunpack.c.l.b16 %v8457
    %v8658 = vunpack.c.h.b16 %v8457
    %v8659 = vunpack.c.l.b16 %v8458
    %v8660 = vunpack.c.h.b16 %v8458
    %v8661 = vunpack.c.l.b16 %v8459
    %v8662 = vunpack.c.h.b16 %v8459
    %v8663 = vpack.c.b16 %v8537, %v8535
    %v8664 = vpack.c.b16 %v8538, %v8536
    %v8665 = vpack.c.b16 %v8541, %v8539
    %v8666 = vpack.c.b16 %v8542, %v8540
    %v8667 = vpack.c.b16 %v8545, %v8543
    %v8668 = vpack.c.b16 %v8546, %v8544
    %v8669 = vpack.c.b16 %v8549, %v8547
    %v8670 = vpack.c.b16 %v8550, %v8548
    %v8671 = vpack.c.b16 %v8553, %v8551
    %v8672 = vpack.c.b16 %v8554, %v8552
    %v8673 = vpack.c.b16 %v8557, %v8555
    %v8674 = vpack.c.b16 %v8558, %v8556
    %v8675 = vpack.c.b16 %v8561, %v8559
    %v8676 = vpack.c.b16 %v8562, %v8560
    %v8677 = vpack.c.b16 %v8565, %v8563
    %v8678 = vpack.c.b16 %v8566, %v8564
    %v8679 = vpack.c.b16 %v8569, %v8567
    %v8680 = vpack.c.b16 %v8570, %v8568
    %v8681 = vpack.c.b16 %v8573, %v8571
    %v8682 = vpack.c.b16 %v8574, %v8572
    %v8683 = vpack.c.b16 %v8577, %v8575
    %v8684 = vpack.c.b16 %v8578, %v8576
    %v8685 = vpack.c.b16 %v8581, %v8579
    %v8686 = vpack.c.b16 %v8582, %v8580
    %v8687 = vpack.c.b16 %v8585, %v8583
    %v8688 = vpack.c.b16 %v8586, %v8584
    %v8689 = vpack.c.b16 %v8589, %v8587
    %v8690 = vpack.c.b16 %v8590, %v8588
    %v8691 = vpack.c.b16 %v8593, %v8591
    %v8692 = vpack.c.b16 %v8594, %v8592
    %v8693 = vpack.c.b16 %v8597, %v8595
    %v8694 = vpack.c.b16 %v8598, %v8596
    %v8695 = vpack.c.b16 %v8601, %v8599
    %v8696 = vpack.c.b16 %v8602, %v8600
    %v8697 = vpack.c.b16 %v8605, %v8603
    %v8698 = vpack.c.b16 %v8606, %v8604
    %v8699 = vpack.c.b16 %v8609, %v8607
    %v8700 = vpack.c.b16 %v8610, %v8608
    %v8701 = vpack.c.b16 %v8613, %v8611
    %v8702 = vpack.c.b16 %v8614, %v8612
    %v8703 = vpack.c.b16 %v8617, %v8615
    %v8704 = vpack.c.b16 %v8618, %v8616
    %v8705 = vpack.c.b16 %v8621, %v8619
    %v8706 = vpack.c.b16 %v8622, %v8620
    %v8707 = vpack.c.b16 %v8625, %v8623
    %v8708 = vpack.c.b16 %v8626, %v8624
    %v8709 = vpack.c.b16 %v8629, %v8627
    %v8710 = vpack.c.b16 %v8630, %v8628
    %v8711 = vpack.c.b16 %v8633, %v8631
    %v8712 = vpack.c.b16 %v8634, %v8632
    %v8713 = vpack.c.b16 %v8637, %v8635
    %v8714 = vpack.c.b16 %v8638, %v8636
    %v8715 = vpack.c.b16 %v8641, %v8639
    %v8716 = vpack.c.b16 %v8642, %v8640
    %v8717 = vpack.c.b16 %v8645, %v8643
    %v8718 = vpack.c.b16 %v8646, %v8644
    %v8719 = vpack.c.b16 %v8649, %v8647
    %v8720 = vpack.c.b16 %v8650, %v8648
    %v8721 = vpack.c.b16 %v8653, %v8651
    %v8722 = vpack.c.b16 %v8654, %v8652
    %v8723 = vpack.c.b16 %v8657, %v8655
    %v8724 = vpack.c.b16 %v8658, %v8656
    %v8725 = vpack.c.b16 %v8661, %v8659
    %v8726 = vpack.c.b16 %v8662, %v8660
    %8791 = vmatpush.bf16.msra.mxu0 %v8677
    %8792 = vmatpush.bf16.msra.mxu0 %v8675
    %8793 = vmatpush.bf16.msra.mxu0 %v8673
    %8794 = vmatpush.bf16.msra.mxu0 %v8671
    %8795 = vmatpush.bf16.msra.mxu0 %v8669
    %8796 = vmatpush.bf16.msra.mxu0 %v8667
    %8797 = vmatpush.bf16.msra.mxu0 %v8665
    %8798 = vmatpush.bf16.msra.mxu0 %v8663
    %8799 = vmatmul.bf16.gmra.mxu0 %v8462
    %v8800 = vpop.f32.mrf.mxu0
    %v8801 = vadd.f32 %v8467, %v8800
    %v8802 = vpop.f32.mrf.mxu0
    %8803 = vdwg.mxu0
    %8804 = vmatpush.bf16.msra.mxu0 %v8693
    %8805 = vmatpush.bf16.msra.mxu0 %v8691
    %8806 = vmatpush.bf16.msra.mxu0 %v8689
    %8807 = vmatpush.bf16.msra.mxu0 %v8687
    %8808 = vmatpush.bf16.msra.mxu0 %v8685
    %8809 = vmatpush.bf16.msra.mxu0 %v8683
    %8810 = vmatpush.bf16.msra.mxu0 %v8681
    %8811 = vmatpush.bf16.msra.mxu0 %v8679
    %8812 = vmatmul.bf16.gmra.mxu0 %v8463
    %v8813 = vpop.f32.mrf.mxu0
    %v8814 = vadd.f32 %v8801, %v8813
    %v8815 = vpop.f32.mrf.mxu0
    %8816 = vdwg.mxu0
    %8817 = vmatpush.bf16.msra.mxu0 %v8709
    %8818 = vmatpush.bf16.msra.mxu0 %v8707
    %8819 = vmatpush.bf16.msra.mxu0 %v8705
    %8820 = vmatpush.bf16.msra.mxu0 %v8703
    %8821 = vmatpush.bf16.msra.mxu0 %v8701
    %8822 = vmatpush.bf16.msra.mxu0 %v8699
    %8823 = vmatpush.bf16.msra.mxu0 %v8697
    %8824 = vmatpush.bf16.msra.mxu0 %v8695
    %8825 = vmatmul.bf16.gmra.mxu0 %v8464
    %v8826 = vpop.f32.mrf.mxu0
    %v8827 = vadd.f32 %v8814, %v8826
    %v8828 = vpop.f32.mrf.mxu0
    %8829 = vdwg.mxu0
    %8830 = vmatpush.bf16.msra.mxu0 %v8725
    %8831 = vmatpush.bf16.msra.mxu0 %v8723
    %8832 = vmatpush.bf16.msra.mxu0 %v8721
    %8833 = vmatpush.bf16.msra.mxu0 %v8719
    %8834 = vmatpush.bf16.msra.mxu0 %v8717
    %8835 = vmatpush.bf16.msra.mxu0 %v8715
    %8836 = vmatpush.bf16.msra.mxu0 %v8713
    %8837 = vmatpush.bf16.msra.mxu0 %v8711
    %8838 = vmatmul.bf16.gmra.mxu0 %v8465
    %v8839 = vpop.f32.mrf.mxu0
    %v8840 = vadd.f32 %v8827, %v8839
    %v8841 = vpop.f32.mrf.mxu0
    %8842 = vdwg.mxu0
    %8843 = vmatpush.bf16.msra.mxu0 %v8678
    %8844 = vmatpush.bf16.msra.mxu0 %v8676
    %8845 = vmatpush.bf16.msra.mxu0 %v8674
    %8846 = vmatpush.bf16.msra.mxu0 %v8672
    %8847 = vmatpush.bf16.msra.mxu0 %v8670
    %8848 = vmatpush.bf16.msra.mxu0 %v8668
    %8849 = vmatpush.bf16.msra.mxu0 %v8666
    %8850 = vmatpush.bf16.msra.mxu0 %v8664
    %8851 = vmatmul.bf16.gmra.mxu0 %v8462
    %v8852 = vpop.f32.mrf.mxu0
    %v8853 = vadd.f32 %v8468, %v8852
    %v8854 = vpop.f32.mrf.mxu0
    %8855 = vdwg.mxu0
    %8856 = vmatpush.bf16.msra.mxu0 %v8694
    %8857 = vmatpush.bf16.msra.mxu0 %v8692
    %8858 = vmatpush.bf16.msra.mxu0 %v8690
    %8859 = vmatpush.bf16.msra.mxu0 %v8688
    %8860 = vmatpush.bf16.msra.mxu0 %v8686
    %8861 = vmatpush.bf16.msra.mxu0 %v8684
    %8862 = vmatpush.bf16.msra.mxu0 %v8682
    %8863 = vmatpush.bf16.msra.mxu0 %v8680
    %8864 = vmatmul.bf16.gmra.mxu0 %v8463
    %v8865 = vpop.f32.mrf.mxu0
    %v8866 = vadd.f32 %v8853, %v8865
    %v8867 = vpop.f32.mrf.mxu0
    %8868 = vdwg.mxu0
    %8869 = vmatpush.bf16.msra.mxu0 %v8710
    %8870 = vmatpush.bf16.msra.mxu0 %v8708
    %8871 = vmatpush.bf16.msra.mxu0 %v8706
    %8872 = vmatpush.bf16.msra.mxu0 %v8704
    %8873 = vmatpush.bf16.msra.mxu0 %v8702
    %8874 = vmatpush.bf16.msra.mxu0 %v8700
    %8875 = vmatpush.bf16.msra.mxu0 %v8698
    %8876 = vmatpush.bf16.msra.mxu0 %v8696
    %8877 = vmatmul.bf16.gmra.mxu0 %v8464
    %v8878 = vpop.f32.mrf.mxu0
    %v8879 = vadd.f32 %v8866, %v8878
    %v8880 = vpop.f32.mrf.mxu0
    %8881 = vdwg.mxu0
    %8882 = vmatpush.bf16.msra.mxu0 %v8726
    %8883 = vmatpush.bf16.msra.mxu0 %v8724
    %8884 = vmatpush.bf16.msra.mxu0 %v8722
    %8885 = vmatpush.bf16.msra.mxu0 %v8720
    %8886 = vmatpush.bf16.msra.mxu0 %v8718
    %8887 = vmatpush.bf16.msra.mxu0 %v8716
    %8888 = vmatpush.bf16.msra.mxu0 %v8714
    %8889 = vmatpush.bf16.msra.mxu0 %v8712
    %8890 = vmatmul.bf16.gmra.mxu0 %v8465
    %v8891 = vpop.f32.mrf.mxu0
    %v8892 = vadd.f32 %v8879, %v8891
    %v8893 = vpop.f32.mrf.mxu0
    %8894 = vdwg.mxu0
    %v8895 = vadd.f32 %v8840, %v8892
    %8896 = vadd.xlane.f32.xlu0 %v8895
    %v8897 = vpop.xlane.xlu0 %8896
    %v8898 = vmul.f32 %v8897, 0.005
    %v8899 = vmul.f32 %v8840, %v8840
    %v8900 = vmul.f32 %v8892, %v8892
    %v8901 = vadd.f32 %v8899, %v8900
    %8902 = vadd.xlane.f32.xlu0 %v8901
    %v8903 = vpop.xlane.xlu0 %8902
    %v8904 = vmul.f32 %v8903, 0.005
    %v8905 = vmul.f32 %v8898, %v8898
    %v8906 = vsub.f32 %v8904, %v8905
    %v8907 = vsub.f32 %v8840, %v8898
    %v8908 = vsub.f32 %v8892, %v8898
    %v8909 = vadd.f32 %v8906, 1e-05
    %v8910 = vrsqrt.pop %v8909
    %v8911 = vmul.f32 %v8910, %v8909
    %v8912 = vmul.f32 %v8911, %v8910
    %v8913 = vmul.f32 0.5, %v8912
    %v8914 = vsub.f32 1.5, %v8913
    %v8915 = vmul.f32 %v8910, %v8914
    %vm8916 = vweird.f32 %v8909
    %vm8917 = vweird.f32 %v8910
    %vm8918 = vmor %vm8916, %vm8917
    %v8919 = vsel %vm8918, %v8910, %v8915
    %v8920 = vmul.f32 %v8907, %v8919
    %v8921 = vmul.f32 %v8908, %v8919
    %s8922 = scalar_lea.vmem [#allocation10], 117
    %v8923 = vld [vmem:[%s8922] ss:$8 sm:$0x3]
    %s8924 = scalar_lea.vmem [#allocation10], 118
    %v8925 = vld [vmem:[%s8924] ss:$8 sm:$0x3]
    %v8927 = vperm.slane %v8923, 0
    %v8928 = vperm.slane %v8923, 1
    %v8931 = vmul.f32 %v8920, %v8927
    %v8932 = vmul.f32 %v8921, %v8928
    %v8934 = vperm.slane %v8925, 0
    %v8935 = vperm.slane %v8925, 1
    %v8938 = vadd.f32 %v8931, %v8934
    %v8939 = vadd.f32 %v8932, %v8935
    %v8940 = vxor.u32 %v8938, 2147483648
    %v8941 = vxor.u32 %v8939, 2147483648
    %v8942 = vmul.f32 %v8940, 1.442695
    %v8943 = vpow.pop %v8942
    %v8944 = vmul.f32 %v8941, 1.442695
    %v8945 = vpow.pop %v8944
    %v8946 = vadd.f32 %v8943, 1.0
    %v8947 = vadd.f32 %v8945, 1.0
    %v8948 = vrcp.pop %v8946
    %v8949 = vmul.f32 %v8946, %v8948
    %v8950 = vsub.f32 1.0, %v8949
    %v8951 = vmul.f32 %v8948, %v8950
    %v8952 = vadd.f32 %v8948, %v8951
    %vm8953 = vweird.f32 %v8946
    %vm8954 = vweird.f32 %v8948
    %vm8955 = vmor %vm8953, %vm8954
    %v8956 = vsel %vm8955, %v8948, %v8952
    %v8957 = vand.u32 2147483647, %v8946
    %vm8958 = vcmp.eq.f32.partialorder %v8957, 8.507059e+37
    %v8959 = vand.u32 %v8946, 2147483648
    %v8960 = vor.u32 1.1754944e-38, %v8959
    %v8961 = vsel %vm8958, %v8960, %v8956
    %v8962 = vmul.f32 1.0, %v8961
    %v8963 = vrcp.pop %v8947
    %v8964 = vmul.f32 %v8947, %v8963
    %v8965 = vsub.f32 1.0, %v8964
    %v8966 = vmul.f32 %v8963, %v8965
    %v8967 = vadd.f32 %v8963, %v8966
    %vm8968 = vweird.f32 %v8947
    %vm8969 = vweird.f32 %v8963
    %vm8970 = vmor %vm8968, %vm8969
    %v8971 = vsel %vm8970, %v8963, %v8967
    %v8972 = vand.u32 2147483647, %v8947
    %vm8973 = vcmp.eq.f32.partialorder %v8972, 8.507059e+37
    %v8974 = vand.u32 %v8947, 2147483648
    %v8975 = vor.u32 1.1754944e-38, %v8974
    %v8976 = vsel %vm8973, %v8975, %v8971
    %v8977 = vmul.f32 1.0, %v8976
    %v8978 = vmul.f32 %v8938, %v8962
    %v8979 = vmul.f32 %v8939, %v8977
    %v8980 = vld [vmem:[#allocation5 + $0x10] sm:$0xf]
    %v8981 = vld [vmem:[#allocation5 + $0x24] sm:$0xf]
    %v8982 = vld [vmem:[#allocation5 + $0x38] sm:$0xf]
    %v8983 = vld [vmem:[#allocation5 + $0x4c] sm:$0xf]
    %v8984 = vld [vmem:[#allocation5 + $0x60] sm:$0xf]
    %v8985 = vld [vmem:[#allocation5 + $0x74] sm:$0xf]
    %v8986 = vld [vmem:[#allocation5 + $0x88] sm:$0xf]
    %v8987 = vld [vmem:[#allocation5 + $0x9c] sm:$0xf]
    %v8988 = vld [vmem:[#allocation5 + $0xb0] sm:$0xf]
    %v8989 = vld [vmem:[#allocation5 + $0xc4] sm:$0xf]
    %v8990 = vld [vmem:[#allocation5 + $0xd8] sm:$0xf]
    %v8991 = vld [vmem:[#allocation5 + $0xec] sm:$0xf]
    %v8992 = vld [vmem:[#allocation5 + $0x100] sm:$0xf]
    %v8993 = vld [vmem:[#allocation5 + $0x114] sm:$0xf]
    %v8994 = vld [vmem:[#allocation5 + $0x128] sm:$0xf]
    %v8995 = vld [vmem:[#allocation5 + $0x13c] sm:$0xf]
    %v8996 = vld [vmem:[#allocation5 + $0x150] sm:$0xf]
    %v8997 = vld [vmem:[#allocation5 + $0x164] sm:$0xf]
    %v8998 = vld [vmem:[#allocation5 + $0x178] sm:$0xf]
    %v8999 = vld [vmem:[#allocation5 + $0x18c] sm:$0xf]
    %v9000 = vld [vmem:[#allocation5 + $0x1a0] sm:$0xf]
    %v9001 = vld [vmem:[#allocation5 + $0x1b4] sm:$0xf]
    %v9002 = vld [vmem:[#allocation5 + $0x1c8] sm:$0xf]
    %v9003 = vld [vmem:[#allocation5 + $0x1dc] sm:$0xf]
    %v9004 = vld [vmem:[#allocation5 + $0x1f0] sm:$0xf]
    %v9005 = vld [vmem:[#allocation5 + $0x204] sm:$0xf]
    %v9006 = vld [vmem:[#allocation5 + $0x218] sm:$0xf]
    %v9007 = vld [vmem:[#allocation5 + $0x22c] sm:$0xf]
    %v9008 = vld [vmem:[#allocation5 + $0x240] sm:$0xf]
    %v9009 = vld [vmem:[#allocation5 + $0x254] sm:$0xf]
    %v9010 = vld [vmem:[#allocation5 + $0x268] sm:$0xf]
    %v9011 = vld [vmem:[#allocation5 + $0x27c] sm:$0xf]
    %v9012 = vld [vmem:[#allocation10 + $0x77] ss:$0 sm:$0xff]
    %v9013 = vpack.c.bf16 %v8978, %v8978
    %v9014 = vpack.c.bf16 %v8979, %v8979
    %v9047 = vunpack.c.l.b16 %v8980
    %v9048 = vunpack.c.l.b16 %v8981
    %v9049 = vunpack.c.l.b16 %v8982
    %v9050 = vunpack.c.l.b16 %v8983
    %v9051 = vunpack.c.l.b16 %v8984
    %v9052 = vunpack.c.l.b16 %v8985
    %v9053 = vunpack.c.l.b16 %v8986
    %v9054 = vunpack.c.l.b16 %v8987
    %v9055 = vunpack.c.l.b16 %v8988
    %v9056 = vunpack.c.l.b16 %v8989
    %v9057 = vunpack.c.l.b16 %v8990
    %v9058 = vunpack.c.l.b16 %v8991
    %v9059 = vunpack.c.l.b16 %v8992
    %v9060 = vunpack.c.l.b16 %v8993
    %v9061 = vunpack.c.l.b16 %v8994
    %v9062 = vunpack.c.l.b16 %v8995
    %v9063 = vunpack.c.l.b16 %v8996
    %v9064 = vunpack.c.l.b16 %v8997
    %v9065 = vunpack.c.l.b16 %v8998
    %v9066 = vunpack.c.l.b16 %v8999
    %v9067 = vunpack.c.l.b16 %v9000
    %v9068 = vunpack.c.l.b16 %v9001
    %v9069 = vunpack.c.l.b16 %v9002
    %v9070 = vunpack.c.l.b16 %v9003
    %v9071 = vunpack.c.l.b16 %v9004
    %v9072 = vunpack.c.l.b16 %v9005
    %v9073 = vunpack.c.l.b16 %v9006
    %v9074 = vunpack.c.l.b16 %v9007
    %v9075 = vunpack.c.l.b16 %v9008
    %v9076 = vunpack.c.l.b16 %v9009
    %v9077 = vunpack.c.l.b16 %v9010
    %v9078 = vunpack.c.l.b16 %v9011
    %v9079 = vpack.c.b16 %v9048, %v9047
    %v9080 = vpack.c.b16 %v9050, %v9049
    %v9081 = vpack.c.b16 %v9052, %v9051
    %v9082 = vpack.c.b16 %v9054, %v9053
    %v9083 = vpack.c.b16 %v9056, %v9055
    %v9084 = vpack.c.b16 %v9058, %v9057
    %v9085 = vpack.c.b16 %v9060, %v9059
    %v9086 = vpack.c.b16 %v9062, %v9061
    %v9087 = vpack.c.b16 %v9064, %v9063
    %v9088 = vpack.c.b16 %v9066, %v9065
    %v9089 = vpack.c.b16 %v9068, %v9067
    %v9090 = vpack.c.b16 %v9070, %v9069
    %v9091 = vpack.c.b16 %v9072, %v9071
    %v9092 = vpack.c.b16 %v9074, %v9073
    %v9093 = vpack.c.b16 %v9076, %v9075
    %v9094 = vpack.c.b16 %v9078, %v9077
    %9111 = vmatpush.bf16.msra.mxu0 %v9086
    %9112 = vmatpush.bf16.msra.mxu0 %v9085
    %9113 = vmatpush.bf16.msra.mxu0 %v9084
    %9114 = vmatpush.bf16.msra.mxu0 %v9083
    %9115 = vmatpush.bf16.msra.mxu0 %v9082
    %9116 = vmatpush.bf16.msra.mxu0 %v9081
    %9117 = vmatpush.bf16.msra.mxu0 %v9080
    %9118 = vmatpush.bf16.msra.mxu0 %v9079
    %9119 = vmatmul.bf16.gmra.mxu0 %v9013
    %v9120 = vpop.f32.mrf.mxu0
    %v9121 = vadd.f32 %v9012, %v9120
    %v9122 = vpop.f32.mrf.mxu0
    %9123 = vdwg.mxu0
    %9124 = vmatpush.bf16.msra.mxu0 %v9094
    %9125 = vmatpush.bf16.msra.mxu0 %v9093
    %9126 = vmatpush.bf16.msra.mxu0 %v9092
    %9127 = vmatpush.bf16.msra.mxu0 %v9091
    %9128 = vmatpush.bf16.msra.mxu0 %v9090
    %9129 = vmatpush.bf16.msra.mxu0 %v9089
    %9130 = vmatpush.bf16.msra.mxu0 %v9088
    %9131 = vmatpush.bf16.msra.mxu0 %v9087
    %9132 = vmatmul.bf16.gmra.mxu0 %v9014
    %v9133 = vpop.f32.mrf.mxu0
    %v9134 = vadd.f32 %v9121, %v9133
    %v9135 = vpop.f32.mrf.mxu0
    %9136 = vdwg.mxu0
    %9137 = vadd.xlane.f32.xlu0 %v9134
    %v9138 = vpop.xlane.xlu0 %9137
    %v9139 = vmul.f32 %v9138, 0.01
    %v9140 = vmul.f32 %v9134, %v9134
    %9141 = vadd.xlane.f32.xlu0 %v9140
    %v9142 = vpop.xlane.xlu0 %9141
    %v9143 = vmul.f32 %v9142, 0.01
    %v9144 = vmul.f32 %v9139, %v9139
    %v9145 = vsub.f32 %v9143, %v9144
    %v9146 = vsub.f32 %v9134, %v9139
    %v9147 = vadd.f32 %v9145, 1e-05
    %v9148 = vrsqrt.pop %v9147
    %v9149 = vmul.f32 %v9148, %v9147
    %v9150 = vmul.f32 %v9149, %v9148
    %v9151 = vmul.f32 0.5, %v9150
    %v9152 = vsub.f32 1.5, %v9151
    %v9153 = vmul.f32 %v9148, %v9152
    %vm9154 = vweird.f32 %v9147
    %vm9155 = vweird.f32 %v9148
    %vm9156 = vmor %vm9154, %vm9155
    %v9157 = vsel %vm9156, %v9148, %v9153
    %v9158 = vmul.f32 %v9146, %v9157
    %v9159 = vld [vmem:[#allocation10 + $0xa8] ss:$0 sm:$0xff]
    %v9160 = vld [vmem:[#allocation10 + $0xa9] ss:$0 sm:$0xff]
    %v9161 = vmul.f32 %v9158, %v9159
    %v9162 = vadd.f32 %v9161, %v9160
    %v9163 = vxor.u32 %v9162, 2147483648
    %v9164 = vmul.f32 %v9163, 1.442695
    %v9165 = vpow.pop %v9164
    %v9166 = vadd.f32 %v9165, 1.0
    %v9167 = vrcp.pop %v9166
    %v9168 = vmul.f32 %v9166, %v9167
    %v9169 = vsub.f32 1.0, %v9168
    %v9170 = vmul.f32 %v9167, %v9169
    %v9171 = vadd.f32 %v9167, %v9170
    %vm9172 = vweird.f32 %v9166
    %vm9173 = vweird.f32 %v9167
    %vm9174 = vmor %vm9172, %vm9173
    %v9175 = vsel %vm9174, %v9167, %v9171
    %v9176 = vand.u32 2147483647, %v9166
    %vm9177 = vcmp.eq.f32.partialorder %v9176, 8.507059e+37
    %v9178 = vand.u32 %v9166, 2147483648
    %v9179 = vor.u32 1.1754944e-38, %v9178
    %v9180 = vsel %vm9177, %v9179, %v9175
    %v9181 = vmul.f32 1.0, %v9180
    %v9182 = vmul.f32 %v9162, %v9181
    %v9183 = vld [vmem:[#allocation2 + $0xc] sm:$0xf]
    %v9184 = vld [vmem:[#allocation2 + $0x1c] sm:$0xf]
    %v9185 = vld [vmem:[#allocation2 + $0x2c] sm:$0xf]
    %v9186 = vld [vmem:[#allocation2 + $0x3c] sm:$0xf]
    %v9187 = vld [vmem:[#allocation2 + $0x4c] sm:$0xf]
    %v9188 = vld [vmem:[#allocation2 + $0x5c] sm:$0xf]
    %v9189 = vld [vmem:[#allocation2 + $0x6c] sm:$0xf]
    %v9190 = vld [vmem:[#allocation2 + $0x7c] sm:$0xf]
    %v9191 = vld [vmem:[#allocation2 + $0x8c] sm:$0xf]
    %v9192 = vld [vmem:[#allocation2 + $0x9c] sm:$0xf]
    %v9193 = vld [vmem:[#allocation2 + $0xac] sm:$0xf]
    %v9194 = vld [vmem:[#allocation2 + $0xbc] sm:$0xf]
    %v9195 = vld [vmem:[#allocation2 + $0xcc] sm:$0xf]
    %v9196 = vld [vmem:[#allocation2 + $0xdc] sm:$0xf]
    %v9197 = vld [vmem:[#allocation2 + $0xec] sm:$0xf]
    %v9198 = vld [vmem:[#allocation2 + $0xfc] sm:$0xf]
    %v9199 = vld [vmem:[#allocation10 + $0xaa] ss:$0 sm:$0xff]
    %v9200 = vpack.c.bf16 %v9182, %v9182
    %v9217 = vunpack.c.l.b16 %v9183
    %v9218 = vunpack.c.l.b16 %v9184
    %v9219 = vunpack.c.l.b16 %v9185
    %v9220 = vunpack.c.l.b16 %v9186
    %v9221 = vunpack.c.l.b16 %v9187
    %v9222 = vunpack.c.l.b16 %v9188
    %v9223 = vunpack.c.l.b16 %v9189
    %v9224 = vunpack.c.l.b16 %v9190
    %v9225 = vunpack.c.l.b16 %v9191
    %v9226 = vunpack.c.l.b16 %v9192
    %v9227 = vunpack.c.l.b16 %v9193
    %v9228 = vunpack.c.l.b16 %v9194
    %v9229 = vunpack.c.l.b16 %v9195
    %v9230 = vunpack.c.l.b16 %v9196
    %v9231 = vunpack.c.l.b16 %v9197
    %v9232 = vunpack.c.l.b16 %v9198
    %v9233 = vpack.c.b16 %v9218, %v9217
    %v9234 = vpack.c.b16 %v9220, %v9219
    %v9235 = vpack.c.b16 %v9222, %v9221
    %v9236 = vpack.c.b16 %v9224, %v9223
    %v9237 = vpack.c.b16 %v9226, %v9225
    %v9238 = vpack.c.b16 %v9228, %v9227
    %v9239 = vpack.c.b16 %v9230, %v9229
    %v9240 = vpack.c.b16 %v9232, %v9231
    %9249 = vmatpush.bf16.msra.mxu0 %v9240
    %9250 = vmatpush.bf16.msra.mxu0 %v9239
    %9251 = vmatpush.bf16.msra.mxu0 %v9238
    %9252 = vmatpush.bf16.msra.mxu0 %v9237
    %9253 = vmatpush.bf16.msra.mxu0 %v9236
    %9254 = vmatpush.bf16.msra.mxu0 %v9235
    %9255 = vmatpush.bf16.msra.mxu0 %v9234
    %9256 = vmatpush.bf16.msra.mxu0 %v9233
    %9257 = vmatmul.bf16.gmra.mxu0 %v9200
    %v9258 = vpop.f32.mrf.mxu0
    %v9259 = vadd.f32 %v9199, %v9258
    %v9260 = vpop.f32.mrf.mxu0
    %9261 = vdwg.mxu0
    %9262 = vst [vmem:[#allocation11] sm:$0xff] %v9259
    // Predicated region
    $region46: #{mlp_forward.1} parent=1 // pred_check
      _
    $region47: #{mlp_forward.1} parent=1 // pred_check_branch
      %9264 = sbr.rel (0) target = $region49
    $region48: #{mlp_forward.1} parent=1 // pred_region
      %9266 = vsyncadd [#allocation4], 0
      %s9268 = sshll.u32 [#allocation11], 4
      %s9269 = int_to_ptr.vmem [resolvable:$true] %s9268
      %s9270 = sshll.u32 %s6, 4
      %s9271 = int_to_ptr.hbm [resolvable:$true] %s9270
      %9273 = dma.vmem_to_hbm [thread:$0]  %s9269, 128, %s9271, [#allocation4]
    $region49: #{mlp_forward.1} parent=1 // pred_fallthru
      _
    // Predicated region
    $region50: #{mlp_forward.1} parent=1 // pred_check
      _
    $region51: #{mlp_forward.1} parent=1 // pred_check_branch
      %9275 = sbr.rel (0) target = $region53
    $region52: #{mlp_forward.1} parent=1 // pred_region
      %9277 = dma.done [#allocation4], 128
    $region53: #{mlp_forward.1} parent=1 // pred_fallthru
      _
    %9278 = vsyncpa [#allocation3], 1
    %9279 = vsyncpa [#allocation6], 1
    %9280 = vsyncpa [#allocation9], 1
    %9281 = vsyncpa [#allocation4], 1

</llo_original>
